<compile_context>
chip_gen: v6e
topology: v6e:2x2x1
jax: 0.10.0
libtpu: 0.0.40
codegen_flags: <defaults>
</compile_context>

<pallas_src>
import functools

import jax
import jax.numpy as jnp
from jax.experimental import pallas as pl
from jax.experimental.pallas import tpu as pltpu

NEG_INF = -1e9  # stand-in for float('-inf') in additive attention masks
_VMEM_LIMIT = 64 * 1024 * 1024


# ----------------------------------------------------------------------------
# Shape / tiling helpers
# ----------------------------------------------------------------------------
def _cdiv(a, b):
    return -(-a // b)


def _round_up(x, m):
    return _cdiv(x, m) * m


def _row_tiling(m, tmax=512):
    """Row (sublane) tiling; aim for >=2 grid steps (v7x has two TensorCores)."""
    nb = max(2, _cdiv(m, tmax))
    tm = min(tmax, _round_up(_cdiv(m, nb), 8))
    return tm, _round_up(m, tm)


def _col_tiling(n, tmax=1024):
    """Column (lane) tiling; always a multiple of 128 lanes -> lane-dense stores."""
    nb = max(1, _cdiv(n, tmax))
    tn = _round_up(_cdiv(n, nb), 128)
    return tn, _round_up(n, tn)


def _k_tiling(k, tmax=512):
    if k <= tmax:
        return k, k                      # single K block (full dim, no padding)
    nb = _cdiv(k, tmax)
    tk = _round_up(_cdiv(k, nb), 128)
    return tk, _round_up(k, tk)


def _pad_rows(x, mp):
    if x.shape[0] == mp:
        return x
    return jnp.pad(x, ((0, mp - x.shape[0]), (0, 0)))


def _pad2(x, mp, np_):
    m, n = x.shape
    if m == mp and n == np_:
        return x
    return jnp.pad(x, ((0, mp - m), (0, np_ - n)))


def _const_weight_spec(shape, index_map):
    """Constant-index weight block: single-buffered when supported (v7x VMEM)."""
    try:
        return pl.BlockSpec(shape, index_map, pipeline_mode=pl.Buffered(1))
    except (TypeError, AttributeError):
        return pl.BlockSpec(shape, index_map)


# ----------------------------------------------------------------------------
# Linear (matmul + bias [+ relu]) kernels
# ----------------------------------------------------------------------------
def _matmul_bias_kernel_1k(x_ref, w_ref, b_ref, o_ref, *, activation):
    # Single K block: write the output tile directly, no accumulator round trip.
    y = jnp.dot(x_ref[...], w_ref[...], preferred_element_type=jnp.float32)
    y = y + b_ref[...]
    if activation == "relu":
        y = jnp.maximum(y, 0.0)
    o_ref[...] = y.astype(o_ref.dtype)


def _matmul_bias_kernel(x_ref, w_ref, b_ref, o_ref, acc_ref, *, activation):
    k = pl.program_id(2)
    prod = jnp.dot(x_ref[...], w_ref[...], preferred_element_type=jnp.float32)

    @pl.when(k == 0)
    def _init():
        acc_ref[...] = prod          # direct init: saves a full zero-store per tile

    @pl.when(k > 0)
    def _acc():
        acc_ref[...] += prod

    @pl.when(k == pl.num_programs(2) - 1)
    def _fin():
        y = acc_ref[...] + b_ref[...]
        if activation == "relu":
            y = jnp.maximum(y, 0.0)
        o_ref[...] = y.astype(o_ref.dtype)


def linear(x, w_t, b, activation=None, out_dtype=jnp.float32):
    """y = act(x @ w_t + b). x: (M, K), w_t: (K, N) bf16 (pre-transposed), b: (N,)."""
    M, K = x.shape
    N = w_t.shape[1]
    tm, Mp = _row_tiling(M)
    tk, Kp = _k_tiling(K)
    tn, Np = _col_tiling(N)

    xp = _pad2(x.astype(jnp.bfloat16), Mp, Kp)     # bf16 activations -> half DMA
    wp = _pad2(w_t.astype(jnp.bfloat16), Kp, Np)
    bp = jnp.pad(b.astype(jnp.float32), (0, Np - N)).reshape(1, Np)

    if Kp == tk:
        out = pl.pallas_call(
            functools.partial(_matmul_bias_kernel_1k, activation=activation),
            out_shape=jax.ShapeDtypeStruct((Mp, Np), out_dtype),
            grid=(Mp // tm, Np // tn),
            in_specs=[
                pl.BlockSpec((tm, tk), lambda i, j: (i, 0)),
                pl.BlockSpec((tk, tn), lambda i, j: (0, j)),
                pl.BlockSpec((1, tn), lambda i, j: (0, j)),
            ],
            out_specs=pl.BlockSpec((tm, tn), lambda i, j: (i, j)),
            compiler_params=pltpu.CompilerParams(
                dimension_semantics=("parallel", "parallel"),
                vmem_limit_bytes=_VMEM_LIMIT),
        )(xp, wp, bp)
    else:
        # TODO(synk): pl.Buffered(3) on the weight spec if fc_out shows exposed DMA.
        out = pl.pallas_call(
            functools.partial(_matmul_bias_kernel, activation=activation),
            out_shape=jax.ShapeDtypeStruct((Mp, Np), out_dtype),
            grid=(Mp // tm, Np // tn, Kp // tk),
            in_specs=[
                pl.BlockSpec((tm, tk), lambda i, j, k: (i, k)),
                pl.BlockSpec((tk, tn), lambda i, j, k: (k, j)),
                pl.BlockSpec((1, tn), lambda i, j, k: (0, j)),
            ],
            out_specs=pl.BlockSpec((tm, tn), lambda i, j, k: (i, j)),
            scratch_shapes=[pltpu.VMEM((tm, tn), jnp.float32)],
            compiler_params=pltpu.CompilerParams(
                dimension_semantics=("parallel", "parallel", "arbitrary"),
                vmem_limit_bytes=_VMEM_LIMIT),
        )(xp, wp, bp)
    return out[:M, :N]


# ----------------------------------------------------------------------------
# LayerNorm / fused residual+LN kernels
# ----------------------------------------------------------------------------
def _ln_math(y, g, b):
    mu = jnp.mean(y, axis=-1, keepdims=True)
    var = jnp.mean(jnp.square(y - mu), axis=-1, keepdims=True)
    return (y - mu) * jax.lax.rsqrt(var + 1e-5) * g + b


def _ln_kernel(x_ref, g_ref, b_ref, o_ref):
    o_ref[...] = _ln_math(x_ref[...], g_ref[...], b_ref[...])


def layer_norm(x, gamma, beta):
    shape = x.shape
    E = shape[-1]
    x2 = x.reshape(-1, E).astype(jnp.float32)
    M = x2.shape[0]
    tm, Mp = _row_tiling(M)
    out = pl.pallas_call(
        _ln_kernel,
        out_shape=jax.ShapeDtypeStruct((Mp, E), jnp.float32),
        grid=(Mp // tm,),
        in_specs=[
            pl.BlockSpec((tm, E), lambda i: (i, 0)),
            pl.BlockSpec((1, E), lambda i: (0, 0)),
            pl.BlockSpec((1, E), lambda i: (0, 0)),
        ],
        out_specs=pl.BlockSpec((tm, E), lambda i: (i, 0)),
        compiler_params=pltpu.CompilerParams(
            dimension_semantics=("parallel",), vmem_limit_bytes=_VMEM_LIMIT),
    )(_pad_rows(x2, Mp), gamma.reshape(1, E), beta.reshape(1, E))
    return out[:M].reshape(shape)


def _linear_res_ln_kernel(x_ref, w_ref, b_ref, r_ref, g_ref, bt_ref, o_ref):
    y = jnp.dot(x_ref[...].astype(jnp.bfloat16), w_ref[...],
                preferred_element_type=jnp.float32) + b_ref[...]
    y = y + r_ref[...]                       # exact fp32 residual
    o_ref[...] = _ln_math(y, g_ref[...], bt_ref[...])


def linear_res_ln(x, w_t, b, res, gamma, beta):
    """LayerNorm(res + x @ w_t + b). x: (M, K) bf16, res: (M, E) f32, w_t: (K, E)."""
    M, K = x.shape
    E = w_t.shape[1]
    tm, Mp = _row_tiling(M)
    out = pl.pallas_call(
        _linear_res_ln_kernel,
        out_shape=jax.ShapeDtypeStruct((Mp, E), jnp.float32),
        grid=(Mp // tm,),
        in_specs=[
            pl.BlockSpec((tm, K), lambda i: (i, 0)),
            _const_weight_spec((K, E), lambda i: (0, 0)),
            pl.BlockSpec((1, E), lambda i: (0, 0)),
            pl.BlockSpec((tm, E), lambda i: (i, 0)),
            pl.BlockSpec((1, E), lambda i: (0, 0)),
            pl.BlockSpec((1, E), lambda i: (0, 0)),
        ],
        out_specs=pl.BlockSpec((tm, E), lambda i: (i, 0)),
        compiler_params=pltpu.CompilerParams(
            dimension_semantics=("parallel",), vmem_limit_bytes=_VMEM_LIMIT),
    )(_pad_rows(x.astype(jnp.bfloat16), Mp), w_t, b.reshape(1, E),
      _pad_rows(res, Mp), gamma.reshape(1, E), beta.reshape(1, E))
    return out[:M]


def _ffn_res_ln_kernel(x_ref, w1_ref, b1_ref, w2_ref, b2_ref, g_ref, bt_ref, o_ref):
    x = x_ref[...]
    h = jnp.dot(x.astype(jnp.bfloat16), w1_ref[...],
                preferred_element_type=jnp.float32) + b1_ref[...]
    h = jnp.maximum(h, 0.0)
    y = jnp.dot(h.astype(jnp.bfloat16), w2_ref[...],
                preferred_element_type=jnp.float32) + b2_ref[...]
    y = y + x                                # exact fp32 residual
    o_ref[...] = _ln_math(y, g_ref[...], bt_ref[...])


def ffn_res_ln(x, w1_t, b1, w2_t, b2, gamma, beta):
    """LayerNorm(x + relu(x @ w1_t + b1) @ w2_t + b2). x: (M, E) f32."""
    M, E = x.shape
    F = w1_t.shape[1]
    tm, Mp = _row_tiling(M)
    out = pl.pallas_call(
        _ffn_res_ln_kernel,
        out_shape=jax.ShapeDtypeStruct((Mp, E), jnp.float32),
        grid=(Mp // tm,),
        in_specs=[
            pl.BlockSpec((tm, E), lambda i: (i, 0)),
            _const_weight_spec((E, F), lambda i: (0, 0)),
            pl.BlockSpec((1, F), lambda i: (0, 0)),
            _const_weight_spec((F, E), lambda i: (0, 0)),
            pl.BlockSpec((1, E), lambda i: (0, 0)),
            pl.BlockSpec((1, E), lambda i: (0, 0)),
            pl.BlockSpec((1, E), lambda i: (0, 0)),
        ],
        out_specs=pl.BlockSpec((tm, E), lambda i: (i, 0)),
        compiler_params=pltpu.CompilerParams(
            dimension_semantics=("parallel",), vmem_limit_bytes=_VMEM_LIMIT),
    )(_pad_rows(x, Mp), w1_t, b1.reshape(1, F), w2_t, b2.reshape(1, E),
      gamma.reshape(1, E), beta.reshape(1, E))
    return out[:M]


# ----------------------------------------------------------------------------
# Attention kernel: all heads in one batched contraction per batch element
# ----------------------------------------------------------------------------
def _attention_kernel(q_ref, k_ref, v_ref, kpm_ref, o_ref, *, scale, causal):
    # q_ref: (1, H, Sq, D) bf16; k_ref/v_ref: (1, H, Sk, D) bf16; kpm: (1, 1, Sk) f32
    Sq = q_ref.shape[2]
    Sk = k_ref.shape[2]

    mask = jnp.broadcast_to(kpm_ref[0], (Sq, Sk))            # additive f32
    if causal:
        rows = jax.lax.broadcasted_iota(jnp.int32, (Sq, Sk), 0)
        cols = jax.lax.broadcasted_iota(jnp.int32, (Sq, Sk), 1)
        mask = jnp.where(cols > rows, NEG_INF, mask)

    q = q_ref[0]                                             # (H, Sq, D)
    k = k_ref[0]                                             # (H, Sk, D)
    v = v_ref[0]                                             # (H, Sk, D)

    # Q.K^T for every head at once: H is a batch dim of the contraction.
    s = jax.lax.dot_general(q, k, (((2,), (2,)), ((0,), (0,))),
                            preferred_element_type=jnp.float32)   # (H, Sq, Sk)
    s = s * scale + mask[None, :, :]
    s = s - jnp.max(s, axis=-1, keepdims=True)
    p = jnp.exp(s)
    p = p * pl.reciprocal(jnp.sum(p, axis=-1, keepdims=True), approx=True)
    o = jax.lax.dot_general(p.astype(jnp.bfloat16), v, (((2,), (1,)), ((0,), (0,))),
                            preferred_element_type=jnp.float32)   # (H, Sq, D)
    o_ref[0] = o.astype(o_ref.dtype)


def sdp_attention(q, k, v, kpm, causal):
    """q: (N, H, Sq, D) bf16, k/v: (N, H, Sk, D) bf16, kpm: (N, 1, Sk) additive f32."""
    N, H, Sq, D = q.shape
    Sk = k.shape[2]
    scale = 1.0 / (D ** 0.5)
    kernel = functools.partial(_attention_kernel, scale=scale, causal=causal)
    return pl.pallas_call(
        kernel,
        out_shape=jax.ShapeDtypeStruct((N, H, Sq, D), jnp.bfloat16),
        grid=(N,),
        in_specs=[
            pl.BlockSpec((1, H, Sq, D), lambda b: (b, 0, 0, 0)),
            pl.BlockSpec((1, H, Sk, D), lambda b: (b, 0, 0, 0)),
            pl.BlockSpec((1, H, Sk, D), lambda b: (b, 0, 0, 0)),
            pl.BlockSpec((1, 1, Sk), lambda b: (b, 0, 0)),
        ],
        out_specs=pl.BlockSpec((1, H, Sq, D), lambda b: (b, 0, 0, 0)),
        compiler_params=pltpu.CompilerParams(
            dimension_semantics=("parallel",), vmem_limit_bytes=_VMEM_LIMIT),
    )(q, k, v, kpm)


# ----------------------------------------------------------------------------
# Transformer building blocks (glue in JAX, compute in Pallas); batch-major.
# ----------------------------------------------------------------------------
def attention_block(x_q, x_kv, p, num_heads, gamma, beta, *, causal,
                    self_attention, key_padding_mask=None):
    """LayerNorm(x_q + MHA(x_q, x_kv, x_kv)) — torch MHA, post-norm, eval mode."""
    N, Sq, E = x_q.shape
    Sk = x_kv.shape[1]
    H = num_heads
    D = E // H
    xq2 = x_q.reshape(N * Sq, E)                             # fp32 residual rows
    xkv2 = x_kv.reshape(N * Sk, E)

    w_in = p["in_proj_w_t"]           # (E, 3E) bf16
    b_in = p["in_proj_b"]             # (3E,)  f32
    if self_attention:
        qkv = linear(xq2, w_in, b_in, out_dtype=jnp.bfloat16)        # fused QKV
        q2, k2, v2 = qkv[:, :E], qkv[:, E:2 * E], qkv[:, 2 * E:]
    else:
        q2 = linear(xq2, w_in[:, :E], b_in[:E], out_dtype=jnp.bfloat16)
        kv = linear(xkv2, w_in[:, E:], b_in[E:], out_dtype=jnp.bfloat16)  # fused K/V
        k2, v2 = kv[:, :E], kv[:, E:]

    # Head split in bf16 glue: (N*S, E) -> (N, H, S, D); no (S,N,E) batch transposes.
    q4 = q2.reshape(N, Sq, H, D).transpose(0, 2, 1, 3)
    k4 = k2.reshape(N, Sk, H, D).transpose(0, 2, 1, 3)
    v4 = v2.reshape(N, Sk, H, D).transpose(0, 2, 1, 3)

    if key_padding_mask is not None:                         # bool (N, Sk), True == pad
        kpm = jnp.where(key_padding_mask, NEG_INF, 0.0).astype(jnp.float32)
    else:
        kpm = jnp.zeros((N, Sk), jnp.float32)
    kpm = kpm.reshape(N, 1, Sk)

    attn = sdp_attention(q4, k4, v4, kpm, causal)            # (N, H, Sq, D) bf16
    attn2 = attn.transpose(0, 2, 1, 3).reshape(N * Sq, E)    # head merge (bf16)

    out = linear_res_ln(attn2, p["out_proj_w_t"], p["out_proj_b"],
                        xq2, gamma, beta)
    return out.reshape(N, Sq, E)


def ffn_block(x, p, gamma, beta):
    N, S, E = x.shape
    x2 = x.reshape(N * S, E)
    out = ffn_res_ln(x2, p["linear1_w_t"], p["linear1_b"],
                     p["linear2_w_t"], p["linear2_b"], gamma, beta)
    return out.reshape(N, S, E)


def encoder_layer(x, p, num_heads, src_key_padding_mask):
    # post-norm (norm_first=False), relu activation — torch defaults
    x = attention_block(x, x, p["self_attn"], num_heads,
                        p["ln1"]["gamma"], p["ln1"]["beta"],
                        causal=False, self_attention=True,
                        key_padding_mask=src_key_padding_mask)
    x = ffn_block(x, p, p["ln2"]["gamma"], p["ln2"]["beta"])
    return x


def decoder_layer(x, memory, p, num_heads):
    x = attention_block(x, x, p["self_attn"], num_heads,
                        p["ln1"]["gamma"], p["ln1"]["beta"],
                        causal=True, self_attention=True)
    # torch reference passes no memory_key_padding_mask -> cross-attn is unmasked
    x = attention_block(x, memory, p["cross_attn"], num_heads,
                        p["ln2"]["gamma"], p["ln2"]["beta"],
                        causal=False, self_attention=False)
    x = ffn_block(x, p, p["ln3"]["gamma"], p["ln3"]["beta"])
    return x


def transformer_forward(params, src, trg, num_heads, src_pad_idx):
    """src: (Ssrc, N) int32, trg: (Strg, N) int32 -> (Strg, N, trg_vocab) f32."""
    Ssrc, N = src.shape
    Strg, _ = trg.shape
    E = params["src_word_emb"].shape[1]

    src_b = src.T                                            # (N, Ssrc) batch-major
    trg_b = trg.T

    embed_src = (jnp.take(params["src_word_emb"], src_b, axis=0)
                 + params["src_pos_emb"][:Ssrc][None, :, :])
    embed_trg = (jnp.take(params["trg_word_emb"], trg_b, axis=0)
                 + params["trg_pos_emb"][:Strg][None, :, :])
    # dropout: inference identity
    # TODO(synk): training-mode dropout (stateful PRNG masking) not implemented.

    src_padding_mask = (src_b == src_pad_idx)                # (N, Ssrc) bool

    memory = embed_src
    for lyr in params["encoder_layers"]:
        memory = encoder_layer(memory, lyr, num_heads, src_padding_mask)
    memory = layer_norm(memory, params["encoder_norm"]["gamma"],
                        params["encoder_norm"]["beta"])

    out = embed_trg
    for lyr in params["decoder_layers"]:
        out = decoder_layer(out, memory, lyr, num_heads)
    out = layer_norm(out, params["decoder_norm"]["gamma"],
                     params["decoder_norm"]["beta"])

    # (N, Strg, E) -> (Strg, N, E) before the vocab projection so the large
    # logits tensor already comes out of the matmul in torch (seq, batch, V) layout.
    out_sb = out.transpose(1, 0, 2).reshape(Strg * N, E)
    logits = linear(out_sb, params["fc_out_w_t"], params["fc_out_b"])
    return logits.reshape(Strg, N, -1)


# ----------------------------------------------------------------------------
# Deterministic parameter initialization (weights pre-transposed, bf16)
# ----------------------------------------------------------------------------
def _normal(key, shape, scale=0.05):
    return scale * jax.random.normal(key, shape, jnp.float32)


def _w16(key, shape, scale=0.05):
    return _normal(key, shape, scale).astype(jnp.bfloat16)


def _init_ln(E):
    return {"gamma": jnp.ones((E,), jnp.float32), "beta": jnp.zeros((E,), jnp.float32)}


def _init_mha(key, E):
    k1, k2 = jax.random.split(key)
    return {
        "in_proj_w_t": _w16(k1, (E, 3 * E)),          # (in, out) layout, bf16
        "in_proj_b": jnp.zeros((3 * E,), jnp.float32),
        "out_proj_w_t": _w16(k2, (E, E)),
        "out_proj_b": jnp.zeros((E,), jnp.float32),
    }


def _init_encoder_layer(key, E, F):
    k1, k2, k3 = jax.random.split(key, 3)
    return {
        "self_attn": _init_mha(k1, E),
        "linear1_w_t": _w16(k2, (E, F)), "linear1_b": jnp.zeros((F,), jnp.float32),
        "linear2_w_t": _w16(k3, (F, E)), "linear2_b": jnp.zeros((E,), jnp.float32),
        "ln1": _init_ln(E), "ln2": _init_ln(E),
    }


def _init_decoder_layer(key, E, F):
    k1, k2, k3, k4 = jax.random.split(key, 4)
    return {
        "self_attn": _init_mha(k1, E),
        "cross_attn": _init_mha(k2, E),
        "linear1_w_t": _w16(k3, (E, F)), "linear1_b": jnp.zeros((F,), jnp.float32),
        "linear2_w_t": _w16(k4, (F, E)), "linear2_b": jnp.zeros((E,), jnp.float32),
        "ln1": _init_ln(E), "ln2": _init_ln(E), "ln3": _init_ln(E),
    }


def init_transformer_params(key, embed_size, src_vocab_size, trg_vocab_size,
                            num_encoder_layers, num_decoder_layers,
                            forward_expansion, max_len):
    keys = jax.random.split(key, 5 + num_encoder_layers + num_decoder_layers + 1)
    it = iter(keys)
    params = {
        "src_word_emb": _normal(next(it), (src_vocab_size, embed_size), 1.0),
        "src_pos_emb": _normal(next(it), (max_len, embed_size), 1.0),
        "trg_word_emb": _normal(next(it), (trg_vocab_size, embed_size), 1.0),
        "trg_pos_emb": _normal(next(it), (max_len, embed_size), 1.0),
        "encoder_layers": [_init_encoder_layer(next(it), embed_size, forward_expansion)
                           for _ in range(num_encoder_layers)],
        "decoder_layers": [_init_decoder_layer(next(it), embed_size, forward_expansion)
                           for _ in range(num_decoder_layers)],
        "encoder_norm": _init_ln(embed_size),
        "decoder_norm": _init_ln(embed_size),
        "fc_out_w_t": _w16(next(it), (embed_size, trg_vocab_size)),
        "fc_out_b": jnp.zeros((trg_vocab_size,), jnp.float32),
    }
    return params


# ----------------------------------------------------------------------------
# Main
# ----------------------------------------------------------------------------
if __name__ == "__main__":
    # Small, shape-consistent configuration (original: 512 / 8 heads / 3+3 layers)
    EMBED_SIZE = 32
    NUM_HEADS = 4
    NUM_ENC_LAYERS = 2
    NUM_DEC_LAYERS = 2
    FORWARD_EXPANSION = 64   # passed directly as nn.Transformer dim_feedforward
    MAX_LEN = 16
    SRC_VOCAB = 50
    TRG_VOCAB = 60
    SRC_PAD_IDX = 1
    SRC_LEN, TRG_LEN, BATCH = 10, 8, 2

    key = jax.random.PRNGKey(0)
    k_params, k_src, k_trg = jax.random.split(key, 3)

    params = init_transformer_params(
        k_params, EMBED_SIZE, SRC_VOCAB, TRG_VOCAB,
        NUM_ENC_LAYERS, NUM_DEC_LAYERS, FORWARD_EXPANSION, MAX_LEN)

    src = jax.random.randint(k_src, (SRC_LEN, BATCH), 2, SRC_VOCAB).astype(jnp.int32)
    src = src.at[SRC_LEN - 2:, 0].set(SRC_PAD_IDX)   # exercise the key-padding mask
    trg = jax.random.randint(k_trg, (TRG_LEN, BATCH), 2, TRG_VOCAB).astype(jnp.int32)

    fwd = jax.jit(functools.partial(transformer_forward,
                                    num_heads=NUM_HEADS, src_pad_idx=SRC_PAD_IDX))
    out = fwd(params, src, trg)
    out = jax.block_until_ready(out)

    assert out.shape == (TRG_LEN, BATCH, TRG_VOCAB), out.shape
    assert bool(jnp.all(jnp.isfinite(out)))
    print("KERNEL_OK")
</pallas_src>

<mosaic_0001>
module attributes {stable_mosaic.version = 11 : i64} {
  func.func @_matmul_bias_kernel_1k(%arg0: i32, %arg1: i32, %arg2: memref<16x32xbf16, #tpu.memory_space<vmem>>, %arg3: memref<32x128xbf16, #tpu.memory_space<vmem>>, %arg4: memref<1x128xf32, #tpu.memory_space<vmem>>, %arg5: memref<16x128xbf16, #tpu.memory_space<vmem>>) attributes {dimension_semantics = [#tpu.dimension_semantics<parallel>, #tpu.dimension_semantics<parallel>], iteration_bounds = array<i64: 2, 1>, scalar_prefetch = 0 : i64, scratch_operands = 0 : i64, tpu.core_type = #tpu.core_type<tc>, window_params = [{transform_indices = @transform_0, window_bounds = array<i64: 16, 32>}, {transform_indices = @transform_1, window_bounds = array<i64: 32, 128>}, {transform_indices = @transform_2, window_bounds = array<i64: 1, 128>}, {transform_indices = @transform_3, window_bounds = array<i64: 16, 128>}]} {
    %c0 = arith.constant 0 : index
    %c0_0 = arith.constant 0 : index
    %0 = vector.load %arg2[%c0, %c0_0] : memref<16x32xbf16, #tpu.memory_space<vmem>>, vector<16x32xbf16>
    %c0_1 = arith.constant 0 : index
    %c0_2 = arith.constant 0 : index
    %1 = vector.load %arg3[%c0_1, %c0_2] : memref<32x128xbf16, #tpu.memory_space<vmem>>, vector<32x128xbf16>
    %cst = arith.constant dense<0.000000e+00> : vector<16x128xf32>
    %2 = tpu.matmul %0, %1, %cst {dimension_numbers = #tpu.dot_dimension_numbers<[1], [0], [0], [1], [0, 0, 1, 1], [], []>} : vector<16x32xbf16>, vector<32x128xbf16>, vector<16x128xf32> -> vector<16x128xf32>
    %c0_3 = arith.constant 0 : index
    %c0_4 = arith.constant 0 : index
    %3 = vector.load %arg4[%c0_3, %c0_4] : memref<1x128xf32, #tpu.memory_space<vmem>>, vector<1x128xf32>
    %4 = vector.broadcast %3 : vector<1x128xf32> to vector<16x128xf32>
    %5 = arith.addf %2, %4 : vector<16x128xf32>
    %6 = arith.truncf %5 : vector<16x128xf32> to vector<16x128xbf16>
    %c0_5 = arith.constant 0 : index
    %c0_6 = arith.constant 0 : index
    %7 = vector.load %arg5[%c0_5, %c0_6] : memref<16x128xbf16, #tpu.memory_space<vmem>>, vector<16x128xbf16>
    tpu.vector_store %arg5[%c0_5, %c0_6], %6 {strides = array<i32>} : memref<16x128xbf16, #tpu.memory_space<vmem>>, vector<16x128xbf16>,
    return
  }
  func.func @transform_0(%arg0: i32, %arg1: i32) -> (i32, i32) {
    %c0_i32 = arith.constant 0 : i32
    %c0_i32_0 = arith.constant 0 : i32
    return %arg0, %c0_i32 : i32, i32
  }
  func.func @transform_1(%arg0: i32, %arg1: i32) -> (i32, i32) {
    %c0_i32 = arith.constant 0 : i32
    %c0_i32_0 = arith.constant 0 : i32
    return %c0_i32, %arg1 : i32, i32
  }
  func.func @transform_2(%arg0: i32, %arg1: i32) -> (i32, i32) {
    %c0_i32 = arith.constant 0 : i32
    %c0_i32_0 = arith.constant 0 : i32
    return %c0_i32, %arg1 : i32, i32
  }
  func.func @transform_3(%arg0: i32, %arg1: i32) -> (i32, i32) {
    %c0_i32 = arith.constant 0 : i32
    return %arg0, %arg1 : i32, i32
  }
}

module attributes {stable_mosaic.version = 11 : i64} {
  func.func @_attention_kernel(%arg0: i32, %arg1: memref<1x4x10x8xbf16, #tpu.memory_space<vmem>>, %arg2: memref<1x4x10x8xbf16, #tpu.memory_space<vmem>>, %arg3: memref<1x4x10x8xbf16, #tpu.memory_space<vmem>>, %arg4: memref<1x1x10xf32, #tpu.memory_space<vmem>>, %arg5: memref<1x4x10x8xbf16, #tpu.memory_space<vmem>>) attributes {dimension_semantics = [#tpu.dimension_semantics<parallel>], iteration_bounds = array<i64: 2>, scalar_prefetch = 0 : i64, scratch_operands = 0 : i64, tpu.core_type = #tpu.core_type<tc>, window_params = [{transform_indices = @transform_0, window_bounds = array<i64: 1, 4, 10, 8>}, {transform_indices = @transform_1, window_bounds = array<i64: 1, 4, 10, 8>}, {transform_indices = @transform_2, window_bounds = array<i64: 1, 4, 10, 8>}, {transform_indices = @transform_3, window_bounds = array<i64: 1, 1, 10>}, {transform_indices = @transform_4, window_bounds = array<i64: 1, 4, 10, 8>}]} {
    %c0 = arith.constant 0 : index
    %c0_0 = arith.constant 0 : index
    %c0_1 = arith.constant 0 : index
    %0 = vector.load %arg4[%c0, %c0_0, %c0_1] : memref<1x1x10xf32, #tpu.memory_space<vmem>>, vector<1x1x10xf32>
    %1 = vector.shape_cast %0 : vector<1x1x10xf32> to vector<1x10xf32>
    %2 = vector.shape_cast %1 : vector<1x10xf32> to vector<1x10xf32>
    %3 = vector.broadcast %2 : vector<1x10xf32> to vector<10x10xf32>
    %c0_2 = arith.constant 0 : index
    %c0_3 = arith.constant 0 : index
    %c0_4 = arith.constant 0 : index
    %c0_5 = arith.constant 0 : index
    %4 = vector.load %arg1[%c0_2, %c0_3, %c0_4, %c0_5] : memref<1x4x10x8xbf16, #tpu.memory_space<vmem>>, vector<1x4x10x8xbf16>
    %5 = vector.shape_cast %4 : vector<1x4x10x8xbf16> to vector<4x10x8xbf16>
    %c0_6 = arith.constant 0 : index
    %c0_7 = arith.constant 0 : index
    %c0_8 = arith.constant 0 : index
    %c0_9 = arith.constant 0 : index
    %6 = vector.load %arg2[%c0_6, %c0_7, %c0_8, %c0_9] : memref<1x4x10x8xbf16, #tpu.memory_space<vmem>>, vector<1x4x10x8xbf16>
    %7 = vector.shape_cast %6 : vector<1x4x10x8xbf16> to vector<4x10x8xbf16>
    %c0_10 = arith.constant 0 : index
    %c0_11 = arith.constant 0 : index
    %c0_12 = arith.constant 0 : index
    %c0_13 = arith.constant 0 : index
    %8 = vector.load %arg3[%c0_10, %c0_11, %c0_12, %c0_13] : memref<1x4x10x8xbf16, #tpu.memory_space<vmem>>, vector<1x4x10x8xbf16>
    %9 = vector.shape_cast %8 : vector<1x4x10x8xbf16> to vector<4x10x8xbf16>
    %cst = arith.constant dense<0.000000e+00> : vector<4x10x10xf32>
    %10 = tpu.matmul %5, %7, %cst {dimension_numbers = #tpu.dot_dimension_numbers<[2], [2], [1], [1], [0, 0, 0, 1, 1, 1], [0], [0]>} : vector<4x10x8xbf16>, vector<4x10x8xbf16>, vector<4x10x10xf32> -> vector<4x10x10xf32>
    %cst_14 = arith.constant 0.353553385 : f32
    %11 = vector.broadcast %cst_14 : f32 to vector<4x10x10xf32>
    %12 = arith.mulf %10, %11 : vector<4x10x10xf32>
    %13 = vector.shape_cast %3 : vector<10x10xf32> to vector<1x10x10xf32>
    %14 = vector.broadcast %13 : vector<1x10x10xf32> to vector<4x10x10xf32>
    %15 = arith.addf %12, %14 : vector<4x10x10xf32>
    %cst_15 = arith.constant dense<0xFF800000> : vector<4x10xf32>
    %16 = vector.multi_reduction <maximumf>, %15, %cst_15 [2] : vector<4x10x10xf32> to vector<4x10xf32>
    %17 = vector.shape_cast %16 : vector<4x10xf32> to vector<4x10x1xf32>
    %18 = vector.broadcast %17 : vector<4x10x1xf32> to vector<4x10x10xf32>
    %19 = arith.subf %15, %18 : vector<4x10x10xf32>
    %20 = math.exp %19 : vector<4x10x10xf32>
    %cst_16 = arith.constant dense<0.000000e+00> : vector<4x10xf32>
    %21 = vector.multi_reduction <add>, %20, %cst_16 [2] : vector<4x10x10xf32> to vector<4x10xf32>
    %22 = vector.shape_cast %21 : vector<4x10xf32> to vector<4x10x1xf32>
    %23 = tpu.reciprocal %22 {approx = true} : vector<4x10x1xf32> -> vector<4x10x1xf32>
    %24 = vector.broadcast %23 : vector<4x10x1xf32> to vector<4x10x10xf32>
    %25 = arith.mulf %20, %24 : vector<4x10x10xf32>
    %26 = arith.truncf %25 : vector<4x10x10xf32> to vector<4x10x10xbf16>
    %cst_17 = arith.constant dense<0.000000e+00> : vector<4x10x8xf32>
    %27 = tpu.matmul %26, %9, %cst_17 {dimension_numbers = #tpu.dot_dimension_numbers<[2], [1], [1], [2], [0, 0, 0, 1, 1, 2], [0], [0]>} : vector<4x10x10xbf16>, vector<4x10x8xbf16>, vector<4x10x8xf32> -> vector<4x10x8xf32>
    %28 = arith.truncf %27 : vector<4x10x8xf32> to vector<4x10x8xbf16>
    %c0_18 = arith.constant 0 : index
    %c0_19 = arith.constant 0 : index
    %c0_20 = arith.constant 0 : index
    %c0_21 = arith.constant 0 : index
    %29 = vector.load %arg5[%c0_18, %c0_19, %c0_20, %c0_21] : memref<1x4x10x8xbf16, #tpu.memory_space<vmem>>, vector<1x4x10x8xbf16>
    %30 = vector.shape_cast %29 : vector<1x4x10x8xbf16> to vector<4x10x8xbf16>
    %31 = vector.shape_cast %28 : vector<4x10x8xbf16> to vector<1x4x10x8xbf16>
    tpu.vector_store %arg5[%c0_18, %c0_19, %c0_20, %c0_21], %31 {strides = array<i32>} : memref<1x4x10x8xbf16, #tpu.memory_space<vmem>>, vector<1x4x10x8xbf16>,
    return
  }
  func.func @transform_0(%arg0: i32) -> (i32, i32, i32, i32) {
    %c0_i32 = arith.constant 0 : i32
    %c0_i32_0 = arith.constant 0 : i32
    %c0_i32_1 = arith.constant 0 : i32
    %c0_i32_2 = arith.constant 0 : i32
    return %arg0, %c0_i32, %c0_i32_0, %c0_i32_1 : i32, i32, i32, i32
  }
  func.func @transform_1(%arg0: i32) -> (i32, i32, i32, i32) {
    %c0_i32 = arith.constant 0 : i32
    %c0_i32_0 = arith.constant 0 : i32
    %c0_i32_1 = arith.constant 0 : i32
    %c0_i32_2 = arith.constant 0 : i32
    return %arg0, %c0_i32, %c0_i32_0, %c0_i32_1 : i32, i32, i32, i32
  }
  func.func @transform_2(%arg0: i32) -> (i32, i32, i32, i32) {
    %c0_i32 = arith.constant 0 : i32
    %c0_i32_0 = arith.constant 0 : i32
    %c0_i32_1 = arith.constant 0 : i32
    %c0_i32_2 = arith.constant 0 : i32
    return %arg0, %c0_i32, %c0_i32_0, %c0_i32_1 : i32, i32, i32, i32
  }
  func.func @transform_3(%arg0: i32) -> (i32, i32, i32) {
    %c0_i32 = arith.constant 0 : i32
    %c0_i32_0 = arith.constant 0 : i32
    %c0_i32_1 = arith.constant 0 : i32
    return %arg0, %c0_i32, %c0_i32_0 : i32, i32, i32
  }
  func.func @transform_4(%arg0: i32) -> (i32, i32, i32, i32) {
    %c0_i32 = arith.constant 0 : i32
    %c0_i32_0 = arith.constant 0 : i32
    %c0_i32_1 = arith.constant 0 : i32
    %c0_i32_2 = arith.constant 0 : i32
    return %arg0, %c0_i32, %c0_i32_0, %c0_i32_1 : i32, i32, i32, i32
  }
}

module attributes {stable_mosaic.version = 11 : i64} {
  func.func @_linear_res_ln_kernel(%arg0: i32, %arg1: memref<16x32xbf16, #tpu.memory_space<vmem>>, %arg2: memref<32x32xbf16, #tpu.memory_space<vmem>>, %arg3: memref<1x32xf32, #tpu.memory_space<vmem>>, %arg4: memref<16x32xf32, #tpu.memory_space<vmem>>, %arg5: memref<1x32xf32, #tpu.memory_space<vmem>>, %arg6: memref<1x32xf32, #tpu.memory_space<vmem>>, %arg7: memref<16x32xf32, #tpu.memory_space<vmem>>) attributes {dimension_semantics = [#tpu.dimension_semantics<parallel>], iteration_bounds = array<i64: 2>, scalar_prefetch = 0 : i64, scratch_operands = 0 : i64, tpu.core_type = #tpu.core_type<tc>, window_params = [{transform_indices = @transform_0, window_bounds = array<i64: 16, 32>}, {pipeline_mode = #tpu.pipeline_mode<synchronous>, transform_indices = @transform_1, window_bounds = array<i64: 32, 32>}, {pipeline_mode = #tpu.pipeline_mode<synchronous>, transform_indices = @transform_2, window_bounds = array<i64: 1, 32>}, {transform_indices = @transform_3, window_bounds = array<i64: 16, 32>}, {pipeline_mode = #tpu.pipeline_mode<synchronous>, transform_indices = @transform_4, window_bounds = array<i64: 1, 32>}, {pipeline_mode = #tpu.pipeline_mode<synchronous>, transform_indices = @transform_5, window_bounds = array<i64: 1, 32>}, {transform_indices = @transform_6, window_bounds = array<i64: 16, 32>}]} {
    %c0 = arith.constant 0 : index
    %c0_0 = arith.constant 0 : index
    %0 = vector.load %arg1[%c0, %c0_0] : memref<16x32xbf16, #tpu.memory_space<vmem>>, vector<16x32xbf16>
    %c0_1 = arith.constant 0 : index
    %c0_2 = arith.constant 0 : index
    %1 = vector.load %arg2[%c0_1, %c0_2] : memref<32x32xbf16, #tpu.memory_space<vmem>>, vector<32x32xbf16>
    %cst = arith.constant dense<0.000000e+00> : vector<16x32xf32>
    %2 = tpu.matmul %0, %1, %cst {dimension_numbers = #tpu.dot_dimension_numbers<[1], [0], [0], [1], [0, 0, 1, 1], [], []>} : vector<16x32xbf16>, vector<32x32xbf16>, vector<16x32xf32> -> vector<16x32xf32>
    %c0_3 = arith.constant 0 : index
    %c0_4 = arith.constant 0 : index
    %3 = vector.load %arg3[%c0_3, %c0_4] : memref<1x32xf32, #tpu.memory_space<vmem>>, vector<1x32xf32>
    %4 = vector.broadcast %3 : vector<1x32xf32> to vector<16x32xf32>
    %5 = arith.addf %2, %4 : vector<16x32xf32>
    %c0_5 = arith.constant 0 : index
    %c0_6 = arith.constant 0 : index
    %6 = vector.load %arg4[%c0_5, %c0_6] : memref<16x32xf32, #tpu.memory_space<vmem>>, vector<16x32xf32>
    %7 = arith.addf %5, %6 : vector<16x32xf32>
    %c0_7 = arith.constant 0 : index
    %c0_8 = arith.constant 0 : index
    %8 = vector.load %arg5[%c0_7, %c0_8] : memref<1x32xf32, #tpu.memory_space<vmem>>, vector<1x32xf32>
    %c0_9 = arith.constant 0 : index
    %c0_10 = arith.constant 0 : index
    %9 = vector.load %arg6[%c0_9, %c0_10] : memref<1x32xf32, #tpu.memory_space<vmem>>, vector<1x32xf32>
    %cst_11 = arith.constant dense<0.000000e+00> : vector<16xf32>
    %10 = vector.multi_reduction <add>, %7, %cst_11 [1] : vector<16x32xf32> to vector<16xf32>
    %11 = vector.shape_cast %10 : vector<16xf32> to vector<16x1xf32>
    %cst_12 = arith.constant 3.200000e+01 : f32
    %12 = vector.broadcast %cst_12 : f32 to vector<16x1xf32>
    %13 = arith.divf %11, %12 : vector<16x1xf32>
    %14 = vector.broadcast %13 : vector<16x1xf32> to vector<16x32xf32>
    %15 = arith.subf %7, %14 : vector<16x32xf32>
    %16 = arith.mulf %15, %15 : vector<16x32xf32>
    %cst_13 = arith.constant dense<0.000000e+00> : vector<16xf32>
    %17 = vector.multi_reduction <add>, %16, %cst_13 [1] : vector<16x32xf32> to vector<16xf32>
    %18 = vector.shape_cast %17 : vector<16xf32> to vector<16x1xf32>
    %cst_14 = arith.constant 3.200000e+01 : f32
    %19 = vector.broadcast %cst_14 : f32 to vector<16x1xf32>
    %20 = arith.divf %18, %19 : vector<16x1xf32>
    %21 = vector.broadcast %13 : vector<16x1xf32> to vector<16x32xf32>
    %22 = arith.subf %7, %21 : vector<16x32xf32>
    %cst_15 = arith.constant 9.99999974E-6 : f32
    %23 = vector.broadcast %cst_15 : f32 to vector<16x1xf32>
    %24 = arith.addf %20, %23 : vector<16x1xf32>
    %25 = math.rsqrt %24 : vector<16x1xf32>
    %26 = vector.broadcast %25 : vector<16x1xf32> to vector<16x32xf32>
    %27 = arith.mulf %22, %26 : vector<16x32xf32>
    %28 = vector.broadcast %8 : vector<1x32xf32> to vector<16x32xf32>
    %29 = arith.mulf %27, %28 : vector<16x32xf32>
    %30 = vector.broadcast %9 : vector<1x32xf32> to vector<16x32xf32>
    %31 = arith.addf %29, %30 : vector<16x32xf32>
    %c0_16 = arith.constant 0 : index
    %c0_17 = arith.constant 0 : index
    %32 = vector.load %arg7[%c0_16, %c0_17] : memref<16x32xf32, #tpu.memory_space<vmem>>, vector<16x32xf32>
    tpu.vector_store %arg7[%c0_16, %c0_17], %31 {strides = array<i32>} : memref<16x32xf32, #tpu.memory_space<vmem>>, vector<16x32xf32>,
    return
  }
  func.func @transform_0(%arg0: i32) -> (i32, i32) {
    %c0_i32 = arith.constant 0 : i32
    %c0_i32_0 = arith.constant 0 : i32
    return %arg0, %c0_i32 : i32, i32
  }
  func.func @transform_1(%arg0: i32) -> (i32, i32) {
    %c0_i32 = arith.constant 0 : i32
    %c0_i32_0 = arith.constant 0 : i32
    %c0_i32_1 = arith.constant 0 : i32
    return %c0_i32, %c0_i32_0 : i32, i32
  }
  func.func @transform_2(%arg0: i32) -> (i32, i32) {
    %c0_i32 = arith.constant 0 : i32
    %c0_i32_0 = arith.constant 0 : i32
    %c0_i32_1 = arith.constant 0 : i32
    return %c0_i32, %c0_i32_0 : i32, i32
  }
  func.func @transform_3(%arg0: i32) -> (i32, i32) {
    %c0_i32 = arith.constant 0 : i32
    %c0_i32_0 = arith.constant 0 : i32
    return %arg0, %c0_i32 : i32, i32
  }
  func.func @transform_4(%arg0: i32) -> (i32, i32) {
    %c0_i32 = arith.constant 0 : i32
    %c0_i32_0 = arith.constant 0 : i32
    %c0_i32_1 = arith.constant 0 : i32
    return %c0_i32, %c0_i32_0 : i32, i32
  }
  func.func @transform_5(%arg0: i32) -> (i32, i32) {
    %c0_i32 = arith.constant 0 : i32
    %c0_i32_0 = arith.constant 0 : i32
    %c0_i32_1 = arith.constant 0 : i32
    return %c0_i32, %c0_i32_0 : i32, i32
  }
  func.func @transform_6(%arg0: i32) -> (i32, i32) {
    %c0_i32 = arith.constant 0 : i32
    %c0_i32_0 = arith.constant 0 : i32
    return %arg0, %c0_i32 : i32, i32
  }
}

module attributes {stable_mosaic.version = 11 : i64} {
  func.func @_ffn_res_ln_kernel(%arg0: i32, %arg1: memref<16x32xf32, #tpu.memory_space<vmem>>, %arg2: memref<32x64xbf16, #tpu.memory_space<vmem>>, %arg3: memref<1x64xf32, #tpu.memory_space<vmem>>, %arg4: memref<64x32xbf16, #tpu.memory_space<vmem>>, %arg5: memref<1x32xf32, #tpu.memory_space<vmem>>, %arg6: memref<1x32xf32, #tpu.memory_space<vmem>>, %arg7: memref<1x32xf32, #tpu.memory_space<vmem>>, %arg8: memref<16x32xf32, #tpu.memory_space<vmem>>) attributes {dimension_semantics = [#tpu.dimension_semantics<parallel>], iteration_bounds = array<i64: 2>, scalar_prefetch = 0 : i64, scratch_operands = 0 : i64, tpu.core_type = #tpu.core_type<tc>, window_params = [{transform_indices = @transform_0, window_bounds = array<i64: 16, 32>}, {pipeline_mode = #tpu.pipeline_mode<synchronous>, transform_indices = @transform_1, window_bounds = array<i64: 32, 64>}, {pipeline_mode = #tpu.pipeline_mode<synchronous>, transform_indices = @transform_2, window_bounds = array<i64: 1, 64>}, {pipeline_mode = #tpu.pipeline_mode<synchronous>, transform_indices = @transform_3, window_bounds = array<i64: 64, 32>}, {pipeline_mode = #tpu.pipeline_mode<synchronous>, transform_indices = @transform_4, window_bounds = array<i64: 1, 32>}, {pipeline_mode = #tpu.pipeline_mode<synchronous>, transform_indices = @transform_5, window_bounds = array<i64: 1, 32>}, {pipeline_mode = #tpu.pipeline_mode<synchronous>, transform_indices = @transform_6, window_bounds = array<i64: 1, 32>}, {transform_indices = @transform_7, window_bounds = array<i64: 16, 32>}]} {
    %c0 = arith.constant 0 : index
    %c0_0 = arith.constant 0 : index
    %0 = vector.load %arg1[%c0, %c0_0] : memref<16x32xf32, #tpu.memory_space<vmem>>, vector<16x32xf32>
    %1 = arith.truncf %0 : vector<16x32xf32> to vector<16x32xbf16>
    %c0_1 = arith.constant 0 : index
    %c0_2 = arith.constant 0 : index
    %2 = vector.load %arg2[%c0_1, %c0_2] : memref<32x64xbf16, #tpu.memory_space<vmem>>, vector<32x64xbf16>
    %cst = arith.constant dense<0.000000e+00> : vector<16x64xf32>
    %3 = tpu.matmul %1, %2, %cst {dimension_numbers = #tpu.dot_dimension_numbers<[1], [0], [0], [1], [0, 0, 1, 1], [], []>} : vector<16x32xbf16>, vector<32x64xbf16>, vector<16x64xf32> -> vector<16x64xf32>
    %c0_3 = arith.constant 0 : index
    %c0_4 = arith.constant 0 : index
    %4 = vector.load %arg3[%c0_3, %c0_4] : memref<1x64xf32, #tpu.memory_space<vmem>>, vector<1x64xf32>
    %5 = vector.broadcast %4 : vector<1x64xf32> to vector<16x64xf32>
    %6 = arith.addf %3, %5 : vector<16x64xf32>
    %cst_5 = arith.constant 0.000000e+00 : f32
    %7 = vector.broadcast %cst_5 : f32 to vector<16x64xf32>
    %8 = arith.maximumf %6, %7 : vector<16x64xf32>
    %9 = arith.truncf %8 : vector<16x64xf32> to vector<16x64xbf16>
    %c0_6 = arith.constant 0 : index
    %c0_7 = arith.constant 0 : index
    %10 = vector.load %arg4[%c0_6, %c0_7] : memref<64x32xbf16, #tpu.memory_space<vmem>>, vector<64x32xbf16>
    %cst_8 = arith.constant dense<0.000000e+00> : vector<16x32xf32>
    %11 = tpu.matmul %9, %10, %cst_8 {dimension_numbers = #tpu.dot_dimension_numbers<[1], [0], [0], [1], [0, 0, 1, 1], [], []>} : vector<16x64xbf16>, vector<64x32xbf16>, vector<16x32xf32> -> vector<16x32xf32>
    %c0_9 = arith.constant 0 : index
    %c0_10 = arith.constant 0 : index
    %12 = vector.load %arg5[%c0_9, %c0_10] : memref<1x32xf32, #tpu.memory_space<vmem>>, vector<1x32xf32>
    %13 = vector.broadcast %12 : vector<1x32xf32> to vector<16x32xf32>
    %14 = arith.addf %11, %13 : vector<16x32xf32>
    %15 = arith.addf %14, %0 : vector<16x32xf32>
    %c0_11 = arith.constant 0 : index
    %c0_12 = arith.constant 0 : index
    %16 = vector.load %arg6[%c0_11, %c0_12] : memref<1x32xf32, #tpu.memory_space<vmem>>, vector<1x32xf32>
    %c0_13 = arith.constant 0 : index
    %c0_14 = arith.constant 0 : index
    %17 = vector.load %arg7[%c0_13, %c0_14] : memref<1x32xf32, #tpu.memory_space<vmem>>, vector<1x32xf32>
    %cst_15 = arith.constant dense<0.000000e+00> : vector<16xf32>
    %18 = vector.multi_reduction <add>, %15, %cst_15 [1] : vector<16x32xf32> to vector<16xf32>
    %19 = vector.shape_cast %18 : vector<16xf32> to vector<16x1xf32>
    %cst_16 = arith.constant 3.200000e+01 : f32
    %20 = vector.broadcast %cst_16 : f32 to vector<16x1xf32>
    %21 = arith.divf %19, %20 : vector<16x1xf32>
    %22 = vector.broadcast %21 : vector<16x1xf32> to vector<16x32xf32>
    %23 = arith.subf %15, %22 : vector<16x32xf32>
    %24 = arith.mulf %23, %23 : vector<16x32xf32>
    %cst_17 = arith.constant dense<0.000000e+00> : vector<16xf32>
    %25 = vector.multi_reduction <add>, %24, %cst_17 [1] : vector<16x32xf32> to vector<16xf32>
    %26 = vector.shape_cast %25 : vector<16xf32> to vector<16x1xf32>
    %cst_18 = arith.constant 3.200000e+01 : f32
    %27 = vector.broadcast %cst_18 : f32 to vector<16x1xf32>
    %28 = arith.divf %26, %27 : vector<16x1xf32>
    %29 = vector.broadcast %21 : vector<16x1xf32> to vector<16x32xf32>
    %30 = arith.subf %15, %29 : vector<16x32xf32>
    %cst_19 = arith.constant 9.99999974E-6 : f32
    %31 = vector.broadcast %cst_19 : f32 to vector<16x1xf32>
    %32 = arith.addf %28, %31 : vector<16x1xf32>
    %33 = math.rsqrt %32 : vector<16x1xf32>
    %34 = vector.broadcast %33 : vector<16x1xf32> to vector<16x32xf32>
    %35 = arith.mulf %30, %34 : vector<16x32xf32>
    %36 = vector.broadcast %16 : vector<1x32xf32> to vector<16x32xf32>
    %37 = arith.mulf %35, %36 : vector<16x32xf32>
    %38 = vector.broadcast %17 : vector<1x32xf32> to vector<16x32xf32>
    %39 = arith.addf %37, %38 : vector<16x32xf32>
    %c0_20 = arith.constant 0 : index
    %c0_21 = arith.constant 0 : index
    %40 = vector.load %arg8[%c0_20, %c0_21] : memref<16x32xf32, #tpu.memory_space<vmem>>, vector<16x32xf32>
    tpu.vector_store %arg8[%c0_20, %c0_21], %39 {strides = array<i32>} : memref<16x32xf32, #tpu.memory_space<vmem>>, vector<16x32xf32>,
    return
  }
  func.func @transform_0(%arg0: i32) -> (i32, i32) {
    %c0_i32 = arith.constant 0 : i32
    %c0_i32_0 = arith.constant 0 : i32
    return %arg0, %c0_i32 : i32, i32
  }
  func.func @transform_1(%arg0: i32) -> (i32, i32) {
    %c0_i32 = arith.constant 0 : i32
    %c0_i32_0 = arith.constant 0 : i32
    %c0_i32_1 = arith.constant 0 : i32
    return %c0_i32, %c0_i32_0 : i32, i32
  }
  func.func @transform_2(%arg0: i32) -> (i32, i32) {
    %c0_i32 = arith.constant 0 : i32
    %c0_i32_0 = arith.constant 0 : i32
    %c0_i32_1 = arith.constant 0 : i32
    return %c0_i32, %c0_i32_0 : i32, i32
  }
  func.func @transform_3(%arg0: i32) -> (i32, i32) {
    %c0_i32 = arith.constant 0 : i32
    %c0_i32_0 = arith.constant 0 : i32
    %c0_i32_1 = arith.constant 0 : i32
    return %c0_i32, %c0_i32_0 : i32, i32
  }
  func.func @transform_4(%arg0: i32) -> (i32, i32) {
    %c0_i32 = arith.constant 0 : i32
    %c0_i32_0 = arith.constant 0 : i32
    %c0_i32_1 = arith.constant 0 : i32
    return %c0_i32, %c0_i32_0 : i32, i32
  }
  func.func @transform_5(%arg0: i32) -> (i32, i32) {
    %c0_i32 = arith.constant 0 : i32
    %c0_i32_0 = arith.constant 0 : i32
    %c0_i32_1 = arith.constant 0 : i32
    return %c0_i32, %c0_i32_0 : i32, i32
  }
  func.func @transform_6(%arg0: i32) -> (i32, i32) {
    %c0_i32 = arith.constant 0 : i32
    %c0_i32_0 = arith.constant 0 : i32
    %c0_i32_1 = arith.constant 0 : i32
    return %c0_i32, %c0_i32_0 : i32, i32
  }
  func.func @transform_7(%arg0: i32) -> (i32, i32) {
    %c0_i32 = arith.constant 0 : i32
    %c0_i32_0 = arith.constant 0 : i32
    return %arg0, %c0_i32 : i32, i32
  }
}

module attributes {stable_mosaic.version = 11 : i64} {
  func.func @_ln_kernel(%arg0: i32, %arg1: memref<16x32xf32, #tpu.memory_space<vmem>>, %arg2: memref<1x32xf32, #tpu.memory_space<vmem>>, %arg3: memref<1x32xf32, #tpu.memory_space<vmem>>, %arg4: memref<16x32xf32, #tpu.memory_space<vmem>>) attributes {dimension_semantics = [#tpu.dimension_semantics<parallel>], iteration_bounds = array<i64: 2>, scalar_prefetch = 0 : i64, scratch_operands = 0 : i64, tpu.core_type = #tpu.core_type<tc>, window_params = [{transform_indices = @transform_0, window_bounds = array<i64: 16, 32>}, {pipeline_mode = #tpu.pipeline_mode<synchronous>, transform_indices = @transform_1, window_bounds = array<i64: 1, 32>}, {pipeline_mode = #tpu.pipeline_mode<synchronous>, transform_indices = @transform_2, window_bounds = array<i64: 1, 32>}, {transform_indices = @transform_3, window_bounds = array<i64: 16, 32>}]} {
    %c0 = arith.constant 0 : index
    %c0_0 = arith.constant 0 : index
    %0 = vector.load %arg1[%c0, %c0_0] : memref<16x32xf32, #tpu.memory_space<vmem>>, vector<16x32xf32>
    %c0_1 = arith.constant 0 : index
    %c0_2 = arith.constant 0 : index
    %1 = vector.load %arg2[%c0_1, %c0_2] : memref<1x32xf32, #tpu.memory_space<vmem>>, vector<1x32xf32>
    %c0_3 = arith.constant 0 : index
    %c0_4 = arith.constant 0 : index
    %2 = vector.load %arg3[%c0_3, %c0_4] : memref<1x32xf32, #tpu.memory_space<vmem>>, vector<1x32xf32>
    %cst = arith.constant dense<0.000000e+00> : vector<16xf32>
    %3 = vector.multi_reduction <add>, %0, %cst [1] : vector<16x32xf32> to vector<16xf32>
    %4 = vector.shape_cast %3 : vector<16xf32> to vector<16x1xf32>
    %cst_5 = arith.constant 3.200000e+01 : f32
    %5 = vector.broadcast %cst_5 : f32 to vector<16x1xf32>
    %6 = arith.divf %4, %5 : vector<16x1xf32>
    %7 = vector.broadcast %6 : vector<16x1xf32> to vector<16x32xf32>
    %8 = arith.subf %0, %7 : vector<16x32xf32>
    %9 = arith.mulf %8, %8 : vector<16x32xf32>
    %cst_6 = arith.constant dense<0.000000e+00> : vector<16xf32>
    %10 = vector.multi_reduction <add>, %9, %cst_6 [1] : vector<16x32xf32> to vector<16xf32>
    %11 = vector.shape_cast %10 : vector<16xf32> to vector<16x1xf32>
    %cst_7 = arith.constant 3.200000e+01 : f32
    %12 = vector.broadcast %cst_7 : f32 to vector<16x1xf32>
    %13 = arith.divf %11, %12 : vector<16x1xf32>
    %14 = vector.broadcast %6 : vector<16x1xf32> to vector<16x32xf32>
    %15 = arith.subf %0, %14 : vector<16x32xf32>
    %cst_8 = arith.constant 9.99999974E-6 : f32
    %16 = vector.broadcast %cst_8 : f32 to vector<16x1xf32>
    %17 = arith.addf %13, %16 : vector<16x1xf32>
    %18 = math.rsqrt %17 : vector<16x1xf32>
    %19 = vector.broadcast %18 : vector<16x1xf32> to vector<16x32xf32>
    %20 = arith.mulf %15, %19 : vector<16x32xf32>
    %21 = vector.broadcast %1 : vector<1x32xf32> to vector<16x32xf32>
    %22 = arith.mulf %20, %21 : vector<16x32xf32>
    %23 = vector.broadcast %2 : vector<1x32xf32> to vector<16x32xf32>
    %24 = arith.addf %22, %23 : vector<16x32xf32>
    %c0_9 = arith.constant 0 : index
    %c0_10 = arith.constant 0 : index
    %25 = vector.load %arg4[%c0_9, %c0_10] : memref<16x32xf32, #tpu.memory_space<vmem>>, vector<16x32xf32>
    tpu.vector_store %arg4[%c0_9, %c0_10], %24 {strides = array<i32>} : memref<16x32xf32, #tpu.memory_space<vmem>>, vector<16x32xf32>,
    return
  }
  func.func @transform_0(%arg0: i32) -> (i32, i32) {
    %c0_i32 = arith.constant 0 : i32
    %c0_i32_0 = arith.constant 0 : i32
    return %arg0, %c0_i32 : i32, i32
  }
  func.func @transform_1(%arg0: i32) -> (i32, i32) {
    %c0_i32 = arith.constant 0 : i32
    %c0_i32_0 = arith.constant 0 : i32
    %c0_i32_1 = arith.constant 0 : i32
    return %c0_i32, %c0_i32_0 : i32, i32
  }
  func.func @transform_2(%arg0: i32) -> (i32, i32) {
    %c0_i32 = arith.constant 0 : i32
    %c0_i32_0 = arith.constant 0 : i32
    %c0_i32_1 = arith.constant 0 : i32
    return %c0_i32, %c0_i32_0 : i32, i32
  }
  func.func @transform_3(%arg0: i32) -> (i32, i32) {
    %c0_i32 = arith.constant 0 : i32
    %c0_i32_0 = arith.constant 0 : i32
    return %arg0, %c0_i32 : i32, i32
  }
}

module attributes {stable_mosaic.version = 11 : i64} {
  func.func @_attention_kernel(%arg0: i32, %arg1: memref<1x4x8x8xbf16, #tpu.memory_space<vmem>>, %arg2: memref<1x4x8x8xbf16, #tpu.memory_space<vmem>>, %arg3: memref<1x4x8x8xbf16, #tpu.memory_space<vmem>>, %arg4: memref<1x1x8xf32, #tpu.memory_space<vmem>>, %arg5: memref<1x4x8x8xbf16, #tpu.memory_space<vmem>>) attributes {dimension_semantics = [#tpu.dimension_semantics<parallel>], iteration_bounds = array<i64: 2>, scalar_prefetch = 0 : i64, scratch_operands = 0 : i64, tpu.core_type = #tpu.core_type<tc>, window_params = [{transform_indices = @transform_0, window_bounds = array<i64: 1, 4, 8, 8>}, {transform_indices = @transform_1, window_bounds = array<i64: 1, 4, 8, 8>}, {transform_indices = @transform_2, window_bounds = array<i64: 1, 4, 8, 8>}, {transform_indices = @transform_3, window_bounds = array<i64: 1, 1, 8>}, {transform_indices = @transform_4, window_bounds = array<i64: 1, 4, 8, 8>}]} {
    %c0 = arith.constant 0 : index
    %c0_0 = arith.constant 0 : index
    %c0_1 = arith.constant 0 : index
    %0 = vector.load %arg4[%c0, %c0_0, %c0_1] : memref<1x1x8xf32, #tpu.memory_space<vmem>>, vector<1x1x8xf32>
    %1 = vector.shape_cast %0 : vector<1x1x8xf32> to vector<1x8xf32>
    %2 = vector.shape_cast %1 : vector<1x8xf32> to vector<1x8xf32>
    %3 = vector.broadcast %2 : vector<1x8xf32> to vector<8x8xf32>
    %4 = tpu.iota {dimensions = array<i32: 0>} : vector<8x8xi32>
    %5 = tpu.iota {dimensions = array<i32: 1>} : vector<8x8xi32>
    %6 = arith.cmpi sgt, %5, %4 : vector<8x8xi32>
    %cst = arith.constant -1.000000e+09 : f32
    %7 = vector.broadcast %cst : f32 to vector<8x8xf32>
    %8 = arith.select %6, %7, %3 : vector<8x8xi1>, vector<8x8xf32>
    %c0_2 = arith.constant 0 : index
    %c0_3 = arith.constant 0 : index
    %c0_4 = arith.constant 0 : index
    %c0_5 = arith.constant 0 : index
    %9 = vector.load %arg1[%c0_2, %c0_3, %c0_4, %c0_5] : memref<1x4x8x8xbf16, #tpu.memory_space<vmem>>, vector<1x4x8x8xbf16>
    %10 = vector.shape_cast %9 : vector<1x4x8x8xbf16> to vector<4x8x8xbf16>
    %c0_6 = arith.constant 0 : index
    %c0_7 = arith.constant 0 : index
    %c0_8 = arith.constant 0 : index
    %c0_9 = arith.constant 0 : index
    %11 = vector.load %arg2[%c0_6, %c0_7, %c0_8, %c0_9] : memref<1x4x8x8xbf16, #tpu.memory_space<vmem>>, vector<1x4x8x8xbf16>
    %12 = vector.shape_cast %11 : vector<1x4x8x8xbf16> to vector<4x8x8xbf16>
    %c0_10 = arith.constant 0 : index
    %c0_11 = arith.constant 0 : index
    %c0_12 = arith.constant 0 : index
    %c0_13 = arith.constant 0 : index
    %13 = vector.load %arg3[%c0_10, %c0_11, %c0_12, %c0_13] : memref<1x4x8x8xbf16, #tpu.memory_space<vmem>>, vector<1x4x8x8xbf16>
    %14 = vector.shape_cast %13 : vector<1x4x8x8xbf16> to vector<4x8x8xbf16>
    %cst_14 = arith.constant dense<0.000000e+00> : vector<4x8x8xf32>
    %15 = tpu.matmul %10, %12, %cst_14 {dimension_numbers = #tpu.dot_dimension_numbers<[2], [2], [1], [1], [0, 0, 0, 1, 1, 1], [0], [0]>} : vector<4x8x8xbf16>, vector<4x8x8xbf16>, vector<4x8x8xf32> -> vector<4x8x8xf32>
    %cst_15 = arith.constant 0.353553385 : f32
    %16 = vector.broadcast %cst_15 : f32 to vector<4x8x8xf32>
    %17 = arith.mulf %15, %16 : vector<4x8x8xf32>
    %18 = vector.shape_cast %8 : vector<8x8xf32> to vector<1x8x8xf32>
    %19 = vector.broadcast %18 : vector<1x8x8xf32> to vector<4x8x8xf32>
    %20 = arith.addf %17, %19 : vector<4x8x8xf32>
    %cst_16 = arith.constant dense<0xFF800000> : vector<4x8xf32>
    %21 = vector.multi_reduction <maximumf>, %20, %cst_16 [2] : vector<4x8x8xf32> to vector<4x8xf32>
    %22 = vector.shape_cast %21 : vector<4x8xf32> to vector<4x8x1xf32>
    %23 = vector.broadcast %22 : vector<4x8x1xf32> to vector<4x8x8xf32>
    %24 = arith.subf %20, %23 : vector<4x8x8xf32>
    %25 = math.exp %24 : vector<4x8x8xf32>
    %cst_17 = arith.constant dense<0.000000e+00> : vector<4x8xf32>
    %26 = vector.multi_reduction <add>, %25, %cst_17 [2] : vector<4x8x8xf32> to vector<4x8xf32>
    %27 = vector.shape_cast %26 : vector<4x8xf32> to vector<4x8x1xf32>
    %28 = tpu.reciprocal %27 {approx = true} : vector<4x8x1xf32> -> vector<4x8x1xf32>
    %29 = vector.broadcast %28 : vector<4x8x1xf32> to vector<4x8x8xf32>
    %30 = arith.mulf %25, %29 : vector<4x8x8xf32>
    %31 = arith.truncf %30 : vector<4x8x8xf32> to vector<4x8x8xbf16>
    %cst_18 = arith.constant dense<0.000000e+00> : vector<4x8x8xf32>
    %32 = tpu.matmul %31, %14, %cst_18 {dimension_numbers = #tpu.dot_dimension_numbers<[2], [1], [1], [2], [0, 0, 0, 1, 1, 2], [0], [0]>} : vector<4x8x8xbf16>, vector<4x8x8xbf16>, vector<4x8x8xf32> -> vector<4x8x8xf32>
    %33 = arith.truncf %32 : vector<4x8x8xf32> to vector<4x8x8xbf16>
    %c0_19 = arith.constant 0 : index
    %c0_20 = arith.constant 0 : index
    %c0_21 = arith.constant 0 : index
    %c0_22 = arith.constant 0 : index
    %34 = vector.load %arg5[%c0_19, %c0_20, %c0_21, %c0_22] : memref<1x4x8x8xbf16, #tpu.memory_space<vmem>>, vector<1x4x8x8xbf16>
    %35 = vector.shape_cast %34 : vector<1x4x8x8xbf16> to vector<4x8x8xbf16>
    %36 = vector.shape_cast %33 : vector<4x8x8xbf16> to vector<1x4x8x8xbf16>
    tpu.vector_store %arg5[%c0_19, %c0_20, %c0_21, %c0_22], %36 {strides = array<i32>} : memref<1x4x8x8xbf16, #tpu.memory_space<vmem>>, vector<1x4x8x8xbf16>,
    return
  }
  func.func @transform_0(%arg0: i32) -> (i32, i32, i32, i32) {
    %c0_i32 = arith.constant 0 : i32
    %c0_i32_0 = arith.constant 0 : i32
    %c0_i32_1 = arith.constant 0 : i32
    %c0_i32_2 = arith.constant 0 : i32
    return %arg0, %c0_i32, %c0_i32_0, %c0_i32_1 : i32, i32, i32, i32
  }
  func.func @transform_1(%arg0: i32) -> (i32, i32, i32, i32) {
    %c0_i32 = arith.constant 0 : i32
    %c0_i32_0 = arith.constant 0 : i32
    %c0_i32_1 = arith.constant 0 : i32
    %c0_i32_2 = arith.constant 0 : i32
    return %arg0, %c0_i32, %c0_i32_0, %c0_i32_1 : i32, i32, i32, i32
  }
  func.func @transform_2(%arg0: i32) -> (i32, i32, i32, i32) {
    %c0_i32 = arith.constant 0 : i32
    %c0_i32_0 = arith.constant 0 : i32
    %c0_i32_1 = arith.constant 0 : i32
    %c0_i32_2 = arith.constant 0 : i32
    return %arg0, %c0_i32, %c0_i32_0, %c0_i32_1 : i32, i32, i32, i32
  }
  func.func @transform_3(%arg0: i32) -> (i32, i32, i32) {
    %c0_i32 = arith.constant 0 : i32
    %c0_i32_0 = arith.constant 0 : i32
    %c0_i32_1 = arith.constant 0 : i32
    return %arg0, %c0_i32, %c0_i32_0 : i32, i32, i32
  }
  func.func @transform_4(%arg0: i32) -> (i32, i32, i32, i32) {
    %c0_i32 = arith.constant 0 : i32
    %c0_i32_0 = arith.constant 0 : i32
    %c0_i32_1 = arith.constant 0 : i32
    %c0_i32_2 = arith.constant 0 : i32
    return %arg0, %c0_i32, %c0_i32_0, %c0_i32_1 : i32, i32, i32, i32
  }
}

module attributes {stable_mosaic.version = 11 : i64} {
  func.func @_matmul_bias_kernel_1k(%arg0: i32, %arg1: i32, %arg2: memref<8x32xbf16, #tpu.memory_space<vmem>>, %arg3: memref<32x128xbf16, #tpu.memory_space<vmem>>, %arg4: memref<1x128xf32, #tpu.memory_space<vmem>>, %arg5: memref<8x128xbf16, #tpu.memory_space<vmem>>) attributes {dimension_semantics = [#tpu.dimension_semantics<parallel>, #tpu.dimension_semantics<parallel>], iteration_bounds = array<i64: 2, 1>, scalar_prefetch = 0 : i64, scratch_operands = 0 : i64, tpu.core_type = #tpu.core_type<tc>, window_params = [{transform_indices = @transform_0, window_bounds = array<i64: 8, 32>}, {transform_indices = @transform_1, window_bounds = array<i64: 32, 128>}, {transform_indices = @transform_2, window_bounds = array<i64: 1, 128>}, {transform_indices = @transform_3, window_bounds = array<i64: 8, 128>}]} {
    %c0 = arith.constant 0 : index
    %c0_0 = arith.constant 0 : index
    %0 = vector.load %arg2[%c0, %c0_0] : memref<8x32xbf16, #tpu.memory_space<vmem>>, vector<8x32xbf16>
    %c0_1 = arith.constant 0 : index
    %c0_2 = arith.constant 0 : index
    %1 = vector.load %arg3[%c0_1, %c0_2] : memref<32x128xbf16, #tpu.memory_space<vmem>>, vector<32x128xbf16>
    %cst = arith.constant dense<0.000000e+00> : vector<8x128xf32>
    %2 = tpu.matmul %0, %1, %cst {dimension_numbers = #tpu.dot_dimension_numbers<[1], [0], [0], [1], [0, 0, 1, 1], [], []>} : vector<8x32xbf16>, vector<32x128xbf16>, vector<8x128xf32> -> vector<8x128xf32>
    %c0_3 = arith.constant 0 : index
    %c0_4 = arith.constant 0 : index
    %3 = vector.load %arg4[%c0_3, %c0_4] : memref<1x128xf32, #tpu.memory_space<vmem>>, vector<1x128xf32>
    %4 = vector.broadcast %3 : vector<1x128xf32> to vector<8x128xf32>
    %5 = arith.addf %2, %4 : vector<8x128xf32>
    %6 = arith.truncf %5 : vector<8x128xf32> to vector<8x128xbf16>
    %c0_5 = arith.constant 0 : index
    %c0_6 = arith.constant 0 : index
    %7 = vector.load %arg5[%c0_5, %c0_6] : memref<8x128xbf16, #tpu.memory_space<vmem>>, vector<8x128xbf16>
    tpu.vector_store %arg5[%c0_5, %c0_6], %6 {strides = array<i32>} : memref<8x128xbf16, #tpu.memory_space<vmem>>, vector<8x128xbf16>,
    return
  }
  func.func @transform_0(%arg0: i32, %arg1: i32) -> (i32, i32) {
    %c0_i32 = arith.constant 0 : i32
    %c0_i32_0 = arith.constant 0 : i32
    return %arg0, %c0_i32 : i32, i32
  }
  func.func @transform_1(%arg0: i32, %arg1: i32) -> (i32, i32) {
    %c0_i32 = arith.constant 0 : i32
    %c0_i32_0 = arith.constant 0 : i32
    return %c0_i32, %arg1 : i32, i32
  }
  func.func @transform_2(%arg0: i32, %arg1: i32) -> (i32, i32) {
    %c0_i32 = arith.constant 0 : i32
    %c0_i32_0 = arith.constant 0 : i32
    return %c0_i32, %arg1 : i32, i32
  }
  func.func @transform_3(%arg0: i32, %arg1: i32) -> (i32, i32) {
    %c0_i32 = arith.constant 0 : i32
    return %arg0, %arg1 : i32, i32
  }
}

module attributes {stable_mosaic.version = 11 : i64} {
  func.func @_linear_res_ln_kernel(%arg0: i32, %arg1: memref<8x32xbf16, #tpu.memory_space<vmem>>, %arg2: memref<32x32xbf16, #tpu.memory_space<vmem>>, %arg3: memref<1x32xf32, #tpu.memory_space<vmem>>, %arg4: memref<8x32xf32, #tpu.memory_space<vmem>>, %arg5: memref<1x32xf32, #tpu.memory_space<vmem>>, %arg6: memref<1x32xf32, #tpu.memory_space<vmem>>, %arg7: memref<8x32xf32, #tpu.memory_space<vmem>>) attributes {dimension_semantics = [#tpu.dimension_semantics<parallel>], iteration_bounds = array<i64: 2>, scalar_prefetch = 0 : i64, scratch_operands = 0 : i64, tpu.core_type = #tpu.core_type<tc>, window_params = [{transform_indices = @transform_0, window_bounds = array<i64: 8, 32>}, {pipeline_mode = #tpu.pipeline_mode<synchronous>, transform_indices = @transform_1, window_bounds = array<i64: 32, 32>}, {pipeline_mode = #tpu.pipeline_mode<synchronous>, transform_indices = @transform_2, window_bounds = array<i64: 1, 32>}, {transform_indices = @transform_3, window_bounds = array<i64: 8, 32>}, {pipeline_mode = #tpu.pipeline_mode<synchronous>, transform_indices = @transform_4, window_bounds = array<i64: 1, 32>}, {pipeline_mode = #tpu.pipeline_mode<synchronous>, transform_indices = @transform_5, window_bounds = array<i64: 1, 32>}, {transform_indices = @transform_6, window_bounds = array<i64: 8, 32>}]} {
    %c0 = arith.constant 0 : index
    %c0_0 = arith.constant 0 : index
    %0 = vector.load %arg1[%c0, %c0_0] : memref<8x32xbf16, #tpu.memory_space<vmem>>, vector<8x32xbf16>
    %c0_1 = arith.constant 0 : index
    %c0_2 = arith.constant 0 : index
    %1 = vector.load %arg2[%c0_1, %c0_2] : memref<32x32xbf16, #tpu.memory_space<vmem>>, vector<32x32xbf16>
    %cst = arith.constant dense<0.000000e+00> : vector<8x32xf32>
    %2 = tpu.matmul %0, %1, %cst {dimension_numbers = #tpu.dot_dimension_numbers<[1], [0], [0], [1], [0, 0, 1, 1], [], []>} : vector<8x32xbf16>, vector<32x32xbf16>, vector<8x32xf32> -> vector<8x32xf32>
    %c0_3 = arith.constant 0 : index
    %c0_4 = arith.constant 0 : index
    %3 = vector.load %arg3[%c0_3, %c0_4] : memref<1x32xf32, #tpu.memory_space<vmem>>, vector<1x32xf32>
    %4 = vector.broadcast %3 : vector<1x32xf32> to vector<8x32xf32>
    %5 = arith.addf %2, %4 : vector<8x32xf32>
    %c0_5 = arith.constant 0 : index
    %c0_6 = arith.constant 0 : index
    %6 = vector.load %arg4[%c0_5, %c0_6] : memref<8x32xf32, #tpu.memory_space<vmem>>, vector<8x32xf32>
    %7 = arith.addf %5, %6 : vector<8x32xf32>
    %c0_7 = arith.constant 0 : index
    %c0_8 = arith.constant 0 : index
    %8 = vector.load %arg5[%c0_7, %c0_8] : memref<1x32xf32, #tpu.memory_space<vmem>>, vector<1x32xf32>
    %c0_9 = arith.constant 0 : index
    %c0_10 = arith.constant 0 : index
    %9 = vector.load %arg6[%c0_9, %c0_10] : memref<1x32xf32, #tpu.memory_space<vmem>>, vector<1x32xf32>
    %cst_11 = arith.constant dense<0.000000e+00> : vector<8xf32>
    %10 = vector.multi_reduction <add>, %7, %cst_11 [1] : vector<8x32xf32> to vector<8xf32>
    %11 = vector.shape_cast %10 : vector<8xf32> to vector<8x1xf32>
    %cst_12 = arith.constant 3.200000e+01 : f32
    %12 = vector.broadcast %cst_12 : f32 to vector<8x1xf32>
    %13 = arith.divf %11, %12 : vector<8x1xf32>
    %14 = vector.broadcast %13 : vector<8x1xf32> to vector<8x32xf32>
    %15 = arith.subf %7, %14 : vector<8x32xf32>
    %16 = arith.mulf %15, %15 : vector<8x32xf32>
    %cst_13 = arith.constant dense<0.000000e+00> : vector<8xf32>
    %17 = vector.multi_reduction <add>, %16, %cst_13 [1] : vector<8x32xf32> to vector<8xf32>
    %18 = vector.shape_cast %17 : vector<8xf32> to vector<8x1xf32>
    %cst_14 = arith.constant 3.200000e+01 : f32
    %19 = vector.broadcast %cst_14 : f32 to vector<8x1xf32>
    %20 = arith.divf %18, %19 : vector<8x1xf32>
    %21 = vector.broadcast %13 : vector<8x1xf32> to vector<8x32xf32>
    %22 = arith.subf %7, %21 : vector<8x32xf32>
    %cst_15 = arith.constant 9.99999974E-6 : f32
    %23 = vector.broadcast %cst_15 : f32 to vector<8x1xf32>
    %24 = arith.addf %20, %23 : vector<8x1xf32>
    %25 = math.rsqrt %24 : vector<8x1xf32>
    %26 = vector.broadcast %25 : vector<8x1xf32> to vector<8x32xf32>
    %27 = arith.mulf %22, %26 : vector<8x32xf32>
    %28 = vector.broadcast %8 : vector<1x32xf32> to vector<8x32xf32>
    %29 = arith.mulf %27, %28 : vector<8x32xf32>
    %30 = vector.broadcast %9 : vector<1x32xf32> to vector<8x32xf32>
    %31 = arith.addf %29, %30 : vector<8x32xf32>
    %c0_16 = arith.constant 0 : index
    %c0_17 = arith.constant 0 : index
    %32 = vector.load %arg7[%c0_16, %c0_17] : memref<8x32xf32, #tpu.memory_space<vmem>>, vector<8x32xf32>
    tpu.vector_store %arg7[%c0_16, %c0_17], %31 {strides = array<i32>} : memref<8x32xf32, #tpu.memory_space<vmem>>, vector<8x32xf32>,
    return
  }
  func.func @transform_0(%arg0: i32) -> (i32, i32) {
    %c0_i32 = arith.constant 0 : i32
    %c0_i32_0 = arith.constant 0 : i32
    return %arg0, %c0_i32 : i32, i32
  }
  func.func @transform_1(%arg0: i32) -> (i32, i32) {
    %c0_i32 = arith.constant 0 : i32
    %c0_i32_0 = arith.constant 0 : i32
    %c0_i32_1 = arith.constant 0 : i32
    return %c0_i32, %c0_i32_0 : i32, i32
  }
  func.func @transform_2(%arg0: i32) -> (i32, i32) {
    %c0_i32 = arith.constant 0 : i32
    %c0_i32_0 = arith.constant 0 : i32
    %c0_i32_1 = arith.constant 0 : i32
    return %c0_i32, %c0_i32_0 : i32, i32
  }
  func.func @transform_3(%arg0: i32) -> (i32, i32) {
    %c0_i32 = arith.constant 0 : i32
    %c0_i32_0 = arith.constant 0 : i32
    return %arg0, %c0_i32 : i32, i32
  }
  func.func @transform_4(%arg0: i32) -> (i32, i32) {
    %c0_i32 = arith.constant 0 : i32
    %c0_i32_0 = arith.constant 0 : i32
    %c0_i32_1 = arith.constant 0 : i32
    return %c0_i32, %c0_i32_0 : i32, i32
  }
  func.func @transform_5(%arg0: i32) -> (i32, i32) {
    %c0_i32 = arith.constant 0 : i32
    %c0_i32_0 = arith.constant 0 : i32
    %c0_i32_1 = arith.constant 0 : i32
    return %c0_i32, %c0_i32_0 : i32, i32
  }
  func.func @transform_6(%arg0: i32) -> (i32, i32) {
    %c0_i32 = arith.constant 0 : i32
    %c0_i32_0 = arith.constant 0 : i32
    return %arg0, %c0_i32 : i32, i32
  }
}

module attributes {stable_mosaic.version = 11 : i64} {
  func.func @_attention_kernel(%arg0: i32, %arg1: memref<1x4x8x8xbf16, #tpu.memory_space<vmem>>, %arg2: memref<1x4x10x8xbf16, #tpu.memory_space<vmem>>, %arg3: memref<1x4x10x8xbf16, #tpu.memory_space<vmem>>, %arg4: memref<1x1x10xf32, #tpu.memory_space<vmem>>, %arg5: memref<1x4x8x8xbf16, #tpu.memory_space<vmem>>) attributes {dimension_semantics = [#tpu.dimension_semantics<parallel>], iteration_bounds = array<i64: 2>, scalar_prefetch = 0 : i64, scratch_operands = 0 : i64, tpu.core_type = #tpu.core_type<tc>, window_params = [{transform_indices = @transform_0, window_bounds = array<i64: 1, 4, 8, 8>}, {transform_indices = @transform_1, window_bounds = array<i64: 1, 4, 10, 8>}, {transform_indices = @transform_2, window_bounds = array<i64: 1, 4, 10, 8>}, {transform_indices = @transform_3, window_bounds = array<i64: 1, 1, 10>}, {transform_indices = @transform_4, window_bounds = array<i64: 1, 4, 8, 8>}]} {
    %c0 = arith.constant 0 : index
    %c0_0 = arith.constant 0 : index
    %c0_1 = arith.constant 0 : index
    %0 = vector.load %arg4[%c0, %c0_0, %c0_1] : memref<1x1x10xf32, #tpu.memory_space<vmem>>, vector<1x1x10xf32>
    %1 = vector.shape_cast %0 : vector<1x1x10xf32> to vector<1x10xf32>
    %2 = vector.shape_cast %1 : vector<1x10xf32> to vector<1x10xf32>
    %3 = vector.broadcast %2 : vector<1x10xf32> to vector<8x10xf32>
    %c0_2 = arith.constant 0 : index
    %c0_3 = arith.constant 0 : index
    %c0_4 = arith.constant 0 : index
    %c0_5 = arith.constant 0 : index
    %4 = vector.load %arg1[%c0_2, %c0_3, %c0_4, %c0_5] : memref<1x4x8x8xbf16, #tpu.memory_space<vmem>>, vector<1x4x8x8xbf16>
    %5 = vector.shape_cast %4 : vector<1x4x8x8xbf16> to vector<4x8x8xbf16>
    %c0_6 = arith.constant 0 : index
    %c0_7 = arith.constant 0 : index
    %c0_8 = arith.constant 0 : index
    %c0_9 = arith.constant 0 : index
    %6 = vector.load %arg2[%c0_6, %c0_7, %c0_8, %c0_9] : memref<1x4x10x8xbf16, #tpu.memory_space<vmem>>, vector<1x4x10x8xbf16>
    %7 = vector.shape_cast %6 : vector<1x4x10x8xbf16> to vector<4x10x8xbf16>
    %c0_10 = arith.constant 0 : index
    %c0_11 = arith.constant 0 : index
    %c0_12 = arith.constant 0 : index
    %c0_13 = arith.constant 0 : index
    %8 = vector.load %arg3[%c0_10, %c0_11, %c0_12, %c0_13] : memref<1x4x10x8xbf16, #tpu.memory_space<vmem>>, vector<1x4x10x8xbf16>
    %9 = vector.shape_cast %8 : vector<1x4x10x8xbf16> to vector<4x10x8xbf16>
    %cst = arith.constant dense<0.000000e+00> : vector<4x8x10xf32>
    %10 = tpu.matmul %5, %7, %cst {dimension_numbers = #tpu.dot_dimension_numbers<[2], [2], [1], [1], [0, 0, 0, 1, 1, 1], [0], [0]>} : vector<4x8x8xbf16>, vector<4x10x8xbf16>, vector<4x8x10xf32> -> vector<4x8x10xf32>
    %cst_14 = arith.constant 0.353553385 : f32
    %11 = vector.broadcast %cst_14 : f32 to vector<4x8x10xf32>
    %12 = arith.mulf %10, %11 : vector<4x8x10xf32>
    %13 = vector.shape_cast %3 : vector<8x10xf32> to vector<1x8x10xf32>
    %14 = vector.broadcast %13 : vector<1x8x10xf32> to vector<4x8x10xf32>
    %15 = arith.addf %12, %14 : vector<4x8x10xf32>
    %cst_15 = arith.constant dense<0xFF800000> : vector<4x8xf32>
    %16 = vector.multi_reduction <maximumf>, %15, %cst_15 [2] : vector<4x8x10xf32> to vector<4x8xf32>
    %17 = vector.shape_cast %16 : vector<4x8xf32> to vector<4x8x1xf32>
    %18 = vector.broadcast %17 : vector<4x8x1xf32> to vector<4x8x10xf32>
    %19 = arith.subf %15, %18 : vector<4x8x10xf32>
    %20 = math.exp %19 : vector<4x8x10xf32>
    %cst_16 = arith.constant dense<0.000000e+00> : vector<4x8xf32>
    %21 = vector.multi_reduction <add>, %20, %cst_16 [2] : vector<4x8x10xf32> to vector<4x8xf32>
    %22 = vector.shape_cast %21 : vector<4x8xf32> to vector<4x8x1xf32>
    %23 = tpu.reciprocal %22 {approx = true} : vector<4x8x1xf32> -> vector<4x8x1xf32>
    %24 = vector.broadcast %23 : vector<4x8x1xf32> to vector<4x8x10xf32>
    %25 = arith.mulf %20, %24 : vector<4x8x10xf32>
    %26 = arith.truncf %25 : vector<4x8x10xf32> to vector<4x8x10xbf16>
    %cst_17 = arith.constant dense<0.000000e+00> : vector<4x8x8xf32>
    %27 = tpu.matmul %26, %9, %cst_17 {dimension_numbers = #tpu.dot_dimension_numbers<[2], [1], [1], [2], [0, 0, 0, 1, 1, 2], [0], [0]>} : vector<4x8x10xbf16>, vector<4x10x8xbf16>, vector<4x8x8xf32> -> vector<4x8x8xf32>
    %28 = arith.truncf %27 : vector<4x8x8xf32> to vector<4x8x8xbf16>
    %c0_18 = arith.constant 0 : index
    %c0_19 = arith.constant 0 : index
    %c0_20 = arith.constant 0 : index
    %c0_21 = arith.constant 0 : index
    %29 = vector.load %arg5[%c0_18, %c0_19, %c0_20, %c0_21] : memref<1x4x8x8xbf16, #tpu.memory_space<vmem>>, vector<1x4x8x8xbf16>
    %30 = vector.shape_cast %29 : vector<1x4x8x8xbf16> to vector<4x8x8xbf16>
    %31 = vector.shape_cast %28 : vector<4x8x8xbf16> to vector<1x4x8x8xbf16>
    tpu.vector_store %arg5[%c0_18, %c0_19, %c0_20, %c0_21], %31 {strides = array<i32>} : memref<1x4x8x8xbf16, #tpu.memory_space<vmem>>, vector<1x4x8x8xbf16>,
    return
  }
  func.func @transform_0(%arg0: i32) -> (i32, i32, i32, i32) {
    %c0_i32 = arith.constant 0 : i32
    %c0_i32_0 = arith.constant 0 : i32
    %c0_i32_1 = arith.constant 0 : i32
    %c0_i32_2 = arith.constant 0 : i32
    return %arg0, %c0_i32, %c0_i32_0, %c0_i32_1 : i32, i32, i32, i32
  }
  func.func @transform_1(%arg0: i32) -> (i32, i32, i32, i32) {
    %c0_i32 = arith.constant 0 : i32
    %c0_i32_0 = arith.constant 0 : i32
    %c0_i32_1 = arith.constant 0 : i32
    %c0_i32_2 = arith.constant 0 : i32
    return %arg0, %c0_i32, %c0_i32_0, %c0_i32_1 : i32, i32, i32, i32
  }
  func.func @transform_2(%arg0: i32) -> (i32, i32, i32, i32) {
    %c0_i32 = arith.constant 0 : i32
    %c0_i32_0 = arith.constant 0 : i32
    %c0_i32_1 = arith.constant 0 : i32
    %c0_i32_2 = arith.constant 0 : i32
    return %arg0, %c0_i32, %c0_i32_0, %c0_i32_1 : i32, i32, i32, i32
  }
  func.func @transform_3(%arg0: i32) -> (i32, i32, i32) {
    %c0_i32 = arith.constant 0 : i32
    %c0_i32_0 = arith.constant 0 : i32
    %c0_i32_1 = arith.constant 0 : i32
    return %arg0, %c0_i32, %c0_i32_0 : i32, i32, i32
  }
  func.func @transform_4(%arg0: i32) -> (i32, i32, i32, i32) {
    %c0_i32 = arith.constant 0 : i32
    %c0_i32_0 = arith.constant 0 : i32
    %c0_i32_1 = arith.constant 0 : i32
    %c0_i32_2 = arith.constant 0 : i32
    return %arg0, %c0_i32, %c0_i32_0, %c0_i32_1 : i32, i32, i32, i32
  }
}

module attributes {stable_mosaic.version = 11 : i64} {
  func.func @_ffn_res_ln_kernel(%arg0: i32, %arg1: memref<8x32xf32, #tpu.memory_space<vmem>>, %arg2: memref<32x64xbf16, #tpu.memory_space<vmem>>, %arg3: memref<1x64xf32, #tpu.memory_space<vmem>>, %arg4: memref<64x32xbf16, #tpu.memory_space<vmem>>, %arg5: memref<1x32xf32, #tpu.memory_space<vmem>>, %arg6: memref<1x32xf32, #tpu.memory_space<vmem>>, %arg7: memref<1x32xf32, #tpu.memory_space<vmem>>, %arg8: memref<8x32xf32, #tpu.memory_space<vmem>>) attributes {dimension_semantics = [#tpu.dimension_semantics<parallel>], iteration_bounds = array<i64: 2>, scalar_prefetch = 0 : i64, scratch_operands = 0 : i64, tpu.core_type = #tpu.core_type<tc>, window_params = [{transform_indices = @transform_0, window_bounds = array<i64: 8, 32>}, {pipeline_mode = #tpu.pipeline_mode<synchronous>, transform_indices = @transform_1, window_bounds = array<i64: 32, 64>}, {pipeline_mode = #tpu.pipeline_mode<synchronous>, transform_indices = @transform_2, window_bounds = array<i64: 1, 64>}, {pipeline_mode = #tpu.pipeline_mode<synchronous>, transform_indices = @transform_3, window_bounds = array<i64: 64, 32>}, {pipeline_mode = #tpu.pipeline_mode<synchronous>, transform_indices = @transform_4, window_bounds = array<i64: 1, 32>}, {pipeline_mode = #tpu.pipeline_mode<synchronous>, transform_indices = @transform_5, window_bounds = array<i64: 1, 32>}, {pipeline_mode = #tpu.pipeline_mode<synchronous>, transform_indices = @transform_6, window_bounds = array<i64: 1, 32>}, {transform_indices = @transform_7, window_bounds = array<i64: 8, 32>}]} {
    %c0 = arith.constant 0 : index
    %c0_0 = arith.constant 0 : index
    %0 = vector.load %arg1[%c0, %c0_0] : memref<8x32xf32, #tpu.memory_space<vmem>>, vector<8x32xf32>
    %1 = arith.truncf %0 : vector<8x32xf32> to vector<8x32xbf16>
    %c0_1 = arith.constant 0 : index
    %c0_2 = arith.constant 0 : index
    %2 = vector.load %arg2[%c0_1, %c0_2] : memref<32x64xbf16, #tpu.memory_space<vmem>>, vector<32x64xbf16>
    %cst = arith.constant dense<0.000000e+00> : vector<8x64xf32>
    %3 = tpu.matmul %1, %2, %cst {dimension_numbers = #tpu.dot_dimension_numbers<[1], [0], [0], [1], [0, 0, 1, 1], [], []>} : vector<8x32xbf16>, vector<32x64xbf16>, vector<8x64xf32> -> vector<8x64xf32>
    %c0_3 = arith.constant 0 : index
    %c0_4 = arith.constant 0 : index
    %4 = vector.load %arg3[%c0_3, %c0_4] : memref<1x64xf32, #tpu.memory_space<vmem>>, vector<1x64xf32>
    %5 = vector.broadcast %4 : vector<1x64xf32> to vector<8x64xf32>
    %6 = arith.addf %3, %5 : vector<8x64xf32>
    %cst_5 = arith.constant 0.000000e+00 : f32
    %7 = vector.broadcast %cst_5 : f32 to vector<8x64xf32>
    %8 = arith.maximumf %6, %7 : vector<8x64xf32>
    %9 = arith.truncf %8 : vector<8x64xf32> to vector<8x64xbf16>
    %c0_6 = arith.constant 0 : index
    %c0_7 = arith.constant 0 : index
    %10 = vector.load %arg4[%c0_6, %c0_7] : memref<64x32xbf16, #tpu.memory_space<vmem>>, vector<64x32xbf16>
    %cst_8 = arith.constant dense<0.000000e+00> : vector<8x32xf32>
    %11 = tpu.matmul %9, %10, %cst_8 {dimension_numbers = #tpu.dot_dimension_numbers<[1], [0], [0], [1], [0, 0, 1, 1], [], []>} : vector<8x64xbf16>, vector<64x32xbf16>, vector<8x32xf32> -> vector<8x32xf32>
    %c0_9 = arith.constant 0 : index
    %c0_10 = arith.constant 0 : index
    %12 = vector.load %arg5[%c0_9, %c0_10] : memref<1x32xf32, #tpu.memory_space<vmem>>, vector<1x32xf32>
    %13 = vector.broadcast %12 : vector<1x32xf32> to vector<8x32xf32>
    %14 = arith.addf %11, %13 : vector<8x32xf32>
    %15 = arith.addf %14, %0 : vector<8x32xf32>
    %c0_11 = arith.constant 0 : index
    %c0_12 = arith.constant 0 : index
    %16 = vector.load %arg6[%c0_11, %c0_12] : memref<1x32xf32, #tpu.memory_space<vmem>>, vector<1x32xf32>
    %c0_13 = arith.constant 0 : index
    %c0_14 = arith.constant 0 : index
    %17 = vector.load %arg7[%c0_13, %c0_14] : memref<1x32xf32, #tpu.memory_space<vmem>>, vector<1x32xf32>
    %cst_15 = arith.constant dense<0.000000e+00> : vector<8xf32>
    %18 = vector.multi_reduction <add>, %15, %cst_15 [1] : vector<8x32xf32> to vector<8xf32>
    %19 = vector.shape_cast %18 : vector<8xf32> to vector<8x1xf32>
    %cst_16 = arith.constant 3.200000e+01 : f32
    %20 = vector.broadcast %cst_16 : f32 to vector<8x1xf32>
    %21 = arith.divf %19, %20 : vector<8x1xf32>
    %22 = vector.broadcast %21 : vector<8x1xf32> to vector<8x32xf32>
    %23 = arith.subf %15, %22 : vector<8x32xf32>
    %24 = arith.mulf %23, %23 : vector<8x32xf32>
    %cst_17 = arith.constant dense<0.000000e+00> : vector<8xf32>
    %25 = vector.multi_reduction <add>, %24, %cst_17 [1] : vector<8x32xf32> to vector<8xf32>
    %26 = vector.shape_cast %25 : vector<8xf32> to vector<8x1xf32>
    %cst_18 = arith.constant 3.200000e+01 : f32
    %27 = vector.broadcast %cst_18 : f32 to vector<8x1xf32>
    %28 = arith.divf %26, %27 : vector<8x1xf32>
    %29 = vector.broadcast %21 : vector<8x1xf32> to vector<8x32xf32>
    %30 = arith.subf %15, %29 : vector<8x32xf32>
    %cst_19 = arith.constant 9.99999974E-6 : f32
    %31 = vector.broadcast %cst_19 : f32 to vector<8x1xf32>
    %32 = arith.addf %28, %31 : vector<8x1xf32>
    %33 = math.rsqrt %32 : vector<8x1xf32>
    %34 = vector.broadcast %33 : vector<8x1xf32> to vector<8x32xf32>
    %35 = arith.mulf %30, %34 : vector<8x32xf32>
    %36 = vector.broadcast %16 : vector<1x32xf32> to vector<8x32xf32>
    %37 = arith.mulf %35, %36 : vector<8x32xf32>
    %38 = vector.broadcast %17 : vector<1x32xf32> to vector<8x32xf32>
    %39 = arith.addf %37, %38 : vector<8x32xf32>
    %c0_20 = arith.constant 0 : index
    %c0_21 = arith.constant 0 : index
    %40 = vector.load %arg8[%c0_20, %c0_21] : memref<8x32xf32, #tpu.memory_space<vmem>>, vector<8x32xf32>
    tpu.vector_store %arg8[%c0_20, %c0_21], %39 {strides = array<i32>} : memref<8x32xf32, #tpu.memory_space<vmem>>, vector<8x32xf32>,
    return
  }
  func.func @transform_0(%arg0: i32) -> (i32, i32) {
    %c0_i32 = arith.constant 0 : i32
    %c0_i32_0 = arith.constant 0 : i32
    return %arg0, %c0_i32 : i32, i32
  }
  func.func @transform_1(%arg0: i32) -> (i32, i32) {
    %c0_i32 = arith.constant 0 : i32
    %c0_i32_0 = arith.constant 0 : i32
    %c0_i32_1 = arith.constant 0 : i32
    return %c0_i32, %c0_i32_0 : i32, i32
  }
  func.func @transform_2(%arg0: i32) -> (i32, i32) {
    %c0_i32 = arith.constant 0 : i32
    %c0_i32_0 = arith.constant 0 : i32
    %c0_i32_1 = arith.constant 0 : i32
    return %c0_i32, %c0_i32_0 : i32, i32
  }
  func.func @transform_3(%arg0: i32) -> (i32, i32) {
    %c0_i32 = arith.constant 0 : i32
    %c0_i32_0 = arith.constant 0 : i32
    %c0_i32_1 = arith.constant 0 : i32
    return %c0_i32, %c0_i32_0 : i32, i32
  }
  func.func @transform_4(%arg0: i32) -> (i32, i32) {
    %c0_i32 = arith.constant 0 : i32
    %c0_i32_0 = arith.constant 0 : i32
    %c0_i32_1 = arith.constant 0 : i32
    return %c0_i32, %c0_i32_0 : i32, i32
  }
  func.func @transform_5(%arg0: i32) -> (i32, i32) {
    %c0_i32 = arith.constant 0 : i32
    %c0_i32_0 = arith.constant 0 : i32
    %c0_i32_1 = arith.constant 0 : i32
    return %c0_i32, %c0_i32_0 : i32, i32
  }
  func.func @transform_6(%arg0: i32) -> (i32, i32) {
    %c0_i32 = arith.constant 0 : i32
    %c0_i32_0 = arith.constant 0 : i32
    %c0_i32_1 = arith.constant 0 : i32
    return %c0_i32, %c0_i32_0 : i32, i32
  }
  func.func @transform_7(%arg0: i32) -> (i32, i32) {
    %c0_i32 = arith.constant 0 : i32
    %c0_i32_0 = arith.constant 0 : i32
    return %arg0, %c0_i32 : i32, i32
  }
}

module attributes {stable_mosaic.version = 11 : i64} {
  func.func @_ln_kernel(%arg0: i32, %arg1: memref<8x32xf32, #tpu.memory_space<vmem>>, %arg2: memref<1x32xf32, #tpu.memory_space<vmem>>, %arg3: memref<1x32xf32, #tpu.memory_space<vmem>>, %arg4: memref<8x32xf32, #tpu.memory_space<vmem>>) attributes {dimension_semantics = [#tpu.dimension_semantics<parallel>], iteration_bounds = array<i64: 2>, scalar_prefetch = 0 : i64, scratch_operands = 0 : i64, tpu.core_type = #tpu.core_type<tc>, window_params = [{transform_indices = @transform_0, window_bounds = array<i64: 8, 32>}, {pipeline_mode = #tpu.pipeline_mode<synchronous>, transform_indices = @transform_1, window_bounds = array<i64: 1, 32>}, {pipeline_mode = #tpu.pipeline_mode<synchronous>, transform_indices = @transform_2, window_bounds = array<i64: 1, 32>}, {transform_indices = @transform_3, window_bounds = array<i64: 8, 32>}]} {
    %c0 = arith.constant 0 : index
    %c0_0 = arith.constant 0 : index
    %0 = vector.load %arg1[%c0, %c0_0] : memref<8x32xf32, #tpu.memory_space<vmem>>, vector<8x32xf32>
    %c0_1 = arith.constant 0 : index
    %c0_2 = arith.constant 0 : index
    %1 = vector.load %arg2[%c0_1, %c0_2] : memref<1x32xf32, #tpu.memory_space<vmem>>, vector<1x32xf32>
    %c0_3 = arith.constant 0 : index
    %c0_4 = arith.constant 0 : index
    %2 = vector.load %arg3[%c0_3, %c0_4] : memref<1x32xf32, #tpu.memory_space<vmem>>, vector<1x32xf32>
    %cst = arith.constant dense<0.000000e+00> : vector<8xf32>
    %3 = vector.multi_reduction <add>, %0, %cst [1] : vector<8x32xf32> to vector<8xf32>
    %4 = vector.shape_cast %3 : vector<8xf32> to vector<8x1xf32>
    %cst_5 = arith.constant 3.200000e+01 : f32
    %5 = vector.broadcast %cst_5 : f32 to vector<8x1xf32>
    %6 = arith.divf %4, %5 : vector<8x1xf32>
    %7 = vector.broadcast %6 : vector<8x1xf32> to vector<8x32xf32>
    %8 = arith.subf %0, %7 : vector<8x32xf32>
    %9 = arith.mulf %8, %8 : vector<8x32xf32>
    %cst_6 = arith.constant dense<0.000000e+00> : vector<8xf32>
    %10 = vector.multi_reduction <add>, %9, %cst_6 [1] : vector<8x32xf32> to vector<8xf32>
    %11 = vector.shape_cast %10 : vector<8xf32> to vector<8x1xf32>
    %cst_7 = arith.constant 3.200000e+01 : f32
    %12 = vector.broadcast %cst_7 : f32 to vector<8x1xf32>
    %13 = arith.divf %11, %12 : vector<8x1xf32>
    %14 = vector.broadcast %6 : vector<8x1xf32> to vector<8x32xf32>
    %15 = arith.subf %0, %14 : vector<8x32xf32>
    %cst_8 = arith.constant 9.99999974E-6 : f32
    %16 = vector.broadcast %cst_8 : f32 to vector<8x1xf32>
    %17 = arith.addf %13, %16 : vector<8x1xf32>
    %18 = math.rsqrt %17 : vector<8x1xf32>
    %19 = vector.broadcast %18 : vector<8x1xf32> to vector<8x32xf32>
    %20 = arith.mulf %15, %19 : vector<8x32xf32>
    %21 = vector.broadcast %1 : vector<1x32xf32> to vector<8x32xf32>
    %22 = arith.mulf %20, %21 : vector<8x32xf32>
    %23 = vector.broadcast %2 : vector<1x32xf32> to vector<8x32xf32>
    %24 = arith.addf %22, %23 : vector<8x32xf32>
    %c0_9 = arith.constant 0 : index
    %c0_10 = arith.constant 0 : index
    %25 = vector.load %arg4[%c0_9, %c0_10] : memref<8x32xf32, #tpu.memory_space<vmem>>, vector<8x32xf32>
    tpu.vector_store %arg4[%c0_9, %c0_10], %24 {strides = array<i32>} : memref<8x32xf32, #tpu.memory_space<vmem>>, vector<8x32xf32>,
    return
  }
  func.func @transform_0(%arg0: i32) -> (i32, i32) {
    %c0_i32 = arith.constant 0 : i32
    %c0_i32_0 = arith.constant 0 : i32
    return %arg0, %c0_i32 : i32, i32
  }
  func.func @transform_1(%arg0: i32) -> (i32, i32) {
    %c0_i32 = arith.constant 0 : i32
    %c0_i32_0 = arith.constant 0 : i32
    %c0_i32_1 = arith.constant 0 : i32
    return %c0_i32, %c0_i32_0 : i32, i32
  }
  func.func @transform_2(%arg0: i32) -> (i32, i32) {
    %c0_i32 = arith.constant 0 : i32
    %c0_i32_0 = arith.constant 0 : i32
    %c0_i32_1 = arith.constant 0 : i32
    return %c0_i32, %c0_i32_0 : i32, i32
  }
  func.func @transform_3(%arg0: i32) -> (i32, i32) {
    %c0_i32 = arith.constant 0 : i32
    %c0_i32_0 = arith.constant 0 : i32
    return %arg0, %c0_i32 : i32, i32
  }
}

module attributes {stable_mosaic.version = 11 : i64} {
  func.func @_matmul_bias_kernel_1k(%arg0: i32, %arg1: i32, %arg2: memref<8x32xbf16, #tpu.memory_space<vmem>>, %arg3: memref<32x128xbf16, #tpu.memory_space<vmem>>, %arg4: memref<1x128xf32, #tpu.memory_space<vmem>>, %arg5: memref<8x128xf32, #tpu.memory_space<vmem>>) attributes {dimension_semantics = [#tpu.dimension_semantics<parallel>, #tpu.dimension_semantics<parallel>], iteration_bounds = array<i64: 2, 1>, scalar_prefetch = 0 : i64, scratch_operands = 0 : i64, tpu.core_type = #tpu.core_type<tc>, window_params = [{transform_indices = @transform_0, window_bounds = array<i64: 8, 32>}, {transform_indices = @transform_1, window_bounds = array<i64: 32, 128>}, {transform_indices = @transform_2, window_bounds = array<i64: 1, 128>}, {transform_indices = @transform_3, window_bounds = array<i64: 8, 128>}]} {
    %c0 = arith.constant 0 : index
    %c0_0 = arith.constant 0 : index
    %0 = vector.load %arg2[%c0, %c0_0] : memref<8x32xbf16, #tpu.memory_space<vmem>>, vector<8x32xbf16>
    %c0_1 = arith.constant 0 : index
    %c0_2 = arith.constant 0 : index
    %1 = vector.load %arg3[%c0_1, %c0_2] : memref<32x128xbf16, #tpu.memory_space<vmem>>, vector<32x128xbf16>
    %cst = arith.constant dense<0.000000e+00> : vector<8x128xf32>
    %2 = tpu.matmul %0, %1, %cst {dimension_numbers = #tpu.dot_dimension_numbers<[1], [0], [0], [1], [0, 0, 1, 1], [], []>} : vector<8x32xbf16>, vector<32x128xbf16>, vector<8x128xf32> -> vector<8x128xf32>
    %c0_3 = arith.constant 0 : index
    %c0_4 = arith.constant 0 : index
    %3 = vector.load %arg4[%c0_3, %c0_4] : memref<1x128xf32, #tpu.memory_space<vmem>>, vector<1x128xf32>
    %4 = vector.broadcast %3 : vector<1x128xf32> to vector<8x128xf32>
    %5 = arith.addf %2, %4 : vector<8x128xf32>
    %c0_5 = arith.constant 0 : index
    %c0_6 = arith.constant 0 : index
    %6 = vector.load %arg5[%c0_5, %c0_6] : memref<8x128xf32, #tpu.memory_space<vmem>>, vector<8x128xf32>
    tpu.vector_store %arg5[%c0_5, %c0_6], %5 {strides = array<i32>} : memref<8x128xf32, #tpu.memory_space<vmem>>, vector<8x128xf32>,
    return
  }
  func.func @transform_0(%arg0: i32, %arg1: i32) -> (i32, i32) {
    %c0_i32 = arith.constant 0 : i32
    %c0_i32_0 = arith.constant 0 : i32
    return %arg0, %c0_i32 : i32, i32
  }
  func.func @transform_1(%arg0: i32, %arg1: i32) -> (i32, i32) {
    %c0_i32 = arith.constant 0 : i32
    %c0_i32_0 = arith.constant 0 : i32
    return %c0_i32, %arg1 : i32, i32
  }
  func.func @transform_2(%arg0: i32, %arg1: i32) -> (i32, i32) {
    %c0_i32 = arith.constant 0 : i32
    %c0_i32_0 = arith.constant 0 : i32
    return %c0_i32, %arg1 : i32, i32
  }
  func.func @transform_3(%arg0: i32, %arg1: i32) -> (i32, i32) {
    %c0_i32 = arith.constant 0 : i32
    return %arg0, %arg1 : i32, i32
  }
}

</mosaic_0001>

<llo_original>
// kernel: transformer_forward.29
$region0: #{transformer_forward.29}
  #allocation0 [shape = 'u32[]', space=smem, size = 0x4, offset = 0x4, fixed_abs, tag = 'smem constant byte address 0x4 - core index']
  #allocation1 [shape = 'u32[144,128]{1,0:T(1,128)}', space=vmem, size = 0x12000, scoped, tag = 'internal scratch']
  %s0 = inlined_call_operand.vmem [shape: bf16[32,32], index: 0, kind: input, shape index: {}]
  %s1 = inlined_call_operand.vmem [shape: bf16[32,32], index: 1, kind: input, shape index: {}]
  %s2 = inlined_call_operand.vmem [shape: f32[1,32], index: 2, kind: input, shape index: {}]
  %s3 = inlined_call_operand.vmem [shape: f32[32,32], index: 3, kind: input, shape index: {}]
  %s4 = inlined_call_operand.vmem [shape: f32[1,32], index: 4, kind: input, shape index: {}]
  %s5 = inlined_call_operand.vmem [shape: f32[1,32], index: 5, kind: input, shape index: {}]
  %s6 = inlined_call_operand.vmem [shape: f32[32,32], index: 6, kind: output, shape index: {}]
  %s7 = sld [smem:[#allocation0]]
  $region57: #{transformer_forward.29} parent=0
    _
  %s9 = ssub.s32 1, %s7
  %s10 = scalar_select 0, %s9, %s7
  loop: start=0, step=1, limit=4
  $region2: #{transformer_forward.29} parent=0 // loop_pre_header
    _
  $region3: #{transformer_forward.29} parent=0 // loop_header
    %s12 = sphi 0, %s16
    %p13 = scmp.ge.s32.totalorder %s12, 4
    %s22 = sphi 0, %s24
    %s25 = sphi 0, %s22
    %s26 = sphi 0, %s25
    %s42 = sphi 0, %s26
    %s46 = sphi 0, %s46
    %s48 = sphi 0, %s46
    %s49 = sphi 0, %s48
    %s63 = sphi 0, %s49
    %s67 = sphi 0, %s67
    %s69 = sphi 0, %s67
    %s70 = sphi 0, %s69
    %s84 = sphi 0, %s70
    %s90 = sphi 0, %s92
    %s93 = sphi 0, %s90
    %s94 = sphi 0, %s93
    %s110 = sphi 0, %s94
    %s114 = sphi 0, %s114
    %s116 = sphi 0, %s114
    %s117 = sphi 0, %s116
    %s131 = sphi 0, %s117
    %s135 = sphi 0, %s135
    %s137 = sphi 0, %s135
    %s138 = sphi 0, %s137
    %s152 = sphi 0, %s138
    %s158 = sphi 0, %s160
    %s161 = sphi 0, %s158
    %s162 = sphi 0, %s161
    %s178 = sphi 0, %s162
  $region4: #{transformer_forward.29} parent=0 // loop_header_branch
    %15 = sbr.rel (%p13) target = $region8
  $region5: #{transformer_forward.29} parent=0 // loop_body
    %s17 = ssub.s32 %s12, 1
    %s18 = ssub.s32 %s12, 2
    %s19 = sadd.s32 %s12, 1
    %s20 = ssub.s32 %s12, %s19
    %p21 = scmp.eq.s32.totalorder %s20, 0
    %s23 = sadd.s32 %s22, 1
    %s24 = scalar_select %p21, %s22, %s23
    %p27 = pneg %p21
    %p28 = scmp.eq.s32.totalorder %s12, 1
    %p29 = por %p27, %p28
    %p30 = scmp.ne.s32.totalorder %s22, %s25
    %p31 = scmp.eq.s32.totalorder %s12, 0
    %p32 = por %p30, %p31
    %p33 = scmp.ne.s32.totalorder %s22, %s25
    %p34 = scmp.eq.s32.totalorder %s17, 1
    %p35 = por %p33, %p34
    %p36 = scmp.ne.s32.totalorder %s25, %s26
    %p37 = scmp.eq.s32.totalorder %s17, 0
    %p38 = por %p36, %p37
    %p39 = scmp.ne.s32.totalorder %s25, %s26
    %p40 = scmp.eq.s32.totalorder %s18, 1
    %p41 = por %p39, %p40
    %p43 = scmp.ne.s32.totalorder %s26, %s42
    %p44 = scmp.eq.s32.totalorder %s18, 0
    %p45 = por %p43, %p44
    %s47 = sadd.s32 %s46, 1
    %p50 = scmp.eq.s32.totalorder %s12, 1
    %p51 = scmp.ne.s32.totalorder %s46, %s48
    %p52 = scmp.eq.s32.totalorder %s12, 0
    %p53 = por %p51, %p52
    %p54 = scmp.ne.s32.totalorder %s46, %s48
    %p55 = scmp.eq.s32.totalorder %s17, 1
    %p56 = por %p54, %p55
    %p57 = scmp.ne.s32.totalorder %s48, %s49
    %p58 = scmp.eq.s32.totalorder %s17, 0
    %p59 = por %p57, %p58
    %p60 = scmp.ne.s32.totalorder %s48, %s49
    %p61 = scmp.eq.s32.totalorder %s18, 1
    %p62 = por %p60, %p61
    %p64 = scmp.ne.s32.totalorder %s49, %s63
    %p65 = scmp.eq.s32.totalorder %s18, 0
    %p66 = por %p64, %p65
    %s68 = sadd.s32 %s67, 1
    %p71 = scmp.eq.s32.totalorder %s12, 1
    %p72 = scmp.ne.s32.totalorder %s67, %s69
    %p73 = scmp.eq.s32.totalorder %s12, 0
    %p74 = por %p72, %p73
    %p75 = scmp.ne.s32.totalorder %s67, %s69
    %p76 = scmp.eq.s32.totalorder %s17, 1
    %p77 = por %p75, %p76
    %p78 = scmp.ne.s32.totalorder %s69, %s70
    %p79 = scmp.eq.s32.totalorder %s17, 0
    %p80 = por %p78, %p79
    %p81 = scmp.ne.s32.totalorder %s69, %s70
    %p82 = scmp.eq.s32.totalorder %s18, 1
    %p83 = por %p81, %p82
    %p85 = scmp.ne.s32.totalorder %s70, %s84
    %p86 = scmp.eq.s32.totalorder %s18, 0
    %p87 = por %p85, %p86
    %s88 = ssub.s32 %s12, %s19
    %p89 = scmp.eq.s32.totalorder %s88, 0
    %s91 = sadd.s32 %s90, 1
    %s92 = scalar_select %p89, %s90, %s91
    %p95 = pneg %p89
    %p96 = scmp.eq.s32.totalorder %s12, 1
    %p97 = por %p95, %p96
    %p98 = scmp.ne.s32.totalorder %s90, %s93
    %p99 = scmp.eq.s32.totalorder %s12, 0
    %p100 = por %p98, %p99
    %p101 = scmp.ne.s32.totalorder %s90, %s93
    %p102 = scmp.eq.s32.totalorder %s17, 1
    %p103 = por %p101, %p102
    %p104 = scmp.ne.s32.totalorder %s93, %s94
    %p105 = scmp.eq.s32.totalorder %s17, 0
    %p106 = por %p104, %p105
    %p107 = scmp.ne.s32.totalorder %s93, %s94
    %p108 = scmp.eq.s32.totalorder %s18, 1
    %p109 = por %p107, %p108
    %p111 = scmp.ne.s32.totalorder %s94, %s110
    %p112 = scmp.eq.s32.totalorder %s18, 0
    %p113 = por %p111, %p112
    %s115 = sadd.s32 %s114, 1
    %p118 = scmp.eq.s32.totalorder %s12, 1
    %p119 = scmp.ne.s32.totalorder %s114, %s116
    %p120 = scmp.eq.s32.totalorder %s12, 0
    %p121 = por %p119, %p120
    %p122 = scmp.ne.s32.totalorder %s114, %s116
    %p123 = scmp.eq.s32.totalorder %s17, 1
    %p124 = por %p122, %p123
    %p125 = scmp.ne.s32.totalorder %s116, %s117
    %p126 = scmp.eq.s32.totalorder %s17, 0
    %p127 = por %p125, %p126
    %p128 = scmp.ne.s32.totalorder %s116, %s117
    %p129 = scmp.eq.s32.totalorder %s18, 1
    %p130 = por %p128, %p129
    %p132 = scmp.ne.s32.totalorder %s117, %s131
    %p133 = scmp.eq.s32.totalorder %s18, 0
    %p134 = por %p132, %p133
    %s136 = sadd.s32 %s135, 1
    %p139 = scmp.eq.s32.totalorder %s12, 1
    %p140 = scmp.ne.s32.totalorder %s135, %s137
    %p141 = scmp.eq.s32.totalorder %s12, 0
    %p142 = por %p140, %p141
    %p143 = scmp.ne.s32.totalorder %s135, %s137
    %p144 = scmp.eq.s32.totalorder %s17, 1
    %p145 = por %p143, %p144
    %p146 = scmp.ne.s32.totalorder %s137, %s138
    %p147 = scmp.eq.s32.totalorder %s17, 0
    %p148 = por %p146, %p147
    %p149 = scmp.ne.s32.totalorder %s137, %s138
    %p150 = scmp.eq.s32.totalorder %s18, 1
    %p151 = por %p149, %p150
    %p153 = scmp.ne.s32.totalorder %s138, %s152
    %p154 = scmp.eq.s32.totalorder %s18, 0
    %p155 = por %p153, %p154
    %s156 = ssub.s32 %s12, %s19
    %p157 = scmp.eq.s32.totalorder %s156, 0
    %s159 = sadd.s32 %s158, 1
    %s160 = scalar_select %p157, %s158, %s159
    %p163 = pneg %p157
    %p164 = scmp.eq.s32.totalorder %s12, 1
    %p165 = por %p163, %p164
    %p166 = scmp.ne.s32.totalorder %s158, %s161
    %p167 = scmp.eq.s32.totalorder %s12, 0
    %p168 = por %p166, %p167
    %p169 = scmp.ne.s32.totalorder %s158, %s161
    %p170 = scmp.eq.s32.totalorder %s17, 1
    %p171 = por %p169, %p170
    %p172 = scmp.ne.s32.totalorder %s161, %s162
    %p173 = scmp.eq.s32.totalorder %s17, 0
    %p174 = por %p172, %p173
    %p175 = scmp.ne.s32.totalorder %s161, %s162
    %p176 = scmp.eq.s32.totalorder %s18, 1
    %p177 = por %p175, %p176
    %p179 = scmp.ne.s32.totalorder %s162, %s178
    %p180 = scmp.eq.s32.totalorder %s18, 0
    %p181 = por %p179, %p180
    %p182 = scmp.le.s32.totalorder 1, %s12
    %p183 = scmp.lt.s32.totalorder %s12, 3
    %p184 = pnand %p182, %p183
    %p185 = pneg %p184
    // Predicated region
    $region9: #{transformer_forward.29} parent=5 // pred_check
      _
    $region10: #{transformer_forward.29} parent=5 // pred_check_branch
      %187 = sbr.rel (%p184) target = $region12
    $region11: #{transformer_forward.29} parent=5 // pred_region
      %s188 = ssub.s32 %s12, 1
      // Predicated region
      $region13: #{transformer_forward.29} parent=11 // pred_check
        %p189 = pneg %p59
      $region14: #{transformer_forward.29} parent=11 // pred_check_branch
        %191 = sbr.rel (%p189) target = $region16
      $region15: #{transformer_forward.29} parent=11 // pred_region
        _
      $region16: #{transformer_forward.29} parent=11 // pred_fallthru
        _
      // Predicated region
      $region17: #{transformer_forward.29} parent=11 // pred_check
        %p192 = pneg %p80
      $region18: #{transformer_forward.29} parent=11 // pred_check_branch
        %194 = sbr.rel (%p192) target = $region20
      $region19: #{transformer_forward.29} parent=11 // pred_region
        _
      $region20: #{transformer_forward.29} parent=11 // pred_fallthru
        _
      // Predicated region
      $region21: #{transformer_forward.29} parent=11 // pred_check
        %p195 = pneg %p127
      $region22: #{transformer_forward.29} parent=11 // pred_check_branch
        %197 = sbr.rel (%p195) target = $region24
      $region23: #{transformer_forward.29} parent=11 // pred_region
        _
      $region24: #{transformer_forward.29} parent=11 // pred_fallthru
        _
      // Predicated region
      $region25: #{transformer_forward.29} parent=11 // pred_check
        %p198 = pneg %p148
      $region26: #{transformer_forward.29} parent=11 // pred_check_branch
        %200 = sbr.rel (%p198) target = $region28
      $region27: #{transformer_forward.29} parent=11 // pred_region
        _
      $region28: #{transformer_forward.29} parent=11 // pred_fallthru
        _
    $region12: #{transformer_forward.29} parent=5 // pred_fallthru
      _
    %p201 = scmp.lt.s32.totalorder %s12, 2
    // Predicated region
    $region29: #{transformer_forward.29} parent=5 // pred_check
      %p202 = pneg %p201
    $region30: #{transformer_forward.29} parent=5 // pred_check_branch
      %204 = sbr.rel (%p202) target = $region32
    $region31: #{transformer_forward.29} parent=5 // pred_region
      // Predicated region
      $region33: #{transformer_forward.29} parent=31 // pred_check
        %p205 = pneg %p32
      $region34: #{transformer_forward.29} parent=31 // pred_check_branch
        %207 = sbr.rel (%p205) target = $region36
      $region35: #{transformer_forward.29} parent=31 // pred_region
        %s208 = smul.u32 2, %s12
        %p209 = scmp.lt.s32.totalorder %s208, 3
        %s210 = scalar_select %p209, %s208, 3
        %s211 = smul.addr %s210, 4
        %s212 = scalar_lea.vmem %s0, %s211
        %s213 = smul.u32 2, %s12
      $region36: #{transformer_forward.29} parent=31 // pred_fallthru
        _
      // Predicated region
      $region37: #{transformer_forward.29} parent=31 // pred_check
        %p214 = pneg %p100
      $region38: #{transformer_forward.29} parent=31 // pred_check_branch
        %216 = sbr.rel (%p214) target = $region40
      $region39: #{transformer_forward.29} parent=31 // pred_region
        %s217 = smul.u32 2, %s12
        %p218 = scmp.lt.s32.totalorder %s217, 3
        %s219 = scalar_select %p218, %s217, 3
        %s220 = smul.addr %s219, 8
        %s221 = scalar_lea.vmem %s3, %s220
        %s222 = smul.u32 2, %s12
      $region40: #{transformer_forward.29} parent=31 // pred_fallthru
        _
    $region32: #{transformer_forward.29} parent=5 // pred_fallthru
      _
    %p223 = scmp.le.s32.totalorder 1, %s12
    %p224 = scmp.lt.s32.totalorder %s12, 3
    %p225 = pnand %p223, %p224
    %p226 = pneg %p225
    // Predicated region
    $region41: #{transformer_forward.29} parent=5 // pred_check
      _
    $region42: #{transformer_forward.29} parent=5 // pred_check_branch
      %228 = sbr.rel (%p225) target = $region44
    $region43: #{transformer_forward.29} parent=5 // pred_region
      %s229 = ssub.s32 %s12, 1
      %s230 = smul.u32 2, %s17
      %p231 = scmp.lt.s32.totalorder %s230, 3
      %s232 = scalar_select %p231, %s230, 3
      %s233 = smul.addr %s232, 4
      %s234 = scalar_lea.vmem %s0, %s233
      %p235 = pneg %p38
      %p236 = pneg %p35
      %p237 = pneg %p59
      %p238 = pneg %p56
      %p239 = pneg %p80
      %p240 = pneg %p77
      %s241 = smul.u32 2, %s17
      %p242 = scmp.lt.s32.totalorder %s241, 3
      %s243 = scalar_select %p242, %s241, 3
      %s244 = smul.addr %s243, 8
      %s245 = scalar_lea.vmem %s3, %s244
      %p246 = pneg %p106
      %p247 = pneg %p103
      %p248 = pneg %p127
      %p249 = pneg %p124
      %p250 = pneg %p148
      %p251 = pneg %p145
      %p252 = pneg %p174
      %p253 = pneg %p171
      %s254 = smul.u32 2, %s17
      %p255 = scmp.lt.s32.totalorder %s254, 3
      %s256 = scalar_select %p255, %s254, 3
      %s257 = smul.addr %s256, 8
      %s258 = scalar_lea.vmem %s6, %s257
      %s259 = smul.u32 2, %s17
      %p260 = scmp.lt.s32.totalorder %s259, 3
      %s261 = scalar_select %p260, %s259, 3
      %s262 = smul.addr %s261, 4
      %s263 = scalar_lea.vmem %s0, %s262
      %s264 = smul.u32 2, %s17
      %s265 = smul.u32 2, %s17
      %p266 = scmp.lt.s32.totalorder %s265, 3
      %s267 = scalar_select %p266, %s265, 3
      %s268 = smul.addr %s267, 8
      %s269 = scalar_lea.vmem %s3, %s268
      %s270 = smul.u32 2, %s17
      %s271 = smul.u32 2, %s17
      %p272 = scmp.lt.s32.totalorder %s271, 3
      %s273 = scalar_select %p272, %s271, 3
      %s274 = smul.addr %s273, 8
      %s275 = scalar_lea.vmem %s6, %s274
      %s276 = smul.u32 2, %s17
      %v278 = vld [vmem:[%s263] sm:$0xf]
      %v279 = vld [vmem:[%s263 + $0x4] sm:$0xf]
      %v280 = vld [vmem:[%s1] sm:$0xf]
      %v281 = vld [vmem:[%s1 + $0x4] sm:$0xf]
      %v282 = vld [vmem:[%s1 + $0x8] sm:$0xf]
      %v283 = vld [vmem:[%s1 + $0xc] sm:$0xf]
      %v284 = vld [vmem:[%s2] sm:$0x1]
      %v286 = vlaneseq
      %v287 = vshrl.u32 %v286, 7
      %v288 = vsub.s32 0, %v287
      %v289 = vrot.slane %v284, %v288
      %v293 = vunpack.c.l.b16 %v278
      %v294 = vunpack.c.l.b16 %v279
      %v295 = vpack.c.b16 %v294, %v293
      %v300 = vunpack.c.l.b16 %v280
      %v301 = vunpack.c.l.b16 %v281
      %v302 = vunpack.c.l.b16 %v282
      %v303 = vunpack.c.l.b16 %v283
      %v304 = vpack.c.b16 %v301, %v300
      %v305 = vpack.c.b16 %v303, %v302
      %vm308 = vcmask 261120
      %v310 = vsel %vm308, %v295, 0
      %312 = vmatprep.subr.bf16.mxu0 0
      %313 = vmatpush1.bf16.msra.mxu0 0
      %314 = vmatprep.subr.bf16.mxu0 0
      %315 = vmatpush1.bf16.msra.mxu0 0
      %316 = vmatprep.subr.bf16.mxu0 0
      %317 = vmatpush1.bf16.msra.mxu0 0
      %318 = vmatprep.subr.bf16.mxu0 0
      %319 = vmatpush1.bf16.msra.mxu0 0
      %320 = vmatprep.subr.bf16.mxu0 0
      %321 = vmatpush1.bf16.msra.mxu0 0
      %322 = vmatprep.subr.bf16.mxu0 0
      %323 = vmatpush1.bf16.msra.mxu0 0
      %324 = vmatprep.subr.bf16.mxu0 0
      %325 = vmatpush1.bf16.msra.mxu0 %v305
      %326 = vmatprep.subr.bf16.mxu0 0
      %327 = vmatpush1.bf16.msra.mxu0 %v304
      %328 = vmatprep.subr.bf16.mxu0 0
      %329 = vmatpush2.bf16.msra.mxu0 0
      %330 = vmatprep.subr.bf16.mxu0 0
      %331 = vmatpush2.bf16.msra.mxu0 0
      %332 = vmatprep.subr.bf16.mxu0 0
      %333 = vmatpush2.bf16.msra.mxu0 0
      %334 = vmatprep.subr.bf16.mxu0 0
      %335 = vmatpush2.bf16.msra.mxu0 0
      %336 = vmatprep.subr.bf16.mxu0 0
      %337 = vmatpush2.bf16.msra.mxu0 0
      %338 = vmatprep.subr.bf16.mxu0 0
      %339 = vmatpush2.bf16.msra.mxu0 0
      %340 = vmatprep.subr.bf16.mxu0 0
      %341 = vmatpush2.bf16.msra.mxu0 0
      %342 = vmatprep.subr.bf16.mxu0 0
      %343 = vmatpush2.bf16.msra.mxu0 0
      %344 = vmatprep.mubr.bf16.mxu0 0
      %345 = vmatmul.mubr.bf16.gmra.mxu0 %v310
      %v346 = vpop.f32.mrf.mxu0
      %v347 = vadd.f32 %v289, %v346
      %v348 = vpop.f32.mrf.mxu0
      %v349 = vpop.f32.mrf.mxu0
      %v350 = vadd.f32 %v289, %v349
      %v351 = vpop.f32.mrf.mxu0
      %352 = vdwg.mxu0
      %v353 = vld [vmem:[%s269] sm:$0xff]
      %v354 = vld [vmem:[%s269 + $0x8] sm:$0xff]
      %v355 = vadd.f32 %v347, %v353
      %v356 = vadd.f32 %v350, %v354
      %v357 = vld [vmem:[%s4] sm:$0x1]
      %v358 = vld [vmem:[%s5] sm:$0x1]
      %v359 = vsel %vm308, %v355, 0.0
      %360 = vadd.xlane.f32.xlu0 %v359
      %v361 = vpop.xlane.xlu0 %360
      %v362 = vsel %vm308, %v356, 0.0
      %363 = vadd.xlane.f32.xlu0 %v362
      %v364 = vpop.xlane.xlu0 %363
      %v365 = vrcp.pop 32.0
      %v366 = vmul.f32 %v361, %v365
      %v367 = vmul.f32 %v364, %v365
      %v368 = vsub.f32 %v355, %v366
      %v369 = vsub.f32 %v356, %v367
      %v370 = vmul.f32 %v368, %v368
      %v371 = vmul.f32 %v369, %v369
      %v372 = vsel %vm308, %v370, 0.0
      %373 = vadd.xlane.f32.xlu0 %v372
      %v374 = vpop.xlane.xlu0 %373
      %v375 = vsel %vm308, %v371, 0.0
      %376 = vadd.xlane.f32.xlu0 %v375
      %v377 = vpop.xlane.xlu0 %376
      %v378 = vmul.f32 %v374, %v365
      %v379 = vmul.f32 %v377, %v365
      %v380 = vadd.f32 %v378, 1e-05
      %v381 = vadd.f32 %v379, 1e-05
      %v382 = vrsqrt.pop %v380
      %v383 = vrsqrt.pop %v381
      %v384 = vmul.f32 %v368, %v382
      %v385 = vmul.f32 %v369, %v383
      %v387 = vlaneseq
      %v388 = vshrl.u32 %v387, 7
      %v389 = vsub.s32 0, %v388
      %v390 = vrot.slane %v357, %v389
      %v392 = vmul.f32 %v384, %v390
      %v393 = vmul.f32 %v385, %v390
      %v395 = vlaneseq
      %v396 = vshrl.u32 %v395, 7
      %v397 = vsub.s32 0, %v396
      %v398 = vrot.slane %v358, %v397
      %v400 = vadd.f32 %v392, %v398
      %v401 = vadd.f32 %v393, %v398
      %402 = vst.msk [vmem:[%s275] sm:$0xff] %vm308, %v400
      %403 = vst.msk [vmem:[%s275 + $0x8] sm:$0xff] %vm308, %v401
      %s404 = smul.u32 2, %s17
      %p405 = scmp.lt.s32.totalorder %s404, 3
      %s406 = scalar_select %p405, %s404, 3
      %s407 = smul.addr %s406, 8
      %s408 = scalar_lea.vmem %s6, %s407
      // Predicated region
      $region45: #{transformer_forward.29} parent=43 // pred_check
        %p409 = pneg %p171
      $region46: #{transformer_forward.29} parent=43 // pred_check_branch
        %411 = sbr.rel (%p409) target = $region48
      $region47: #{transformer_forward.29} parent=43 // pred_region
        %s412 = smul.u32 2, %s17
      $region48: #{transformer_forward.29} parent=43 // pred_fallthru
        _
    $region44: #{transformer_forward.29} parent=5 // pred_fallthru
      _
    %p413 = scmp.le.s32.totalorder 2, %s12
    // Predicated region
    $region49: #{transformer_forward.29} parent=5 // pred_check
      %p414 = pneg %p413
    $region50: #{transformer_forward.29} parent=5 // pred_check_branch
      %416 = sbr.rel (%p414) target = $region52
    $region51: #{transformer_forward.29} parent=5 // pred_region
      %s417 = ssub.s32 %s12, 2
      // Predicated region
      $region53: #{transformer_forward.29} parent=51 // pred_check
        %p418 = pneg %p177
      $region54: #{transformer_forward.29} parent=51 // pred_check_branch
        %420 = sbr.rel (%p418) target = $region56
      $region55: #{transformer_forward.29} parent=51 // pred_region
        %s421 = smul.u32 2, %s18
        %p422 = scmp.lt.s32.totalorder %s421, 3
        %s423 = scalar_select %p422, %s421, 3
        %s424 = smul.addr %s423, 8
        %s425 = scalar_lea.vmem %s6, %s424
      $region56: #{transformer_forward.29} parent=51 // pred_fallthru
        _
    $region52: #{transformer_forward.29} parent=5 // pred_fallthru
      _
  $region6: #{transformer_forward.29} parent=0 // loop_footer
    %s16 = sadd.s32 1, %s12
  $region7: #{transformer_forward.29} parent=0 // loop_footer_branch
    %11 = sbr.rel target = $region3
  $region8: #{transformer_forward.29} parent=0 // loop_exit
    _

// kernel: transformer_forward.27
$region0: #{transformer_forward.27}
  #allocation0 [shape = 'u32[]', space=smem, size = 0x4, offset = 0x4, fixed_abs, tag = 'smem constant byte address 0x4 - core index']
  #allocation1 [shape = 'u32[144,128]{1,0:T(1,128)}', space=vmem, size = 0x12000, scoped, tag = 'internal scratch']
  %s0 = inlined_call_operand.vmem [shape: bf16[32,32], index: 0, kind: input, shape index: {}]
  %s1 = inlined_call_operand.vmem [shape: bf16[32,128], index: 1, kind: input, shape index: {}]
  %s2 = inlined_call_operand.vmem [shape: f32[1,128], index: 2, kind: input, shape index: {}]
  %s3 = inlined_call_operand.vmem [shape: bf16[32,128], index: 3, kind: output, shape index: {}]
  %s4 = sld [smem:[#allocation0]]
  $region45: #{transformer_forward.27} parent=0
    _
  %s6 = ssub.s32 1, %s4
  %s7 = scalar_select 0, %s6, %s4
  loop: start=0, step=1, limit=4
  $region2: #{transformer_forward.27} parent=0 // loop_pre_header
    _
  $region3: #{transformer_forward.27} parent=0 // loop_header
    %s9 = sphi 0, %s13
    %p10 = scmp.ge.s32.totalorder %s9, 4
    %s16 = sphi 0, %s28
    %s17 = sphi 0, %s24
    %s18 = sphi 0, %s16
    %s19 = sphi 0, %s17
    %s20 = sphi 0, %s18
    %s21 = sphi 0, %s19
    %s31 = sphi 0, %s33
    %s34 = sphi 0, %s31
    %s35 = sphi 0, %s34
    %s51 = sphi 0, %s35
    %s57 = sphi 0, %s59
    %s60 = sphi 0, %s57
    %s61 = sphi 0, %s60
    %s77 = sphi 0, %s61
    %s83 = sphi 0, %s85
    %s86 = sphi 0, %s83
    %s87 = sphi 0, %s86
    %s103 = sphi 0, %s87
    %s111 = sphi 0, %s113
    %s114 = sphi 0, %s111
    %s115 = sphi 0, %s114
    %s131 = sphi 0, %s115
  $region4: #{transformer_forward.27} parent=0 // loop_header_branch
    %12 = sbr.rel (%p10) target = $region8
  $region5: #{transformer_forward.27} parent=0 // loop_body
    %s14 = ssub.s32 %s9, 1
    %s15 = ssub.s32 %s9, 2
    %s22 = sadd.s32 1, %s17
    %p23 = scmp.ge.s32.totalorder %s22, 1
    %s24 = scalar_select %p23, 0, %s22
    %s25 = sadd.s32 1, %s16
    %s26 = scalar_select %p23, %s25, %s16
    %p27 = scmp.ge.s32.totalorder %s26, 2
    %s28 = scalar_select %p27, 0, %s26
    %s29 = ssub.s32 %s16, %s28
    %p30 = scmp.eq.s32.totalorder %s29, 0
    %s32 = sadd.s32 %s31, 1
    %s33 = scalar_select %p30, %s31, %s32
    %p36 = pneg %p30
    %p37 = scmp.eq.s32.totalorder %s9, 1
    %p38 = por %p36, %p37
    %p39 = scmp.ne.s32.totalorder %s31, %s34
    %p40 = scmp.eq.s32.totalorder %s9, 0
    %p41 = por %p39, %p40
    %p42 = scmp.ne.s32.totalorder %s31, %s34
    %p43 = scmp.eq.s32.totalorder %s14, 1
    %p44 = por %p42, %p43
    %p45 = scmp.ne.s32.totalorder %s34, %s35
    %p46 = scmp.eq.s32.totalorder %s14, 0
    %p47 = por %p45, %p46
    %p48 = scmp.ne.s32.totalorder %s34, %s35
    %p49 = scmp.eq.s32.totalorder %s15, 1
    %p50 = por %p48, %p49
    %p52 = scmp.ne.s32.totalorder %s35, %s51
    %p53 = scmp.eq.s32.totalorder %s15, 0
    %p54 = por %p52, %p53
    %s55 = ssub.s32 %s17, %s24
    %p56 = scmp.eq.s32.totalorder %s55, 0
    %s58 = sadd.s32 %s57, 1
    %s59 = scalar_select %p56, %s57, %s58
    %p62 = pneg %p56
    %p63 = scmp.eq.s32.totalorder %s9, 1
    %p64 = por %p62, %p63
    %p65 = scmp.ne.s32.totalorder %s57, %s60
    %p66 = scmp.eq.s32.totalorder %s9, 0
    %p67 = por %p65, %p66
    %p68 = scmp.ne.s32.totalorder %s57, %s60
    %p69 = scmp.eq.s32.totalorder %s14, 1
    %p70 = por %p68, %p69
    %p71 = scmp.ne.s32.totalorder %s60, %s61
    %p72 = scmp.eq.s32.totalorder %s14, 0
    %p73 = por %p71, %p72
    %p74 = scmp.ne.s32.totalorder %s60, %s61
    %p75 = scmp.eq.s32.totalorder %s15, 1
    %p76 = por %p74, %p75
    %p78 = scmp.ne.s32.totalorder %s61, %s77
    %p79 = scmp.eq.s32.totalorder %s15, 0
    %p80 = por %p78, %p79
    %s81 = ssub.s32 %s17, %s24
    %p82 = scmp.eq.s32.totalorder %s81, 0
    %s84 = sadd.s32 %s83, 1
    %s85 = scalar_select %p82, %s83, %s84
    %p88 = pneg %p82
    %p89 = scmp.eq.s32.totalorder %s9, 1
    %p90 = por %p88, %p89
    %p91 = scmp.ne.s32.totalorder %s83, %s86
    %p92 = scmp.eq.s32.totalorder %s9, 0
    %p93 = por %p91, %p92
    %p94 = scmp.ne.s32.totalorder %s83, %s86
    %p95 = scmp.eq.s32.totalorder %s14, 1
    %p96 = por %p94, %p95
    %p97 = scmp.ne.s32.totalorder %s86, %s87
    %p98 = scmp.eq.s32.totalorder %s14, 0
    %p99 = por %p97, %p98
    %p100 = scmp.ne.s32.totalorder %s86, %s87
    %p101 = scmp.eq.s32.totalorder %s15, 1
    %p102 = por %p100, %p101
    %p104 = scmp.ne.s32.totalorder %s87, %s103
    %p105 = scmp.eq.s32.totalorder %s15, 0
    %p106 = por %p104, %p105
    %s107 = ssub.s32 %s16, %s28
    %s108 = ssub.s32 %s17, %s24
    %s109 = sor.u32 %s107, %s108
    %p110 = scmp.eq.s32.totalorder %s109, 0
    %s112 = sadd.s32 %s111, 1
    %s113 = scalar_select %p110, %s111, %s112
    %p116 = pneg %p110
    %p117 = scmp.eq.s32.totalorder %s9, 1
    %p118 = por %p116, %p117
    %p119 = scmp.ne.s32.totalorder %s111, %s114
    %p120 = scmp.eq.s32.totalorder %s9, 0
    %p121 = por %p119, %p120
    %p122 = scmp.ne.s32.totalorder %s111, %s114
    %p123 = scmp.eq.s32.totalorder %s14, 1
    %p124 = por %p122, %p123
    %p125 = scmp.ne.s32.totalorder %s114, %s115
    %p126 = scmp.eq.s32.totalorder %s14, 0
    %p127 = por %p125, %p126
    %p128 = scmp.ne.s32.totalorder %s114, %s115
    %p129 = scmp.eq.s32.totalorder %s15, 1
    %p130 = por %p128, %p129
    %p132 = scmp.ne.s32.totalorder %s115, %s131
    %p133 = scmp.eq.s32.totalorder %s15, 0
    %p134 = por %p132, %p133
    %p135 = scmp.le.s32.totalorder 1, %s9
    %p136 = scmp.lt.s32.totalorder %s9, 3
    %p137 = pnand %p135, %p136
    %p138 = pneg %p137
    // Predicated region
    $region9: #{transformer_forward.27} parent=5 // pred_check
      _
    $region10: #{transformer_forward.27} parent=5 // pred_check_branch
      %140 = sbr.rel (%p137) target = $region12
    $region11: #{transformer_forward.27} parent=5 // pred_region
      %s141 = ssub.s32 %s9, 1
      // Predicated region
      $region13: #{transformer_forward.27} parent=11 // pred_check
        %p142 = pneg %p73
      $region14: #{transformer_forward.27} parent=11 // pred_check_branch
        %144 = sbr.rel (%p142) target = $region16
      $region15: #{transformer_forward.27} parent=11 // pred_region
        %p145 = scmp.lt.s32.totalorder %s19, 0
        %s146 = scalar_select %p145, %s19, 0
        %s147 = smul.addr %s146, 4
        %s148 = scalar_lea.vmem %s1, %s147
      $region16: #{transformer_forward.27} parent=11 // pred_fallthru
        _
      // Predicated region
      $region17: #{transformer_forward.27} parent=11 // pred_check
        %p149 = pneg %p99
      $region18: #{transformer_forward.27} parent=11 // pred_check_branch
        %151 = sbr.rel (%p149) target = $region20
      $region19: #{transformer_forward.27} parent=11 // pred_region
        %p152 = scmp.lt.s32.totalorder %s19, 0
        %s153 = scalar_select %p152, %s19, 0
        %s154 = scalar_lea.vmem %s2, %s153
      $region20: #{transformer_forward.27} parent=11 // pred_fallthru
        _
    $region12: #{transformer_forward.27} parent=5 // pred_fallthru
      _
    %p155 = scmp.lt.s32.totalorder %s9, 2
    // Predicated region
    $region21: #{transformer_forward.27} parent=5 // pred_check
      %p156 = pneg %p155
    $region22: #{transformer_forward.27} parent=5 // pred_check_branch
      %158 = sbr.rel (%p156) target = $region24
    $region23: #{transformer_forward.27} parent=5 // pred_region
      // Predicated region
      $region25: #{transformer_forward.27} parent=23 // pred_check
        %p159 = pneg %p41
      $region26: #{transformer_forward.27} parent=23 // pred_check_branch
        %161 = sbr.rel (%p159) target = $region28
      $region27: #{transformer_forward.27} parent=23 // pred_region
        %s162 = smul.u32 2, %s16
        %p163 = scmp.lt.s32.totalorder %s162, 3
        %s164 = scalar_select %p163, %s162, 3
        %s165 = smul.addr %s164, 4
        %s166 = scalar_lea.vmem %s0, %s165
        %s167 = smul.u32 2, %s16
      $region28: #{transformer_forward.27} parent=23 // pred_fallthru
        _
    $region24: #{transformer_forward.27} parent=5 // pred_fallthru
      _
    %p168 = scmp.le.s32.totalorder 1, %s9
    %p169 = scmp.lt.s32.totalorder %s9, 3
    %p170 = pnand %p168, %p169
    %p171 = pneg %p170
    // Predicated region
    $region29: #{transformer_forward.27} parent=5 // pred_check
      _
    $region30: #{transformer_forward.27} parent=5 // pred_check_branch
      %173 = sbr.rel (%p170) target = $region32
    $region31: #{transformer_forward.27} parent=5 // pred_region
      %s174 = ssub.s32 %s9, 1
      %s175 = smul.u32 2, %s18
      %p176 = scmp.lt.s32.totalorder %s175, 3
      %s177 = scalar_select %p176, %s175, 3
      %s178 = smul.addr %s177, 4
      %s179 = scalar_lea.vmem %s0, %s178
      %p180 = pneg %p47
      %p181 = pneg %p44
      %p182 = scmp.lt.s32.totalorder %s19, 0
      %s183 = scalar_select %p182, %s19, 0
      %s184 = smul.addr %s183, 4
      %s185 = scalar_lea.vmem %s1, %s184
      %p186 = pneg %p73
      %p187 = pneg %p70
      %p188 = scmp.lt.s32.totalorder %s19, 0
      %s189 = scalar_select %p188, %s19, 0
      %s190 = scalar_lea.vmem %s2, %s189
      %p191 = pneg %p99
      %p192 = pneg %p96
      %p193 = pneg %p127
      %p194 = pneg %p124
      %s195 = smul.u32 2, %s18
      %p196 = scmp.lt.s32.totalorder %s195, 3
      %s197 = scalar_select %p196, %s195, 3
      %p198 = scmp.lt.s32.totalorder %s19, 0
      %s199 = scalar_select %p198, %s19, 0
      %s200 = sadd.s32 %s199, %s197
      %s201 = smul.addr %s200, 4
      %s202 = scalar_lea.vmem %s3, %s201
      %s203 = smul.u32 2, %s18
      %p204 = scmp.lt.s32.totalorder %s203, 3
      %s205 = scalar_select %p204, %s203, 3
      %s206 = smul.addr %s205, 4
      %s207 = scalar_lea.vmem %s0, %s206
      %s208 = smul.u32 2, %s18
      %p209 = scmp.lt.s32.totalorder %s19, 0
      %s210 = scalar_select %p209, %s19, 0
      %s211 = smul.addr %s210, 4
      %s212 = scalar_lea.vmem %s1, %s211
      %p213 = scmp.lt.s32.totalorder %s19, 0
      %s214 = scalar_select %p213, %s19, 0
      %s215 = scalar_lea.vmem %s2, %s214
      %s216 = smul.u32 2, %s18
      %p217 = scmp.lt.s32.totalorder %s216, 3
      %s218 = scalar_select %p217, %s216, 3
      %p219 = scmp.lt.s32.totalorder %s19, 0
      %s220 = scalar_select %p219, %s19, 0
      %s221 = sadd.s32 %s220, %s218
      %s222 = smul.addr %s221, 4
      %s223 = scalar_lea.vmem %s3, %s222
      %s224 = smul.u32 2, %s18
      %v226 = vld [vmem:[%s207] sm:$0xf]
      %v227 = vld [vmem:[%s207 + $0x4] sm:$0xf]
      %v228 = vld [vmem:[%s212] sm:$0xf]
      %v229 = vld [vmem:[%s212 + $0x4] sm:$0xf]
      %v230 = vld [vmem:[%s212 + $0x8] sm:$0xf]
      %v231 = vld [vmem:[%s212 + $0xc] sm:$0xf]
      %v232 = vld [vmem:[%s215] sm:$0x1]
      %v234 = vlaneseq
      %v235 = vshrl.u32 %v234, 7
      %v236 = vsub.s32 0, %v235
      %v237 = vrot.slane %v232, %v236
      %v241 = vunpack.c.l.b16 %v226
      %v242 = vunpack.c.l.b16 %v227
      %v243 = vpack.c.b16 %v242, %v241
      %v248 = vunpack.c.l.b16 %v228
      %v249 = vunpack.c.l.b16 %v229
      %v250 = vunpack.c.l.b16 %v230
      %v251 = vunpack.c.l.b16 %v231
      %v252 = vpack.c.b16 %v249, %v248
      %v253 = vpack.c.b16 %v251, %v250
      %vm256 = vcmask 261120
      %v258 = vsel %vm256, %v243, 0
      %260 = vmatprep.subr.bf16.mxu0 0
      %261 = vmatpush1.bf16.msra.mxu0 0
      %262 = vmatprep.subr.bf16.mxu0 0
      %263 = vmatpush1.bf16.msra.mxu0 0
      %264 = vmatprep.subr.bf16.mxu0 0
      %265 = vmatpush1.bf16.msra.mxu0 0
      %266 = vmatprep.subr.bf16.mxu0 0
      %267 = vmatpush1.bf16.msra.mxu0 0
      %268 = vmatprep.subr.bf16.mxu0 0
      %269 = vmatpush1.bf16.msra.mxu0 0
      %270 = vmatprep.subr.bf16.mxu0 0
      %271 = vmatpush1.bf16.msra.mxu0 0
      %272 = vmatprep.subr.bf16.mxu0 0
      %273 = vmatpush1.bf16.msra.mxu0 %v253
      %274 = vmatprep.subr.bf16.mxu0 0
      %275 = vmatpush1.bf16.msra.mxu0 %v252
      %276 = vmatprep.subr.bf16.mxu0 0
      %277 = vmatpush2.bf16.msra.mxu0 0
      %278 = vmatprep.subr.bf16.mxu0 0
      %279 = vmatpush2.bf16.msra.mxu0 0
      %280 = vmatprep.subr.bf16.mxu0 0
      %281 = vmatpush2.bf16.msra.mxu0 0
      %282 = vmatprep.subr.bf16.mxu0 0
      %283 = vmatpush2.bf16.msra.mxu0 0
      %284 = vmatprep.subr.bf16.mxu0 0
      %285 = vmatpush2.bf16.msra.mxu0 0
      %286 = vmatprep.subr.bf16.mxu0 0
      %287 = vmatpush2.bf16.msra.mxu0 0
      %288 = vmatprep.subr.bf16.mxu0 0
      %289 = vmatpush2.bf16.msra.mxu0 0
      %290 = vmatprep.subr.bf16.mxu0 0
      %291 = vmatpush2.bf16.msra.mxu0 0
      %292 = vmatprep.mubr.bf16.mxu0 0
      %293 = vmatmul.mubr.bf16.gmra.mxu0 %v258
      %v294 = vpop.f32.mrf.mxu0
      %v295 = vadd.f32 %v237, %v294
      %v296 = vpop.f32.mrf.mxu0
      %v297 = vpop.f32.mrf.mxu0
      %v298 = vadd.f32 %v237, %v297
      %v299 = vpop.f32.mrf.mxu0
      %300 = vdwg.mxu0
      %v301 = vpack.c.bf16 %v298, %v295
      %v303 = vunpack.c.l.b16 %v301
      %v304 = vunpack.c.h.b16 %v301
      %v305 = vpack.c.b16 %v303, %v303
      %v306 = vpack.c.b16 %v304, %v304
      %309 = vst [vmem:[%s223] sm:$0xf] %v305
      %310 = vst [vmem:[%s223 + $0x4] sm:$0xf] %v306
      %s311 = smul.u32 2, %s18
      %p312 = scmp.lt.s32.totalorder %s311, 3
      %s313 = scalar_select %p312, %s311, 3
      %p314 = scmp.lt.s32.totalorder %s19, 0
      %s315 = scalar_select %p314, %s19, 0
      %s316 = sadd.s32 %s315, %s313
      %s317 = smul.addr %s316, 4
      %s318 = scalar_lea.vmem %s3, %s317
      // Predicated region
      $region33: #{transformer_forward.27} parent=31 // pred_check
        %p319 = pneg %p124
      $region34: #{transformer_forward.27} parent=31 // pred_check_branch
        %321 = sbr.rel (%p319) target = $region36
      $region35: #{transformer_forward.27} parent=31 // pred_region
        %s322 = smul.u32 2, %s18
      $region36: #{transformer_forward.27} parent=31 // pred_fallthru
        _
    $region32: #{transformer_forward.27} parent=5 // pred_fallthru
      _
    %p323 = scmp.le.s32.totalorder 2, %s9
    // Predicated region
    $region37: #{transformer_forward.27} parent=5 // pred_check
      %p324 = pneg %p323
    $region38: #{transformer_forward.27} parent=5 // pred_check_branch
      %326 = sbr.rel (%p324) target = $region40
    $region39: #{transformer_forward.27} parent=5 // pred_region
      %s327 = ssub.s32 %s9, 2
      // Predicated region
      $region41: #{transformer_forward.27} parent=39 // pred_check
        %p328 = pneg %p130
      $region42: #{transformer_forward.27} parent=39 // pred_check_branch
        %330 = sbr.rel (%p328) target = $region44
      $region43: #{transformer_forward.27} parent=39 // pred_region
        %s331 = smul.u32 2, %s20
        %p332 = scmp.lt.s32.totalorder %s331, 3
        %s333 = scalar_select %p332, %s331, 3
        %p334 = scmp.lt.s32.totalorder %s21, 0
        %s335 = scalar_select %p334, %s21, 0
        %s336 = sadd.s32 %s335, %s333
        %s337 = smul.addr %s336, 4
        %s338 = scalar_lea.vmem %s3, %s337
      $region44: #{transformer_forward.27} parent=39 // pred_fallthru
        _
    $region40: #{transformer_forward.27} parent=5 // pred_fallthru
      _
  $region6: #{transformer_forward.27} parent=0 // loop_footer
    %s13 = sadd.s32 1, %s9
  $region7: #{transformer_forward.27} parent=0 // loop_footer_branch
    %8 = sbr.rel target = $region3
  $region8: #{transformer_forward.27} parent=0 // loop_exit
    _

// kernel: transformer_forward.30
$region0: #{transformer_forward.30}
  #allocation0 [shape = 'u32[]', space=smem, size = 0x4, offset = 0x4, fixed_abs, tag = 'smem constant byte address 0x4 - core index']
  #allocation1 [shape = 'u32[144,128]{1,0:T(1,128)}', space=vmem, size = 0x12000, scoped, tag = 'internal scratch']
  %s0 = inlined_call_operand.vmem [shape: f32[32,32], index: 0, kind: input, shape index: {}]
  %s1 = inlined_call_operand.vmem [shape: bf16[32,64], index: 1, kind: input, shape index: {}]
  %s2 = inlined_call_operand.vmem [shape: f32[1,64], index: 2, kind: input, shape index: {}]
  %s3 = inlined_call_operand.vmem [shape: bf16[64,32], index: 3, kind: input, shape index: {}]
  %s4 = inlined_call_operand.vmem [shape: f32[1,32], index: 4, kind: input, shape index: {}]
  %s5 = inlined_call_operand.vmem [shape: f32[1,32], index: 5, kind: input, shape index: {}]
  %s6 = inlined_call_operand.vmem [shape: f32[1,32], index: 6, kind: input, shape index: {}]
  %s7 = inlined_call_operand.vmem [shape: f32[32,32], index: 7, kind: output, shape index: {}]
  %s8 = sld [smem:[#allocation0]]
  $region61: #{transformer_forward.30} parent=0
    _
  %s10 = ssub.s32 1, %s8
  %s11 = scalar_select 0, %s10, %s8
  loop: start=0, step=1, limit=4
  $region2: #{transformer_forward.30} parent=0 // loop_pre_header
    _
  $region3: #{transformer_forward.30} parent=0 // loop_header
    %s13 = sphi 0, %s17
    %p14 = scmp.ge.s32.totalorder %s13, 4
    %s23 = sphi 0, %s25
    %s26 = sphi 0, %s23
    %s27 = sphi 0, %s26
    %s43 = sphi 0, %s27
    %s47 = sphi 0, %s47
    %s49 = sphi 0, %s47
    %s50 = sphi 0, %s49
    %s64 = sphi 0, %s50
    %s68 = sphi 0, %s68
    %s70 = sphi 0, %s68
    %s71 = sphi 0, %s70
    %s85 = sphi 0, %s71
    %s89 = sphi 0, %s89
    %s91 = sphi 0, %s89
    %s92 = sphi 0, %s91
    %s106 = sphi 0, %s92
    %s110 = sphi 0, %s110
    %s112 = sphi 0, %s110
    %s113 = sphi 0, %s112
    %s127 = sphi 0, %s113
    %s131 = sphi 0, %s131
    %s133 = sphi 0, %s131
    %s134 = sphi 0, %s133
    %s148 = sphi 0, %s134
    %s152 = sphi 0, %s152
    %s154 = sphi 0, %s152
    %s155 = sphi 0, %s154
    %s169 = sphi 0, %s155
    %s175 = sphi 0, %s177
    %s178 = sphi 0, %s175
    %s179 = sphi 0, %s178
    %s195 = sphi 0, %s179
  $region4: #{transformer_forward.30} parent=0 // loop_header_branch
    %16 = sbr.rel (%p14) target = $region8
  $region5: #{transformer_forward.30} parent=0 // loop_body
    %s18 = ssub.s32 %s13, 1
    %s19 = ssub.s32 %s13, 2
    %s20 = sadd.s32 %s13, 1
    %s21 = ssub.s32 %s13, %s20
    %p22 = scmp.eq.s32.totalorder %s21, 0
    %s24 = sadd.s32 %s23, 1
    %s25 = scalar_select %p22, %s23, %s24
    %p28 = pneg %p22
    %p29 = scmp.eq.s32.totalorder %s13, 1
    %p30 = por %p28, %p29
    %p31 = scmp.ne.s32.totalorder %s23, %s26
    %p32 = scmp.eq.s32.totalorder %s13, 0
    %p33 = por %p31, %p32
    %p34 = scmp.ne.s32.totalorder %s23, %s26
    %p35 = scmp.eq.s32.totalorder %s18, 1
    %p36 = por %p34, %p35
    %p37 = scmp.ne.s32.totalorder %s26, %s27
    %p38 = scmp.eq.s32.totalorder %s18, 0
    %p39 = por %p37, %p38
    %p40 = scmp.ne.s32.totalorder %s26, %s27
    %p41 = scmp.eq.s32.totalorder %s19, 1
    %p42 = por %p40, %p41
    %p44 = scmp.ne.s32.totalorder %s27, %s43
    %p45 = scmp.eq.s32.totalorder %s19, 0
    %p46 = por %p44, %p45
    %s48 = sadd.s32 %s47, 1
    %p51 = scmp.eq.s32.totalorder %s13, 1
    %p52 = scmp.ne.s32.totalorder %s47, %s49
    %p53 = scmp.eq.s32.totalorder %s13, 0
    %p54 = por %p52, %p53
    %p55 = scmp.ne.s32.totalorder %s47, %s49
    %p56 = scmp.eq.s32.totalorder %s18, 1
    %p57 = por %p55, %p56
    %p58 = scmp.ne.s32.totalorder %s49, %s50
    %p59 = scmp.eq.s32.totalorder %s18, 0
    %p60 = por %p58, %p59
    %p61 = scmp.ne.s32.totalorder %s49, %s50
    %p62 = scmp.eq.s32.totalorder %s19, 1
    %p63 = por %p61, %p62
    %p65 = scmp.ne.s32.totalorder %s50, %s64
    %p66 = scmp.eq.s32.totalorder %s19, 0
    %p67 = por %p65, %p66
    %s69 = sadd.s32 %s68, 1
    %p72 = scmp.eq.s32.totalorder %s13, 1
    %p73 = scmp.ne.s32.totalorder %s68, %s70
    %p74 = scmp.eq.s32.totalorder %s13, 0
    %p75 = por %p73, %p74
    %p76 = scmp.ne.s32.totalorder %s68, %s70
    %p77 = scmp.eq.s32.totalorder %s18, 1
    %p78 = por %p76, %p77
    %p79 = scmp.ne.s32.totalorder %s70, %s71
    %p80 = scmp.eq.s32.totalorder %s18, 0
    %p81 = por %p79, %p80
    %p82 = scmp.ne.s32.totalorder %s70, %s71
    %p83 = scmp.eq.s32.totalorder %s19, 1
    %p84 = por %p82, %p83
    %p86 = scmp.ne.s32.totalorder %s71, %s85
    %p87 = scmp.eq.s32.totalorder %s19, 0
    %p88 = por %p86, %p87
    %s90 = sadd.s32 %s89, 1
    %p93 = scmp.eq.s32.totalorder %s13, 1
    %p94 = scmp.ne.s32.totalorder %s89, %s91
    %p95 = scmp.eq.s32.totalorder %s13, 0
    %p96 = por %p94, %p95
    %p97 = scmp.ne.s32.totalorder %s89, %s91
    %p98 = scmp.eq.s32.totalorder %s18, 1
    %p99 = por %p97, %p98
    %p100 = scmp.ne.s32.totalorder %s91, %s92
    %p101 = scmp.eq.s32.totalorder %s18, 0
    %p102 = por %p100, %p101
    %p103 = scmp.ne.s32.totalorder %s91, %s92
    %p104 = scmp.eq.s32.totalorder %s19, 1
    %p105 = por %p103, %p104
    %p107 = scmp.ne.s32.totalorder %s92, %s106
    %p108 = scmp.eq.s32.totalorder %s19, 0
    %p109 = por %p107, %p108
    %s111 = sadd.s32 %s110, 1
    %p114 = scmp.eq.s32.totalorder %s13, 1
    %p115 = scmp.ne.s32.totalorder %s110, %s112
    %p116 = scmp.eq.s32.totalorder %s13, 0
    %p117 = por %p115, %p116
    %p118 = scmp.ne.s32.totalorder %s110, %s112
    %p119 = scmp.eq.s32.totalorder %s18, 1
    %p120 = por %p118, %p119
    %p121 = scmp.ne.s32.totalorder %s112, %s113
    %p122 = scmp.eq.s32.totalorder %s18, 0
    %p123 = por %p121, %p122
    %p124 = scmp.ne.s32.totalorder %s112, %s113
    %p125 = scmp.eq.s32.totalorder %s19, 1
    %p126 = por %p124, %p125
    %p128 = scmp.ne.s32.totalorder %s113, %s127
    %p129 = scmp.eq.s32.totalorder %s19, 0
    %p130 = por %p128, %p129
    %s132 = sadd.s32 %s131, 1
    %p135 = scmp.eq.s32.totalorder %s13, 1
    %p136 = scmp.ne.s32.totalorder %s131, %s133
    %p137 = scmp.eq.s32.totalorder %s13, 0
    %p138 = por %p136, %p137
    %p139 = scmp.ne.s32.totalorder %s131, %s133
    %p140 = scmp.eq.s32.totalorder %s18, 1
    %p141 = por %p139, %p140
    %p142 = scmp.ne.s32.totalorder %s133, %s134
    %p143 = scmp.eq.s32.totalorder %s18, 0
    %p144 = por %p142, %p143
    %p145 = scmp.ne.s32.totalorder %s133, %s134
    %p146 = scmp.eq.s32.totalorder %s19, 1
    %p147 = por %p145, %p146
    %p149 = scmp.ne.s32.totalorder %s134, %s148
    %p150 = scmp.eq.s32.totalorder %s19, 0
    %p151 = por %p149, %p150
    %s153 = sadd.s32 %s152, 1
    %p156 = scmp.eq.s32.totalorder %s13, 1
    %p157 = scmp.ne.s32.totalorder %s152, %s154
    %p158 = scmp.eq.s32.totalorder %s13, 0
    %p159 = por %p157, %p158
    %p160 = scmp.ne.s32.totalorder %s152, %s154
    %p161 = scmp.eq.s32.totalorder %s18, 1
    %p162 = por %p160, %p161
    %p163 = scmp.ne.s32.totalorder %s154, %s155
    %p164 = scmp.eq.s32.totalorder %s18, 0
    %p165 = por %p163, %p164
    %p166 = scmp.ne.s32.totalorder %s154, %s155
    %p167 = scmp.eq.s32.totalorder %s19, 1
    %p168 = por %p166, %p167
    %p170 = scmp.ne.s32.totalorder %s155, %s169
    %p171 = scmp.eq.s32.totalorder %s19, 0
    %p172 = por %p170, %p171
    %s173 = ssub.s32 %s13, %s20
    %p174 = scmp.eq.s32.totalorder %s173, 0
    %s176 = sadd.s32 %s175, 1
    %s177 = scalar_select %p174, %s175, %s176
    %p180 = pneg %p174
    %p181 = scmp.eq.s32.totalorder %s13, 1
    %p182 = por %p180, %p181
    %p183 = scmp.ne.s32.totalorder %s175, %s178
    %p184 = scmp.eq.s32.totalorder %s13, 0
    %p185 = por %p183, %p184
    %p186 = scmp.ne.s32.totalorder %s175, %s178
    %p187 = scmp.eq.s32.totalorder %s18, 1
    %p188 = por %p186, %p187
    %p189 = scmp.ne.s32.totalorder %s178, %s179
    %p190 = scmp.eq.s32.totalorder %s18, 0
    %p191 = por %p189, %p190
    %p192 = scmp.ne.s32.totalorder %s178, %s179
    %p193 = scmp.eq.s32.totalorder %s19, 1
    %p194 = por %p192, %p193
    %p196 = scmp.ne.s32.totalorder %s179, %s195
    %p197 = scmp.eq.s32.totalorder %s19, 0
    %p198 = por %p196, %p197
    %p199 = scmp.le.s32.totalorder 1, %s13
    %p200 = scmp.lt.s32.totalorder %s13, 3
    %p201 = pnand %p199, %p200
    %p202 = pneg %p201
    // Predicated region
    $region9: #{transformer_forward.30} parent=5 // pred_check
      _
    $region10: #{transformer_forward.30} parent=5 // pred_check_branch
      %204 = sbr.rel (%p201) target = $region12
    $region11: #{transformer_forward.30} parent=5 // pred_region
      %s205 = ssub.s32 %s13, 1
      // Predicated region
      $region13: #{transformer_forward.30} parent=11 // pred_check
        %p206 = pneg %p60
      $region14: #{transformer_forward.30} parent=11 // pred_check_branch
        %208 = sbr.rel (%p206) target = $region16
      $region15: #{transformer_forward.30} parent=11 // pred_region
        _
      $region16: #{transformer_forward.30} parent=11 // pred_fallthru
        _
      // Predicated region
      $region17: #{transformer_forward.30} parent=11 // pred_check
        %p209 = pneg %p81
      $region18: #{transformer_forward.30} parent=11 // pred_check_branch
        %211 = sbr.rel (%p209) target = $region20
      $region19: #{transformer_forward.30} parent=11 // pred_region
        _
      $region20: #{transformer_forward.30} parent=11 // pred_fallthru
        _
      // Predicated region
      $region21: #{transformer_forward.30} parent=11 // pred_check
        %p212 = pneg %p102
      $region22: #{transformer_forward.30} parent=11 // pred_check_branch
        %214 = sbr.rel (%p212) target = $region24
      $region23: #{transformer_forward.30} parent=11 // pred_region
        _
      $region24: #{transformer_forward.30} parent=11 // pred_fallthru
        _
      // Predicated region
      $region25: #{transformer_forward.30} parent=11 // pred_check
        %p215 = pneg %p123
      $region26: #{transformer_forward.30} parent=11 // pred_check_branch
        %217 = sbr.rel (%p215) target = $region28
      $region27: #{transformer_forward.30} parent=11 // pred_region
        _
      $region28: #{transformer_forward.30} parent=11 // pred_fallthru
        _
      // Predicated region
      $region29: #{transformer_forward.30} parent=11 // pred_check
        %p218 = pneg %p144
      $region30: #{transformer_forward.30} parent=11 // pred_check_branch
        %220 = sbr.rel (%p218) target = $region32
      $region31: #{transformer_forward.30} parent=11 // pred_region
        _
      $region32: #{transformer_forward.30} parent=11 // pred_fallthru
        _
      // Predicated region
      $region33: #{transformer_forward.30} parent=11 // pred_check
        %p221 = pneg %p165
      $region34: #{transformer_forward.30} parent=11 // pred_check_branch
        %223 = sbr.rel (%p221) target = $region36
      $region35: #{transformer_forward.30} parent=11 // pred_region
        _
      $region36: #{transformer_forward.30} parent=11 // pred_fallthru
        _
    $region12: #{transformer_forward.30} parent=5 // pred_fallthru
      _
    %p224 = scmp.lt.s32.totalorder %s13, 2
    // Predicated region
    $region37: #{transformer_forward.30} parent=5 // pred_check
      %p225 = pneg %p224
    $region38: #{transformer_forward.30} parent=5 // pred_check_branch
      %227 = sbr.rel (%p225) target = $region40
    $region39: #{transformer_forward.30} parent=5 // pred_region
      // Predicated region
      $region41: #{transformer_forward.30} parent=39 // pred_check
        %p228 = pneg %p33
      $region42: #{transformer_forward.30} parent=39 // pred_check_branch
        %230 = sbr.rel (%p228) target = $region44
      $region43: #{transformer_forward.30} parent=39 // pred_region
        %s231 = smul.u32 2, %s13
        %p232 = scmp.lt.s32.totalorder %s231, 3
        %s233 = scalar_select %p232, %s231, 3
        %s234 = smul.addr %s233, 8
        %s235 = scalar_lea.vmem %s0, %s234
        %s236 = smul.u32 2, %s13
      $region44: #{transformer_forward.30} parent=39 // pred_fallthru
        _
    $region40: #{transformer_forward.30} parent=5 // pred_fallthru
      _
    %p237 = scmp.le.s32.totalorder 1, %s13
    %p238 = scmp.lt.s32.totalorder %s13, 3
    %p239 = pnand %p237, %p238
    %p240 = pneg %p239
    // Predicated region
    $region45: #{transformer_forward.30} parent=5 // pred_check
      _
    $region46: #{transformer_forward.30} parent=5 // pred_check_branch
      %242 = sbr.rel (%p239) target = $region48
    $region47: #{transformer_forward.30} parent=5 // pred_region
      %s243 = ssub.s32 %s13, 1
      %s244 = smul.u32 2, %s18
      %p245 = scmp.lt.s32.totalorder %s244, 3
      %s246 = scalar_select %p245, %s244, 3
      %s247 = smul.addr %s246, 8
      %s248 = scalar_lea.vmem %s0, %s247
      %p249 = pneg %p39
      %p250 = pneg %p36
      %p251 = pneg %p60
      %p252 = pneg %p57
      %p253 = pneg %p81
      %p254 = pneg %p78
      %p255 = pneg %p102
      %p256 = pneg %p99
      %p257 = pneg %p123
      %p258 = pneg %p120
      %p259 = pneg %p144
      %p260 = pneg %p141
      %p261 = pneg %p165
      %p262 = pneg %p162
      %p263 = pneg %p191
      %p264 = pneg %p188
      %s265 = smul.u32 2, %s18
      %p266 = scmp.lt.s32.totalorder %s265, 3
      %s267 = scalar_select %p266, %s265, 3
      %s268 = smul.addr %s267, 8
      %s269 = scalar_lea.vmem %s7, %s268
      %s270 = smul.u32 2, %s18
      %p271 = scmp.lt.s32.totalorder %s270, 3
      %s272 = scalar_select %p271, %s270, 3
      %s273 = smul.addr %s272, 8
      %s274 = scalar_lea.vmem %s0, %s273
      %s275 = smul.u32 2, %s18
      %s276 = smul.u32 2, %s18
      %p277 = scmp.lt.s32.totalorder %s276, 3
      %s278 = scalar_select %p277, %s276, 3
      %s279 = smul.addr %s278, 8
      %s280 = scalar_lea.vmem %s7, %s279
      %s281 = smul.u32 2, %s18
      %v283 = vld [vmem:[%s274] sm:$0xff]
      %v284 = vld [vmem:[%s274 + $0x8] sm:$0xff]
      %v285 = vpack.c.bf16 %v284, %v283
      %v286 = vld [vmem:[%s1] sm:$0xf]
      %v287 = vld [vmem:[%s1 + $0x4] sm:$0xf]
      %v288 = vld [vmem:[%s1 + $0x8] sm:$0xf]
      %v289 = vld [vmem:[%s1 + $0xc] sm:$0xf]
      %v290 = vld [vmem:[%s2] sm:$0x1]
      %v292 = vlaneseq
      %v293 = vshrl.u32 %v292, 7
      %v294 = vsub.s32 0, %v293
      %v295 = vrot.slane %v290, %v294
      %v301 = vunpack.c.l.b16 %v286
      %v302 = vunpack.c.l.b16 %v287
      %v303 = vunpack.c.l.b16 %v288
      %v304 = vunpack.c.l.b16 %v289
      %v305 = vpack.c.b16 %v302, %v301
      %v306 = vpack.c.b16 %v304, %v303
      %vm309 = vcmask 261120
      %v311 = vsel %vm309, %v285, 0
      %313 = vmatprep.subr.bf16.mxu0 0
      %314 = vmatpush1.bf16.msra.mxu0 0
      %315 = vmatprep.subr.bf16.mxu0 0
      %316 = vmatpush1.bf16.msra.mxu0 0
      %317 = vmatprep.subr.bf16.mxu0 0
      %318 = vmatpush1.bf16.msra.mxu0 0
      %319 = vmatprep.subr.bf16.mxu0 0
      %320 = vmatpush1.bf16.msra.mxu0 0
      %321 = vmatprep.subr.bf16.mxu0 0
      %322 = vmatpush1.bf16.msra.mxu0 0
      %323 = vmatprep.subr.bf16.mxu0 0
      %324 = vmatpush1.bf16.msra.mxu0 0
      %325 = vmatprep.subr.bf16.mxu0 0
      %326 = vmatpush1.bf16.msra.mxu0 %v306
      %327 = vmatprep.subr.bf16.mxu0 0
      %328 = vmatpush1.bf16.msra.mxu0 %v305
      %329 = vmatprep.subr.bf16.mxu0 0
      %330 = vmatpush2.bf16.msra.mxu0 0
      %331 = vmatprep.subr.bf16.mxu0 0
      %332 = vmatpush2.bf16.msra.mxu0 0
      %333 = vmatprep.subr.bf16.mxu0 0
      %334 = vmatpush2.bf16.msra.mxu0 0
      %335 = vmatprep.subr.bf16.mxu0 0
      %336 = vmatpush2.bf16.msra.mxu0 0
      %337 = vmatprep.subr.bf16.mxu0 0
      %338 = vmatpush2.bf16.msra.mxu0 0
      %339 = vmatprep.subr.bf16.mxu0 0
      %340 = vmatpush2.bf16.msra.mxu0 0
      %341 = vmatprep.subr.bf16.mxu0 0
      %342 = vmatpush2.bf16.msra.mxu0 0
      %343 = vmatprep.subr.bf16.mxu0 0
      %344 = vmatpush2.bf16.msra.mxu0 0
      %345 = vmatprep.mubr.bf16.mxu0 0
      %346 = vmatmul.mubr.bf16.gmra.mxu0 %v311
      %v347 = vpop.f32.mrf.mxu0
      %v348 = vadd.f32 %v295, %v347
      %v349 = vpop.f32.mrf.mxu0
      %v350 = vpop.f32.mrf.mxu0
      %v351 = vadd.f32 %v295, %v350
      %v352 = vpop.f32.mrf.mxu0
      %353 = vdwg.mxu0
      %v354 = vmax.f32 %v348, 0.0
      %v355 = vmax.f32 %v351, 0.0
      %v356 = vpack.c.bf16 %v355, %v354
      %v357 = vld [vmem:[%s3] sm:$0xf]
      %v358 = vld [vmem:[%s3 + $0x4] sm:$0xf]
      %v359 = vld [vmem:[%s3 + $0x8] sm:$0xf]
      %v360 = vld [vmem:[%s3 + $0xc] sm:$0xf]
      %v361 = vld [vmem:[%s3 + $0x10] sm:$0xf]
      %v362 = vld [vmem:[%s3 + $0x14] sm:$0xf]
      %v363 = vld [vmem:[%s3 + $0x18] sm:$0xf]
      %v364 = vld [vmem:[%s3 + $0x1c] sm:$0xf]
      %v365 = vld [vmem:[%s4] sm:$0x1]
      %v367 = vlaneseq
      %v368 = vshrl.u32 %v367, 7
      %v369 = vsub.s32 0, %v368
      %v370 = vrot.slane %v365, %v369
      %v380 = vunpack.c.l.b16 %v357
      %v381 = vunpack.c.l.b16 %v358
      %v382 = vunpack.c.l.b16 %v359
      %v383 = vunpack.c.l.b16 %v360
      %v384 = vunpack.c.l.b16 %v361
      %v385 = vunpack.c.l.b16 %v362
      %v386 = vunpack.c.l.b16 %v363
      %v387 = vunpack.c.l.b16 %v364
      %v388 = vpack.c.b16 %v381, %v380
      %v389 = vpack.c.b16 %v383, %v382
      %v390 = vpack.c.b16 %v385, %v384
      %v391 = vpack.c.b16 %v387, %v386
      %vm396 = vcmask 523264
      %v398 = vsel %vm396, %v356, 0
      %400 = vmatprep.subr.bf16.mxu0 0
      %401 = vmatpush1.bf16.msra.mxu0 0
      %402 = vmatprep.subr.bf16.mxu0 0
      %403 = vmatpush1.bf16.msra.mxu0 0
      %404 = vmatprep.subr.bf16.mxu0 0
      %405 = vmatpush1.bf16.msra.mxu0 0
      %406 = vmatprep.subr.bf16.mxu0 0
      %407 = vmatpush1.bf16.msra.mxu0 0
      %408 = vmatprep.subr.bf16.mxu0 0
      %409 = vmatpush1.bf16.msra.mxu0 %v391
      %410 = vmatprep.subr.bf16.mxu0 0
      %411 = vmatpush1.bf16.msra.mxu0 %v390
      %412 = vmatprep.subr.bf16.mxu0 0
      %413 = vmatpush1.bf16.msra.mxu0 %v389
      %414 = vmatprep.subr.bf16.mxu0 0
      %415 = vmatpush1.bf16.msra.mxu0 %v388
      %416 = vmatprep.subr.bf16.mxu0 0
      %417 = vmatpush2.bf16.msra.mxu0 0
      %418 = vmatprep.subr.bf16.mxu0 0
      %419 = vmatpush2.bf16.msra.mxu0 0
      %420 = vmatprep.subr.bf16.mxu0 0
      %421 = vmatpush2.bf16.msra.mxu0 0
      %422 = vmatprep.subr.bf16.mxu0 0
      %423 = vmatpush2.bf16.msra.mxu0 0
      %424 = vmatprep.subr.bf16.mxu0 0
      %425 = vmatpush2.bf16.msra.mxu0 0
      %426 = vmatprep.subr.bf16.mxu0 0
      %427 = vmatpush2.bf16.msra.mxu0 0
      %428 = vmatprep.subr.bf16.mxu0 0
      %429 = vmatpush2.bf16.msra.mxu0 0
      %430 = vmatprep.subr.bf16.mxu0 0
      %431 = vmatpush2.bf16.msra.mxu0 0
      %432 = vmatprep.mubr.bf16.mxu0 0
      %433 = vmatmul.mubr.bf16.gmra.mxu0 %v398
      %v434 = vpop.f32.mrf.mxu0
      %v435 = vadd.f32 %v370, %v434
      %v436 = vpop.f32.mrf.mxu0
      %v437 = vpop.f32.mrf.mxu0
      %v438 = vadd.f32 %v370, %v437
      %v439 = vpop.f32.mrf.mxu0
      %440 = vdwg.mxu0
      %v441 = vadd.f32 %v435, %v283
      %v442 = vadd.f32 %v438, %v284
      %v443 = vld [vmem:[%s5] sm:$0x1]
      %v444 = vld [vmem:[%s6] sm:$0x1]
      %v445 = vsel %vm309, %v441, 0.0
      %446 = vadd.xlane.f32.xlu0 %v445
      %v447 = vpop.xlane.xlu0 %446
      %v448 = vsel %vm309, %v442, 0.0
      %449 = vadd.xlane.f32.xlu0 %v448
      %v450 = vpop.xlane.xlu0 %449
      %v451 = vrcp.pop 32.0
      %v452 = vmul.f32 %v447, %v451
      %v453 = vmul.f32 %v450, %v451
      %v454 = vsub.f32 %v441, %v452
      %v455 = vsub.f32 %v442, %v453
      %v456 = vmul.f32 %v454, %v454
      %v457 = vmul.f32 %v455, %v455
      %v458 = vsel %vm309, %v456, 0.0
      %459 = vadd.xlane.f32.xlu0 %v458
      %v460 = vpop.xlane.xlu0 %459
      %v461 = vsel %vm309, %v457, 0.0
      %462 = vadd.xlane.f32.xlu0 %v461
      %v463 = vpop.xlane.xlu0 %462
      %v464 = vmul.f32 %v460, %v451
      %v465 = vmul.f32 %v463, %v451
      %v466 = vadd.f32 %v464, 1e-05
      %v467 = vadd.f32 %v465, 1e-05
      %v468 = vrsqrt.pop %v466
      %v469 = vrsqrt.pop %v467
      %v470 = vmul.f32 %v454, %v468
      %v471 = vmul.f32 %v455, %v469
      %v473 = vlaneseq
      %v474 = vshrl.u32 %v473, 7
      %v475 = vsub.s32 0, %v474
      %v476 = vrot.slane %v443, %v475
      %v478 = vmul.f32 %v470, %v476
      %v479 = vmul.f32 %v471, %v476
      %v481 = vlaneseq
      %v482 = vshrl.u32 %v481, 7
      %v483 = vsub.s32 0, %v482
      %v484 = vrot.slane %v444, %v483
      %v486 = vadd.f32 %v478, %v484
      %v487 = vadd.f32 %v479, %v484
      %488 = vst.msk [vmem:[%s280] sm:$0xff] %vm309, %v486
      %489 = vst.msk [vmem:[%s280 + $0x8] sm:$0xff] %vm309, %v487
      %s490 = smul.u32 2, %s18
      %p491 = scmp.lt.s32.totalorder %s490, 3
      %s492 = scalar_select %p491, %s490, 3
      %s493 = smul.addr %s492, 8
      %s494 = scalar_lea.vmem %s7, %s493
      // Predicated region
      $region49: #{transformer_forward.30} parent=47 // pred_check
        %p495 = pneg %p188
      $region50: #{transformer_forward.30} parent=47 // pred_check_branch
        %497 = sbr.rel (%p495) target = $region52
      $region51: #{transformer_forward.30} parent=47 // pred_region
        %s498 = smul.u32 2, %s18
      $region52: #{transformer_forward.30} parent=47 // pred_fallthru
        _
    $region48: #{transformer_forward.30} parent=5 // pred_fallthru
      _
    %p499 = scmp.le.s32.totalorder 2, %s13
    // Predicated region
    $region53: #{transformer_forward.30} parent=5 // pred_check
      %p500 = pneg %p499
    $region54: #{transformer_forward.30} parent=5 // pred_check_branch
      %502 = sbr.rel (%p500) target = $region56
    $region55: #{transformer_forward.30} parent=5 // pred_region
      %s503 = ssub.s32 %s13, 2
      // Predicated region
      $region57: #{transformer_forward.30} parent=55 // pred_check
        %p504 = pneg %p194
      $region58: #{transformer_forward.30} parent=55 // pred_check_branch
        %506 = sbr.rel (%p504) target = $region60
      $region59: #{transformer_forward.30} parent=55 // pred_region
        %s507 = smul.u32 2, %s19
        %p508 = scmp.lt.s32.totalorder %s507, 3
        %s509 = scalar_select %p508, %s507, 3
        %s510 = smul.addr %s509, 8
        %s511 = scalar_lea.vmem %s7, %s510
      $region60: #{transformer_forward.30} parent=55 // pred_fallthru
        _
    $region56: #{transformer_forward.30} parent=5 // pred_fallthru
      _
  $region6: #{transformer_forward.30} parent=0 // loop_footer
    %s17 = sadd.s32 1, %s13
  $region7: #{transformer_forward.30} parent=0 // loop_footer_branch
    %12 = sbr.rel target = $region3
  $region8: #{transformer_forward.30} parent=0 // loop_exit
    _

// kernel: transformer_forward.28
$region0: #{transformer_forward.28}
  #allocation0 [shape = 'u32[]', space=smem, size = 0x4, offset = 0x4, fixed_abs, tag = 'smem constant byte address 0x4 - core index']
  #allocation1 [shape = 'u32[144,128]{1,0:T(1,128)}', space=vmem, size = 0x12000, scoped, tag = 'internal scratch']
  %s0 = inlined_call_operand.vmem [shape: bf16[2,4,10,8], index: 0, kind: input, shape index: {}]
  %s1 = inlined_call_operand.vmem [shape: bf16[2,4,10,8], index: 1, kind: input, shape index: {}]
  %s2 = inlined_call_operand.vmem [shape: bf16[2,4,10,8], index: 2, kind: input, shape index: {}]
  %s3 = inlined_call_operand.vmem [shape: f32[2,1,10], index: 3, kind: input, shape index: {}]
  %s4 = inlined_call_operand.vmem [shape: bf16[2,4,10,8], index: 4, kind: output, shape index: {}]
  %s5 = sld [smem:[#allocation0]]
  $region49: #{transformer_forward.28} parent=0
    _
  %s7 = ssub.s32 1, %s5
  %s8 = scalar_select 0, %s7, %s5
  loop: start=0, step=1, limit=4
  $region2: #{transformer_forward.28} parent=0 // loop_pre_header
    _
  $region3: #{transformer_forward.28} parent=0 // loop_header
    %s10 = sphi 0, %s14
    %p11 = scmp.ge.s32.totalorder %s10, 4
    %s20 = sphi 0, %s22
    %s23 = sphi 0, %s20
    %s24 = sphi 0, %s23
    %s40 = sphi 0, %s24
    %s46 = sphi 0, %s48
    %s49 = sphi 0, %s46
    %s50 = sphi 0, %s49
    %s66 = sphi 0, %s50
    %s72 = sphi 0, %s74
    %s75 = sphi 0, %s72
    %s76 = sphi 0, %s75
    %s92 = sphi 0, %s76
    %s98 = sphi 0, %s100
    %s101 = sphi 0, %s98
    %s102 = sphi 0, %s101
    %s118 = sphi 0, %s102
    %s124 = sphi 0, %s126
    %s127 = sphi 0, %s124
    %s128 = sphi 0, %s127
    %s144 = sphi 0, %s128
  $region4: #{transformer_forward.28} parent=0 // loop_header_branch
    %13 = sbr.rel (%p11) target = $region8
  $region5: #{transformer_forward.28} parent=0 // loop_body
    %s15 = ssub.s32 %s10, 1
    %s16 = ssub.s32 %s10, 2
    %s17 = sadd.s32 %s10, 1
    %s18 = ssub.s32 %s10, %s17
    %p19 = scmp.eq.s32.totalorder %s18, 0
    %s21 = sadd.s32 %s20, 1
    %s22 = scalar_select %p19, %s20, %s21
    %p25 = pneg %p19
    %p26 = scmp.eq.s32.totalorder %s10, 1
    %p27 = por %p25, %p26
    %p28 = scmp.ne.s32.totalorder %s20, %s23
    %p29 = scmp.eq.s32.totalorder %s10, 0
    %p30 = por %p28, %p29
    %p31 = scmp.ne.s32.totalorder %s20, %s23
    %p32 = scmp.eq.s32.totalorder %s15, 1
    %p33 = por %p31, %p32
    %p34 = scmp.ne.s32.totalorder %s23, %s24
    %p35 = scmp.eq.s32.totalorder %s15, 0
    %p36 = por %p34, %p35
    %p37 = scmp.ne.s32.totalorder %s23, %s24
    %p38 = scmp.eq.s32.totalorder %s16, 1
    %p39 = por %p37, %p38
    %p41 = scmp.ne.s32.totalorder %s24, %s40
    %p42 = scmp.eq.s32.totalorder %s16, 0
    %p43 = por %p41, %p42
    %s44 = ssub.s32 %s10, %s17
    %p45 = scmp.eq.s32.totalorder %s44, 0
    %s47 = sadd.s32 %s46, 1
    %s48 = scalar_select %p45, %s46, %s47
    %p51 = pneg %p45
    %p52 = scmp.eq.s32.totalorder %s10, 1
    %p53 = por %p51, %p52
    %p54 = scmp.ne.s32.totalorder %s46, %s49
    %p55 = scmp.eq.s32.totalorder %s10, 0
    %p56 = por %p54, %p55
    %p57 = scmp.ne.s32.totalorder %s46, %s49
    %p58 = scmp.eq.s32.totalorder %s15, 1
    %p59 = por %p57, %p58
    %p60 = scmp.ne.s32.totalorder %s49, %s50
    %p61 = scmp.eq.s32.totalorder %s15, 0
    %p62 = por %p60, %p61
    %p63 = scmp.ne.s32.totalorder %s49, %s50
    %p64 = scmp.eq.s32.totalorder %s16, 1
    %p65 = por %p63, %p64
    %p67 = scmp.ne.s32.totalorder %s50, %s66
    %p68 = scmp.eq.s32.totalorder %s16, 0
    %p69 = por %p67, %p68
    %s70 = ssub.s32 %s10, %s17
    %p71 = scmp.eq.s32.totalorder %s70, 0
    %s73 = sadd.s32 %s72, 1
    %s74 = scalar_select %p71, %s72, %s73
    %p77 = pneg %p71
    %p78 = scmp.eq.s32.totalorder %s10, 1
    %p79 = por %p77, %p78
    %p80 = scmp.ne.s32.totalorder %s72, %s75
    %p81 = scmp.eq.s32.totalorder %s10, 0
    %p82 = por %p80, %p81
    %p83 = scmp.ne.s32.totalorder %s72, %s75
    %p84 = scmp.eq.s32.totalorder %s15, 1
    %p85 = por %p83, %p84
    %p86 = scmp.ne.s32.totalorder %s75, %s76
    %p87 = scmp.eq.s32.totalorder %s15, 0
    %p88 = por %p86, %p87
    %p89 = scmp.ne.s32.totalorder %s75, %s76
    %p90 = scmp.eq.s32.totalorder %s16, 1
    %p91 = por %p89, %p90
    %p93 = scmp.ne.s32.totalorder %s76, %s92
    %p94 = scmp.eq.s32.totalorder %s16, 0
    %p95 = por %p93, %p94
    %s96 = ssub.s32 %s10, %s17
    %p97 = scmp.eq.s32.totalorder %s96, 0
    %s99 = sadd.s32 %s98, 1
    %s100 = scalar_select %p97, %s98, %s99
    %p103 = pneg %p97
    %p104 = scmp.eq.s32.totalorder %s10, 1
    %p105 = por %p103, %p104
    %p106 = scmp.ne.s32.totalorder %s98, %s101
    %p107 = scmp.eq.s32.totalorder %s10, 0
    %p108 = por %p106, %p107
    %p109 = scmp.ne.s32.totalorder %s98, %s101
    %p110 = scmp.eq.s32.totalorder %s15, 1
    %p111 = por %p109, %p110
    %p112 = scmp.ne.s32.totalorder %s101, %s102
    %p113 = scmp.eq.s32.totalorder %s15, 0
    %p114 = por %p112, %p113
    %p115 = scmp.ne.s32.totalorder %s101, %s102
    %p116 = scmp.eq.s32.totalorder %s16, 1
    %p117 = por %p115, %p116
    %p119 = scmp.ne.s32.totalorder %s102, %s118
    %p120 = scmp.eq.s32.totalorder %s16, 0
    %p121 = por %p119, %p120
    %s122 = ssub.s32 %s10, %s17
    %p123 = scmp.eq.s32.totalorder %s122, 0
    %s125 = sadd.s32 %s124, 1
    %s126 = scalar_select %p123, %s124, %s125
    %p129 = pneg %p123
    %p130 = scmp.eq.s32.totalorder %s10, 1
    %p131 = por %p129, %p130
    %p132 = scmp.ne.s32.totalorder %s124, %s127
    %p133 = scmp.eq.s32.totalorder %s10, 0
    %p134 = por %p132, %p133
    %p135 = scmp.ne.s32.totalorder %s124, %s127
    %p136 = scmp.eq.s32.totalorder %s15, 1
    %p137 = por %p135, %p136
    %p138 = scmp.ne.s32.totalorder %s127, %s128
    %p139 = scmp.eq.s32.totalorder %s15, 0
    %p140 = por %p138, %p139
    %p141 = scmp.ne.s32.totalorder %s127, %s128
    %p142 = scmp.eq.s32.totalorder %s16, 1
    %p143 = por %p141, %p142
    %p145 = scmp.ne.s32.totalorder %s128, %s144
    %p146 = scmp.eq.s32.totalorder %s16, 0
    %p147 = por %p145, %p146
    %p148 = scmp.le.s32.totalorder 1, %s10
    %p149 = scmp.lt.s32.totalorder %s10, 3
    %p150 = pnand %p148, %p149
    %p151 = pneg %p150
    // Predicated region
    $region9: #{transformer_forward.28} parent=5 // pred_check
      _
    $region10: #{transformer_forward.28} parent=5 // pred_check_branch
      %153 = sbr.rel (%p150) target = $region12
    $region11: #{transformer_forward.28} parent=5 // pred_region
      %s154 = ssub.s32 %s10, 1
    $region12: #{transformer_forward.28} parent=5 // pred_fallthru
      _
    %p155 = scmp.lt.s32.totalorder %s10, 2
    // Predicated region
    $region13: #{transformer_forward.28} parent=5 // pred_check
      %p156 = pneg %p155
    $region14: #{transformer_forward.28} parent=5 // pred_check_branch
      %158 = sbr.rel (%p156) target = $region16
    $region15: #{transformer_forward.28} parent=5 // pred_region
      // Predicated region
      $region17: #{transformer_forward.28} parent=15 // pred_check
        %p159 = pneg %p30
      $region18: #{transformer_forward.28} parent=15 // pred_check_branch
        %161 = sbr.rel (%p159) target = $region20
      $region19: #{transformer_forward.28} parent=15 // pred_region
        %p162 = scmp.lt.s32.totalorder %s10, 1
        %s163 = scalar_select %p162, %s10, 1
        %s164 = smul.addr %s163, 8
        %s165 = smul.addr %s164, 4
        %s166 = scalar_lea.vmem %s0, %s165
      $region20: #{transformer_forward.28} parent=15 // pred_fallthru
        _
      // Predicated region
      $region21: #{transformer_forward.28} parent=15 // pred_check
        %p167 = pneg %p56
      $region22: #{transformer_forward.28} parent=15 // pred_check_branch
        %169 = sbr.rel (%p167) target = $region24
      $region23: #{transformer_forward.28} parent=15 // pred_region
        %p170 = scmp.lt.s32.totalorder %s10, 1
        %s171 = scalar_select %p170, %s10, 1
        %s172 = smul.addr %s171, 8
        %s173 = smul.addr %s172, 4
        %s174 = scalar_lea.vmem %s1, %s173
      $region24: #{transformer_forward.28} parent=15 // pred_fallthru
        _
      // Predicated region
      $region25: #{transformer_forward.28} parent=15 // pred_check
        %p175 = pneg %p82
      $region26: #{transformer_forward.28} parent=15 // pred_check_branch
        %177 = sbr.rel (%p175) target = $region28
      $region27: #{transformer_forward.28} parent=15 // pred_region
        %p178 = scmp.lt.s32.totalorder %s10, 1
        %s179 = scalar_select %p178, %s10, 1
        %s180 = smul.addr %s179, 8
        %s181 = smul.addr %s180, 4
        %s182 = scalar_lea.vmem %s2, %s181
      $region28: #{transformer_forward.28} parent=15 // pred_fallthru
        _
      // Predicated region
      $region29: #{transformer_forward.28} parent=15 // pred_check
        %p183 = pneg %p108
      $region30: #{transformer_forward.28} parent=15 // pred_check_branch
        %185 = sbr.rel (%p183) target = $region32
      $region31: #{transformer_forward.28} parent=15 // pred_region
        %p186 = scmp.lt.s32.totalorder %s10, 1
        %s187 = scalar_select %p186, %s10, 1
        %s188 = scalar_lea.vmem %s3, %s187
      $region32: #{transformer_forward.28} parent=15 // pred_fallthru
        _
    $region16: #{transformer_forward.28} parent=5 // pred_fallthru
      _
    %p189 = scmp.le.s32.totalorder 1, %s10
    %p190 = scmp.lt.s32.totalorder %s10, 3
    %p191 = pnand %p189, %p190
    %p192 = pneg %p191
    // Predicated region
    $region33: #{transformer_forward.28} parent=5 // pred_check
      _
    $region34: #{transformer_forward.28} parent=5 // pred_check_branch
      %194 = sbr.rel (%p191) target = $region36
    $region35: #{transformer_forward.28} parent=5 // pred_region
      %s195 = ssub.s32 %s10, 1
      %p196 = scmp.lt.s32.totalorder %s15, 1
      %s197 = scalar_select %p196, %s15, 1
      %s198 = smul.addr %s197, 8
      %s199 = smul.addr %s198, 4
      %s200 = scalar_lea.vmem %s0, %s199
      %p201 = pneg %p36
      %p202 = pneg %p33
      %p203 = scmp.lt.s32.totalorder %s15, 1
      %s204 = scalar_select %p203, %s15, 1
      %s205 = smul.addr %s204, 8
      %s206 = smul.addr %s205, 4
      %s207 = scalar_lea.vmem %s1, %s206
      %p208 = pneg %p62
      %p209 = pneg %p59
      %p210 = scmp.lt.s32.totalorder %s15, 1
      %s211 = scalar_select %p210, %s15, 1
      %s212 = smul.addr %s211, 8
      %s213 = smul.addr %s212, 4
      %s214 = scalar_lea.vmem %s2, %s213
      %p215 = pneg %p88
      %p216 = pneg %p85
      %p217 = scmp.lt.s32.totalorder %s15, 1
      %s218 = scalar_select %p217, %s15, 1
      %s219 = scalar_lea.vmem %s3, %s218
      %p220 = pneg %p114
      %p221 = pneg %p111
      %p222 = pneg %p140
      %p223 = pneg %p137
      %p224 = scmp.lt.s32.totalorder %s15, 1
      %s225 = scalar_select %p224, %s15, 1
      %s226 = smul.addr %s225, 8
      %s227 = smul.addr %s226, 4
      %s228 = scalar_lea.vmem %s4, %s227
      %p229 = scmp.lt.s32.totalorder %s15, 1
      %s230 = scalar_select %p229, %s15, 1
      %s231 = smul.addr %s230, 8
      %s232 = smul.addr %s231, 4
      %s233 = scalar_lea.vmem %s0, %s232
      %p234 = scmp.lt.s32.totalorder %s15, 1
      %s235 = scalar_select %p234, %s15, 1
      %s236 = smul.addr %s235, 8
      %s237 = smul.addr %s236, 4
      %s238 = scalar_lea.vmem %s1, %s237
      %p239 = scmp.lt.s32.totalorder %s15, 1
      %s240 = scalar_select %p239, %s15, 1
      %s241 = smul.addr %s240, 8
      %s242 = smul.addr %s241, 4
      %s243 = scalar_lea.vmem %s2, %s242
      %p244 = scmp.lt.s32.totalorder %s15, 1
      %s245 = scalar_select %p244, %s15, 1
      %s246 = scalar_lea.vmem %s3, %s245
      %p247 = scmp.lt.s32.totalorder %s15, 1
      %s248 = scalar_select %p247, %s15, 1
      %s249 = smul.addr %s248, 8
      %s250 = smul.addr %s249, 4
      %s251 = scalar_lea.vmem %s4, %s250
      %v253 = vld [vmem:[%s246] sm:$0x1]
      %v254 = vld [vmem:[%s233] sm:$0xf]
      %v255 = vld [vmem:[%s233 + $0x4] sm:$0x1]
      %v256 = vld [vmem:[%s233 + $0x8] sm:$0xf]
      %v257 = vld [vmem:[%s233 + $0xc] sm:$0x1]
      %v258 = vld [vmem:[%s233 + $0x10] sm:$0xf]
      %v259 = vld [vmem:[%s233 + $0x14] sm:$0x1]
      %v260 = vld [vmem:[%s233 + $0x18] sm:$0xf]
      %v261 = vld [vmem:[%s233 + $0x1c] sm:$0x1]
      %v262 = vld [vmem:[%s238] sm:$0xf]
      %v263 = vld [vmem:[%s238 + $0x4] sm:$0x1]
      %v264 = vld [vmem:[%s238 + $0x8] sm:$0xf]
      %v265 = vld [vmem:[%s238 + $0xc] sm:$0x1]
      %v266 = vld [vmem:[%s238 + $0x10] sm:$0xf]
      %v267 = vld [vmem:[%s238 + $0x14] sm:$0x1]
      %v268 = vld [vmem:[%s238 + $0x18] sm:$0xf]
      %v269 = vld [vmem:[%s238 + $0x1c] sm:$0x1]
      %v270 = vld [vmem:[%s243] sm:$0xf]
      %v271 = vld [vmem:[%s243 + $0x4] sm:$0x1]
      %v272 = vld [vmem:[%s243 + $0x8] sm:$0xf]
      %v273 = vld [vmem:[%s243 + $0xc] sm:$0x1]
      %v274 = vld [vmem:[%s243 + $0x10] sm:$0xf]
      %v275 = vld [vmem:[%s243 + $0x14] sm:$0x1]
      %v276 = vld [vmem:[%s243 + $0x18] sm:$0xf]
      %v277 = vld [vmem:[%s243 + $0x1c] sm:$0x1]
      %v280 = vunpack.c.l.b16 %v254
      %v281 = vunpack.c.l.b16 %v255
      %v282 = vpack.c.b16 %v281, %v280
      %v285 = vunpack.c.l.b16 %v262
      %v286 = vunpack.c.l.b16 %v263
      %v287 = vpack.c.b16 %v286, %v285
      %vm288 = vcmask 64512
      %v290 = vsel %vm288, %v282, 0
      %v293 = vsel %vm288, %v287, 0
      %295 = vmatprep.subr.bf16.mxu0 0
      %296 = vmatpush1.bf16.xpose.msra.mxu0 0
      %297 = vmatprep.subr.bf16.mxu0 0
      %298 = vmatpush1.bf16.xpose.msra.mxu0 0
      %299 = vmatprep.subr.bf16.mxu0 0
      %300 = vmatpush1.bf16.xpose.msra.mxu0 0
      %301 = vmatprep.subr.bf16.mxu0 0
      %302 = vmatpush1.bf16.xpose.msra.mxu0 0
      %303 = vmatprep.subr.bf16.mxu0 0
      %304 = vmatpush1.bf16.xpose.msra.mxu0 0
      %305 = vmatprep.subr.bf16.mxu0 0
      %306 = vmatpush1.bf16.xpose.msra.mxu0 0
      %307 = vmatprep.subr.bf16.mxu0 0
      %308 = vmatpush1.bf16.xpose.msra.mxu0 0
      %309 = vmatprep.subr.bf16.mxu0 0
      %310 = vmatpush1.bf16.xpose.msra.mxu0 %v293
      %311 = vmatprep.subr.bf16.mxu0 0
      %312 = vmatpush2.bf16.xpose.msra.mxu0 0
      %313 = vmatprep.subr.bf16.mxu0 0
      %314 = vmatpush2.bf16.xpose.msra.mxu0 0
      %315 = vmatprep.subr.bf16.mxu0 0
      %316 = vmatpush2.bf16.xpose.msra.mxu0 0
      %317 = vmatprep.subr.bf16.mxu0 0
      %318 = vmatpush2.bf16.xpose.msra.mxu0 0
      %319 = vmatprep.subr.bf16.mxu0 0
      %320 = vmatpush2.bf16.xpose.msra.mxu0 0
      %321 = vmatprep.subr.bf16.mxu0 0
      %322 = vmatpush2.bf16.xpose.msra.mxu0 0
      %323 = vmatprep.subr.bf16.mxu0 0
      %324 = vmatpush2.bf16.xpose.msra.mxu0 0
      %325 = vmatprep.subr.bf16.mxu0 0
      %326 = vmatpush2.bf16.xpose.msra.mxu0 0
      %327 = vmatprep.mubr.bf16.mxu0 0
      %328 = vmatmul.mubr.bf16.gmra.mxu0 %v290
      %v329 = vpop.f32.mrf.mxu0
      %v330 = vadd.f32 0.0, %v329
      %v331 = vpop.f32.mrf.mxu0
      %v332 = vpop.f32.mrf.mxu0
      %v333 = vadd.f32 0.0, %v332
      %v334 = vpop.f32.mrf.mxu0
      %335 = vdwg.mxu0
      %v338 = vunpack.c.l.b16 %v256
      %v339 = vunpack.c.l.b16 %v257
      %v340 = vpack.c.b16 %v339, %v338
      %v343 = vunpack.c.l.b16 %v264
      %v344 = vunpack.c.l.b16 %v265
      %v345 = vpack.c.b16 %v344, %v343
      %v347 = vsel %vm288, %v340, 0
      %v350 = vsel %vm288, %v345, 0
      %352 = vmatprep.subr.bf16.mxu0 0
      %353 = vmatpush1.bf16.xpose.msra.mxu0 0
      %354 = vmatprep.subr.bf16.mxu0 0
      %355 = vmatpush1.bf16.xpose.msra.mxu0 0
      %356 = vmatprep.subr.bf16.mxu0 0
      %357 = vmatpush1.bf16.xpose.msra.mxu0 0
      %358 = vmatprep.subr.bf16.mxu0 0
      %359 = vmatpush1.bf16.xpose.msra.mxu0 0
      %360 = vmatprep.subr.bf16.mxu0 0
      %361 = vmatpush1.bf16.xpose.msra.mxu0 0
      %362 = vmatprep.subr.bf16.mxu0 0
      %363 = vmatpush1.bf16.xpose.msra.mxu0 0
      %364 = vmatprep.subr.bf16.mxu0 0
      %365 = vmatpush1.bf16.xpose.msra.mxu0 0
      %366 = vmatprep.subr.bf16.mxu0 0
      %367 = vmatpush1.bf16.xpose.msra.mxu0 %v350
      %368 = vmatprep.subr.bf16.mxu0 0
      %369 = vmatpush2.bf16.xpose.msra.mxu0 0
      %370 = vmatprep.subr.bf16.mxu0 0
      %371 = vmatpush2.bf16.xpose.msra.mxu0 0
      %372 = vmatprep.subr.bf16.mxu0 0
      %373 = vmatpush2.bf16.xpose.msra.mxu0 0
      %374 = vmatprep.subr.bf16.mxu0 0
      %375 = vmatpush2.bf16.xpose.msra.mxu0 0
      %376 = vmatprep.subr.bf16.mxu0 0
      %377 = vmatpush2.bf16.xpose.msra.mxu0 0
      %378 = vmatprep.subr.bf16.mxu0 0
      %379 = vmatpush2.bf16.xpose.msra.mxu0 0
      %380 = vmatprep.subr.bf16.mxu0 0
      %381 = vmatpush2.bf16.xpose.msra.mxu0 0
      %382 = vmatprep.subr.bf16.mxu0 0
      %383 = vmatpush2.bf16.xpose.msra.mxu0 0
      %384 = vmatprep.mubr.bf16.mxu0 0
      %385 = vmatmul.mubr.bf16.gmra.mxu0 %v347
      %v386 = vpop.f32.mrf.mxu0
      %v387 = vadd.f32 0.0, %v386
      %v388 = vpop.f32.mrf.mxu0
      %v389 = vpop.f32.mrf.mxu0
      %v390 = vadd.f32 0.0, %v389
      %v391 = vpop.f32.mrf.mxu0
      %392 = vdwg.mxu0
      %v395 = vunpack.c.l.b16 %v258
      %v396 = vunpack.c.l.b16 %v259
      %v397 = vpack.c.b16 %v396, %v395
      %v400 = vunpack.c.l.b16 %v266
      %v401 = vunpack.c.l.b16 %v267
      %v402 = vpack.c.b16 %v401, %v400
      %v404 = vsel %vm288, %v397, 0
      %v407 = vsel %vm288, %v402, 0
      %409 = vmatprep.subr.bf16.mxu0 0
      %410 = vmatpush1.bf16.xpose.msra.mxu0 0
      %411 = vmatprep.subr.bf16.mxu0 0
      %412 = vmatpush1.bf16.xpose.msra.mxu0 0
      %413 = vmatprep.subr.bf16.mxu0 0
      %414 = vmatpush1.bf16.xpose.msra.mxu0 0
      %415 = vmatprep.subr.bf16.mxu0 0
      %416 = vmatpush1.bf16.xpose.msra.mxu0 0
      %417 = vmatprep.subr.bf16.mxu0 0
      %418 = vmatpush1.bf16.xpose.msra.mxu0 0
      %419 = vmatprep.subr.bf16.mxu0 0
      %420 = vmatpush1.bf16.xpose.msra.mxu0 0
      %421 = vmatprep.subr.bf16.mxu0 0
      %422 = vmatpush1.bf16.xpose.msra.mxu0 0
      %423 = vmatprep.subr.bf16.mxu0 0
      %424 = vmatpush1.bf16.xpose.msra.mxu0 %v407
      %425 = vmatprep.subr.bf16.mxu0 0
      %426 = vmatpush2.bf16.xpose.msra.mxu0 0
      %427 = vmatprep.subr.bf16.mxu0 0
      %428 = vmatpush2.bf16.xpose.msra.mxu0 0
      %429 = vmatprep.subr.bf16.mxu0 0
      %430 = vmatpush2.bf16.xpose.msra.mxu0 0
      %431 = vmatprep.subr.bf16.mxu0 0
      %432 = vmatpush2.bf16.xpose.msra.mxu0 0
      %433 = vmatprep.subr.bf16.mxu0 0
      %434 = vmatpush2.bf16.xpose.msra.mxu0 0
      %435 = vmatprep.subr.bf16.mxu0 0
      %436 = vmatpush2.bf16.xpose.msra.mxu0 0
      %437 = vmatprep.subr.bf16.mxu0 0
      %438 = vmatpush2.bf16.xpose.msra.mxu0 0
      %439 = vmatprep.subr.bf16.mxu0 0
      %440 = vmatpush2.bf16.xpose.msra.mxu0 0
      %441 = vmatprep.mubr.bf16.mxu0 0
      %442 = vmatmul.mubr.bf16.gmra.mxu0 %v404
      %v443 = vpop.f32.mrf.mxu0
      %v444 = vadd.f32 0.0, %v443
      %v445 = vpop.f32.mrf.mxu0
      %v446 = vpop.f32.mrf.mxu0
      %v447 = vadd.f32 0.0, %v446
      %v448 = vpop.f32.mrf.mxu0
      %449 = vdwg.mxu0
      %v452 = vunpack.c.l.b16 %v260
      %v453 = vunpack.c.l.b16 %v261
      %v454 = vpack.c.b16 %v453, %v452
      %v457 = vunpack.c.l.b16 %v268
      %v458 = vunpack.c.l.b16 %v269
      %v459 = vpack.c.b16 %v458, %v457
      %v461 = vsel %vm288, %v454, 0
      %v464 = vsel %vm288, %v459, 0
      %466 = vmatprep.subr.bf16.mxu0 0
      %467 = vmatpush1.bf16.xpose.msra.mxu0 0
      %468 = vmatprep.subr.bf16.mxu0 0
      %469 = vmatpush1.bf16.xpose.msra.mxu0 0
      %470 = vmatprep.subr.bf16.mxu0 0
      %471 = vmatpush1.bf16.xpose.msra.mxu0 0
      %472 = vmatprep.subr.bf16.mxu0 0
      %473 = vmatpush1.bf16.xpose.msra.mxu0 0
      %474 = vmatprep.subr.bf16.mxu0 0
      %475 = vmatpush1.bf16.xpose.msra.mxu0 0
      %476 = vmatprep.subr.bf16.mxu0 0
      %477 = vmatpush1.bf16.xpose.msra.mxu0 0
      %478 = vmatprep.subr.bf16.mxu0 0
      %479 = vmatpush1.bf16.xpose.msra.mxu0 0
      %480 = vmatprep.subr.bf16.mxu0 0
      %481 = vmatpush1.bf16.xpose.msra.mxu0 %v464
      %482 = vmatprep.subr.bf16.mxu0 0
      %483 = vmatpush2.bf16.xpose.msra.mxu0 0
      %484 = vmatprep.subr.bf16.mxu0 0
      %485 = vmatpush2.bf16.xpose.msra.mxu0 0
      %486 = vmatprep.subr.bf16.mxu0 0
      %487 = vmatpush2.bf16.xpose.msra.mxu0 0
      %488 = vmatprep.subr.bf16.mxu0 0
      %489 = vmatpush2.bf16.xpose.msra.mxu0 0
      %490 = vmatprep.subr.bf16.mxu0 0
      %491 = vmatpush2.bf16.xpose.msra.mxu0 0
      %492 = vmatprep.subr.bf16.mxu0 0
      %493 = vmatpush2.bf16.xpose.msra.mxu0 0
      %494 = vmatprep.subr.bf16.mxu0 0
      %495 = vmatpush2.bf16.xpose.msra.mxu0 0
      %496 = vmatprep.subr.bf16.mxu0 0
      %497 = vmatpush2.bf16.xpose.msra.mxu0 0
      %498 = vmatprep.mubr.bf16.mxu0 0
      %499 = vmatmul.mubr.bf16.gmra.mxu0 %v461
      %v500 = vpop.f32.mrf.mxu0
      %v501 = vadd.f32 0.0, %v500
      %v502 = vpop.f32.mrf.mxu0
      %v503 = vpop.f32.mrf.mxu0
      %v504 = vadd.f32 0.0, %v503
      %v505 = vpop.f32.mrf.mxu0
      %506 = vdwg.mxu0
      %v507 = vmul.f32 %v330, 0.35355338
      %v508 = vmul.f32 %v333, 0.35355338
      %v509 = vmul.f32 %v387, 0.35355338
      %v510 = vmul.f32 %v390, 0.35355338
      %v511 = vmul.f32 %v444, 0.35355338
      %v512 = vmul.f32 %v447, 0.35355338
      %v513 = vmul.f32 %v501, 0.35355338
      %v514 = vmul.f32 %v504, 0.35355338
      %v516 = vlaneseq
      %v517 = vshrl.u32 %v516, 7
      %v518 = vsub.s32 0, %v517
      %v519 = vrot.slane %v253, %v518
      %v521 = vadd.f32 %v507, %v519
      %v522 = vadd.f32 %v508, %v519
      %v523 = vadd.f32 %v509, %v519
      %v524 = vadd.f32 %v510, %v519
      %v525 = vadd.f32 %v511, %v519
      %v526 = vadd.f32 %v512, %v519
      %v527 = vadd.f32 %v513, %v519
      %v528 = vadd.f32 %v514, %v519
      %vm529 = vcmask 80896
      %v530 = vsel %vm529, %v521, -inf
      %531 = vmax.xlane.f32.xlu0 %v530
      %v532 = vpop.xlane.xlu0 %531
      %vm533 = vcmask 74752
      %v534 = vsel %vm533, %v522, -inf
      %535 = vmax.xlane.f32.xlu0 %v534
      %v536 = vpop.xlane.xlu0 %535
      %v537 = vsel %vm529, %v523, -inf
      %538 = vmax.xlane.f32.xlu0 %v537
      %v539 = vpop.xlane.xlu0 %538
      %v540 = vsel %vm533, %v524, -inf
      %541 = vmax.xlane.f32.xlu0 %v540
      %v542 = vpop.xlane.xlu0 %541
      %v543 = vsel %vm529, %v525, -inf
      %544 = vmax.xlane.f32.xlu0 %v543
      %v545 = vpop.xlane.xlu0 %544
      %v546 = vsel %vm533, %v526, -inf
      %547 = vmax.xlane.f32.xlu0 %v546
      %v548 = vpop.xlane.xlu0 %547
      %v549 = vsel %vm529, %v527, -inf
      %550 = vmax.xlane.f32.xlu0 %v549
      %v551 = vpop.xlane.xlu0 %550
      %v552 = vsel %vm533, %v528, -inf
      %553 = vmax.xlane.f32.xlu0 %v552
      %v554 = vpop.xlane.xlu0 %553
      %v555 = vsub.f32 %v521, %v532
      %v556 = vsub.f32 %v522, %v536
      %v557 = vsub.f32 %v523, %v539
      %v558 = vsub.f32 %v524, %v542
      %v559 = vsub.f32 %v525, %v545
      %v560 = vsub.f32 %v526, %v548
      %v561 = vsub.f32 %v527, %v551
      %v562 = vsub.f32 %v528, %v554
      %v563 = vmul.f32 %v555, 1.442695
      %v564 = vpow.pop %v563
      %v565 = vmul.f32 %v556, 1.442695
      %v566 = vpow.pop %v565
      %v567 = vmul.f32 %v557, 1.442695
      %v568 = vpow.pop %v567
      %v569 = vmul.f32 %v558, 1.442695
      %v570 = vpow.pop %v569
      %v571 = vmul.f32 %v559, 1.442695
      %v572 = vpow.pop %v571
      %v573 = vmul.f32 %v560, 1.442695
      %v574 = vpow.pop %v573
      %v575 = vmul.f32 %v561, 1.442695
      %v576 = vpow.pop %v575
      %v577 = vmul.f32 %v562, 1.442695
      %v578 = vpow.pop %v577
      %v579 = vsel %vm529, %v564, 0.0
      %580 = vadd.xlane.f32.xlu0 %v579
      %v581 = vpop.xlane.xlu0 %580
      %v582 = vsel %vm533, %v566, 0.0
      %583 = vadd.xlane.f32.xlu0 %v582
      %v584 = vpop.xlane.xlu0 %583
      %v585 = vsel %vm529, %v568, 0.0
      %586 = vadd.xlane.f32.xlu0 %v585
      %v587 = vpop.xlane.xlu0 %586
      %v588 = vsel %vm533, %v570, 0.0
      %589 = vadd.xlane.f32.xlu0 %v588
      %v590 = vpop.xlane.xlu0 %589
      %v591 = vsel %vm529, %v572, 0.0
      %592 = vadd.xlane.f32.xlu0 %v591
      %v593 = vpop.xlane.xlu0 %592
      %v594 = vsel %vm533, %v574, 0.0
      %595 = vadd.xlane.f32.xlu0 %v594
      %v596 = vpop.xlane.xlu0 %595
      %v597 = vsel %vm529, %v576, 0.0
      %598 = vadd.xlane.f32.xlu0 %v597
      %v599 = vpop.xlane.xlu0 %598
      %v600 = vsel %vm533, %v578, 0.0
      %601 = vadd.xlane.f32.xlu0 %v600
      %v602 = vpop.xlane.xlu0 %601
      %v603 = vrcp.pop %v581
      %v604 = vrcp.pop %v584
      %v605 = vrcp.pop %v587
      %v606 = vrcp.pop %v590
      %v607 = vrcp.pop %v593
      %v608 = vrcp.pop %v596
      %v609 = vrcp.pop %v599
      %v610 = vrcp.pop %v602
      %v611 = vmul.f32 %v564, %v603
      %v612 = vmul.f32 %v566, %v604
      %v613 = vmul.f32 %v568, %v605
      %v614 = vmul.f32 %v570, %v606
      %v615 = vmul.f32 %v572, %v607
      %v616 = vmul.f32 %v574, %v608
      %v617 = vmul.f32 %v576, %v609
      %v618 = vmul.f32 %v578, %v610
      %v619 = vpack.c.bf16 %v612, %v611
      %v620 = vpack.c.bf16 %v614, %v613
      %v621 = vpack.c.bf16 %v616, %v615
      %v622 = vpack.c.bf16 %v618, %v617
      %v625 = vunpack.c.l.b16 %v270
      %v626 = vunpack.c.l.b16 %v271
      %v627 = vpack.c.b16 %v626, %v625
      %v629 = vsel %vm529, %v619, 0
      %vm631 = vcmask 1044480
      %v633 = vsel %vm631, %v627, 0
      %635 = vmatprep.subr.bf16.mxu0 0
      %636 = vmatpush1.bf16.msra.mxu0 0
      %637 = vmatprep.subr.bf16.mxu0 0
      %638 = vmatpush1.bf16.msra.mxu0 0
      %639 = vmatprep.subr.bf16.mxu0 0
      %640 = vmatpush1.bf16.msra.mxu0 0
      %641 = vmatprep.subr.bf16.mxu0 0
      %642 = vmatpush1.bf16.msra.mxu0 0
      %643 = vmatprep.subr.bf16.mxu0 0
      %644 = vmatpush1.bf16.msra.mxu0 0
      %645 = vmatprep.subr.bf16.mxu0 0
      %646 = vmatpush1.bf16.msra.mxu0 0
      %647 = vmatprep.subr.bf16.mxu0 0
      %648 = vmatpush1.bf16.msra.mxu0 0
      %649 = vmatprep.subr.bf16.mxu0 0
      %650 = vmatpush1.bf16.msra.mxu0 %v633
      %651 = vmatprep.subr.bf16.mxu0 0
      %652 = vmatpush2.bf16.msra.mxu0 0
      %653 = vmatprep.subr.bf16.mxu0 0
      %654 = vmatpush2.bf16.msra.mxu0 0
      %655 = vmatprep.subr.bf16.mxu0 0
      %656 = vmatpush2.bf16.msra.mxu0 0
      %657 = vmatprep.subr.bf16.mxu0 0
      %658 = vmatpush2.bf16.msra.mxu0 0
      %659 = vmatprep.subr.bf16.mxu0 0
      %660 = vmatpush2.bf16.msra.mxu0 0
      %661 = vmatprep.subr.bf16.mxu0 0
      %662 = vmatpush2.bf16.msra.mxu0 0
      %663 = vmatprep.subr.bf16.mxu0 0
      %664 = vmatpush2.bf16.msra.mxu0 0
      %665 = vmatprep.subr.bf16.mxu0 0
      %666 = vmatpush2.bf16.msra.mxu0 0
      %667 = vmatprep.mubr.bf16.mxu0 0
      %668 = vmatmul.mubr.bf16.gmra.mxu0 %v629
      %v669 = vpop.f32.mrf.mxu0
      %v670 = vadd.f32 0.0, %v669
      %v671 = vpop.f32.mrf.mxu0
      %v672 = vpop.f32.mrf.mxu0
      %v673 = vadd.f32 0.0, %v672
      %v674 = vpop.f32.mrf.mxu0
      %675 = vdwg.mxu0
      %v678 = vunpack.c.l.b16 %v272
      %v679 = vunpack.c.l.b16 %v273
      %v680 = vpack.c.b16 %v679, %v678
      %v682 = vsel %vm529, %v620, 0
      %v685 = vsel %vm631, %v680, 0
      %687 = vmatprep.subr.bf16.mxu0 0
      %688 = vmatpush1.bf16.msra.mxu0 0
      %689 = vmatprep.subr.bf16.mxu0 0
      %690 = vmatpush1.bf16.msra.mxu0 0
      %691 = vmatprep.subr.bf16.mxu0 0
      %692 = vmatpush1.bf16.msra.mxu0 0
      %693 = vmatprep.subr.bf16.mxu0 0
      %694 = vmatpush1.bf16.msra.mxu0 0
      %695 = vmatprep.subr.bf16.mxu0 0
      %696 = vmatpush1.bf16.msra.mxu0 0
      %697 = vmatprep.subr.bf16.mxu0 0
      %698 = vmatpush1.bf16.msra.mxu0 0
      %699 = vmatprep.subr.bf16.mxu0 0
      %700 = vmatpush1.bf16.msra.mxu0 0
      %701 = vmatprep.subr.bf16.mxu0 0
      %702 = vmatpush1.bf16.msra.mxu0 %v685
      %703 = vmatprep.subr.bf16.mxu0 0
      %704 = vmatpush2.bf16.msra.mxu0 0
      %705 = vmatprep.subr.bf16.mxu0 0
      %706 = vmatpush2.bf16.msra.mxu0 0
      %707 = vmatprep.subr.bf16.mxu0 0
      %708 = vmatpush2.bf16.msra.mxu0 0
      %709 = vmatprep.subr.bf16.mxu0 0
      %710 = vmatpush2.bf16.msra.mxu0 0
      %711 = vmatprep.subr.bf16.mxu0 0
      %712 = vmatpush2.bf16.msra.mxu0 0
      %713 = vmatprep.subr.bf16.mxu0 0
      %714 = vmatpush2.bf16.msra.mxu0 0
      %715 = vmatprep.subr.bf16.mxu0 0
      %716 = vmatpush2.bf16.msra.mxu0 0
      %717 = vmatprep.subr.bf16.mxu0 0
      %718 = vmatpush2.bf16.msra.mxu0 0
      %719 = vmatprep.mubr.bf16.mxu0 0
      %720 = vmatmul.mubr.bf16.gmra.mxu0 %v682
      %v721 = vpop.f32.mrf.mxu0
      %v722 = vadd.f32 0.0, %v721
      %v723 = vpop.f32.mrf.mxu0
      %v724 = vpop.f32.mrf.mxu0
      %v725 = vadd.f32 0.0, %v724
      %v726 = vpop.f32.mrf.mxu0
      %727 = vdwg.mxu0
      %v730 = vunpack.c.l.b16 %v274
      %v731 = vunpack.c.l.b16 %v275
      %v732 = vpack.c.b16 %v731, %v730
      %v734 = vsel %vm529, %v621, 0
      %v737 = vsel %vm631, %v732, 0
      %739 = vmatprep.subr.bf16.mxu0 0
      %740 = vmatpush1.bf16.msra.mxu0 0
      %741 = vmatprep.subr.bf16.mxu0 0
      %742 = vmatpush1.bf16.msra.mxu0 0
      %743 = vmatprep.subr.bf16.mxu0 0
      %744 = vmatpush1.bf16.msra.mxu0 0
      %745 = vmatprep.subr.bf16.mxu0 0
      %746 = vmatpush1.bf16.msra.mxu0 0
      %747 = vmatprep.subr.bf16.mxu0 0
      %748 = vmatpush1.bf16.msra.mxu0 0
      %749 = vmatprep.subr.bf16.mxu0 0
      %750 = vmatpush1.bf16.msra.mxu0 0
      %751 = vmatprep.subr.bf16.mxu0 0
      %752 = vmatpush1.bf16.msra.mxu0 0
      %753 = vmatprep.subr.bf16.mxu0 0
      %754 = vmatpush1.bf16.msra.mxu0 %v737
      %755 = vmatprep.subr.bf16.mxu0 0
      %756 = vmatpush2.bf16.msra.mxu0 0
      %757 = vmatprep.subr.bf16.mxu0 0
      %758 = vmatpush2.bf16.msra.mxu0 0
      %759 = vmatprep.subr.bf16.mxu0 0
      %760 = vmatpush2.bf16.msra.mxu0 0
      %761 = vmatprep.subr.bf16.mxu0 0
      %762 = vmatpush2.bf16.msra.mxu0 0
      %763 = vmatprep.subr.bf16.mxu0 0
      %764 = vmatpush2.bf16.msra.mxu0 0
      %765 = vmatprep.subr.bf16.mxu0 0
      %766 = vmatpush2.bf16.msra.mxu0 0
      %767 = vmatprep.subr.bf16.mxu0 0
      %768 = vmatpush2.bf16.msra.mxu0 0
      %769 = vmatprep.subr.bf16.mxu0 0
      %770 = vmatpush2.bf16.msra.mxu0 0
      %771 = vmatprep.mubr.bf16.mxu0 0
      %772 = vmatmul.mubr.bf16.gmra.mxu0 %v734
      %v773 = vpop.f32.mrf.mxu0
      %v774 = vadd.f32 0.0, %v773
      %v775 = vpop.f32.mrf.mxu0
      %v776 = vpop.f32.mrf.mxu0
      %v777 = vadd.f32 0.0, %v776
      %v778 = vpop.f32.mrf.mxu0
      %779 = vdwg.mxu0
      %v782 = vunpack.c.l.b16 %v276
      %v783 = vunpack.c.l.b16 %v277
      %v784 = vpack.c.b16 %v783, %v782
      %v786 = vsel %vm529, %v622, 0
      %v789 = vsel %vm631, %v784, 0
      %791 = vmatprep.subr.bf16.mxu0 0
      %792 = vmatpush1.bf16.msra.mxu0 0
      %793 = vmatprep.subr.bf16.mxu0 0
      %794 = vmatpush1.bf16.msra.mxu0 0
      %795 = vmatprep.subr.bf16.mxu0 0
      %796 = vmatpush1.bf16.msra.mxu0 0
      %797 = vmatprep.subr.bf16.mxu0 0
      %798 = vmatpush1.bf16.msra.mxu0 0
      %799 = vmatprep.subr.bf16.mxu0 0
      %800 = vmatpush1.bf16.msra.mxu0 0
      %801 = vmatprep.subr.bf16.mxu0 0
      %802 = vmatpush1.bf16.msra.mxu0 0
      %803 = vmatprep.subr.bf16.mxu0 0
      %804 = vmatpush1.bf16.msra.mxu0 0
      %805 = vmatprep.subr.bf16.mxu0 0
      %806 = vmatpush1.bf16.msra.mxu0 %v789
      %807 = vmatprep.subr.bf16.mxu0 0
      %808 = vmatpush2.bf16.msra.mxu0 0
      %809 = vmatprep.subr.bf16.mxu0 0
      %810 = vmatpush2.bf16.msra.mxu0 0
      %811 = vmatprep.subr.bf16.mxu0 0
      %812 = vmatpush2.bf16.msra.mxu0 0
      %813 = vmatprep.subr.bf16.mxu0 0
      %814 = vmatpush2.bf16.msra.mxu0 0
      %815 = vmatprep.subr.bf16.mxu0 0
      %816 = vmatpush2.bf16.msra.mxu0 0
      %817 = vmatprep.subr.bf16.mxu0 0
      %818 = vmatpush2.bf16.msra.mxu0 0
      %819 = vmatprep.subr.bf16.mxu0 0
      %820 = vmatpush2.bf16.msra.mxu0 0
      %821 = vmatprep.subr.bf16.mxu0 0
      %822 = vmatpush2.bf16.msra.mxu0 0
      %823 = vmatprep.mubr.bf16.mxu0 0
      %824 = vmatmul.mubr.bf16.gmra.mxu0 %v786
      %v825 = vpop.f32.mrf.mxu0
      %v826 = vadd.f32 0.0, %v825
      %v827 = vpop.f32.mrf.mxu0
      %v828 = vpop.f32.mrf.mxu0
      %v829 = vadd.f32 0.0, %v828
      %v830 = vpop.f32.mrf.mxu0
      %831 = vdwg.mxu0
      %v832 = vpack.c.bf16 %v673, %v670
      %v833 = vpack.c.bf16 %v725, %v722
      %v834 = vpack.c.bf16 %v777, %v774
      %v835 = vpack.c.bf16 %v829, %v826
      %v840 = vunpack.c.l.b16 %v832
      %v841 = vunpack.c.h.b16 %v832
      %v842 = vunpack.c.l.b16 %v833
      %v843 = vunpack.c.h.b16 %v833
      %v844 = vunpack.c.l.b16 %v834
      %v845 = vunpack.c.h.b16 %v834
      %v846 = vunpack.c.l.b16 %v835
      %v847 = vunpack.c.h.b16 %v835
      %v848 = vpack.c.b16 %v840, %v840
      %v849 = vpack.c.b16 %v841, %v841
      %v850 = vpack.c.b16 %v842, %v842
      %v851 = vpack.c.b16 %v843, %v843
      %v852 = vpack.c.b16 %v844, %v844
      %v853 = vpack.c.b16 %v845, %v845
      %v854 = vpack.c.b16 %v846, %v846
      %v855 = vpack.c.b16 %v847, %v847
      %vm864 = vcmask 60416
      %865 = vst.msk [vmem:[%s251] sm:$0xf] %vm864, %v848
      %vm866 = vcmask 57344
      %867 = vst.msk [vmem:[%s251 + $0x4] sm:$0x1] %vm866, %v849
      %868 = vst.msk [vmem:[%s251 + $0x8] sm:$0xf] %vm864, %v850
      %869 = vst.msk [vmem:[%s251 + $0xc] sm:$0x1] %vm866, %v851
      %870 = vst.msk [vmem:[%s251 + $0x10] sm:$0xf] %vm864, %v852
      %871 = vst.msk [vmem:[%s251 + $0x14] sm:$0x1] %vm866, %v853
      %872 = vst.msk [vmem:[%s251 + $0x18] sm:$0xf] %vm864, %v854
      %873 = vst.msk [vmem:[%s251 + $0x1c] sm:$0x1] %vm866, %v855
      %p874 = scmp.lt.s32.totalorder %s15, 1
      %s875 = scalar_select %p874, %s15, 1
      %s876 = smul.addr %s875, 8
      %s877 = smul.addr %s876, 4
      %s878 = scalar_lea.vmem %s4, %s877
      // Predicated region
      $region37: #{transformer_forward.28} parent=35 // pred_check
        %p879 = pneg %p137
      $region38: #{transformer_forward.28} parent=35 // pred_check_branch
        %881 = sbr.rel (%p879) target = $region40
      $region39: #{transformer_forward.28} parent=35 // pred_region
        _
      $region40: #{transformer_forward.28} parent=35 // pred_fallthru
        _
    $region36: #{transformer_forward.28} parent=5 // pred_fallthru
      _
    %p882 = scmp.le.s32.totalorder 2, %s10
    // Predicated region
    $region41: #{transformer_forward.28} parent=5 // pred_check
      %p883 = pneg %p882
    $region42: #{transformer_forward.28} parent=5 // pred_check_branch
      %885 = sbr.rel (%p883) target = $region44
    $region43: #{transformer_forward.28} parent=5 // pred_region
      %s886 = ssub.s32 %s10, 2
      // Predicated region
      $region45: #{transformer_forward.28} parent=43 // pred_check
        %p887 = pneg %p143
      $region46: #{transformer_forward.28} parent=43 // pred_check_branch
        %889 = sbr.rel (%p887) target = $region48
      $region47: #{transformer_forward.28} parent=43 // pred_region
        %p890 = scmp.lt.s32.totalorder %s16, 1
        %s891 = scalar_select %p890, %s16, 1
        %s892 = smul.addr %s891, 8
        %s893 = smul.addr %s892, 4
        %s894 = scalar_lea.vmem %s4, %s893
      $region48: #{transformer_forward.28} parent=43 // pred_fallthru
        _
    $region44: #{transformer_forward.28} parent=5 // pred_fallthru
      _
  $region6: #{transformer_forward.28} parent=0 // loop_footer
    %s14 = sadd.s32 1, %s10
  $region7: #{transformer_forward.28} parent=0 // loop_footer_branch
    %9 = sbr.rel target = $region3
  $region8: #{transformer_forward.28} parent=0 // loop_exit
    _

// kernel: transformer_forward.35
$region0: #{transformer_forward.35}
  #allocation0 [shape = 'u32[]', space=smem, size = 0x4, offset = 0x4, fixed_abs, tag = 'smem constant byte address 0x4 - core index']
  #allocation1 [shape = 'u32[144,128]{1,0:T(1,128)}', space=vmem, size = 0x12000, scoped, tag = 'internal scratch']
  %s0 = inlined_call_operand.vmem [shape: f32[32,32], index: 0, kind: input, shape index: {}]
  %s1 = inlined_call_operand.vmem [shape: f32[1,32], index: 1, kind: input, shape index: {}]
  %s2 = inlined_call_operand.vmem [shape: f32[1,32], index: 2, kind: input, shape index: {}]
  %s3 = inlined_call_operand.vmem [shape: f32[32,32], index: 3, kind: output, shape index: {}]
  %s4 = sld [smem:[#allocation0]]
  $region45: #{transformer_forward.35} parent=0
    _
  %s6 = ssub.s32 1, %s4
  %s7 = scalar_select 0, %s6, %s4
  loop: start=0, step=1, limit=4
  $region2: #{transformer_forward.35} parent=0 // loop_pre_header
    _
  $region3: #{transformer_forward.35} parent=0 // loop_header
    %s9 = sphi 0, %s13
    %p10 = scmp.ge.s32.totalorder %s9, 4
    %s19 = sphi 0, %s21
    %s22 = sphi 0, %s19
    %s23 = sphi 0, %s22
    %s39 = sphi 0, %s23
    %s43 = sphi 0, %s43
    %s45 = sphi 0, %s43
    %s46 = sphi 0, %s45
    %s60 = sphi 0, %s46
    %s64 = sphi 0, %s64
    %s66 = sphi 0, %s64
    %s67 = sphi 0, %s66
    %s81 = sphi 0, %s67
    %s87 = sphi 0, %s89
    %s90 = sphi 0, %s87
    %s91 = sphi 0, %s90
    %s107 = sphi 0, %s91
  $region4: #{transformer_forward.35} parent=0 // loop_header_branch
    %12 = sbr.rel (%p10) target = $region8
  $region5: #{transformer_forward.35} parent=0 // loop_body
    %s14 = ssub.s32 %s9, 1
    %s15 = ssub.s32 %s9, 2
    %s16 = sadd.s32 %s9, 1
    %s17 = ssub.s32 %s9, %s16
    %p18 = scmp.eq.s32.totalorder %s17, 0
    %s20 = sadd.s32 %s19, 1
    %s21 = scalar_select %p18, %s19, %s20
    %p24 = pneg %p18
    %p25 = scmp.eq.s32.totalorder %s9, 1
    %p26 = por %p24, %p25
    %p27 = scmp.ne.s32.totalorder %s19, %s22
    %p28 = scmp.eq.s32.totalorder %s9, 0
    %p29 = por %p27, %p28
    %p30 = scmp.ne.s32.totalorder %s19, %s22
    %p31 = scmp.eq.s32.totalorder %s14, 1
    %p32 = por %p30, %p31
    %p33 = scmp.ne.s32.totalorder %s22, %s23
    %p34 = scmp.eq.s32.totalorder %s14, 0
    %p35 = por %p33, %p34
    %p36 = scmp.ne.s32.totalorder %s22, %s23
    %p37 = scmp.eq.s32.totalorder %s15, 1
    %p38 = por %p36, %p37
    %p40 = scmp.ne.s32.totalorder %s23, %s39
    %p41 = scmp.eq.s32.totalorder %s15, 0
    %p42 = por %p40, %p41
    %s44 = sadd.s32 %s43, 1
    %p47 = scmp.eq.s32.totalorder %s9, 1
    %p48 = scmp.ne.s32.totalorder %s43, %s45
    %p49 = scmp.eq.s32.totalorder %s9, 0
    %p50 = por %p48, %p49
    %p51 = scmp.ne.s32.totalorder %s43, %s45
    %p52 = scmp.eq.s32.totalorder %s14, 1
    %p53 = por %p51, %p52
    %p54 = scmp.ne.s32.totalorder %s45, %s46
    %p55 = scmp.eq.s32.totalorder %s14, 0
    %p56 = por %p54, %p55
    %p57 = scmp.ne.s32.totalorder %s45, %s46
    %p58 = scmp.eq.s32.totalorder %s15, 1
    %p59 = por %p57, %p58
    %p61 = scmp.ne.s32.totalorder %s46, %s60
    %p62 = scmp.eq.s32.totalorder %s15, 0
    %p63 = por %p61, %p62
    %s65 = sadd.s32 %s64, 1
    %p68 = scmp.eq.s32.totalorder %s9, 1
    %p69 = scmp.ne.s32.totalorder %s64, %s66
    %p70 = scmp.eq.s32.totalorder %s9, 0
    %p71 = por %p69, %p70
    %p72 = scmp.ne.s32.totalorder %s64, %s66
    %p73 = scmp.eq.s32.totalorder %s14, 1
    %p74 = por %p72, %p73
    %p75 = scmp.ne.s32.totalorder %s66, %s67
    %p76 = scmp.eq.s32.totalorder %s14, 0
    %p77 = por %p75, %p76
    %p78 = scmp.ne.s32.totalorder %s66, %s67
    %p79 = scmp.eq.s32.totalorder %s15, 1
    %p80 = por %p78, %p79
    %p82 = scmp.ne.s32.totalorder %s67, %s81
    %p83 = scmp.eq.s32.totalorder %s15, 0
    %p84 = por %p82, %p83
    %s85 = ssub.s32 %s9, %s16
    %p86 = scmp.eq.s32.totalorder %s85, 0
    %s88 = sadd.s32 %s87, 1
    %s89 = scalar_select %p86, %s87, %s88
    %p92 = pneg %p86
    %p93 = scmp.eq.s32.totalorder %s9, 1
    %p94 = por %p92, %p93
    %p95 = scmp.ne.s32.totalorder %s87, %s90
    %p96 = scmp.eq.s32.totalorder %s9, 0
    %p97 = por %p95, %p96
    %p98 = scmp.ne.s32.totalorder %s87, %s90
    %p99 = scmp.eq.s32.totalorder %s14, 1
    %p100 = por %p98, %p99
    %p101 = scmp.ne.s32.totalorder %s90, %s91
    %p102 = scmp.eq.s32.totalorder %s14, 0
    %p103 = por %p101, %p102
    %p104 = scmp.ne.s32.totalorder %s90, %s91
    %p105 = scmp.eq.s32.totalorder %s15, 1
    %p106 = por %p104, %p105
    %p108 = scmp.ne.s32.totalorder %s91, %s107
    %p109 = scmp.eq.s32.totalorder %s15, 0
    %p110 = por %p108, %p109
    %p111 = scmp.le.s32.totalorder 1, %s9
    %p112 = scmp.lt.s32.totalorder %s9, 3
    %p113 = pnand %p111, %p112
    %p114 = pneg %p113
    // Predicated region
    $region9: #{transformer_forward.35} parent=5 // pred_check
      _
    $region10: #{transformer_forward.35} parent=5 // pred_check_branch
      %116 = sbr.rel (%p113) target = $region12
    $region11: #{transformer_forward.35} parent=5 // pred_region
      %s117 = ssub.s32 %s9, 1
      // Predicated region
      $region13: #{transformer_forward.35} parent=11 // pred_check
        %p118 = pneg %p56
      $region14: #{transformer_forward.35} parent=11 // pred_check_branch
        %120 = sbr.rel (%p118) target = $region16
      $region15: #{transformer_forward.35} parent=11 // pred_region
        _
      $region16: #{transformer_forward.35} parent=11 // pred_fallthru
        _
      // Predicated region
      $region17: #{transformer_forward.35} parent=11 // pred_check
        %p121 = pneg %p77
      $region18: #{transformer_forward.35} parent=11 // pred_check_branch
        %123 = sbr.rel (%p121) target = $region20
      $region19: #{transformer_forward.35} parent=11 // pred_region
        _
      $region20: #{transformer_forward.35} parent=11 // pred_fallthru
        _
    $region12: #{transformer_forward.35} parent=5 // pred_fallthru
      _
    %p124 = scmp.lt.s32.totalorder %s9, 2
    // Predicated region
    $region21: #{transformer_forward.35} parent=5 // pred_check
      %p125 = pneg %p124
    $region22: #{transformer_forward.35} parent=5 // pred_check_branch
      %127 = sbr.rel (%p125) target = $region24
    $region23: #{transformer_forward.35} parent=5 // pred_region
      // Predicated region
      $region25: #{transformer_forward.35} parent=23 // pred_check
        %p128 = pneg %p29
      $region26: #{transformer_forward.35} parent=23 // pred_check_branch
        %130 = sbr.rel (%p128) target = $region28
      $region27: #{transformer_forward.35} parent=23 // pred_region
        %s131 = smul.u32 2, %s9
        %p132 = scmp.lt.s32.totalorder %s131, 3
        %s133 = scalar_select %p132, %s131, 3
        %s134 = smul.addr %s133, 8
        %s135 = scalar_lea.vmem %s0, %s134
        %s136 = smul.u32 2, %s9
      $region28: #{transformer_forward.35} parent=23 // pred_fallthru
        _
    $region24: #{transformer_forward.35} parent=5 // pred_fallthru
      _
    %p137 = scmp.le.s32.totalorder 1, %s9
    %p138 = scmp.lt.s32.totalorder %s9, 3
    %p139 = pnand %p137, %p138
    %p140 = pneg %p139
    // Predicated region
    $region29: #{transformer_forward.35} parent=5 // pred_check
      _
    $region30: #{transformer_forward.35} parent=5 // pred_check_branch
      %142 = sbr.rel (%p139) target = $region32
    $region31: #{transformer_forward.35} parent=5 // pred_region
      %s143 = ssub.s32 %s9, 1
      %s144 = smul.u32 2, %s14
      %p145 = scmp.lt.s32.totalorder %s144, 3
      %s146 = scalar_select %p145, %s144, 3
      %s147 = smul.addr %s146, 8
      %s148 = scalar_lea.vmem %s0, %s147
      %p149 = pneg %p35
      %p150 = pneg %p32
      %p151 = pneg %p56
      %p152 = pneg %p53
      %p153 = pneg %p77
      %p154 = pneg %p74
      %p155 = pneg %p103
      %p156 = pneg %p100
      %s157 = smul.u32 2, %s14
      %p158 = scmp.lt.s32.totalorder %s157, 3
      %s159 = scalar_select %p158, %s157, 3
      %s160 = smul.addr %s159, 8
      %s161 = scalar_lea.vmem %s3, %s160
      %s162 = smul.u32 2, %s14
      %p163 = scmp.lt.s32.totalorder %s162, 3
      %s164 = scalar_select %p163, %s162, 3
      %s165 = smul.addr %s164, 8
      %s166 = scalar_lea.vmem %s0, %s165
      %s167 = smul.u32 2, %s14
      %s168 = smul.u32 2, %s14
      %p169 = scmp.lt.s32.totalorder %s168, 3
      %s170 = scalar_select %p169, %s168, 3
      %s171 = smul.addr %s170, 8
      %s172 = scalar_lea.vmem %s3, %s171
      %s173 = smul.u32 2, %s14
      %v174 = vld [vmem:[%s166] sm:$0xff]
      %v175 = vld [vmem:[%s166 + $0x8] sm:$0xff]
      %v176 = vld [vmem:[%s1] sm:$0x1]
      %v177 = vld [vmem:[%s2] sm:$0x1]
      %vm178 = vcmask 261120
      %v179 = vsel %vm178, %v174, 0.0
      %180 = vadd.xlane.f32.xlu0 %v179
      %v181 = vpop.xlane.xlu0 %180
      %v182 = vsel %vm178, %v175, 0.0
      %183 = vadd.xlane.f32.xlu0 %v182
      %v184 = vpop.xlane.xlu0 %183
      %v185 = vrcp.pop 32.0
      %v186 = vmul.f32 %v181, %v185
      %v187 = vmul.f32 %v184, %v185
      %v188 = vsub.f32 %v174, %v186
      %v189 = vsub.f32 %v175, %v187
      %v190 = vmul.f32 %v188, %v188
      %v191 = vmul.f32 %v189, %v189
      %v192 = vsel %vm178, %v190, 0.0
      %193 = vadd.xlane.f32.xlu0 %v192
      %v194 = vpop.xlane.xlu0 %193
      %v195 = vsel %vm178, %v191, 0.0
      %196 = vadd.xlane.f32.xlu0 %v195
      %v197 = vpop.xlane.xlu0 %196
      %v198 = vmul.f32 %v194, %v185
      %v199 = vmul.f32 %v197, %v185
      %v200 = vadd.f32 %v198, 1e-05
      %v201 = vadd.f32 %v199, 1e-05
      %v202 = vrsqrt.pop %v200
      %v203 = vrsqrt.pop %v201
      %v204 = vmul.f32 %v188, %v202
      %v205 = vmul.f32 %v189, %v203
      %v207 = vlaneseq
      %v208 = vshrl.u32 %v207, 7
      %v209 = vsub.s32 0, %v208
      %v210 = vrot.slane %v176, %v209
      %v212 = vmul.f32 %v204, %v210
      %v213 = vmul.f32 %v205, %v210
      %v215 = vlaneseq
      %v216 = vshrl.u32 %v215, 7
      %v217 = vsub.s32 0, %v216
      %v218 = vrot.slane %v177, %v217
      %v220 = vadd.f32 %v212, %v218
      %v221 = vadd.f32 %v213, %v218
      %222 = vst.msk [vmem:[%s172] sm:$0xff] %vm178, %v220
      %223 = vst.msk [vmem:[%s172 + $0x8] sm:$0xff] %vm178, %v221
      %s224 = smul.u32 2, %s14
      %p225 = scmp.lt.s32.totalorder %s224, 3
      %s226 = scalar_select %p225, %s224, 3
      %s227 = smul.addr %s226, 8
      %s228 = scalar_lea.vmem %s3, %s227
      // Predicated region
      $region33: #{transformer_forward.35} parent=31 // pred_check
        %p229 = pneg %p100
      $region34: #{transformer_forward.35} parent=31 // pred_check_branch
        %231 = sbr.rel (%p229) target = $region36
      $region35: #{transformer_forward.35} parent=31 // pred_region
        %s232 = smul.u32 2, %s14
      $region36: #{transformer_forward.35} parent=31 // pred_fallthru
        _
    $region32: #{transformer_forward.35} parent=5 // pred_fallthru
      _
    %p233 = scmp.le.s32.totalorder 2, %s9
    // Predicated region
    $region37: #{transformer_forward.35} parent=5 // pred_check
      %p234 = pneg %p233
    $region38: #{transformer_forward.35} parent=5 // pred_check_branch
      %236 = sbr.rel (%p234) target = $region40
    $region39: #{transformer_forward.35} parent=5 // pred_region
      %s237 = ssub.s32 %s9, 2
      // Predicated region
      $region41: #{transformer_forward.35} parent=39 // pred_check
        %p238 = pneg %p106
      $region42: #{transformer_forward.35} parent=39 // pred_check_branch
        %240 = sbr.rel (%p238) target = $region44
      $region43: #{transformer_forward.35} parent=39 // pred_region
        %s241 = smul.u32 2, %s15
        %p242 = scmp.lt.s32.totalorder %s241, 3
        %s243 = scalar_select %p242, %s241, 3
        %s244 = smul.addr %s243, 8
        %s245 = scalar_lea.vmem %s3, %s244
      $region44: #{transformer_forward.35} parent=39 // pred_fallthru
        _
    $region40: #{transformer_forward.35} parent=5 // pred_fallthru
      _
  $region6: #{transformer_forward.35} parent=0 // loop_footer
    %s13 = sadd.s32 1, %s9
  $region7: #{transformer_forward.35} parent=0 // loop_footer_branch
    %8 = sbr.rel target = $region3
  $region8: #{transformer_forward.35} parent=0 // loop_exit
    _

// kernel: transformer_forward.36
$region0: #{transformer_forward.36}
  #allocation0 [shape = 'u32[]', space=smem, size = 0x4, offset = 0x4, fixed_abs, tag = 'smem constant byte address 0x4 - core index']
  #allocation1 [shape = 'u32[144,128]{1,0:T(1,128)}', space=vmem, size = 0x12000, scoped, tag = 'internal scratch']
  %s0 = inlined_call_operand.vmem [shape: bf16[16,32], index: 0, kind: input, shape index: {}]
  %s1 = inlined_call_operand.vmem [shape: bf16[32,128], index: 1, kind: input, shape index: {}]
  %s2 = inlined_call_operand.vmem [shape: f32[1,128], index: 2, kind: input, shape index: {}]
  %s3 = inlined_call_operand.vmem [shape: bf16[16,128], index: 3, kind: output, shape index: {}]
  %s4 = sld [smem:[#allocation0]]
  $region45: #{transformer_forward.36} parent=0
    _
  %s6 = ssub.s32 1, %s4
  %s7 = scalar_select 0, %s6, %s4
  loop: start=0, step=1, limit=4
  $region2: #{transformer_forward.36} parent=0 // loop_pre_header
    _
  $region3: #{transformer_forward.36} parent=0 // loop_header
    %s9 = sphi 0, %s13
    %p10 = scmp.ge.s32.totalorder %s9, 4
    %s16 = sphi 0, %s28
    %s17 = sphi 0, %s24
    %s18 = sphi 0, %s16
    %s19 = sphi 0, %s17
    %s20 = sphi 0, %s18
    %s21 = sphi 0, %s19
    %s31 = sphi 0, %s33
    %s34 = sphi 0, %s31
    %s35 = sphi 0, %s34
    %s51 = sphi 0, %s35
    %s57 = sphi 0, %s59
    %s60 = sphi 0, %s57
    %s61 = sphi 0, %s60
    %s77 = sphi 0, %s61
    %s83 = sphi 0, %s85
    %s86 = sphi 0, %s83
    %s87 = sphi 0, %s86
    %s103 = sphi 0, %s87
    %s111 = sphi 0, %s113
    %s114 = sphi 0, %s111
    %s115 = sphi 0, %s114
    %s131 = sphi 0, %s115
  $region4: #{transformer_forward.36} parent=0 // loop_header_branch
    %12 = sbr.rel (%p10) target = $region8
  $region5: #{transformer_forward.36} parent=0 // loop_body
    %s14 = ssub.s32 %s9, 1
    %s15 = ssub.s32 %s9, 2
    %s22 = sadd.s32 1, %s17
    %p23 = scmp.ge.s32.totalorder %s22, 1
    %s24 = scalar_select %p23, 0, %s22
    %s25 = sadd.s32 1, %s16
    %s26 = scalar_select %p23, %s25, %s16
    %p27 = scmp.ge.s32.totalorder %s26, 2
    %s28 = scalar_select %p27, 0, %s26
    %s29 = ssub.s32 %s16, %s28
    %p30 = scmp.eq.s32.totalorder %s29, 0
    %s32 = sadd.s32 %s31, 1
    %s33 = scalar_select %p30, %s31, %s32
    %p36 = pneg %p30
    %p37 = scmp.eq.s32.totalorder %s9, 1
    %p38 = por %p36, %p37
    %p39 = scmp.ne.s32.totalorder %s31, %s34
    %p40 = scmp.eq.s32.totalorder %s9, 0
    %p41 = por %p39, %p40
    %p42 = scmp.ne.s32.totalorder %s31, %s34
    %p43 = scmp.eq.s32.totalorder %s14, 1
    %p44 = por %p42, %p43
    %p45 = scmp.ne.s32.totalorder %s34, %s35
    %p46 = scmp.eq.s32.totalorder %s14, 0
    %p47 = por %p45, %p46
    %p48 = scmp.ne.s32.totalorder %s34, %s35
    %p49 = scmp.eq.s32.totalorder %s15, 1
    %p50 = por %p48, %p49
    %p52 = scmp.ne.s32.totalorder %s35, %s51
    %p53 = scmp.eq.s32.totalorder %s15, 0
    %p54 = por %p52, %p53
    %s55 = ssub.s32 %s17, %s24
    %p56 = scmp.eq.s32.totalorder %s55, 0
    %s58 = sadd.s32 %s57, 1
    %s59 = scalar_select %p56, %s57, %s58
    %p62 = pneg %p56
    %p63 = scmp.eq.s32.totalorder %s9, 1
    %p64 = por %p62, %p63
    %p65 = scmp.ne.s32.totalorder %s57, %s60
    %p66 = scmp.eq.s32.totalorder %s9, 0
    %p67 = por %p65, %p66
    %p68 = scmp.ne.s32.totalorder %s57, %s60
    %p69 = scmp.eq.s32.totalorder %s14, 1
    %p70 = por %p68, %p69
    %p71 = scmp.ne.s32.totalorder %s60, %s61
    %p72 = scmp.eq.s32.totalorder %s14, 0
    %p73 = por %p71, %p72
    %p74 = scmp.ne.s32.totalorder %s60, %s61
    %p75 = scmp.eq.s32.totalorder %s15, 1
    %p76 = por %p74, %p75
    %p78 = scmp.ne.s32.totalorder %s61, %s77
    %p79 = scmp.eq.s32.totalorder %s15, 0
    %p80 = por %p78, %p79
    %s81 = ssub.s32 %s17, %s24
    %p82 = scmp.eq.s32.totalorder %s81, 0
    %s84 = sadd.s32 %s83, 1
    %s85 = scalar_select %p82, %s83, %s84
    %p88 = pneg %p82
    %p89 = scmp.eq.s32.totalorder %s9, 1
    %p90 = por %p88, %p89
    %p91 = scmp.ne.s32.totalorder %s83, %s86
    %p92 = scmp.eq.s32.totalorder %s9, 0
    %p93 = por %p91, %p92
    %p94 = scmp.ne.s32.totalorder %s83, %s86
    %p95 = scmp.eq.s32.totalorder %s14, 1
    %p96 = por %p94, %p95
    %p97 = scmp.ne.s32.totalorder %s86, %s87
    %p98 = scmp.eq.s32.totalorder %s14, 0
    %p99 = por %p97, %p98
    %p100 = scmp.ne.s32.totalorder %s86, %s87
    %p101 = scmp.eq.s32.totalorder %s15, 1
    %p102 = por %p100, %p101
    %p104 = scmp.ne.s32.totalorder %s87, %s103
    %p105 = scmp.eq.s32.totalorder %s15, 0
    %p106 = por %p104, %p105
    %s107 = ssub.s32 %s16, %s28
    %s108 = ssub.s32 %s17, %s24
    %s109 = sor.u32 %s107, %s108
    %p110 = scmp.eq.s32.totalorder %s109, 0
    %s112 = sadd.s32 %s111, 1
    %s113 = scalar_select %p110, %s111, %s112
    %p116 = pneg %p110
    %p117 = scmp.eq.s32.totalorder %s9, 1
    %p118 = por %p116, %p117
    %p119 = scmp.ne.s32.totalorder %s111, %s114
    %p120 = scmp.eq.s32.totalorder %s9, 0
    %p121 = por %p119, %p120
    %p122 = scmp.ne.s32.totalorder %s111, %s114
    %p123 = scmp.eq.s32.totalorder %s14, 1
    %p124 = por %p122, %p123
    %p125 = scmp.ne.s32.totalorder %s114, %s115
    %p126 = scmp.eq.s32.totalorder %s14, 0
    %p127 = por %p125, %p126
    %p128 = scmp.ne.s32.totalorder %s114, %s115
    %p129 = scmp.eq.s32.totalorder %s15, 1
    %p130 = por %p128, %p129
    %p132 = scmp.ne.s32.totalorder %s115, %s131
    %p133 = scmp.eq.s32.totalorder %s15, 0
    %p134 = por %p132, %p133
    %p135 = scmp.le.s32.totalorder 1, %s9
    %p136 = scmp.lt.s32.totalorder %s9, 3
    %p137 = pnand %p135, %p136
    %p138 = pneg %p137
    // Predicated region
    $region9: #{transformer_forward.36} parent=5 // pred_check
      _
    $region10: #{transformer_forward.36} parent=5 // pred_check_branch
      %140 = sbr.rel (%p137) target = $region12
    $region11: #{transformer_forward.36} parent=5 // pred_region
      %s141 = ssub.s32 %s9, 1
      // Predicated region
      $region13: #{transformer_forward.36} parent=11 // pred_check
        %p142 = pneg %p73
      $region14: #{transformer_forward.36} parent=11 // pred_check_branch
        %144 = sbr.rel (%p142) target = $region16
      $region15: #{transformer_forward.36} parent=11 // pred_region
        %p145 = scmp.lt.s32.totalorder %s19, 0
        %s146 = scalar_select %p145, %s19, 0
        %s147 = smul.addr %s146, 4
        %s148 = scalar_lea.vmem %s1, %s147
      $region16: #{transformer_forward.36} parent=11 // pred_fallthru
        _
      // Predicated region
      $region17: #{transformer_forward.36} parent=11 // pred_check
        %p149 = pneg %p99
      $region18: #{transformer_forward.36} parent=11 // pred_check_branch
        %151 = sbr.rel (%p149) target = $region20
      $region19: #{transformer_forward.36} parent=11 // pred_region
        %p152 = scmp.lt.s32.totalorder %s19, 0
        %s153 = scalar_select %p152, %s19, 0
        %s154 = scalar_lea.vmem %s2, %s153
      $region20: #{transformer_forward.36} parent=11 // pred_fallthru
        _
    $region12: #{transformer_forward.36} parent=5 // pred_fallthru
      _
    %p155 = scmp.lt.s32.totalorder %s9, 2
    // Predicated region
    $region21: #{transformer_forward.36} parent=5 // pred_check
      %p156 = pneg %p155
    $region22: #{transformer_forward.36} parent=5 // pred_check_branch
      %158 = sbr.rel (%p156) target = $region24
    $region23: #{transformer_forward.36} parent=5 // pred_region
      // Predicated region
      $region25: #{transformer_forward.36} parent=23 // pred_check
        %p159 = pneg %p41
      $region26: #{transformer_forward.36} parent=23 // pred_check_branch
        %161 = sbr.rel (%p159) target = $region28
      $region27: #{transformer_forward.36} parent=23 // pred_region
        %p162 = scmp.lt.s32.totalorder %s16, 1
        %s163 = scalar_select %p162, %s16, 1
        %s164 = smul.addr %s163, 4
        %s165 = scalar_lea.vmem %s0, %s164
      $region28: #{transformer_forward.36} parent=23 // pred_fallthru
        _
    $region24: #{transformer_forward.36} parent=5 // pred_fallthru
      _
    %p166 = scmp.le.s32.totalorder 1, %s9
    %p167 = scmp.lt.s32.totalorder %s9, 3
    %p168 = pnand %p166, %p167
    %p169 = pneg %p168
    // Predicated region
    $region29: #{transformer_forward.36} parent=5 // pred_check
      _
    $region30: #{transformer_forward.36} parent=5 // pred_check_branch
      %171 = sbr.rel (%p168) target = $region32
    $region31: #{transformer_forward.36} parent=5 // pred_region
      %s172 = ssub.s32 %s9, 1
      %p173 = scmp.lt.s32.totalorder %s18, 1
      %s174 = scalar_select %p173, %s18, 1
      %s175 = smul.addr %s174, 4
      %s176 = scalar_lea.vmem %s0, %s175
      %p177 = pneg %p47
      %p178 = pneg %p44
      %p179 = scmp.lt.s32.totalorder %s19, 0
      %s180 = scalar_select %p179, %s19, 0
      %s181 = smul.addr %s180, 4
      %s182 = scalar_lea.vmem %s1, %s181
      %p183 = pneg %p73
      %p184 = pneg %p70
      %p185 = scmp.lt.s32.totalorder %s19, 0
      %s186 = scalar_select %p185, %s19, 0
      %s187 = scalar_lea.vmem %s2, %s186
      %p188 = pneg %p99
      %p189 = pneg %p96
      %p190 = pneg %p127
      %p191 = pneg %p124
      %p192 = scmp.lt.s32.totalorder %s18, 1
      %s193 = scalar_select %p192, %s18, 1
      %p194 = scmp.lt.s32.totalorder %s19, 0
      %s195 = scalar_select %p194, %s19, 0
      %s196 = sadd.s32 %s195, %s193
      %s197 = smul.addr %s196, 4
      %s198 = scalar_lea.vmem %s3, %s197
      %p199 = scmp.lt.s32.totalorder %s18, 1
      %s200 = scalar_select %p199, %s18, 1
      %s201 = smul.addr %s200, 4
      %s202 = scalar_lea.vmem %s0, %s201
      %p203 = scmp.lt.s32.totalorder %s19, 0
      %s204 = scalar_select %p203, %s19, 0
      %s205 = smul.addr %s204, 4
      %s206 = scalar_lea.vmem %s1, %s205
      %p207 = scmp.lt.s32.totalorder %s19, 0
      %s208 = scalar_select %p207, %s19, 0
      %s209 = scalar_lea.vmem %s2, %s208
      %p210 = scmp.lt.s32.totalorder %s18, 1
      %s211 = scalar_select %p210, %s18, 1
      %p212 = scmp.lt.s32.totalorder %s19, 0
      %s213 = scalar_select %p212, %s19, 0
      %s214 = sadd.s32 %s213, %s211
      %s215 = smul.addr %s214, 4
      %s216 = scalar_lea.vmem %s3, %s215
      %v218 = vld [vmem:[%s202] sm:$0xf]
      %v219 = vld [vmem:[%s206] sm:$0xf]
      %v220 = vld [vmem:[%s206 + $0x4] sm:$0xf]
      %v221 = vld [vmem:[%s206 + $0x8] sm:$0xf]
      %v222 = vld [vmem:[%s206 + $0xc] sm:$0xf]
      %v223 = vld [vmem:[%s209] sm:$0x1]
      %v225 = vlaneseq
      %v226 = vshrl.u32 %v225, 7
      %v227 = vsub.s32 0, %v226
      %v228 = vrot.slane %v223, %v227
      %v234 = vunpack.c.l.b16 %v219
      %v235 = vunpack.c.l.b16 %v220
      %v236 = vunpack.c.l.b16 %v221
      %v237 = vunpack.c.l.b16 %v222
      %v238 = vpack.c.b16 %v235, %v234
      %v239 = vpack.c.b16 %v237, %v236
      %vm242 = vcmask 261120
      %v244 = vsel %vm242, %v218, 0
      %246 = vmatprep.subr.bf16.mxu0 0
      %247 = vmatpush1.bf16.msra.mxu0 0
      %248 = vmatprep.subr.bf16.mxu0 0
      %249 = vmatpush1.bf16.msra.mxu0 0
      %250 = vmatprep.subr.bf16.mxu0 0
      %251 = vmatpush1.bf16.msra.mxu0 0
      %252 = vmatprep.subr.bf16.mxu0 0
      %253 = vmatpush1.bf16.msra.mxu0 0
      %254 = vmatprep.subr.bf16.mxu0 0
      %255 = vmatpush1.bf16.msra.mxu0 0
      %256 = vmatprep.subr.bf16.mxu0 0
      %257 = vmatpush1.bf16.msra.mxu0 0
      %258 = vmatprep.subr.bf16.mxu0 0
      %259 = vmatpush1.bf16.msra.mxu0 %v239
      %260 = vmatprep.subr.bf16.mxu0 0
      %261 = vmatpush1.bf16.msra.mxu0 %v238
      %262 = vmatprep.subr.bf16.mxu0 0
      %263 = vmatpush2.bf16.msra.mxu0 0
      %264 = vmatprep.subr.bf16.mxu0 0
      %265 = vmatpush2.bf16.msra.mxu0 0
      %266 = vmatprep.subr.bf16.mxu0 0
      %267 = vmatpush2.bf16.msra.mxu0 0
      %268 = vmatprep.subr.bf16.mxu0 0
      %269 = vmatpush2.bf16.msra.mxu0 0
      %270 = vmatprep.subr.bf16.mxu0 0
      %271 = vmatpush2.bf16.msra.mxu0 0
      %272 = vmatprep.subr.bf16.mxu0 0
      %273 = vmatpush2.bf16.msra.mxu0 0
      %274 = vmatprep.subr.bf16.mxu0 0
      %275 = vmatpush2.bf16.msra.mxu0 0
      %276 = vmatprep.subr.bf16.mxu0 0
      %277 = vmatpush2.bf16.msra.mxu0 0
      %278 = vmatprep.mubr.bf16.mxu0 0
      %279 = vmatmul.mubr.bf16.gmra.mxu0 %v244
      %v280 = vpop.f32.mrf.mxu0
      %v281 = vadd.f32 %v228, %v280
      %v282 = vpop.f32.mrf.mxu0
      %v283 = vpop.f32.mrf.mxu0
      %v284 = vpop.f32.mrf.mxu0
      %285 = vdwg.mxu0
      %v286 = vpack.c.bf16 %v281, %v281
      %287 = vst [vmem:[%s216] sm:$0xf] %v286
      %p288 = scmp.lt.s32.totalorder %s18, 1
      %s289 = scalar_select %p288, %s18, 1
      %p290 = scmp.lt.s32.totalorder %s19, 0
      %s291 = scalar_select %p290, %s19, 0
      %s292 = sadd.s32 %s291, %s289
      %s293 = smul.addr %s292, 4
      %s294 = scalar_lea.vmem %s3, %s293
      // Predicated region
      $region33: #{transformer_forward.36} parent=31 // pred_check
        %p295 = pneg %p124
      $region34: #{transformer_forward.36} parent=31 // pred_check_branch
        %297 = sbr.rel (%p295) target = $region36
      $region35: #{transformer_forward.36} parent=31 // pred_region
        _
      $region36: #{transformer_forward.36} parent=31 // pred_fallthru
        _
    $region32: #{transformer_forward.36} parent=5 // pred_fallthru
      _
    %p298 = scmp.le.s32.totalorder 2, %s9
    // Predicated region
    $region37: #{transformer_forward.36} parent=5 // pred_check
      %p299 = pneg %p298
    $region38: #{transformer_forward.36} parent=5 // pred_check_branch
      %301 = sbr.rel (%p299) target = $region40
    $region39: #{transformer_forward.36} parent=5 // pred_region
      %s302 = ssub.s32 %s9, 2
      // Predicated region
      $region41: #{transformer_forward.36} parent=39 // pred_check
        %p303 = pneg %p130
      $region42: #{transformer_forward.36} parent=39 // pred_check_branch
        %305 = sbr.rel (%p303) target = $region44
      $region43: #{transformer_forward.36} parent=39 // pred_region
        %p306 = scmp.lt.s32.totalorder %s20, 1
        %s307 = scalar_select %p306, %s20, 1
        %p308 = scmp.lt.s32.totalorder %s21, 0
        %s309 = scalar_select %p308, %s21, 0
        %s310 = sadd.s32 %s309, %s307
        %s311 = smul.addr %s310, 4
        %s312 = scalar_lea.vmem %s3, %s311
      $region44: #{transformer_forward.36} parent=39 // pred_fallthru
        _
    $region40: #{transformer_forward.36} parent=5 // pred_fallthru
      _
  $region6: #{transformer_forward.36} parent=0 // loop_footer
    %s13 = sadd.s32 1, %s9
  $region7: #{transformer_forward.36} parent=0 // loop_footer_branch
    %8 = sbr.rel target = $region3
  $region8: #{transformer_forward.36} parent=0 // loop_exit
    _

// kernel: transformer_forward.38
$region0: #{transformer_forward.38}
  #allocation0 [shape = 'u32[]', space=smem, size = 0x4, offset = 0x4, fixed_abs, tag = 'smem constant byte address 0x4 - core index']
  #allocation1 [shape = 'u32[144,128]{1,0:T(1,128)}', space=vmem, size = 0x12000, scoped, tag = 'internal scratch']
  %s0 = inlined_call_operand.vmem [shape: bf16[16,32], index: 0, kind: input, shape index: {}]
  %s1 = inlined_call_operand.vmem [shape: bf16[32,32], index: 1, kind: input, shape index: {}]
  %s2 = inlined_call_operand.vmem [shape: f32[1,32], index: 2, kind: input, shape index: {}]
  %s3 = inlined_call_operand.vmem [shape: f32[16,32], index: 3, kind: input, shape index: {}]
  %s4 = inlined_call_operand.vmem [shape: f32[1,32], index: 4, kind: input, shape index: {}]
  %s5 = inlined_call_operand.vmem [shape: f32[1,32], index: 5, kind: input, shape index: {}]
  %s6 = inlined_call_operand.vmem [shape: f32[16,32], index: 6, kind: output, shape index: {}]
  %s7 = sld [smem:[#allocation0]]
  $region57: #{transformer_forward.38} parent=0
    _
  %s9 = ssub.s32 1, %s7
  %s10 = scalar_select 0, %s9, %s7
  loop: start=0, step=1, limit=4
  $region2: #{transformer_forward.38} parent=0 // loop_pre_header
    _
  $region3: #{transformer_forward.38} parent=0 // loop_header
    %s12 = sphi 0, %s16
    %p13 = scmp.ge.s32.totalorder %s12, 4
    %s22 = sphi 0, %s24
    %s25 = sphi 0, %s22
    %s26 = sphi 0, %s25
    %s42 = sphi 0, %s26
    %s46 = sphi 0, %s46
    %s48 = sphi 0, %s46
    %s49 = sphi 0, %s48
    %s63 = sphi 0, %s49
    %s67 = sphi 0, %s67
    %s69 = sphi 0, %s67
    %s70 = sphi 0, %s69
    %s84 = sphi 0, %s70
    %s90 = sphi 0, %s92
    %s93 = sphi 0, %s90
    %s94 = sphi 0, %s93
    %s110 = sphi 0, %s94
    %s114 = sphi 0, %s114
    %s116 = sphi 0, %s114
    %s117 = sphi 0, %s116
    %s131 = sphi 0, %s117
    %s135 = sphi 0, %s135
    %s137 = sphi 0, %s135
    %s138 = sphi 0, %s137
    %s152 = sphi 0, %s138
    %s158 = sphi 0, %s160
    %s161 = sphi 0, %s158
    %s162 = sphi 0, %s161
    %s178 = sphi 0, %s162
  $region4: #{transformer_forward.38} parent=0 // loop_header_branch
    %15 = sbr.rel (%p13) target = $region8
  $region5: #{transformer_forward.38} parent=0 // loop_body
    %s17 = ssub.s32 %s12, 1
    %s18 = ssub.s32 %s12, 2
    %s19 = sadd.s32 %s12, 1
    %s20 = ssub.s32 %s12, %s19
    %p21 = scmp.eq.s32.totalorder %s20, 0
    %s23 = sadd.s32 %s22, 1
    %s24 = scalar_select %p21, %s22, %s23
    %p27 = pneg %p21
    %p28 = scmp.eq.s32.totalorder %s12, 1
    %p29 = por %p27, %p28
    %p30 = scmp.ne.s32.totalorder %s22, %s25
    %p31 = scmp.eq.s32.totalorder %s12, 0
    %p32 = por %p30, %p31
    %p33 = scmp.ne.s32.totalorder %s22, %s25
    %p34 = scmp.eq.s32.totalorder %s17, 1
    %p35 = por %p33, %p34
    %p36 = scmp.ne.s32.totalorder %s25, %s26
    %p37 = scmp.eq.s32.totalorder %s17, 0
    %p38 = por %p36, %p37
    %p39 = scmp.ne.s32.totalorder %s25, %s26
    %p40 = scmp.eq.s32.totalorder %s18, 1
    %p41 = por %p39, %p40
    %p43 = scmp.ne.s32.totalorder %s26, %s42
    %p44 = scmp.eq.s32.totalorder %s18, 0
    %p45 = por %p43, %p44
    %s47 = sadd.s32 %s46, 1
    %p50 = scmp.eq.s32.totalorder %s12, 1
    %p51 = scmp.ne.s32.totalorder %s46, %s48
    %p52 = scmp.eq.s32.totalorder %s12, 0
    %p53 = por %p51, %p52
    %p54 = scmp.ne.s32.totalorder %s46, %s48
    %p55 = scmp.eq.s32.totalorder %s17, 1
    %p56 = por %p54, %p55
    %p57 = scmp.ne.s32.totalorder %s48, %s49
    %p58 = scmp.eq.s32.totalorder %s17, 0
    %p59 = por %p57, %p58
    %p60 = scmp.ne.s32.totalorder %s48, %s49
    %p61 = scmp.eq.s32.totalorder %s18, 1
    %p62 = por %p60, %p61
    %p64 = scmp.ne.s32.totalorder %s49, %s63
    %p65 = scmp.eq.s32.totalorder %s18, 0
    %p66 = por %p64, %p65
    %s68 = sadd.s32 %s67, 1
    %p71 = scmp.eq.s32.totalorder %s12, 1
    %p72 = scmp.ne.s32.totalorder %s67, %s69
    %p73 = scmp.eq.s32.totalorder %s12, 0
    %p74 = por %p72, %p73
    %p75 = scmp.ne.s32.totalorder %s67, %s69
    %p76 = scmp.eq.s32.totalorder %s17, 1
    %p77 = por %p75, %p76
    %p78 = scmp.ne.s32.totalorder %s69, %s70
    %p79 = scmp.eq.s32.totalorder %s17, 0
    %p80 = por %p78, %p79
    %p81 = scmp.ne.s32.totalorder %s69, %s70
    %p82 = scmp.eq.s32.totalorder %s18, 1
    %p83 = por %p81, %p82
    %p85 = scmp.ne.s32.totalorder %s70, %s84
    %p86 = scmp.eq.s32.totalorder %s18, 0
    %p87 = por %p85, %p86
    %s88 = ssub.s32 %s12, %s19
    %p89 = scmp.eq.s32.totalorder %s88, 0
    %s91 = sadd.s32 %s90, 1
    %s92 = scalar_select %p89, %s90, %s91
    %p95 = pneg %p89
    %p96 = scmp.eq.s32.totalorder %s12, 1
    %p97 = por %p95, %p96
    %p98 = scmp.ne.s32.totalorder %s90, %s93
    %p99 = scmp.eq.s32.totalorder %s12, 0
    %p100 = por %p98, %p99
    %p101 = scmp.ne.s32.totalorder %s90, %s93
    %p102 = scmp.eq.s32.totalorder %s17, 1
    %p103 = por %p101, %p102
    %p104 = scmp.ne.s32.totalorder %s93, %s94
    %p105 = scmp.eq.s32.totalorder %s17, 0
    %p106 = por %p104, %p105
    %p107 = scmp.ne.s32.totalorder %s93, %s94
    %p108 = scmp.eq.s32.totalorder %s18, 1
    %p109 = por %p107, %p108
    %p111 = scmp.ne.s32.totalorder %s94, %s110
    %p112 = scmp.eq.s32.totalorder %s18, 0
    %p113 = por %p111, %p112
    %s115 = sadd.s32 %s114, 1
    %p118 = scmp.eq.s32.totalorder %s12, 1
    %p119 = scmp.ne.s32.totalorder %s114, %s116
    %p120 = scmp.eq.s32.totalorder %s12, 0
    %p121 = por %p119, %p120
    %p122 = scmp.ne.s32.totalorder %s114, %s116
    %p123 = scmp.eq.s32.totalorder %s17, 1
    %p124 = por %p122, %p123
    %p125 = scmp.ne.s32.totalorder %s116, %s117
    %p126 = scmp.eq.s32.totalorder %s17, 0
    %p127 = por %p125, %p126
    %p128 = scmp.ne.s32.totalorder %s116, %s117
    %p129 = scmp.eq.s32.totalorder %s18, 1
    %p130 = por %p128, %p129
    %p132 = scmp.ne.s32.totalorder %s117, %s131
    %p133 = scmp.eq.s32.totalorder %s18, 0
    %p134 = por %p132, %p133
    %s136 = sadd.s32 %s135, 1
    %p139 = scmp.eq.s32.totalorder %s12, 1
    %p140 = scmp.ne.s32.totalorder %s135, %s137
    %p141 = scmp.eq.s32.totalorder %s12, 0
    %p142 = por %p140, %p141
    %p143 = scmp.ne.s32.totalorder %s135, %s137
    %p144 = scmp.eq.s32.totalorder %s17, 1
    %p145 = por %p143, %p144
    %p146 = scmp.ne.s32.totalorder %s137, %s138
    %p147 = scmp.eq.s32.totalorder %s17, 0
    %p148 = por %p146, %p147
    %p149 = scmp.ne.s32.totalorder %s137, %s138
    %p150 = scmp.eq.s32.totalorder %s18, 1
    %p151 = por %p149, %p150
    %p153 = scmp.ne.s32.totalorder %s138, %s152
    %p154 = scmp.eq.s32.totalorder %s18, 0
    %p155 = por %p153, %p154
    %s156 = ssub.s32 %s12, %s19
    %p157 = scmp.eq.s32.totalorder %s156, 0
    %s159 = sadd.s32 %s158, 1
    %s160 = scalar_select %p157, %s158, %s159
    %p163 = pneg %p157
    %p164 = scmp.eq.s32.totalorder %s12, 1
    %p165 = por %p163, %p164
    %p166 = scmp.ne.s32.totalorder %s158, %s161
    %p167 = scmp.eq.s32.totalorder %s12, 0
    %p168 = por %p166, %p167
    %p169 = scmp.ne.s32.totalorder %s158, %s161
    %p170 = scmp.eq.s32.totalorder %s17, 1
    %p171 = por %p169, %p170
    %p172 = scmp.ne.s32.totalorder %s161, %s162
    %p173 = scmp.eq.s32.totalorder %s17, 0
    %p174 = por %p172, %p173
    %p175 = scmp.ne.s32.totalorder %s161, %s162
    %p176 = scmp.eq.s32.totalorder %s18, 1
    %p177 = por %p175, %p176
    %p179 = scmp.ne.s32.totalorder %s162, %s178
    %p180 = scmp.eq.s32.totalorder %s18, 0
    %p181 = por %p179, %p180
    %p182 = scmp.le.s32.totalorder 1, %s12
    %p183 = scmp.lt.s32.totalorder %s12, 3
    %p184 = pnand %p182, %p183
    %p185 = pneg %p184
    // Predicated region
    $region9: #{transformer_forward.38} parent=5 // pred_check
      _
    $region10: #{transformer_forward.38} parent=5 // pred_check_branch
      %187 = sbr.rel (%p184) target = $region12
    $region11: #{transformer_forward.38} parent=5 // pred_region
      %s188 = ssub.s32 %s12, 1
      // Predicated region
      $region13: #{transformer_forward.38} parent=11 // pred_check
        %p189 = pneg %p59
      $region14: #{transformer_forward.38} parent=11 // pred_check_branch
        %191 = sbr.rel (%p189) target = $region16
      $region15: #{transformer_forward.38} parent=11 // pred_region
        _
      $region16: #{transformer_forward.38} parent=11 // pred_fallthru
        _
      // Predicated region
      $region17: #{transformer_forward.38} parent=11 // pred_check
        %p192 = pneg %p80
      $region18: #{transformer_forward.38} parent=11 // pred_check_branch
        %194 = sbr.rel (%p192) target = $region20
      $region19: #{transformer_forward.38} parent=11 // pred_region
        _
      $region20: #{transformer_forward.38} parent=11 // pred_fallthru
        _
      // Predicated region
      $region21: #{transformer_forward.38} parent=11 // pred_check
        %p195 = pneg %p127
      $region22: #{transformer_forward.38} parent=11 // pred_check_branch
        %197 = sbr.rel (%p195) target = $region24
      $region23: #{transformer_forward.38} parent=11 // pred_region
        _
      $region24: #{transformer_forward.38} parent=11 // pred_fallthru
        _
      // Predicated region
      $region25: #{transformer_forward.38} parent=11 // pred_check
        %p198 = pneg %p148
      $region26: #{transformer_forward.38} parent=11 // pred_check_branch
        %200 = sbr.rel (%p198) target = $region28
      $region27: #{transformer_forward.38} parent=11 // pred_region
        _
      $region28: #{transformer_forward.38} parent=11 // pred_fallthru
        _
    $region12: #{transformer_forward.38} parent=5 // pred_fallthru
      _
    %p201 = scmp.lt.s32.totalorder %s12, 2
    // Predicated region
    $region29: #{transformer_forward.38} parent=5 // pred_check
      %p202 = pneg %p201
    $region30: #{transformer_forward.38} parent=5 // pred_check_branch
      %204 = sbr.rel (%p202) target = $region32
    $region31: #{transformer_forward.38} parent=5 // pred_region
      // Predicated region
      $region33: #{transformer_forward.38} parent=31 // pred_check
        %p205 = pneg %p32
      $region34: #{transformer_forward.38} parent=31 // pred_check_branch
        %207 = sbr.rel (%p205) target = $region36
      $region35: #{transformer_forward.38} parent=31 // pred_region
        %p208 = scmp.lt.s32.totalorder %s12, 1
        %s209 = scalar_select %p208, %s12, 1
        %s210 = smul.addr %s209, 4
        %s211 = scalar_lea.vmem %s0, %s210
      $region36: #{transformer_forward.38} parent=31 // pred_fallthru
        _
      // Predicated region
      $region37: #{transformer_forward.38} parent=31 // pred_check
        %p212 = pneg %p100
      $region38: #{transformer_forward.38} parent=31 // pred_check_branch
        %214 = sbr.rel (%p212) target = $region40
      $region39: #{transformer_forward.38} parent=31 // pred_region
        %p215 = scmp.lt.s32.totalorder %s12, 1
        %s216 = scalar_select %p215, %s12, 1
        %s217 = smul.addr %s216, 8
        %s218 = scalar_lea.vmem %s3, %s217
      $region40: #{transformer_forward.38} parent=31 // pred_fallthru
        _
    $region32: #{transformer_forward.38} parent=5 // pred_fallthru
      _
    %p219 = scmp.le.s32.totalorder 1, %s12
    %p220 = scmp.lt.s32.totalorder %s12, 3
    %p221 = pnand %p219, %p220
    %p222 = pneg %p221
    // Predicated region
    $region41: #{transformer_forward.38} parent=5 // pred_check
      _
    $region42: #{transformer_forward.38} parent=5 // pred_check_branch
      %224 = sbr.rel (%p221) target = $region44
    $region43: #{transformer_forward.38} parent=5 // pred_region
      %s225 = ssub.s32 %s12, 1
      %p226 = scmp.lt.s32.totalorder %s17, 1
      %s227 = scalar_select %p226, %s17, 1
      %s228 = smul.addr %s227, 4
      %s229 = scalar_lea.vmem %s0, %s228
      %p230 = pneg %p38
      %p231 = pneg %p35
      %p232 = pneg %p59
      %p233 = pneg %p56
      %p234 = pneg %p80
      %p235 = pneg %p77
      %p236 = scmp.lt.s32.totalorder %s17, 1
      %s237 = scalar_select %p236, %s17, 1
      %s238 = smul.addr %s237, 8
      %s239 = scalar_lea.vmem %s3, %s238
      %p240 = pneg %p106
      %p241 = pneg %p103
      %p242 = pneg %p127
      %p243 = pneg %p124
      %p244 = pneg %p148
      %p245 = pneg %p145
      %p246 = pneg %p174
      %p247 = pneg %p171
      %p248 = scmp.lt.s32.totalorder %s17, 1
      %s249 = scalar_select %p248, %s17, 1
      %s250 = smul.addr %s249, 8
      %s251 = scalar_lea.vmem %s6, %s250
      %p252 = scmp.lt.s32.totalorder %s17, 1
      %s253 = scalar_select %p252, %s17, 1
      %s254 = smul.addr %s253, 4
      %s255 = scalar_lea.vmem %s0, %s254
      %p256 = scmp.lt.s32.totalorder %s17, 1
      %s257 = scalar_select %p256, %s17, 1
      %s258 = smul.addr %s257, 8
      %s259 = scalar_lea.vmem %s3, %s258
      %p260 = scmp.lt.s32.totalorder %s17, 1
      %s261 = scalar_select %p260, %s17, 1
      %s262 = smul.addr %s261, 8
      %s263 = scalar_lea.vmem %s6, %s262
      %v265 = vld [vmem:[%s255] sm:$0xf]
      %v266 = vld [vmem:[%s1] sm:$0xf]
      %v267 = vld [vmem:[%s1 + $0x4] sm:$0xf]
      %v268 = vld [vmem:[%s1 + $0x8] sm:$0xf]
      %v269 = vld [vmem:[%s1 + $0xc] sm:$0xf]
      %v270 = vld [vmem:[%s2] sm:$0x1]
      %v272 = vlaneseq
      %v273 = vshrl.u32 %v272, 7
      %v274 = vsub.s32 0, %v273
      %v275 = vrot.slane %v270, %v274
      %v281 = vunpack.c.l.b16 %v266
      %v282 = vunpack.c.l.b16 %v267
      %v283 = vunpack.c.l.b16 %v268
      %v284 = vunpack.c.l.b16 %v269
      %v285 = vpack.c.b16 %v282, %v281
      %v286 = vpack.c.b16 %v284, %v283
      %vm289 = vcmask 261120
      %v291 = vsel %vm289, %v265, 0
      %293 = vmatprep.subr.bf16.mxu0 0
      %294 = vmatpush1.bf16.msra.mxu0 0
      %295 = vmatprep.subr.bf16.mxu0 0
      %296 = vmatpush1.bf16.msra.mxu0 0
      %297 = vmatprep.subr.bf16.mxu0 0
      %298 = vmatpush1.bf16.msra.mxu0 0
      %299 = vmatprep.subr.bf16.mxu0 0
      %300 = vmatpush1.bf16.msra.mxu0 0
      %301 = vmatprep.subr.bf16.mxu0 0
      %302 = vmatpush1.bf16.msra.mxu0 0
      %303 = vmatprep.subr.bf16.mxu0 0
      %304 = vmatpush1.bf16.msra.mxu0 0
      %305 = vmatprep.subr.bf16.mxu0 0
      %306 = vmatpush1.bf16.msra.mxu0 %v286
      %307 = vmatprep.subr.bf16.mxu0 0
      %308 = vmatpush1.bf16.msra.mxu0 %v285
      %309 = vmatprep.subr.bf16.mxu0 0
      %310 = vmatpush2.bf16.msra.mxu0 0
      %311 = vmatprep.subr.bf16.mxu0 0
      %312 = vmatpush2.bf16.msra.mxu0 0
      %313 = vmatprep.subr.bf16.mxu0 0
      %314 = vmatpush2.bf16.msra.mxu0 0
      %315 = vmatprep.subr.bf16.mxu0 0
      %316 = vmatpush2.bf16.msra.mxu0 0
      %317 = vmatprep.subr.bf16.mxu0 0
      %318 = vmatpush2.bf16.msra.mxu0 0
      %319 = vmatprep.subr.bf16.mxu0 0
      %320 = vmatpush2.bf16.msra.mxu0 0
      %321 = vmatprep.subr.bf16.mxu0 0
      %322 = vmatpush2.bf16.msra.mxu0 0
      %323 = vmatprep.subr.bf16.mxu0 0
      %324 = vmatpush2.bf16.msra.mxu0 0
      %325 = vmatprep.mubr.bf16.mxu0 0
      %326 = vmatmul.mubr.bf16.gmra.mxu0 %v291
      %v327 = vpop.f32.mrf.mxu0
      %v328 = vadd.f32 %v275, %v327
      %v329 = vpop.f32.mrf.mxu0
      %v330 = vpop.f32.mrf.mxu0
      %v331 = vpop.f32.mrf.mxu0
      %332 = vdwg.mxu0
      %v333 = vld [vmem:[%s259] sm:$0xff]
      %v334 = vadd.f32 %v328, %v333
      %v335 = vld [vmem:[%s4] sm:$0x1]
      %v336 = vld [vmem:[%s5] sm:$0x1]
      %v337 = vsel %vm289, %v334, 0.0
      %338 = vadd.xlane.f32.xlu0 %v337
      %v339 = vpop.xlane.xlu0 %338
      %v340 = vrcp.pop 32.0
      %v341 = vmul.f32 %v339, %v340
      %v342 = vsub.f32 %v334, %v341
      %v343 = vmul.f32 %v342, %v342
      %v344 = vsel %vm289, %v343, 0.0
      %345 = vadd.xlane.f32.xlu0 %v344
      %v346 = vpop.xlane.xlu0 %345
      %v347 = vmul.f32 %v346, %v340
      %v348 = vadd.f32 %v347, 1e-05
      %v349 = vrsqrt.pop %v348
      %v350 = vmul.f32 %v342, %v349
      %v352 = vlaneseq
      %v353 = vshrl.u32 %v352, 7
      %v354 = vsub.s32 0, %v353
      %v355 = vrot.slane %v335, %v354
      %v357 = vmul.f32 %v350, %v355
      %v359 = vlaneseq
      %v360 = vshrl.u32 %v359, 7
      %v361 = vsub.s32 0, %v360
      %v362 = vrot.slane %v336, %v361
      %v364 = vadd.f32 %v357, %v362
      %365 = vst.msk [vmem:[%s263] sm:$0xff] %vm289, %v364
      %p366 = scmp.lt.s32.totalorder %s17, 1
      %s367 = scalar_select %p366, %s17, 1
      %s368 = smul.addr %s367, 8
      %s369 = scalar_lea.vmem %s6, %s368
      // Predicated region
      $region45: #{transformer_forward.38} parent=43 // pred_check
        %p370 = pneg %p171
      $region46: #{transformer_forward.38} parent=43 // pred_check_branch
        %372 = sbr.rel (%p370) target = $region48
      $region47: #{transformer_forward.38} parent=43 // pred_region
        _
      $region48: #{transformer_forward.38} parent=43 // pred_fallthru
        _
    $region44: #{transformer_forward.38} parent=5 // pred_fallthru
      _
    %p373 = scmp.le.s32.totalorder 2, %s12
    // Predicated region
    $region49: #{transformer_forward.38} parent=5 // pred_check
      %p374 = pneg %p373
    $region50: #{transformer_forward.38} parent=5 // pred_check_branch
      %376 = sbr.rel (%p374) target = $region52
    $region51: #{transformer_forward.38} parent=5 // pred_region
      %s377 = ssub.s32 %s12, 2
      // Predicated region
      $region53: #{transformer_forward.38} parent=51 // pred_check
        %p378 = pneg %p177
      $region54: #{transformer_forward.38} parent=51 // pred_check_branch
        %380 = sbr.rel (%p378) target = $region56
      $region55: #{transformer_forward.38} parent=51 // pred_region
        %p381 = scmp.lt.s32.totalorder %s18, 1
        %s382 = scalar_select %p381, %s18, 1
        %s383 = smul.addr %s382, 8
        %s384 = scalar_lea.vmem %s6, %s383
      $region56: #{transformer_forward.38} parent=51 // pred_fallthru
        _
    $region52: #{transformer_forward.38} parent=5 // pred_fallthru
      _
  $region6: #{transformer_forward.38} parent=0 // loop_footer
    %s16 = sadd.s32 1, %s12
  $region7: #{transformer_forward.38} parent=0 // loop_footer_branch
    %11 = sbr.rel target = $region3
  $region8: #{transformer_forward.38} parent=0 // loop_exit
    _

// kernel: transformer_forward.37
$region0: #{transformer_forward.37}
  #allocation0 [shape = 'u32[]', space=smem, size = 0x4, offset = 0x4, fixed_abs, tag = 'smem constant byte address 0x4 - core index']
  #allocation1 [shape = 'u32[144,128]{1,0:T(1,128)}', space=vmem, size = 0x12000, scoped, tag = 'internal scratch']
  %s0 = inlined_call_operand.vmem [shape: bf16[2,4,8,8], index: 0, kind: input, shape index: {}]
  %s1 = inlined_call_operand.vmem [shape: bf16[2,4,8,8], index: 1, kind: input, shape index: {}]
  %s2 = inlined_call_operand.vmem [shape: bf16[2,4,8,8], index: 2, kind: input, shape index: {}]
  %s3 = inlined_call_operand.vmem [shape: f32[2,1,8], index: 3, kind: input, shape index: {}]
  %s4 = inlined_call_operand.vmem [shape: bf16[2,4,8,8], index: 4, kind: output, shape index: {}]
  %s5 = sld [smem:[#allocation0]]
  $region49: #{transformer_forward.37} parent=0
    _
  %s7 = ssub.s32 1, %s5
  %s8 = scalar_select 0, %s7, %s5
  loop: start=0, step=1, limit=4
  $region2: #{transformer_forward.37} parent=0 // loop_pre_header
    _
  $region3: #{transformer_forward.37} parent=0 // loop_header
    %s10 = sphi 0, %s14
    %p11 = scmp.ge.s32.totalorder %s10, 4
    %s20 = sphi 0, %s22
    %s23 = sphi 0, %s20
    %s24 = sphi 0, %s23
    %s40 = sphi 0, %s24
    %s46 = sphi 0, %s48
    %s49 = sphi 0, %s46
    %s50 = sphi 0, %s49
    %s66 = sphi 0, %s50
    %s72 = sphi 0, %s74
    %s75 = sphi 0, %s72
    %s76 = sphi 0, %s75
    %s92 = sphi 0, %s76
    %s98 = sphi 0, %s100
    %s101 = sphi 0, %s98
    %s102 = sphi 0, %s101
    %s118 = sphi 0, %s102
    %s124 = sphi 0, %s126
    %s127 = sphi 0, %s124
    %s128 = sphi 0, %s127
    %s144 = sphi 0, %s128
  $region4: #{transformer_forward.37} parent=0 // loop_header_branch
    %13 = sbr.rel (%p11) target = $region8
  $region5: #{transformer_forward.37} parent=0 // loop_body
    %s15 = ssub.s32 %s10, 1
    %s16 = ssub.s32 %s10, 2
    %s17 = sadd.s32 %s10, 1
    %s18 = ssub.s32 %s10, %s17
    %p19 = scmp.eq.s32.totalorder %s18, 0
    %s21 = sadd.s32 %s20, 1
    %s22 = scalar_select %p19, %s20, %s21
    %p25 = pneg %p19
    %p26 = scmp.eq.s32.totalorder %s10, 1
    %p27 = por %p25, %p26
    %p28 = scmp.ne.s32.totalorder %s20, %s23
    %p29 = scmp.eq.s32.totalorder %s10, 0
    %p30 = por %p28, %p29
    %p31 = scmp.ne.s32.totalorder %s20, %s23
    %p32 = scmp.eq.s32.totalorder %s15, 1
    %p33 = por %p31, %p32
    %p34 = scmp.ne.s32.totalorder %s23, %s24
    %p35 = scmp.eq.s32.totalorder %s15, 0
    %p36 = por %p34, %p35
    %p37 = scmp.ne.s32.totalorder %s23, %s24
    %p38 = scmp.eq.s32.totalorder %s16, 1
    %p39 = por %p37, %p38
    %p41 = scmp.ne.s32.totalorder %s24, %s40
    %p42 = scmp.eq.s32.totalorder %s16, 0
    %p43 = por %p41, %p42
    %s44 = ssub.s32 %s10, %s17
    %p45 = scmp.eq.s32.totalorder %s44, 0
    %s47 = sadd.s32 %s46, 1
    %s48 = scalar_select %p45, %s46, %s47
    %p51 = pneg %p45
    %p52 = scmp.eq.s32.totalorder %s10, 1
    %p53 = por %p51, %p52
    %p54 = scmp.ne.s32.totalorder %s46, %s49
    %p55 = scmp.eq.s32.totalorder %s10, 0
    %p56 = por %p54, %p55
    %p57 = scmp.ne.s32.totalorder %s46, %s49
    %p58 = scmp.eq.s32.totalorder %s15, 1
    %p59 = por %p57, %p58
    %p60 = scmp.ne.s32.totalorder %s49, %s50
    %p61 = scmp.eq.s32.totalorder %s15, 0
    %p62 = por %p60, %p61
    %p63 = scmp.ne.s32.totalorder %s49, %s50
    %p64 = scmp.eq.s32.totalorder %s16, 1
    %p65 = por %p63, %p64
    %p67 = scmp.ne.s32.totalorder %s50, %s66
    %p68 = scmp.eq.s32.totalorder %s16, 0
    %p69 = por %p67, %p68
    %s70 = ssub.s32 %s10, %s17
    %p71 = scmp.eq.s32.totalorder %s70, 0
    %s73 = sadd.s32 %s72, 1
    %s74 = scalar_select %p71, %s72, %s73
    %p77 = pneg %p71
    %p78 = scmp.eq.s32.totalorder %s10, 1
    %p79 = por %p77, %p78
    %p80 = scmp.ne.s32.totalorder %s72, %s75
    %p81 = scmp.eq.s32.totalorder %s10, 0
    %p82 = por %p80, %p81
    %p83 = scmp.ne.s32.totalorder %s72, %s75
    %p84 = scmp.eq.s32.totalorder %s15, 1
    %p85 = por %p83, %p84
    %p86 = scmp.ne.s32.totalorder %s75, %s76
    %p87 = scmp.eq.s32.totalorder %s15, 0
    %p88 = por %p86, %p87
    %p89 = scmp.ne.s32.totalorder %s75, %s76
    %p90 = scmp.eq.s32.totalorder %s16, 1
    %p91 = por %p89, %p90
    %p93 = scmp.ne.s32.totalorder %s76, %s92
    %p94 = scmp.eq.s32.totalorder %s16, 0
    %p95 = por %p93, %p94
    %s96 = ssub.s32 %s10, %s17
    %p97 = scmp.eq.s32.totalorder %s96, 0
    %s99 = sadd.s32 %s98, 1
    %s100 = scalar_select %p97, %s98, %s99
    %p103 = pneg %p97
    %p104 = scmp.eq.s32.totalorder %s10, 1
    %p105 = por %p103, %p104
    %p106 = scmp.ne.s32.totalorder %s98, %s101
    %p107 = scmp.eq.s32.totalorder %s10, 0
    %p108 = por %p106, %p107
    %p109 = scmp.ne.s32.totalorder %s98, %s101
    %p110 = scmp.eq.s32.totalorder %s15, 1
    %p111 = por %p109, %p110
    %p112 = scmp.ne.s32.totalorder %s101, %s102
    %p113 = scmp.eq.s32.totalorder %s15, 0
    %p114 = por %p112, %p113
    %p115 = scmp.ne.s32.totalorder %s101, %s102
    %p116 = scmp.eq.s32.totalorder %s16, 1
    %p117 = por %p115, %p116
    %p119 = scmp.ne.s32.totalorder %s102, %s118
    %p120 = scmp.eq.s32.totalorder %s16, 0
    %p121 = por %p119, %p120
    %s122 = ssub.s32 %s10, %s17
    %p123 = scmp.eq.s32.totalorder %s122, 0
    %s125 = sadd.s32 %s124, 1
    %s126 = scalar_select %p123, %s124, %s125
    %p129 = pneg %p123
    %p130 = scmp.eq.s32.totalorder %s10, 1
    %p131 = por %p129, %p130
    %p132 = scmp.ne.s32.totalorder %s124, %s127
    %p133 = scmp.eq.s32.totalorder %s10, 0
    %p134 = por %p132, %p133
    %p135 = scmp.ne.s32.totalorder %s124, %s127
    %p136 = scmp.eq.s32.totalorder %s15, 1
    %p137 = por %p135, %p136
    %p138 = scmp.ne.s32.totalorder %s127, %s128
    %p139 = scmp.eq.s32.totalorder %s15, 0
    %p140 = por %p138, %p139
    %p141 = scmp.ne.s32.totalorder %s127, %s128
    %p142 = scmp.eq.s32.totalorder %s16, 1
    %p143 = por %p141, %p142
    %p145 = scmp.ne.s32.totalorder %s128, %s144
    %p146 = scmp.eq.s32.totalorder %s16, 0
    %p147 = por %p145, %p146
    %p148 = scmp.le.s32.totalorder 1, %s10
    %p149 = scmp.lt.s32.totalorder %s10, 3
    %p150 = pnand %p148, %p149
    %p151 = pneg %p150
    // Predicated region
    $region9: #{transformer_forward.37} parent=5 // pred_check
      _
    $region10: #{transformer_forward.37} parent=5 // pred_check_branch
      %153 = sbr.rel (%p150) target = $region12
    $region11: #{transformer_forward.37} parent=5 // pred_region
      %s154 = ssub.s32 %s10, 1
    $region12: #{transformer_forward.37} parent=5 // pred_fallthru
      _
    %p155 = scmp.lt.s32.totalorder %s10, 2
    // Predicated region
    $region13: #{transformer_forward.37} parent=5 // pred_check
      %p156 = pneg %p155
    $region14: #{transformer_forward.37} parent=5 // pred_check_branch
      %158 = sbr.rel (%p156) target = $region16
    $region15: #{transformer_forward.37} parent=5 // pred_region
      // Predicated region
      $region17: #{transformer_forward.37} parent=15 // pred_check
        %p159 = pneg %p30
      $region18: #{transformer_forward.37} parent=15 // pred_check_branch
        %161 = sbr.rel (%p159) target = $region20
      $region19: #{transformer_forward.37} parent=15 // pred_region
        %p162 = scmp.lt.s32.totalorder %s10, 1
        %s163 = scalar_select %p162, %s10, 1
        %s164 = smul.addr %s163, 4
        %s165 = smul.addr %s164, 4
        %s166 = scalar_lea.vmem %s0, %s165
      $region20: #{transformer_forward.37} parent=15 // pred_fallthru
        _
      // Predicated region
      $region21: #{transformer_forward.37} parent=15 // pred_check
        %p167 = pneg %p56
      $region22: #{transformer_forward.37} parent=15 // pred_check_branch
        %169 = sbr.rel (%p167) target = $region24
      $region23: #{transformer_forward.37} parent=15 // pred_region
        %p170 = scmp.lt.s32.totalorder %s10, 1
        %s171 = scalar_select %p170, %s10, 1
        %s172 = smul.addr %s171, 4
        %s173 = smul.addr %s172, 4
        %s174 = scalar_lea.vmem %s1, %s173
      $region24: #{transformer_forward.37} parent=15 // pred_fallthru
        _
      // Predicated region
      $region25: #{transformer_forward.37} parent=15 // pred_check
        %p175 = pneg %p82
      $region26: #{transformer_forward.37} parent=15 // pred_check_branch
        %177 = sbr.rel (%p175) target = $region28
      $region27: #{transformer_forward.37} parent=15 // pred_region
        %p178 = scmp.lt.s32.totalorder %s10, 1
        %s179 = scalar_select %p178, %s10, 1
        %s180 = smul.addr %s179, 4
        %s181 = smul.addr %s180, 4
        %s182 = scalar_lea.vmem %s2, %s181
      $region28: #{transformer_forward.37} parent=15 // pred_fallthru
        _
      // Predicated region
      $region29: #{transformer_forward.37} parent=15 // pred_check
        %p183 = pneg %p108
      $region30: #{transformer_forward.37} parent=15 // pred_check_branch
        %185 = sbr.rel (%p183) target = $region32
      $region31: #{transformer_forward.37} parent=15 // pred_region
        %p186 = scmp.lt.s32.totalorder %s10, 1
        %s187 = scalar_select %p186, %s10, 1
        %s188 = scalar_lea.vmem %s3, %s187
      $region32: #{transformer_forward.37} parent=15 // pred_fallthru
        _
    $region16: #{transformer_forward.37} parent=5 // pred_fallthru
      _
    %p189 = scmp.le.s32.totalorder 1, %s10
    %p190 = scmp.lt.s32.totalorder %s10, 3
    %p191 = pnand %p189, %p190
    %p192 = pneg %p191
    // Predicated region
    $region33: #{transformer_forward.37} parent=5 // pred_check
      _
    $region34: #{transformer_forward.37} parent=5 // pred_check_branch
      %194 = sbr.rel (%p191) target = $region36
    $region35: #{transformer_forward.37} parent=5 // pred_region
      %s195 = ssub.s32 %s10, 1
      %p196 = scmp.lt.s32.totalorder %s15, 1
      %s197 = scalar_select %p196, %s15, 1
      %s198 = smul.addr %s197, 4
      %s199 = smul.addr %s198, 4
      %s200 = scalar_lea.vmem %s0, %s199
      %p201 = pneg %p36
      %p202 = pneg %p33
      %p203 = scmp.lt.s32.totalorder %s15, 1
      %s204 = scalar_select %p203, %s15, 1
      %s205 = smul.addr %s204, 4
      %s206 = smul.addr %s205, 4
      %s207 = scalar_lea.vmem %s1, %s206
      %p208 = pneg %p62
      %p209 = pneg %p59
      %p210 = scmp.lt.s32.totalorder %s15, 1
      %s211 = scalar_select %p210, %s15, 1
      %s212 = smul.addr %s211, 4
      %s213 = smul.addr %s212, 4
      %s214 = scalar_lea.vmem %s2, %s213
      %p215 = pneg %p88
      %p216 = pneg %p85
      %p217 = scmp.lt.s32.totalorder %s15, 1
      %s218 = scalar_select %p217, %s15, 1
      %s219 = scalar_lea.vmem %s3, %s218
      %p220 = pneg %p114
      %p221 = pneg %p111
      %p222 = pneg %p140
      %p223 = pneg %p137
      %p224 = scmp.lt.s32.totalorder %s15, 1
      %s225 = scalar_select %p224, %s15, 1
      %s226 = smul.addr %s225, 4
      %s227 = smul.addr %s226, 4
      %s228 = scalar_lea.vmem %s4, %s227
      %p229 = scmp.lt.s32.totalorder %s15, 1
      %s230 = scalar_select %p229, %s15, 1
      %s231 = smul.addr %s230, 4
      %s232 = smul.addr %s231, 4
      %s233 = scalar_lea.vmem %s0, %s232
      %p234 = scmp.lt.s32.totalorder %s15, 1
      %s235 = scalar_select %p234, %s15, 1
      %s236 = smul.addr %s235, 4
      %s237 = smul.addr %s236, 4
      %s238 = scalar_lea.vmem %s1, %s237
      %p239 = scmp.lt.s32.totalorder %s15, 1
      %s240 = scalar_select %p239, %s15, 1
      %s241 = smul.addr %s240, 4
      %s242 = smul.addr %s241, 4
      %s243 = scalar_lea.vmem %s2, %s242
      %p244 = scmp.lt.s32.totalorder %s15, 1
      %s245 = scalar_select %p244, %s15, 1
      %s246 = scalar_lea.vmem %s3, %s245
      %p247 = scmp.lt.s32.totalorder %s15, 1
      %s248 = scalar_select %p247, %s15, 1
      %s249 = smul.addr %s248, 4
      %s250 = smul.addr %s249, 4
      %s251 = scalar_lea.vmem %s4, %s250
      %v253 = vld [vmem:[%s246] sm:$0x1]
      %v255 = vlaneseq
      %v256 = vshrl.u32 %v255, 7
      %v257 = vsub.s32 0, %v256
      %v258 = vrot.slane %v253, %v257
      %v260 = vlaneseq
      %v261 = vshrl.u32 %v260, 7
      %v262 = vlaneseq
      %v263 = vand.u32 %v262, 127
      %vm264 = vcmp.gt.s32.totalorder %v263, %v261
      %v265 = vsel %vm264, -1e+09, %v258
      %v266 = vld [vmem:[%s233] sm:$0xf]
      %v267 = vld [vmem:[%s233 + $0x4] sm:$0xf]
      %v268 = vld [vmem:[%s233 + $0x8] sm:$0xf]
      %v269 = vld [vmem:[%s233 + $0xc] sm:$0xf]
      %v270 = vld [vmem:[%s238] sm:$0xf]
      %v271 = vld [vmem:[%s238 + $0x4] sm:$0xf]
      %v272 = vld [vmem:[%s238 + $0x8] sm:$0xf]
      %v273 = vld [vmem:[%s238 + $0xc] sm:$0xf]
      %v274 = vld [vmem:[%s243] sm:$0xf]
      %v275 = vld [vmem:[%s243 + $0x4] sm:$0xf]
      %v276 = vld [vmem:[%s243 + $0x8] sm:$0xf]
      %v277 = vld [vmem:[%s243 + $0xc] sm:$0xf]
      %vm278 = vcmask 64512
      %v280 = vsel %vm278, %v266, 0
      %v283 = vsel %vm278, %v270, 0
      %285 = vmatprep.subr.bf16.mxu0 0
      %286 = vmatpush1.bf16.xpose.msra.mxu0 0
      %287 = vmatprep.subr.bf16.mxu0 0
      %288 = vmatpush1.bf16.xpose.msra.mxu0 0
      %289 = vmatprep.subr.bf16.mxu0 0
      %290 = vmatpush1.bf16.xpose.msra.mxu0 0
      %291 = vmatprep.subr.bf16.mxu0 0
      %292 = vmatpush1.bf16.xpose.msra.mxu0 0
      %293 = vmatprep.subr.bf16.mxu0 0
      %294 = vmatpush1.bf16.xpose.msra.mxu0 0
      %295 = vmatprep.subr.bf16.mxu0 0
      %296 = vmatpush1.bf16.xpose.msra.mxu0 0
      %297 = vmatprep.subr.bf16.mxu0 0
      %298 = vmatpush1.bf16.xpose.msra.mxu0 0
      %299 = vmatprep.subr.bf16.mxu0 0
      %300 = vmatpush1.bf16.xpose.msra.mxu0 %v283
      %301 = vmatprep.subr.bf16.mxu0 0
      %302 = vmatpush2.bf16.xpose.msra.mxu0 0
      %303 = vmatprep.subr.bf16.mxu0 0
      %304 = vmatpush2.bf16.xpose.msra.mxu0 0
      %305 = vmatprep.subr.bf16.mxu0 0
      %306 = vmatpush2.bf16.xpose.msra.mxu0 0
      %307 = vmatprep.subr.bf16.mxu0 0
      %308 = vmatpush2.bf16.xpose.msra.mxu0 0
      %309 = vmatprep.subr.bf16.mxu0 0
      %310 = vmatpush2.bf16.xpose.msra.mxu0 0
      %311 = vmatprep.subr.bf16.mxu0 0
      %312 = vmatpush2.bf16.xpose.msra.mxu0 0
      %313 = vmatprep.subr.bf16.mxu0 0
      %314 = vmatpush2.bf16.xpose.msra.mxu0 0
      %315 = vmatprep.subr.bf16.mxu0 0
      %316 = vmatpush2.bf16.xpose.msra.mxu0 0
      %317 = vmatprep.mubr.bf16.mxu0 0
      %318 = vmatmul.mubr.bf16.gmra.mxu0 %v280
      %v319 = vpop.f32.mrf.mxu0
      %v320 = vadd.f32 0.0, %v319
      %v321 = vpop.f32.mrf.mxu0
      %v322 = vpop.f32.mrf.mxu0
      %v323 = vpop.f32.mrf.mxu0
      %324 = vdwg.mxu0
      %v326 = vsel %vm278, %v267, 0
      %v329 = vsel %vm278, %v271, 0
      %331 = vmatprep.subr.bf16.mxu0 0
      %332 = vmatpush1.bf16.xpose.msra.mxu0 0
      %333 = vmatprep.subr.bf16.mxu0 0
      %334 = vmatpush1.bf16.xpose.msra.mxu0 0
      %335 = vmatprep.subr.bf16.mxu0 0
      %336 = vmatpush1.bf16.xpose.msra.mxu0 0
      %337 = vmatprep.subr.bf16.mxu0 0
      %338 = vmatpush1.bf16.xpose.msra.mxu0 0
      %339 = vmatprep.subr.bf16.mxu0 0
      %340 = vmatpush1.bf16.xpose.msra.mxu0 0
      %341 = vmatprep.subr.bf16.mxu0 0
      %342 = vmatpush1.bf16.xpose.msra.mxu0 0
      %343 = vmatprep.subr.bf16.mxu0 0
      %344 = vmatpush1.bf16.xpose.msra.mxu0 0
      %345 = vmatprep.subr.bf16.mxu0 0
      %346 = vmatpush1.bf16.xpose.msra.mxu0 %v329
      %347 = vmatprep.subr.bf16.mxu0 0
      %348 = vmatpush2.bf16.xpose.msra.mxu0 0
      %349 = vmatprep.subr.bf16.mxu0 0
      %350 = vmatpush2.bf16.xpose.msra.mxu0 0
      %351 = vmatprep.subr.bf16.mxu0 0
      %352 = vmatpush2.bf16.xpose.msra.mxu0 0
      %353 = vmatprep.subr.bf16.mxu0 0
      %354 = vmatpush2.bf16.xpose.msra.mxu0 0
      %355 = vmatprep.subr.bf16.mxu0 0
      %356 = vmatpush2.bf16.xpose.msra.mxu0 0
      %357 = vmatprep.subr.bf16.mxu0 0
      %358 = vmatpush2.bf16.xpose.msra.mxu0 0
      %359 = vmatprep.subr.bf16.mxu0 0
      %360 = vmatpush2.bf16.xpose.msra.mxu0 0
      %361 = vmatprep.subr.bf16.mxu0 0
      %362 = vmatpush2.bf16.xpose.msra.mxu0 0
      %363 = vmatprep.mubr.bf16.mxu0 0
      %364 = vmatmul.mubr.bf16.gmra.mxu0 %v326
      %v365 = vpop.f32.mrf.mxu0
      %v366 = vadd.f32 0.0, %v365
      %v367 = vpop.f32.mrf.mxu0
      %v368 = vpop.f32.mrf.mxu0
      %v369 = vpop.f32.mrf.mxu0
      %370 = vdwg.mxu0
      %v372 = vsel %vm278, %v268, 0
      %v375 = vsel %vm278, %v272, 0
      %377 = vmatprep.subr.bf16.mxu0 0
      %378 = vmatpush1.bf16.xpose.msra.mxu0 0
      %379 = vmatprep.subr.bf16.mxu0 0
      %380 = vmatpush1.bf16.xpose.msra.mxu0 0
      %381 = vmatprep.subr.bf16.mxu0 0
      %382 = vmatpush1.bf16.xpose.msra.mxu0 0
      %383 = vmatprep.subr.bf16.mxu0 0
      %384 = vmatpush1.bf16.xpose.msra.mxu0 0
      %385 = vmatprep.subr.bf16.mxu0 0
      %386 = vmatpush1.bf16.xpose.msra.mxu0 0
      %387 = vmatprep.subr.bf16.mxu0 0
      %388 = vmatpush1.bf16.xpose.msra.mxu0 0
      %389 = vmatprep.subr.bf16.mxu0 0
      %390 = vmatpush1.bf16.xpose.msra.mxu0 0
      %391 = vmatprep.subr.bf16.mxu0 0
      %392 = vmatpush1.bf16.xpose.msra.mxu0 %v375
      %393 = vmatprep.subr.bf16.mxu0 0
      %394 = vmatpush2.bf16.xpose.msra.mxu0 0
      %395 = vmatprep.subr.bf16.mxu0 0
      %396 = vmatpush2.bf16.xpose.msra.mxu0 0
      %397 = vmatprep.subr.bf16.mxu0 0
      %398 = vmatpush2.bf16.xpose.msra.mxu0 0
      %399 = vmatprep.subr.bf16.mxu0 0
      %400 = vmatpush2.bf16.xpose.msra.mxu0 0
      %401 = vmatprep.subr.bf16.mxu0 0
      %402 = vmatpush2.bf16.xpose.msra.mxu0 0
      %403 = vmatprep.subr.bf16.mxu0 0
      %404 = vmatpush2.bf16.xpose.msra.mxu0 0
      %405 = vmatprep.subr.bf16.mxu0 0
      %406 = vmatpush2.bf16.xpose.msra.mxu0 0
      %407 = vmatprep.subr.bf16.mxu0 0
      %408 = vmatpush2.bf16.xpose.msra.mxu0 0
      %409 = vmatprep.mubr.bf16.mxu0 0
      %410 = vmatmul.mubr.bf16.gmra.mxu0 %v372
      %v411 = vpop.f32.mrf.mxu0
      %v412 = vadd.f32 0.0, %v411
      %v413 = vpop.f32.mrf.mxu0
      %v414 = vpop.f32.mrf.mxu0
      %v415 = vpop.f32.mrf.mxu0
      %416 = vdwg.mxu0
      %v418 = vsel %vm278, %v269, 0
      %v421 = vsel %vm278, %v273, 0
      %423 = vmatprep.subr.bf16.mxu0 0
      %424 = vmatpush1.bf16.xpose.msra.mxu0 0
      %425 = vmatprep.subr.bf16.mxu0 0
      %426 = vmatpush1.bf16.xpose.msra.mxu0 0
      %427 = vmatprep.subr.bf16.mxu0 0
      %428 = vmatpush1.bf16.xpose.msra.mxu0 0
      %429 = vmatprep.subr.bf16.mxu0 0
      %430 = vmatpush1.bf16.xpose.msra.mxu0 0
      %431 = vmatprep.subr.bf16.mxu0 0
      %432 = vmatpush1.bf16.xpose.msra.mxu0 0
      %433 = vmatprep.subr.bf16.mxu0 0
      %434 = vmatpush1.bf16.xpose.msra.mxu0 0
      %435 = vmatprep.subr.bf16.mxu0 0
      %436 = vmatpush1.bf16.xpose.msra.mxu0 0
      %437 = vmatprep.subr.bf16.mxu0 0
      %438 = vmatpush1.bf16.xpose.msra.mxu0 %v421
      %439 = vmatprep.subr.bf16.mxu0 0
      %440 = vmatpush2.bf16.xpose.msra.mxu0 0
      %441 = vmatprep.subr.bf16.mxu0 0
      %442 = vmatpush2.bf16.xpose.msra.mxu0 0
      %443 = vmatprep.subr.bf16.mxu0 0
      %444 = vmatpush2.bf16.xpose.msra.mxu0 0
      %445 = vmatprep.subr.bf16.mxu0 0
      %446 = vmatpush2.bf16.xpose.msra.mxu0 0
      %447 = vmatprep.subr.bf16.mxu0 0
      %448 = vmatpush2.bf16.xpose.msra.mxu0 0
      %449 = vmatprep.subr.bf16.mxu0 0
      %450 = vmatpush2.bf16.xpose.msra.mxu0 0
      %451 = vmatprep.subr.bf16.mxu0 0
      %452 = vmatpush2.bf16.xpose.msra.mxu0 0
      %453 = vmatprep.subr.bf16.mxu0 0
      %454 = vmatpush2.bf16.xpose.msra.mxu0 0
      %455 = vmatprep.mubr.bf16.mxu0 0
      %456 = vmatmul.mubr.bf16.gmra.mxu0 %v418
      %v457 = vpop.f32.mrf.mxu0
      %v458 = vadd.f32 0.0, %v457
      %v459 = vpop.f32.mrf.mxu0
      %v460 = vpop.f32.mrf.mxu0
      %v461 = vpop.f32.mrf.mxu0
      %462 = vdwg.mxu0
      %v463 = vmul.f32 %v320, 0.35355338
      %v464 = vmul.f32 %v366, 0.35355338
      %v465 = vmul.f32 %v412, 0.35355338
      %v466 = vmul.f32 %v458, 0.35355338
      %v467 = vadd.f32 %v463, %v265
      %v468 = vadd.f32 %v464, %v265
      %v469 = vadd.f32 %v465, %v265
      %v470 = vadd.f32 %v466, %v265
      %v471 = vsel %vm278, %v467, -inf
      %472 = vmax.xlane.f32.xlu0 %v471
      %v473 = vpop.xlane.xlu0 %472
      %v474 = vsel %vm278, %v468, -inf
      %475 = vmax.xlane.f32.xlu0 %v474
      %v476 = vpop.xlane.xlu0 %475
      %v477 = vsel %vm278, %v469, -inf
      %478 = vmax.xlane.f32.xlu0 %v477
      %v479 = vpop.xlane.xlu0 %478
      %v480 = vsel %vm278, %v470, -inf
      %481 = vmax.xlane.f32.xlu0 %v480
      %v482 = vpop.xlane.xlu0 %481
      %v483 = vsub.f32 %v467, %v473
      %v484 = vsub.f32 %v468, %v476
      %v485 = vsub.f32 %v469, %v479
      %v486 = vsub.f32 %v470, %v482
      %v487 = vmul.f32 %v483, 1.442695
      %v488 = vpow.pop %v487
      %v489 = vmul.f32 %v484, 1.442695
      %v490 = vpow.pop %v489
      %v491 = vmul.f32 %v485, 1.442695
      %v492 = vpow.pop %v491
      %v493 = vmul.f32 %v486, 1.442695
      %v494 = vpow.pop %v493
      %v495 = vsel %vm278, %v488, 0.0
      %496 = vadd.xlane.f32.xlu0 %v495
      %v497 = vpop.xlane.xlu0 %496
      %v498 = vsel %vm278, %v490, 0.0
      %499 = vadd.xlane.f32.xlu0 %v498
      %v500 = vpop.xlane.xlu0 %499
      %v501 = vsel %vm278, %v492, 0.0
      %502 = vadd.xlane.f32.xlu0 %v501
      %v503 = vpop.xlane.xlu0 %502
      %v504 = vsel %vm278, %v494, 0.0
      %505 = vadd.xlane.f32.xlu0 %v504
      %v506 = vpop.xlane.xlu0 %505
      %v507 = vrcp.pop %v497
      %v508 = vrcp.pop %v500
      %v509 = vrcp.pop %v503
      %v510 = vrcp.pop %v506
      %v511 = vmul.f32 %v488, %v507
      %v512 = vmul.f32 %v490, %v508
      %v513 = vmul.f32 %v492, %v509
      %v514 = vmul.f32 %v494, %v510
      %v515 = vpack.c.bf16 %v511, %v511
      %v516 = vpack.c.bf16 %v512, %v512
      %v517 = vpack.c.bf16 %v513, %v513
      %v518 = vpack.c.bf16 %v514, %v514
      %v520 = vsel %vm278, %v515, 0
      %vm522 = vcmask 1043456
      %v524 = vsel %vm522, %v274, 0
      %526 = vmatprep.subr.bf16.mxu0 0
      %527 = vmatpush1.bf16.msra.mxu0 0
      %528 = vmatprep.subr.bf16.mxu0 0
      %529 = vmatpush1.bf16.msra.mxu0 0
      %530 = vmatprep.subr.bf16.mxu0 0
      %531 = vmatpush1.bf16.msra.mxu0 0
      %532 = vmatprep.subr.bf16.mxu0 0
      %533 = vmatpush1.bf16.msra.mxu0 0
      %534 = vmatprep.subr.bf16.mxu0 0
      %535 = vmatpush1.bf16.msra.mxu0 0
      %536 = vmatprep.subr.bf16.mxu0 0
      %537 = vmatpush1.bf16.msra.mxu0 0
      %538 = vmatprep.subr.bf16.mxu0 0
      %539 = vmatpush1.bf16.msra.mxu0 0
      %540 = vmatprep.subr.bf16.mxu0 0
      %541 = vmatpush1.bf16.msra.mxu0 %v524
      %542 = vmatprep.subr.bf16.mxu0 0
      %543 = vmatpush2.bf16.msra.mxu0 0
      %544 = vmatprep.subr.bf16.mxu0 0
      %545 = vmatpush2.bf16.msra.mxu0 0
      %546 = vmatprep.subr.bf16.mxu0 0
      %547 = vmatpush2.bf16.msra.mxu0 0
      %548 = vmatprep.subr.bf16.mxu0 0
      %549 = vmatpush2.bf16.msra.mxu0 0
      %550 = vmatprep.subr.bf16.mxu0 0
      %551 = vmatpush2.bf16.msra.mxu0 0
      %552 = vmatprep.subr.bf16.mxu0 0
      %553 = vmatpush2.bf16.msra.mxu0 0
      %554 = vmatprep.subr.bf16.mxu0 0
      %555 = vmatpush2.bf16.msra.mxu0 0
      %556 = vmatprep.subr.bf16.mxu0 0
      %557 = vmatpush2.bf16.msra.mxu0 0
      %558 = vmatprep.mubr.bf16.mxu0 0
      %559 = vmatmul.mubr.bf16.gmra.mxu0 %v520
      %v560 = vpop.f32.mrf.mxu0
      %v561 = vadd.f32 0.0, %v560
      %v562 = vpop.f32.mrf.mxu0
      %v563 = vpop.f32.mrf.mxu0
      %v564 = vpop.f32.mrf.mxu0
      %565 = vdwg.mxu0
      %v567 = vsel %vm278, %v516, 0
      %v570 = vsel %vm522, %v275, 0
      %572 = vmatprep.subr.bf16.mxu0 0
      %573 = vmatpush1.bf16.msra.mxu0 0
      %574 = vmatprep.subr.bf16.mxu0 0
      %575 = vmatpush1.bf16.msra.mxu0 0
      %576 = vmatprep.subr.bf16.mxu0 0
      %577 = vmatpush1.bf16.msra.mxu0 0
      %578 = vmatprep.subr.bf16.mxu0 0
      %579 = vmatpush1.bf16.msra.mxu0 0
      %580 = vmatprep.subr.bf16.mxu0 0
      %581 = vmatpush1.bf16.msra.mxu0 0
      %582 = vmatprep.subr.bf16.mxu0 0
      %583 = vmatpush1.bf16.msra.mxu0 0
      %584 = vmatprep.subr.bf16.mxu0 0
      %585 = vmatpush1.bf16.msra.mxu0 0
      %586 = vmatprep.subr.bf16.mxu0 0
      %587 = vmatpush1.bf16.msra.mxu0 %v570
      %588 = vmatprep.subr.bf16.mxu0 0
      %589 = vmatpush2.bf16.msra.mxu0 0
      %590 = vmatprep.subr.bf16.mxu0 0
      %591 = vmatpush2.bf16.msra.mxu0 0
      %592 = vmatprep.subr.bf16.mxu0 0
      %593 = vmatpush2.bf16.msra.mxu0 0
      %594 = vmatprep.subr.bf16.mxu0 0
      %595 = vmatpush2.bf16.msra.mxu0 0
      %596 = vmatprep.subr.bf16.mxu0 0
      %597 = vmatpush2.bf16.msra.mxu0 0
      %598 = vmatprep.subr.bf16.mxu0 0
      %599 = vmatpush2.bf16.msra.mxu0 0
      %600 = vmatprep.subr.bf16.mxu0 0
      %601 = vmatpush2.bf16.msra.mxu0 0
      %602 = vmatprep.subr.bf16.mxu0 0
      %603 = vmatpush2.bf16.msra.mxu0 0
      %604 = vmatprep.mubr.bf16.mxu0 0
      %605 = vmatmul.mubr.bf16.gmra.mxu0 %v567
      %v606 = vpop.f32.mrf.mxu0
      %v607 = vadd.f32 0.0, %v606
      %v608 = vpop.f32.mrf.mxu0
      %v609 = vpop.f32.mrf.mxu0
      %v610 = vpop.f32.mrf.mxu0
      %611 = vdwg.mxu0
      %v613 = vsel %vm278, %v517, 0
      %v616 = vsel %vm522, %v276, 0
      %618 = vmatprep.subr.bf16.mxu0 0
      %619 = vmatpush1.bf16.msra.mxu0 0
      %620 = vmatprep.subr.bf16.mxu0 0
      %621 = vmatpush1.bf16.msra.mxu0 0
      %622 = vmatprep.subr.bf16.mxu0 0
      %623 = vmatpush1.bf16.msra.mxu0 0
      %624 = vmatprep.subr.bf16.mxu0 0
      %625 = vmatpush1.bf16.msra.mxu0 0
      %626 = vmatprep.subr.bf16.mxu0 0
      %627 = vmatpush1.bf16.msra.mxu0 0
      %628 = vmatprep.subr.bf16.mxu0 0
      %629 = vmatpush1.bf16.msra.mxu0 0
      %630 = vmatprep.subr.bf16.mxu0 0
      %631 = vmatpush1.bf16.msra.mxu0 0
      %632 = vmatprep.subr.bf16.mxu0 0
      %633 = vmatpush1.bf16.msra.mxu0 %v616
      %634 = vmatprep.subr.bf16.mxu0 0
      %635 = vmatpush2.bf16.msra.mxu0 0
      %636 = vmatprep.subr.bf16.mxu0 0
      %637 = vmatpush2.bf16.msra.mxu0 0
      %638 = vmatprep.subr.bf16.mxu0 0
      %639 = vmatpush2.bf16.msra.mxu0 0
      %640 = vmatprep.subr.bf16.mxu0 0
      %641 = vmatpush2.bf16.msra.mxu0 0
      %642 = vmatprep.subr.bf16.mxu0 0
      %643 = vmatpush2.bf16.msra.mxu0 0
      %644 = vmatprep.subr.bf16.mxu0 0
      %645 = vmatpush2.bf16.msra.mxu0 0
      %646 = vmatprep.subr.bf16.mxu0 0
      %647 = vmatpush2.bf16.msra.mxu0 0
      %648 = vmatprep.subr.bf16.mxu0 0
      %649 = vmatpush2.bf16.msra.mxu0 0
      %650 = vmatprep.mubr.bf16.mxu0 0
      %651 = vmatmul.mubr.bf16.gmra.mxu0 %v613
      %v652 = vpop.f32.mrf.mxu0
      %v653 = vadd.f32 0.0, %v652
      %v654 = vpop.f32.mrf.mxu0
      %v655 = vpop.f32.mrf.mxu0
      %v656 = vpop.f32.mrf.mxu0
      %657 = vdwg.mxu0
      %v659 = vsel %vm278, %v518, 0
      %v662 = vsel %vm522, %v277, 0
      %664 = vmatprep.subr.bf16.mxu0 0
      %665 = vmatpush1.bf16.msra.mxu0 0
      %666 = vmatprep.subr.bf16.mxu0 0
      %667 = vmatpush1.bf16.msra.mxu0 0
      %668 = vmatprep.subr.bf16.mxu0 0
      %669 = vmatpush1.bf16.msra.mxu0 0
      %670 = vmatprep.subr.bf16.mxu0 0
      %671 = vmatpush1.bf16.msra.mxu0 0
      %672 = vmatprep.subr.bf16.mxu0 0
      %673 = vmatpush1.bf16.msra.mxu0 0
      %674 = vmatprep.subr.bf16.mxu0 0
      %675 = vmatpush1.bf16.msra.mxu0 0
      %676 = vmatprep.subr.bf16.mxu0 0
      %677 = vmatpush1.bf16.msra.mxu0 0
      %678 = vmatprep.subr.bf16.mxu0 0
      %679 = vmatpush1.bf16.msra.mxu0 %v662
      %680 = vmatprep.subr.bf16.mxu0 0
      %681 = vmatpush2.bf16.msra.mxu0 0
      %682 = vmatprep.subr.bf16.mxu0 0
      %683 = vmatpush2.bf16.msra.mxu0 0
      %684 = vmatprep.subr.bf16.mxu0 0
      %685 = vmatpush2.bf16.msra.mxu0 0
      %686 = vmatprep.subr.bf16.mxu0 0
      %687 = vmatpush2.bf16.msra.mxu0 0
      %688 = vmatprep.subr.bf16.mxu0 0
      %689 = vmatpush2.bf16.msra.mxu0 0
      %690 = vmatprep.subr.bf16.mxu0 0
      %691 = vmatpush2.bf16.msra.mxu0 0
      %692 = vmatprep.subr.bf16.mxu0 0
      %693 = vmatpush2.bf16.msra.mxu0 0
      %694 = vmatprep.subr.bf16.mxu0 0
      %695 = vmatpush2.bf16.msra.mxu0 0
      %696 = vmatprep.mubr.bf16.mxu0 0
      %697 = vmatmul.mubr.bf16.gmra.mxu0 %v659
      %v698 = vpop.f32.mrf.mxu0
      %v699 = vadd.f32 0.0, %v698
      %v700 = vpop.f32.mrf.mxu0
      %v701 = vpop.f32.mrf.mxu0
      %v702 = vpop.f32.mrf.mxu0
      %703 = vdwg.mxu0
      %v704 = vpack.c.bf16 %v561, %v561
      %v705 = vpack.c.bf16 %v607, %v607
      %v706 = vpack.c.bf16 %v653, %v653
      %v707 = vpack.c.bf16 %v699, %v699
      %vm708 = vcmask 60416
      %709 = vst.msk [vmem:[%s251] sm:$0xf] %vm708, %v704
      %710 = vst.msk [vmem:[%s251 + $0x4] sm:$0xf] %vm708, %v705
      %711 = vst.msk [vmem:[%s251 + $0x8] sm:$0xf] %vm708, %v706
      %712 = vst.msk [vmem:[%s251 + $0xc] sm:$0xf] %vm708, %v707
      %p713 = scmp.lt.s32.totalorder %s15, 1
      %s714 = scalar_select %p713, %s15, 1
      %s715 = smul.addr %s714, 4
      %s716 = smul.addr %s715, 4
      %s717 = scalar_lea.vmem %s4, %s716
      // Predicated region
      $region37: #{transformer_forward.37} parent=35 // pred_check
        %p718 = pneg %p137
      $region38: #{transformer_forward.37} parent=35 // pred_check_branch
        %720 = sbr.rel (%p718) target = $region40
      $region39: #{transformer_forward.37} parent=35 // pred_region
        _
      $region40: #{transformer_forward.37} parent=35 // pred_fallthru
        _
    $region36: #{transformer_forward.37} parent=5 // pred_fallthru
      _
    %p721 = scmp.le.s32.totalorder 2, %s10
    // Predicated region
    $region41: #{transformer_forward.37} parent=5 // pred_check
      %p722 = pneg %p721
    $region42: #{transformer_forward.37} parent=5 // pred_check_branch
      %724 = sbr.rel (%p722) target = $region44
    $region43: #{transformer_forward.37} parent=5 // pred_region
      %s725 = ssub.s32 %s10, 2
      // Predicated region
      $region45: #{transformer_forward.37} parent=43 // pred_check
        %p726 = pneg %p143
      $region46: #{transformer_forward.37} parent=43 // pred_check_branch
        %728 = sbr.rel (%p726) target = $region48
      $region47: #{transformer_forward.37} parent=43 // pred_region
        %p729 = scmp.lt.s32.totalorder %s16, 1
        %s730 = scalar_select %p729, %s16, 1
        %s731 = smul.addr %s730, 4
        %s732 = smul.addr %s731, 4
        %s733 = scalar_lea.vmem %s4, %s732
      $region48: #{transformer_forward.37} parent=43 // pred_fallthru
        _
    $region44: #{transformer_forward.37} parent=5 // pred_fallthru
      _
  $region6: #{transformer_forward.37} parent=0 // loop_footer
    %s14 = sadd.s32 1, %s10
  $region7: #{transformer_forward.37} parent=0 // loop_footer_branch
    %9 = sbr.rel target = $region3
  $region8: #{transformer_forward.37} parent=0 // loop_exit
    _

// kernel: transformer_forward.41
$region0: #{transformer_forward.41}
  #allocation0 [shape = 'u32[]', space=smem, size = 0x4, offset = 0x4, fixed_abs, tag = 'smem constant byte address 0x4 - core index']
  #allocation1 [shape = 'u32[144,128]{1,0:T(1,128)}', space=vmem, size = 0x12000, scoped, tag = 'internal scratch']
  %s0 = inlined_call_operand.vmem [shape: bf16[2,4,8,8], index: 0, kind: input, shape index: {}]
  %s1 = inlined_call_operand.vmem [shape: bf16[2,4,10,8], index: 1, kind: input, shape index: {}]
  %s2 = inlined_call_operand.vmem [shape: bf16[2,4,10,8], index: 2, kind: input, shape index: {}]
  %s3 = inlined_call_operand.vmem [shape: f32[2,1,10], index: 3, kind: input, shape index: {}]
  %s4 = inlined_call_operand.vmem [shape: bf16[2,4,8,8], index: 4, kind: output, shape index: {}]
  %s5 = sld [smem:[#allocation0]]
  $region49: #{transformer_forward.41} parent=0
    _
  %s7 = ssub.s32 1, %s5
  %s8 = scalar_select 0, %s7, %s5
  loop: start=0, step=1, limit=4
  $region2: #{transformer_forward.41} parent=0 // loop_pre_header
    _
  $region3: #{transformer_forward.41} parent=0 // loop_header
    %s10 = sphi 0, %s14
    %p11 = scmp.ge.s32.totalorder %s10, 4
    %s20 = sphi 0, %s22
    %s23 = sphi 0, %s20
    %s24 = sphi 0, %s23
    %s40 = sphi 0, %s24
    %s46 = sphi 0, %s48
    %s49 = sphi 0, %s46
    %s50 = sphi 0, %s49
    %s66 = sphi 0, %s50
    %s72 = sphi 0, %s74
    %s75 = sphi 0, %s72
    %s76 = sphi 0, %s75
    %s92 = sphi 0, %s76
    %s98 = sphi 0, %s100
    %s101 = sphi 0, %s98
    %s102 = sphi 0, %s101
    %s118 = sphi 0, %s102
    %s124 = sphi 0, %s126
    %s127 = sphi 0, %s124
    %s128 = sphi 0, %s127
    %s144 = sphi 0, %s128
  $region4: #{transformer_forward.41} parent=0 // loop_header_branch
    %13 = sbr.rel (%p11) target = $region8
  $region5: #{transformer_forward.41} parent=0 // loop_body
    %s15 = ssub.s32 %s10, 1
    %s16 = ssub.s32 %s10, 2
    %s17 = sadd.s32 %s10, 1
    %s18 = ssub.s32 %s10, %s17
    %p19 = scmp.eq.s32.totalorder %s18, 0
    %s21 = sadd.s32 %s20, 1
    %s22 = scalar_select %p19, %s20, %s21
    %p25 = pneg %p19
    %p26 = scmp.eq.s32.totalorder %s10, 1
    %p27 = por %p25, %p26
    %p28 = scmp.ne.s32.totalorder %s20, %s23
    %p29 = scmp.eq.s32.totalorder %s10, 0
    %p30 = por %p28, %p29
    %p31 = scmp.ne.s32.totalorder %s20, %s23
    %p32 = scmp.eq.s32.totalorder %s15, 1
    %p33 = por %p31, %p32
    %p34 = scmp.ne.s32.totalorder %s23, %s24
    %p35 = scmp.eq.s32.totalorder %s15, 0
    %p36 = por %p34, %p35
    %p37 = scmp.ne.s32.totalorder %s23, %s24
    %p38 = scmp.eq.s32.totalorder %s16, 1
    %p39 = por %p37, %p38
    %p41 = scmp.ne.s32.totalorder %s24, %s40
    %p42 = scmp.eq.s32.totalorder %s16, 0
    %p43 = por %p41, %p42
    %s44 = ssub.s32 %s10, %s17
    %p45 = scmp.eq.s32.totalorder %s44, 0
    %s47 = sadd.s32 %s46, 1
    %s48 = scalar_select %p45, %s46, %s47
    %p51 = pneg %p45
    %p52 = scmp.eq.s32.totalorder %s10, 1
    %p53 = por %p51, %p52
    %p54 = scmp.ne.s32.totalorder %s46, %s49
    %p55 = scmp.eq.s32.totalorder %s10, 0
    %p56 = por %p54, %p55
    %p57 = scmp.ne.s32.totalorder %s46, %s49
    %p58 = scmp.eq.s32.totalorder %s15, 1
    %p59 = por %p57, %p58
    %p60 = scmp.ne.s32.totalorder %s49, %s50
    %p61 = scmp.eq.s32.totalorder %s15, 0
    %p62 = por %p60, %p61
    %p63 = scmp.ne.s32.totalorder %s49, %s50
    %p64 = scmp.eq.s32.totalorder %s16, 1
    %p65 = por %p63, %p64
    %p67 = scmp.ne.s32.totalorder %s50, %s66
    %p68 = scmp.eq.s32.totalorder %s16, 0
    %p69 = por %p67, %p68
    %s70 = ssub.s32 %s10, %s17
    %p71 = scmp.eq.s32.totalorder %s70, 0
    %s73 = sadd.s32 %s72, 1
    %s74 = scalar_select %p71, %s72, %s73
    %p77 = pneg %p71
    %p78 = scmp.eq.s32.totalorder %s10, 1
    %p79 = por %p77, %p78
    %p80 = scmp.ne.s32.totalorder %s72, %s75
    %p81 = scmp.eq.s32.totalorder %s10, 0
    %p82 = por %p80, %p81
    %p83 = scmp.ne.s32.totalorder %s72, %s75
    %p84 = scmp.eq.s32.totalorder %s15, 1
    %p85 = por %p83, %p84
    %p86 = scmp.ne.s32.totalorder %s75, %s76
    %p87 = scmp.eq.s32.totalorder %s15, 0
    %p88 = por %p86, %p87
    %p89 = scmp.ne.s32.totalorder %s75, %s76
    %p90 = scmp.eq.s32.totalorder %s16, 1
    %p91 = por %p89, %p90
    %p93 = scmp.ne.s32.totalorder %s76, %s92
    %p94 = scmp.eq.s32.totalorder %s16, 0
    %p95 = por %p93, %p94
    %s96 = ssub.s32 %s10, %s17
    %p97 = scmp.eq.s32.totalorder %s96, 0
    %s99 = sadd.s32 %s98, 1
    %s100 = scalar_select %p97, %s98, %s99
    %p103 = pneg %p97
    %p104 = scmp.eq.s32.totalorder %s10, 1
    %p105 = por %p103, %p104
    %p106 = scmp.ne.s32.totalorder %s98, %s101
    %p107 = scmp.eq.s32.totalorder %s10, 0
    %p108 = por %p106, %p107
    %p109 = scmp.ne.s32.totalorder %s98, %s101
    %p110 = scmp.eq.s32.totalorder %s15, 1
    %p111 = por %p109, %p110
    %p112 = scmp.ne.s32.totalorder %s101, %s102
    %p113 = scmp.eq.s32.totalorder %s15, 0
    %p114 = por %p112, %p113
    %p115 = scmp.ne.s32.totalorder %s101, %s102
    %p116 = scmp.eq.s32.totalorder %s16, 1
    %p117 = por %p115, %p116
    %p119 = scmp.ne.s32.totalorder %s102, %s118
    %p120 = scmp.eq.s32.totalorder %s16, 0
    %p121 = por %p119, %p120
    %s122 = ssub.s32 %s10, %s17
    %p123 = scmp.eq.s32.totalorder %s122, 0
    %s125 = sadd.s32 %s124, 1
    %s126 = scalar_select %p123, %s124, %s125
    %p129 = pneg %p123
    %p130 = scmp.eq.s32.totalorder %s10, 1
    %p131 = por %p129, %p130
    %p132 = scmp.ne.s32.totalorder %s124, %s127
    %p133 = scmp.eq.s32.totalorder %s10, 0
    %p134 = por %p132, %p133
    %p135 = scmp.ne.s32.totalorder %s124, %s127
    %p136 = scmp.eq.s32.totalorder %s15, 1
    %p137 = por %p135, %p136
    %p138 = scmp.ne.s32.totalorder %s127, %s128
    %p139 = scmp.eq.s32.totalorder %s15, 0
    %p140 = por %p138, %p139
    %p141 = scmp.ne.s32.totalorder %s127, %s128
    %p142 = scmp.eq.s32.totalorder %s16, 1
    %p143 = por %p141, %p142
    %p145 = scmp.ne.s32.totalorder %s128, %s144
    %p146 = scmp.eq.s32.totalorder %s16, 0
    %p147 = por %p145, %p146
    %p148 = scmp.le.s32.totalorder 1, %s10
    %p149 = scmp.lt.s32.totalorder %s10, 3
    %p150 = pnand %p148, %p149
    %p151 = pneg %p150
    // Predicated region
    $region9: #{transformer_forward.41} parent=5 // pred_check
      _
    $region10: #{transformer_forward.41} parent=5 // pred_check_branch
      %153 = sbr.rel (%p150) target = $region12
    $region11: #{transformer_forward.41} parent=5 // pred_region
      %s154 = ssub.s32 %s10, 1
    $region12: #{transformer_forward.41} parent=5 // pred_fallthru
      _
    %p155 = scmp.lt.s32.totalorder %s10, 2
    // Predicated region
    $region13: #{transformer_forward.41} parent=5 // pred_check
      %p156 = pneg %p155
    $region14: #{transformer_forward.41} parent=5 // pred_check_branch
      %158 = sbr.rel (%p156) target = $region16
    $region15: #{transformer_forward.41} parent=5 // pred_region
      // Predicated region
      $region17: #{transformer_forward.41} parent=15 // pred_check
        %p159 = pneg %p30
      $region18: #{transformer_forward.41} parent=15 // pred_check_branch
        %161 = sbr.rel (%p159) target = $region20
      $region19: #{transformer_forward.41} parent=15 // pred_region
        %p162 = scmp.lt.s32.totalorder %s10, 1
        %s163 = scalar_select %p162, %s10, 1
        %s164 = smul.addr %s163, 4
        %s165 = smul.addr %s164, 4
        %s166 = scalar_lea.vmem %s0, %s165
      $region20: #{transformer_forward.41} parent=15 // pred_fallthru
        _
      // Predicated region
      $region21: #{transformer_forward.41} parent=15 // pred_check
        %p167 = pneg %p56
      $region22: #{transformer_forward.41} parent=15 // pred_check_branch
        %169 = sbr.rel (%p167) target = $region24
      $region23: #{transformer_forward.41} parent=15 // pred_region
        %p170 = scmp.lt.s32.totalorder %s10, 1
        %s171 = scalar_select %p170, %s10, 1
        %s172 = smul.addr %s171, 8
        %s173 = smul.addr %s172, 4
        %s174 = scalar_lea.vmem %s1, %s173
      $region24: #{transformer_forward.41} parent=15 // pred_fallthru
        _
      // Predicated region
      $region25: #{transformer_forward.41} parent=15 // pred_check
        %p175 = pneg %p82
      $region26: #{transformer_forward.41} parent=15 // pred_check_branch
        %177 = sbr.rel (%p175) target = $region28
      $region27: #{transformer_forward.41} parent=15 // pred_region
        %p178 = scmp.lt.s32.totalorder %s10, 1
        %s179 = scalar_select %p178, %s10, 1
        %s180 = smul.addr %s179, 8
        %s181 = smul.addr %s180, 4
        %s182 = scalar_lea.vmem %s2, %s181
      $region28: #{transformer_forward.41} parent=15 // pred_fallthru
        _
      // Predicated region
      $region29: #{transformer_forward.41} parent=15 // pred_check
        %p183 = pneg %p108
      $region30: #{transformer_forward.41} parent=15 // pred_check_branch
        %185 = sbr.rel (%p183) target = $region32
      $region31: #{transformer_forward.41} parent=15 // pred_region
        %p186 = scmp.lt.s32.totalorder %s10, 1
        %s187 = scalar_select %p186, %s10, 1
        %s188 = scalar_lea.vmem %s3, %s187
      $region32: #{transformer_forward.41} parent=15 // pred_fallthru
        _
    $region16: #{transformer_forward.41} parent=5 // pred_fallthru
      _
    %p189 = scmp.le.s32.totalorder 1, %s10
    %p190 = scmp.lt.s32.totalorder %s10, 3
    %p191 = pnand %p189, %p190
    %p192 = pneg %p191
    // Predicated region
    $region33: #{transformer_forward.41} parent=5 // pred_check
      _
    $region34: #{transformer_forward.41} parent=5 // pred_check_branch
      %194 = sbr.rel (%p191) target = $region36
    $region35: #{transformer_forward.41} parent=5 // pred_region
      %s195 = ssub.s32 %s10, 1
      %p196 = scmp.lt.s32.totalorder %s15, 1
      %s197 = scalar_select %p196, %s15, 1
      %s198 = smul.addr %s197, 4
      %s199 = smul.addr %s198, 4
      %s200 = scalar_lea.vmem %s0, %s199
      %p201 = pneg %p36
      %p202 = pneg %p33
      %p203 = scmp.lt.s32.totalorder %s15, 1
      %s204 = scalar_select %p203, %s15, 1
      %s205 = smul.addr %s204, 8
      %s206 = smul.addr %s205, 4
      %s207 = scalar_lea.vmem %s1, %s206
      %p208 = pneg %p62
      %p209 = pneg %p59
      %p210 = scmp.lt.s32.totalorder %s15, 1
      %s211 = scalar_select %p210, %s15, 1
      %s212 = smul.addr %s211, 8
      %s213 = smul.addr %s212, 4
      %s214 = scalar_lea.vmem %s2, %s213
      %p215 = pneg %p88
      %p216 = pneg %p85
      %p217 = scmp.lt.s32.totalorder %s15, 1
      %s218 = scalar_select %p217, %s15, 1
      %s219 = scalar_lea.vmem %s3, %s218
      %p220 = pneg %p114
      %p221 = pneg %p111
      %p222 = pneg %p140
      %p223 = pneg %p137
      %p224 = scmp.lt.s32.totalorder %s15, 1
      %s225 = scalar_select %p224, %s15, 1
      %s226 = smul.addr %s225, 4
      %s227 = smul.addr %s226, 4
      %s228 = scalar_lea.vmem %s4, %s227
      %p229 = scmp.lt.s32.totalorder %s15, 1
      %s230 = scalar_select %p229, %s15, 1
      %s231 = smul.addr %s230, 4
      %s232 = smul.addr %s231, 4
      %s233 = scalar_lea.vmem %s0, %s232
      %p234 = scmp.lt.s32.totalorder %s15, 1
      %s235 = scalar_select %p234, %s15, 1
      %s236 = smul.addr %s235, 8
      %s237 = smul.addr %s236, 4
      %s238 = scalar_lea.vmem %s1, %s237
      %p239 = scmp.lt.s32.totalorder %s15, 1
      %s240 = scalar_select %p239, %s15, 1
      %s241 = smul.addr %s240, 8
      %s242 = smul.addr %s241, 4
      %s243 = scalar_lea.vmem %s2, %s242
      %p244 = scmp.lt.s32.totalorder %s15, 1
      %s245 = scalar_select %p244, %s15, 1
      %s246 = scalar_lea.vmem %s3, %s245
      %p247 = scmp.lt.s32.totalorder %s15, 1
      %s248 = scalar_select %p247, %s15, 1
      %s249 = smul.addr %s248, 4
      %s250 = smul.addr %s249, 4
      %s251 = scalar_lea.vmem %s4, %s250
      %v253 = vld [vmem:[%s246] sm:$0x1]
      %v254 = vld [vmem:[%s233] sm:$0xf]
      %v255 = vld [vmem:[%s233 + $0x4] sm:$0xf]
      %v256 = vld [vmem:[%s233 + $0x8] sm:$0xf]
      %v257 = vld [vmem:[%s233 + $0xc] sm:$0xf]
      %v258 = vld [vmem:[%s238] sm:$0xf]
      %v259 = vld [vmem:[%s238 + $0x4] sm:$0x1]
      %v260 = vld [vmem:[%s238 + $0x8] sm:$0xf]
      %v261 = vld [vmem:[%s238 + $0xc] sm:$0x1]
      %v262 = vld [vmem:[%s238 + $0x10] sm:$0xf]
      %v263 = vld [vmem:[%s238 + $0x14] sm:$0x1]
      %v264 = vld [vmem:[%s238 + $0x18] sm:$0xf]
      %v265 = vld [vmem:[%s238 + $0x1c] sm:$0x1]
      %v266 = vld [vmem:[%s243] sm:$0xf]
      %v267 = vld [vmem:[%s243 + $0x4] sm:$0x1]
      %v268 = vld [vmem:[%s243 + $0x8] sm:$0xf]
      %v269 = vld [vmem:[%s243 + $0xc] sm:$0x1]
      %v270 = vld [vmem:[%s243 + $0x10] sm:$0xf]
      %v271 = vld [vmem:[%s243 + $0x14] sm:$0x1]
      %v272 = vld [vmem:[%s243 + $0x18] sm:$0xf]
      %v273 = vld [vmem:[%s243 + $0x1c] sm:$0x1]
      %v276 = vunpack.c.l.b16 %v258
      %v277 = vunpack.c.l.b16 %v259
      %v278 = vpack.c.b16 %v277, %v276
      %vm279 = vcmask 64512
      %v281 = vsel %vm279, %v254, 0
      %v284 = vsel %vm279, %v278, 0
      %286 = vmatprep.subr.bf16.mxu0 0
      %287 = vmatpush1.bf16.xpose.msra.mxu0 0
      %288 = vmatprep.subr.bf16.mxu0 0
      %289 = vmatpush1.bf16.xpose.msra.mxu0 0
      %290 = vmatprep.subr.bf16.mxu0 0
      %291 = vmatpush1.bf16.xpose.msra.mxu0 0
      %292 = vmatprep.subr.bf16.mxu0 0
      %293 = vmatpush1.bf16.xpose.msra.mxu0 0
      %294 = vmatprep.subr.bf16.mxu0 0
      %295 = vmatpush1.bf16.xpose.msra.mxu0 0
      %296 = vmatprep.subr.bf16.mxu0 0
      %297 = vmatpush1.bf16.xpose.msra.mxu0 0
      %298 = vmatprep.subr.bf16.mxu0 0
      %299 = vmatpush1.bf16.xpose.msra.mxu0 0
      %300 = vmatprep.subr.bf16.mxu0 0
      %301 = vmatpush1.bf16.xpose.msra.mxu0 %v284
      %302 = vmatprep.subr.bf16.mxu0 0
      %303 = vmatpush2.bf16.xpose.msra.mxu0 0
      %304 = vmatprep.subr.bf16.mxu0 0
      %305 = vmatpush2.bf16.xpose.msra.mxu0 0
      %306 = vmatprep.subr.bf16.mxu0 0
      %307 = vmatpush2.bf16.xpose.msra.mxu0 0
      %308 = vmatprep.subr.bf16.mxu0 0
      %309 = vmatpush2.bf16.xpose.msra.mxu0 0
      %310 = vmatprep.subr.bf16.mxu0 0
      %311 = vmatpush2.bf16.xpose.msra.mxu0 0
      %312 = vmatprep.subr.bf16.mxu0 0
      %313 = vmatpush2.bf16.xpose.msra.mxu0 0
      %314 = vmatprep.subr.bf16.mxu0 0
      %315 = vmatpush2.bf16.xpose.msra.mxu0 0
      %316 = vmatprep.subr.bf16.mxu0 0
      %317 = vmatpush2.bf16.xpose.msra.mxu0 0
      %318 = vmatprep.mubr.bf16.mxu0 0
      %319 = vmatmul.mubr.bf16.gmra.mxu0 %v281
      %v320 = vpop.f32.mrf.mxu0
      %v321 = vadd.f32 0.0, %v320
      %v322 = vpop.f32.mrf.mxu0
      %v323 = vpop.f32.mrf.mxu0
      %v324 = vpop.f32.mrf.mxu0
      %325 = vdwg.mxu0
      %v328 = vunpack.c.l.b16 %v260
      %v329 = vunpack.c.l.b16 %v261
      %v330 = vpack.c.b16 %v329, %v328
      %v332 = vsel %vm279, %v255, 0
      %v335 = vsel %vm279, %v330, 0
      %337 = vmatprep.subr.bf16.mxu0 0
      %338 = vmatpush1.bf16.xpose.msra.mxu0 0
      %339 = vmatprep.subr.bf16.mxu0 0
      %340 = vmatpush1.bf16.xpose.msra.mxu0 0
      %341 = vmatprep.subr.bf16.mxu0 0
      %342 = vmatpush1.bf16.xpose.msra.mxu0 0
      %343 = vmatprep.subr.bf16.mxu0 0
      %344 = vmatpush1.bf16.xpose.msra.mxu0 0
      %345 = vmatprep.subr.bf16.mxu0 0
      %346 = vmatpush1.bf16.xpose.msra.mxu0 0
      %347 = vmatprep.subr.bf16.mxu0 0
      %348 = vmatpush1.bf16.xpose.msra.mxu0 0
      %349 = vmatprep.subr.bf16.mxu0 0
      %350 = vmatpush1.bf16.xpose.msra.mxu0 0
      %351 = vmatprep.subr.bf16.mxu0 0
      %352 = vmatpush1.bf16.xpose.msra.mxu0 %v335
      %353 = vmatprep.subr.bf16.mxu0 0
      %354 = vmatpush2.bf16.xpose.msra.mxu0 0
      %355 = vmatprep.subr.bf16.mxu0 0
      %356 = vmatpush2.bf16.xpose.msra.mxu0 0
      %357 = vmatprep.subr.bf16.mxu0 0
      %358 = vmatpush2.bf16.xpose.msra.mxu0 0
      %359 = vmatprep.subr.bf16.mxu0 0
      %360 = vmatpush2.bf16.xpose.msra.mxu0 0
      %361 = vmatprep.subr.bf16.mxu0 0
      %362 = vmatpush2.bf16.xpose.msra.mxu0 0
      %363 = vmatprep.subr.bf16.mxu0 0
      %364 = vmatpush2.bf16.xpose.msra.mxu0 0
      %365 = vmatprep.subr.bf16.mxu0 0
      %366 = vmatpush2.bf16.xpose.msra.mxu0 0
      %367 = vmatprep.subr.bf16.mxu0 0
      %368 = vmatpush2.bf16.xpose.msra.mxu0 0
      %369 = vmatprep.mubr.bf16.mxu0 0
      %370 = vmatmul.mubr.bf16.gmra.mxu0 %v332
      %v371 = vpop.f32.mrf.mxu0
      %v372 = vadd.f32 0.0, %v371
      %v373 = vpop.f32.mrf.mxu0
      %v374 = vpop.f32.mrf.mxu0
      %v375 = vpop.f32.mrf.mxu0
      %376 = vdwg.mxu0
      %v379 = vunpack.c.l.b16 %v262
      %v380 = vunpack.c.l.b16 %v263
      %v381 = vpack.c.b16 %v380, %v379
      %v383 = vsel %vm279, %v256, 0
      %v386 = vsel %vm279, %v381, 0
      %388 = vmatprep.subr.bf16.mxu0 0
      %389 = vmatpush1.bf16.xpose.msra.mxu0 0
      %390 = vmatprep.subr.bf16.mxu0 0
      %391 = vmatpush1.bf16.xpose.msra.mxu0 0
      %392 = vmatprep.subr.bf16.mxu0 0
      %393 = vmatpush1.bf16.xpose.msra.mxu0 0
      %394 = vmatprep.subr.bf16.mxu0 0
      %395 = vmatpush1.bf16.xpose.msra.mxu0 0
      %396 = vmatprep.subr.bf16.mxu0 0
      %397 = vmatpush1.bf16.xpose.msra.mxu0 0
      %398 = vmatprep.subr.bf16.mxu0 0
      %399 = vmatpush1.bf16.xpose.msra.mxu0 0
      %400 = vmatprep.subr.bf16.mxu0 0
      %401 = vmatpush1.bf16.xpose.msra.mxu0 0
      %402 = vmatprep.subr.bf16.mxu0 0
      %403 = vmatpush1.bf16.xpose.msra.mxu0 %v386
      %404 = vmatprep.subr.bf16.mxu0 0
      %405 = vmatpush2.bf16.xpose.msra.mxu0 0
      %406 = vmatprep.subr.bf16.mxu0 0
      %407 = vmatpush2.bf16.xpose.msra.mxu0 0
      %408 = vmatprep.subr.bf16.mxu0 0
      %409 = vmatpush2.bf16.xpose.msra.mxu0 0
      %410 = vmatprep.subr.bf16.mxu0 0
      %411 = vmatpush2.bf16.xpose.msra.mxu0 0
      %412 = vmatprep.subr.bf16.mxu0 0
      %413 = vmatpush2.bf16.xpose.msra.mxu0 0
      %414 = vmatprep.subr.bf16.mxu0 0
      %415 = vmatpush2.bf16.xpose.msra.mxu0 0
      %416 = vmatprep.subr.bf16.mxu0 0
      %417 = vmatpush2.bf16.xpose.msra.mxu0 0
      %418 = vmatprep.subr.bf16.mxu0 0
      %419 = vmatpush2.bf16.xpose.msra.mxu0 0
      %420 = vmatprep.mubr.bf16.mxu0 0
      %421 = vmatmul.mubr.bf16.gmra.mxu0 %v383
      %v422 = vpop.f32.mrf.mxu0
      %v423 = vadd.f32 0.0, %v422
      %v424 = vpop.f32.mrf.mxu0
      %v425 = vpop.f32.mrf.mxu0
      %v426 = vpop.f32.mrf.mxu0
      %427 = vdwg.mxu0
      %v430 = vunpack.c.l.b16 %v264
      %v431 = vunpack.c.l.b16 %v265
      %v432 = vpack.c.b16 %v431, %v430
      %v434 = vsel %vm279, %v257, 0
      %v437 = vsel %vm279, %v432, 0
      %439 = vmatprep.subr.bf16.mxu0 0
      %440 = vmatpush1.bf16.xpose.msra.mxu0 0
      %441 = vmatprep.subr.bf16.mxu0 0
      %442 = vmatpush1.bf16.xpose.msra.mxu0 0
      %443 = vmatprep.subr.bf16.mxu0 0
      %444 = vmatpush1.bf16.xpose.msra.mxu0 0
      %445 = vmatprep.subr.bf16.mxu0 0
      %446 = vmatpush1.bf16.xpose.msra.mxu0 0
      %447 = vmatprep.subr.bf16.mxu0 0
      %448 = vmatpush1.bf16.xpose.msra.mxu0 0
      %449 = vmatprep.subr.bf16.mxu0 0
      %450 = vmatpush1.bf16.xpose.msra.mxu0 0
      %451 = vmatprep.subr.bf16.mxu0 0
      %452 = vmatpush1.bf16.xpose.msra.mxu0 0
      %453 = vmatprep.subr.bf16.mxu0 0
      %454 = vmatpush1.bf16.xpose.msra.mxu0 %v437
      %455 = vmatprep.subr.bf16.mxu0 0
      %456 = vmatpush2.bf16.xpose.msra.mxu0 0
      %457 = vmatprep.subr.bf16.mxu0 0
      %458 = vmatpush2.bf16.xpose.msra.mxu0 0
      %459 = vmatprep.subr.bf16.mxu0 0
      %460 = vmatpush2.bf16.xpose.msra.mxu0 0
      %461 = vmatprep.subr.bf16.mxu0 0
      %462 = vmatpush2.bf16.xpose.msra.mxu0 0
      %463 = vmatprep.subr.bf16.mxu0 0
      %464 = vmatpush2.bf16.xpose.msra.mxu0 0
      %465 = vmatprep.subr.bf16.mxu0 0
      %466 = vmatpush2.bf16.xpose.msra.mxu0 0
      %467 = vmatprep.subr.bf16.mxu0 0
      %468 = vmatpush2.bf16.xpose.msra.mxu0 0
      %469 = vmatprep.subr.bf16.mxu0 0
      %470 = vmatpush2.bf16.xpose.msra.mxu0 0
      %471 = vmatprep.mubr.bf16.mxu0 0
      %472 = vmatmul.mubr.bf16.gmra.mxu0 %v434
      %v473 = vpop.f32.mrf.mxu0
      %v474 = vadd.f32 0.0, %v473
      %v475 = vpop.f32.mrf.mxu0
      %v476 = vpop.f32.mrf.mxu0
      %v477 = vpop.f32.mrf.mxu0
      %478 = vdwg.mxu0
      %v479 = vmul.f32 %v321, 0.35355338
      %v480 = vmul.f32 %v372, 0.35355338
      %v481 = vmul.f32 %v423, 0.35355338
      %v482 = vmul.f32 %v474, 0.35355338
      %v484 = vlaneseq
      %v485 = vshrl.u32 %v484, 7
      %v486 = vsub.s32 0, %v485
      %v487 = vrot.slane %v253, %v486
      %v489 = vadd.f32 %v479, %v487
      %v490 = vadd.f32 %v480, %v487
      %v491 = vadd.f32 %v481, %v487
      %v492 = vadd.f32 %v482, %v487
      %vm493 = vcmask 80896
      %v494 = vsel %vm493, %v489, -inf
      %495 = vmax.xlane.f32.xlu0 %v494
      %v496 = vpop.xlane.xlu0 %495
      %v497 = vsel %vm493, %v490, -inf
      %498 = vmax.xlane.f32.xlu0 %v497
      %v499 = vpop.xlane.xlu0 %498
      %v500 = vsel %vm493, %v491, -inf
      %501 = vmax.xlane.f32.xlu0 %v500
      %v502 = vpop.xlane.xlu0 %501
      %v503 = vsel %vm493, %v492, -inf
      %504 = vmax.xlane.f32.xlu0 %v503
      %v505 = vpop.xlane.xlu0 %504
      %v506 = vsub.f32 %v489, %v496
      %v507 = vsub.f32 %v490, %v499
      %v508 = vsub.f32 %v491, %v502
      %v509 = vsub.f32 %v492, %v505
      %v510 = vmul.f32 %v506, 1.442695
      %v511 = vpow.pop %v510
      %v512 = vmul.f32 %v507, 1.442695
      %v513 = vpow.pop %v512
      %v514 = vmul.f32 %v508, 1.442695
      %v515 = vpow.pop %v514
      %v516 = vmul.f32 %v509, 1.442695
      %v517 = vpow.pop %v516
      %v518 = vsel %vm493, %v511, 0.0
      %519 = vadd.xlane.f32.xlu0 %v518
      %v520 = vpop.xlane.xlu0 %519
      %v521 = vsel %vm493, %v513, 0.0
      %522 = vadd.xlane.f32.xlu0 %v521
      %v523 = vpop.xlane.xlu0 %522
      %v524 = vsel %vm493, %v515, 0.0
      %525 = vadd.xlane.f32.xlu0 %v524
      %v526 = vpop.xlane.xlu0 %525
      %v527 = vsel %vm493, %v517, 0.0
      %528 = vadd.xlane.f32.xlu0 %v527
      %v529 = vpop.xlane.xlu0 %528
      %v530 = vrcp.pop %v520
      %v531 = vrcp.pop %v523
      %v532 = vrcp.pop %v526
      %v533 = vrcp.pop %v529
      %v534 = vmul.f32 %v511, %v530
      %v535 = vmul.f32 %v513, %v531
      %v536 = vmul.f32 %v515, %v532
      %v537 = vmul.f32 %v517, %v533
      %v538 = vpack.c.bf16 %v534, %v534
      %v539 = vpack.c.bf16 %v535, %v535
      %v540 = vpack.c.bf16 %v536, %v536
      %v541 = vpack.c.bf16 %v537, %v537
      %v544 = vunpack.c.l.b16 %v266
      %v545 = vunpack.c.l.b16 %v267
      %v546 = vpack.c.b16 %v545, %v544
      %v548 = vsel %vm493, %v538, 0
      %vm550 = vcmask 1044480
      %v552 = vsel %vm550, %v546, 0
      %554 = vmatprep.subr.bf16.mxu0 0
      %555 = vmatpush1.bf16.msra.mxu0 0
      %556 = vmatprep.subr.bf16.mxu0 0
      %557 = vmatpush1.bf16.msra.mxu0 0
      %558 = vmatprep.subr.bf16.mxu0 0
      %559 = vmatpush1.bf16.msra.mxu0 0
      %560 = vmatprep.subr.bf16.mxu0 0
      %561 = vmatpush1.bf16.msra.mxu0 0
      %562 = vmatprep.subr.bf16.mxu0 0
      %563 = vmatpush1.bf16.msra.mxu0 0
      %564 = vmatprep.subr.bf16.mxu0 0
      %565 = vmatpush1.bf16.msra.mxu0 0
      %566 = vmatprep.subr.bf16.mxu0 0
      %567 = vmatpush1.bf16.msra.mxu0 0
      %568 = vmatprep.subr.bf16.mxu0 0
      %569 = vmatpush1.bf16.msra.mxu0 %v552
      %570 = vmatprep.subr.bf16.mxu0 0
      %571 = vmatpush2.bf16.msra.mxu0 0
      %572 = vmatprep.subr.bf16.mxu0 0
      %573 = vmatpush2.bf16.msra.mxu0 0
      %574 = vmatprep.subr.bf16.mxu0 0
      %575 = vmatpush2.bf16.msra.mxu0 0
      %576 = vmatprep.subr.bf16.mxu0 0
      %577 = vmatpush2.bf16.msra.mxu0 0
      %578 = vmatprep.subr.bf16.mxu0 0
      %579 = vmatpush2.bf16.msra.mxu0 0
      %580 = vmatprep.subr.bf16.mxu0 0
      %581 = vmatpush2.bf16.msra.mxu0 0
      %582 = vmatprep.subr.bf16.mxu0 0
      %583 = vmatpush2.bf16.msra.mxu0 0
      %584 = vmatprep.subr.bf16.mxu0 0
      %585 = vmatpush2.bf16.msra.mxu0 0
      %586 = vmatprep.mubr.bf16.mxu0 0
      %587 = vmatmul.mubr.bf16.gmra.mxu0 %v548
      %v588 = vpop.f32.mrf.mxu0
      %v589 = vadd.f32 0.0, %v588
      %v590 = vpop.f32.mrf.mxu0
      %v591 = vpop.f32.mrf.mxu0
      %v592 = vpop.f32.mrf.mxu0
      %593 = vdwg.mxu0
      %v596 = vunpack.c.l.b16 %v268
      %v597 = vunpack.c.l.b16 %v269
      %v598 = vpack.c.b16 %v597, %v596
      %v600 = vsel %vm493, %v539, 0
      %v603 = vsel %vm550, %v598, 0
      %605 = vmatprep.subr.bf16.mxu0 0
      %606 = vmatpush1.bf16.msra.mxu0 0
      %607 = vmatprep.subr.bf16.mxu0 0
      %608 = vmatpush1.bf16.msra.mxu0 0
      %609 = vmatprep.subr.bf16.mxu0 0
      %610 = vmatpush1.bf16.msra.mxu0 0
      %611 = vmatprep.subr.bf16.mxu0 0
      %612 = vmatpush1.bf16.msra.mxu0 0
      %613 = vmatprep.subr.bf16.mxu0 0
      %614 = vmatpush1.bf16.msra.mxu0 0
      %615 = vmatprep.subr.bf16.mxu0 0
      %616 = vmatpush1.bf16.msra.mxu0 0
      %617 = vmatprep.subr.bf16.mxu0 0
      %618 = vmatpush1.bf16.msra.mxu0 0
      %619 = vmatprep.subr.bf16.mxu0 0
      %620 = vmatpush1.bf16.msra.mxu0 %v603
      %621 = vmatprep.subr.bf16.mxu0 0
      %622 = vmatpush2.bf16.msra.mxu0 0
      %623 = vmatprep.subr.bf16.mxu0 0
      %624 = vmatpush2.bf16.msra.mxu0 0
      %625 = vmatprep.subr.bf16.mxu0 0
      %626 = vmatpush2.bf16.msra.mxu0 0
      %627 = vmatprep.subr.bf16.mxu0 0
      %628 = vmatpush2.bf16.msra.mxu0 0
      %629 = vmatprep.subr.bf16.mxu0 0
      %630 = vmatpush2.bf16.msra.mxu0 0
      %631 = vmatprep.subr.bf16.mxu0 0
      %632 = vmatpush2.bf16.msra.mxu0 0
      %633 = vmatprep.subr.bf16.mxu0 0
      %634 = vmatpush2.bf16.msra.mxu0 0
      %635 = vmatprep.subr.bf16.mxu0 0
      %636 = vmatpush2.bf16.msra.mxu0 0
      %637 = vmatprep.mubr.bf16.mxu0 0
      %638 = vmatmul.mubr.bf16.gmra.mxu0 %v600
      %v639 = vpop.f32.mrf.mxu0
      %v640 = vadd.f32 0.0, %v639
      %v641 = vpop.f32.mrf.mxu0
      %v642 = vpop.f32.mrf.mxu0
      %v643 = vpop.f32.mrf.mxu0
      %644 = vdwg.mxu0
      %v647 = vunpack.c.l.b16 %v270
      %v648 = vunpack.c.l.b16 %v271
      %v649 = vpack.c.b16 %v648, %v647
      %v651 = vsel %vm493, %v540, 0
      %v654 = vsel %vm550, %v649, 0
      %656 = vmatprep.subr.bf16.mxu0 0
      %657 = vmatpush1.bf16.msra.mxu0 0
      %658 = vmatprep.subr.bf16.mxu0 0
      %659 = vmatpush1.bf16.msra.mxu0 0
      %660 = vmatprep.subr.bf16.mxu0 0
      %661 = vmatpush1.bf16.msra.mxu0 0
      %662 = vmatprep.subr.bf16.mxu0 0
      %663 = vmatpush1.bf16.msra.mxu0 0
      %664 = vmatprep.subr.bf16.mxu0 0
      %665 = vmatpush1.bf16.msra.mxu0 0
      %666 = vmatprep.subr.bf16.mxu0 0
      %667 = vmatpush1.bf16.msra.mxu0 0
      %668 = vmatprep.subr.bf16.mxu0 0
      %669 = vmatpush1.bf16.msra.mxu0 0
      %670 = vmatprep.subr.bf16.mxu0 0
      %671 = vmatpush1.bf16.msra.mxu0 %v654
      %672 = vmatprep.subr.bf16.mxu0 0
      %673 = vmatpush2.bf16.msra.mxu0 0
      %674 = vmatprep.subr.bf16.mxu0 0
      %675 = vmatpush2.bf16.msra.mxu0 0
      %676 = vmatprep.subr.bf16.mxu0 0
      %677 = vmatpush2.bf16.msra.mxu0 0
      %678 = vmatprep.subr.bf16.mxu0 0
      %679 = vmatpush2.bf16.msra.mxu0 0
      %680 = vmatprep.subr.bf16.mxu0 0
      %681 = vmatpush2.bf16.msra.mxu0 0
      %682 = vmatprep.subr.bf16.mxu0 0
      %683 = vmatpush2.bf16.msra.mxu0 0
      %684 = vmatprep.subr.bf16.mxu0 0
      %685 = vmatpush2.bf16.msra.mxu0 0
      %686 = vmatprep.subr.bf16.mxu0 0
      %687 = vmatpush2.bf16.msra.mxu0 0
      %688 = vmatprep.mubr.bf16.mxu0 0
      %689 = vmatmul.mubr.bf16.gmra.mxu0 %v651
      %v690 = vpop.f32.mrf.mxu0
      %v691 = vadd.f32 0.0, %v690
      %v692 = vpop.f32.mrf.mxu0
      %v693 = vpop.f32.mrf.mxu0
      %v694 = vpop.f32.mrf.mxu0
      %695 = vdwg.mxu0
      %v698 = vunpack.c.l.b16 %v272
      %v699 = vunpack.c.l.b16 %v273
      %v700 = vpack.c.b16 %v699, %v698
      %v702 = vsel %vm493, %v541, 0
      %v705 = vsel %vm550, %v700, 0
      %707 = vmatprep.subr.bf16.mxu0 0
      %708 = vmatpush1.bf16.msra.mxu0 0
      %709 = vmatprep.subr.bf16.mxu0 0
      %710 = vmatpush1.bf16.msra.mxu0 0
      %711 = vmatprep.subr.bf16.mxu0 0
      %712 = vmatpush1.bf16.msra.mxu0 0
      %713 = vmatprep.subr.bf16.mxu0 0
      %714 = vmatpush1.bf16.msra.mxu0 0
      %715 = vmatprep.subr.bf16.mxu0 0
      %716 = vmatpush1.bf16.msra.mxu0 0
      %717 = vmatprep.subr.bf16.mxu0 0
      %718 = vmatpush1.bf16.msra.mxu0 0
      %719 = vmatprep.subr.bf16.mxu0 0
      %720 = vmatpush1.bf16.msra.mxu0 0
      %721 = vmatprep.subr.bf16.mxu0 0
      %722 = vmatpush1.bf16.msra.mxu0 %v705
      %723 = vmatprep.subr.bf16.mxu0 0
      %724 = vmatpush2.bf16.msra.mxu0 0
      %725 = vmatprep.subr.bf16.mxu0 0
      %726 = vmatpush2.bf16.msra.mxu0 0
      %727 = vmatprep.subr.bf16.mxu0 0
      %728 = vmatpush2.bf16.msra.mxu0 0
      %729 = vmatprep.subr.bf16.mxu0 0
      %730 = vmatpush2.bf16.msra.mxu0 0
      %731 = vmatprep.subr.bf16.mxu0 0
      %732 = vmatpush2.bf16.msra.mxu0 0
      %733 = vmatprep.subr.bf16.mxu0 0
      %734 = vmatpush2.bf16.msra.mxu0 0
      %735 = vmatprep.subr.bf16.mxu0 0
      %736 = vmatpush2.bf16.msra.mxu0 0
      %737 = vmatprep.subr.bf16.mxu0 0
      %738 = vmatpush2.bf16.msra.mxu0 0
      %739 = vmatprep.mubr.bf16.mxu0 0
      %740 = vmatmul.mubr.bf16.gmra.mxu0 %v702
      %v741 = vpop.f32.mrf.mxu0
      %v742 = vadd.f32 0.0, %v741
      %v743 = vpop.f32.mrf.mxu0
      %v744 = vpop.f32.mrf.mxu0
      %v745 = vpop.f32.mrf.mxu0
      %746 = vdwg.mxu0
      %v747 = vpack.c.bf16 %v589, %v589
      %v748 = vpack.c.bf16 %v640, %v640
      %v749 = vpack.c.bf16 %v691, %v691
      %v750 = vpack.c.bf16 %v742, %v742
      %vm751 = vcmask 60416
      %752 = vst.msk [vmem:[%s251] sm:$0xf] %vm751, %v747
      %753 = vst.msk [vmem:[%s251 + $0x4] sm:$0xf] %vm751, %v748
      %754 = vst.msk [vmem:[%s251 + $0x8] sm:$0xf] %vm751, %v749
      %755 = vst.msk [vmem:[%s251 + $0xc] sm:$0xf] %vm751, %v750
      %p756 = scmp.lt.s32.totalorder %s15, 1
      %s757 = scalar_select %p756, %s15, 1
      %s758 = smul.addr %s757, 4
      %s759 = smul.addr %s758, 4
      %s760 = scalar_lea.vmem %s4, %s759
      // Predicated region
      $region37: #{transformer_forward.41} parent=35 // pred_check
        %p761 = pneg %p137
      $region38: #{transformer_forward.41} parent=35 // pred_check_branch
        %763 = sbr.rel (%p761) target = $region40
      $region39: #{transformer_forward.41} parent=35 // pred_region
        _
      $region40: #{transformer_forward.41} parent=35 // pred_fallthru
        _
    $region36: #{transformer_forward.41} parent=5 // pred_fallthru
      _
    %p764 = scmp.le.s32.totalorder 2, %s10
    // Predicated region
    $region41: #{transformer_forward.41} parent=5 // pred_check
      %p765 = pneg %p764
    $region42: #{transformer_forward.41} parent=5 // pred_check_branch
      %767 = sbr.rel (%p765) target = $region44
    $region43: #{transformer_forward.41} parent=5 // pred_region
      %s768 = ssub.s32 %s10, 2
      // Predicated region
      $region45: #{transformer_forward.41} parent=43 // pred_check
        %p769 = pneg %p143
      $region46: #{transformer_forward.41} parent=43 // pred_check_branch
        %771 = sbr.rel (%p769) target = $region48
      $region47: #{transformer_forward.41} parent=43 // pred_region
        %p772 = scmp.lt.s32.totalorder %s16, 1
        %s773 = scalar_select %p772, %s16, 1
        %s774 = smul.addr %s773, 4
        %s775 = smul.addr %s774, 4
        %s776 = scalar_lea.vmem %s4, %s775
      $region48: #{transformer_forward.41} parent=43 // pred_fallthru
        _
    $region44: #{transformer_forward.41} parent=5 // pred_fallthru
      _
  $region6: #{transformer_forward.41} parent=0 // loop_footer
    %s14 = sadd.s32 1, %s10
  $region7: #{transformer_forward.41} parent=0 // loop_footer_branch
    %9 = sbr.rel target = $region3
  $region8: #{transformer_forward.41} parent=0 // loop_exit
    _

// kernel: transformer_forward.52
$region0: #{transformer_forward.52}
  #allocation0 [shape = 'u32[]', space=smem, size = 0x4, offset = 0x4, fixed_abs, tag = 'smem constant byte address 0x4 - core index']
  #allocation1 [shape = 'u32[144,128]{1,0:T(1,128)}', space=vmem, size = 0x12000, scoped, tag = 'internal scratch']
  %s0 = inlined_call_operand.vmem [shape: f32[16,32], index: 0, kind: input, shape index: {}]
  %s1 = inlined_call_operand.vmem [shape: f32[1,32], index: 1, kind: input, shape index: {}]
  %s2 = inlined_call_operand.vmem [shape: f32[1,32], index: 2, kind: input, shape index: {}]
  %s3 = inlined_call_operand.vmem [shape: f32[16,32], index: 3, kind: output, shape index: {}]
  %s4 = sld [smem:[#allocation0]]
  $region45: #{transformer_forward.52} parent=0
    _
  %s6 = ssub.s32 1, %s4
  %s7 = scalar_select 0, %s6, %s4
  loop: start=0, step=1, limit=4
  $region2: #{transformer_forward.52} parent=0 // loop_pre_header
    _
  $region3: #{transformer_forward.52} parent=0 // loop_header
    %s9 = sphi 0, %s13
    %p10 = scmp.ge.s32.totalorder %s9, 4
    %s19 = sphi 0, %s21
    %s22 = sphi 0, %s19
    %s23 = sphi 0, %s22
    %s39 = sphi 0, %s23
    %s43 = sphi 0, %s43
    %s45 = sphi 0, %s43
    %s46 = sphi 0, %s45
    %s60 = sphi 0, %s46
    %s64 = sphi 0, %s64
    %s66 = sphi 0, %s64
    %s67 = sphi 0, %s66
    %s81 = sphi 0, %s67
    %s87 = sphi 0, %s89
    %s90 = sphi 0, %s87
    %s91 = sphi 0, %s90
    %s107 = sphi 0, %s91
  $region4: #{transformer_forward.52} parent=0 // loop_header_branch
    %12 = sbr.rel (%p10) target = $region8
  $region5: #{transformer_forward.52} parent=0 // loop_body
    %s14 = ssub.s32 %s9, 1
    %s15 = ssub.s32 %s9, 2
    %s16 = sadd.s32 %s9, 1
    %s17 = ssub.s32 %s9, %s16
    %p18 = scmp.eq.s32.totalorder %s17, 0
    %s20 = sadd.s32 %s19, 1
    %s21 = scalar_select %p18, %s19, %s20
    %p24 = pneg %p18
    %p25 = scmp.eq.s32.totalorder %s9, 1
    %p26 = por %p24, %p25
    %p27 = scmp.ne.s32.totalorder %s19, %s22
    %p28 = scmp.eq.s32.totalorder %s9, 0
    %p29 = por %p27, %p28
    %p30 = scmp.ne.s32.totalorder %s19, %s22
    %p31 = scmp.eq.s32.totalorder %s14, 1
    %p32 = por %p30, %p31
    %p33 = scmp.ne.s32.totalorder %s22, %s23
    %p34 = scmp.eq.s32.totalorder %s14, 0
    %p35 = por %p33, %p34
    %p36 = scmp.ne.s32.totalorder %s22, %s23
    %p37 = scmp.eq.s32.totalorder %s15, 1
    %p38 = por %p36, %p37
    %p40 = scmp.ne.s32.totalorder %s23, %s39
    %p41 = scmp.eq.s32.totalorder %s15, 0
    %p42 = por %p40, %p41
    %s44 = sadd.s32 %s43, 1
    %p47 = scmp.eq.s32.totalorder %s9, 1
    %p48 = scmp.ne.s32.totalorder %s43, %s45
    %p49 = scmp.eq.s32.totalorder %s9, 0
    %p50 = por %p48, %p49
    %p51 = scmp.ne.s32.totalorder %s43, %s45
    %p52 = scmp.eq.s32.totalorder %s14, 1
    %p53 = por %p51, %p52
    %p54 = scmp.ne.s32.totalorder %s45, %s46
    %p55 = scmp.eq.s32.totalorder %s14, 0
    %p56 = por %p54, %p55
    %p57 = scmp.ne.s32.totalorder %s45, %s46
    %p58 = scmp.eq.s32.totalorder %s15, 1
    %p59 = por %p57, %p58
    %p61 = scmp.ne.s32.totalorder %s46, %s60
    %p62 = scmp.eq.s32.totalorder %s15, 0
    %p63 = por %p61, %p62
    %s65 = sadd.s32 %s64, 1
    %p68 = scmp.eq.s32.totalorder %s9, 1
    %p69 = scmp.ne.s32.totalorder %s64, %s66
    %p70 = scmp.eq.s32.totalorder %s9, 0
    %p71 = por %p69, %p70
    %p72 = scmp.ne.s32.totalorder %s64, %s66
    %p73 = scmp.eq.s32.totalorder %s14, 1
    %p74 = por %p72, %p73
    %p75 = scmp.ne.s32.totalorder %s66, %s67
    %p76 = scmp.eq.s32.totalorder %s14, 0
    %p77 = por %p75, %p76
    %p78 = scmp.ne.s32.totalorder %s66, %s67
    %p79 = scmp.eq.s32.totalorder %s15, 1
    %p80 = por %p78, %p79
    %p82 = scmp.ne.s32.totalorder %s67, %s81
    %p83 = scmp.eq.s32.totalorder %s15, 0
    %p84 = por %p82, %p83
    %s85 = ssub.s32 %s9, %s16
    %p86 = scmp.eq.s32.totalorder %s85, 0
    %s88 = sadd.s32 %s87, 1
    %s89 = scalar_select %p86, %s87, %s88
    %p92 = pneg %p86
    %p93 = scmp.eq.s32.totalorder %s9, 1
    %p94 = por %p92, %p93
    %p95 = scmp.ne.s32.totalorder %s87, %s90
    %p96 = scmp.eq.s32.totalorder %s9, 0
    %p97 = por %p95, %p96
    %p98 = scmp.ne.s32.totalorder %s87, %s90
    %p99 = scmp.eq.s32.totalorder %s14, 1
    %p100 = por %p98, %p99
    %p101 = scmp.ne.s32.totalorder %s90, %s91
    %p102 = scmp.eq.s32.totalorder %s14, 0
    %p103 = por %p101, %p102
    %p104 = scmp.ne.s32.totalorder %s90, %s91
    %p105 = scmp.eq.s32.totalorder %s15, 1
    %p106 = por %p104, %p105
    %p108 = scmp.ne.s32.totalorder %s91, %s107
    %p109 = scmp.eq.s32.totalorder %s15, 0
    %p110 = por %p108, %p109
    %p111 = scmp.le.s32.totalorder 1, %s9
    %p112 = scmp.lt.s32.totalorder %s9, 3
    %p113 = pnand %p111, %p112
    %p114 = pneg %p113
    // Predicated region
    $region9: #{transformer_forward.52} parent=5 // pred_check
      _
    $region10: #{transformer_forward.52} parent=5 // pred_check_branch
      %116 = sbr.rel (%p113) target = $region12
    $region11: #{transformer_forward.52} parent=5 // pred_region
      %s117 = ssub.s32 %s9, 1
      // Predicated region
      $region13: #{transformer_forward.52} parent=11 // pred_check
        %p118 = pneg %p56
      $region14: #{transformer_forward.52} parent=11 // pred_check_branch
        %120 = sbr.rel (%p118) target = $region16
      $region15: #{transformer_forward.52} parent=11 // pred_region
        _
      $region16: #{transformer_forward.52} parent=11 // pred_fallthru
        _
      // Predicated region
      $region17: #{transformer_forward.52} parent=11 // pred_check
        %p121 = pneg %p77
      $region18: #{transformer_forward.52} parent=11 // pred_check_branch
        %123 = sbr.rel (%p121) target = $region20
      $region19: #{transformer_forward.52} parent=11 // pred_region
        _
      $region20: #{transformer_forward.52} parent=11 // pred_fallthru
        _
    $region12: #{transformer_forward.52} parent=5 // pred_fallthru
      _
    %p124 = scmp.lt.s32.totalorder %s9, 2
    // Predicated region
    $region21: #{transformer_forward.52} parent=5 // pred_check
      %p125 = pneg %p124
    $region22: #{transformer_forward.52} parent=5 // pred_check_branch
      %127 = sbr.rel (%p125) target = $region24
    $region23: #{transformer_forward.52} parent=5 // pred_region
      // Predicated region
      $region25: #{transformer_forward.52} parent=23 // pred_check
        %p128 = pneg %p29
      $region26: #{transformer_forward.52} parent=23 // pred_check_branch
        %130 = sbr.rel (%p128) target = $region28
      $region27: #{transformer_forward.52} parent=23 // pred_region
        %p131 = scmp.lt.s32.totalorder %s9, 1
        %s132 = scalar_select %p131, %s9, 1
        %s133 = smul.addr %s132, 8
        %s134 = scalar_lea.vmem %s0, %s133
      $region28: #{transformer_forward.52} parent=23 // pred_fallthru
        _
    $region24: #{transformer_forward.52} parent=5 // pred_fallthru
      _
    %p135 = scmp.le.s32.totalorder 1, %s9
    %p136 = scmp.lt.s32.totalorder %s9, 3
    %p137 = pnand %p135, %p136
    %p138 = pneg %p137
    // Predicated region
    $region29: #{transformer_forward.52} parent=5 // pred_check
      _
    $region30: #{transformer_forward.52} parent=5 // pred_check_branch
      %140 = sbr.rel (%p137) target = $region32
    $region31: #{transformer_forward.52} parent=5 // pred_region
      %s141 = ssub.s32 %s9, 1
      %p142 = scmp.lt.s32.totalorder %s14, 1
      %s143 = scalar_select %p142, %s14, 1
      %s144 = smul.addr %s143, 8
      %s145 = scalar_lea.vmem %s0, %s144
      %p146 = pneg %p35
      %p147 = pneg %p32
      %p148 = pneg %p56
      %p149 = pneg %p53
      %p150 = pneg %p77
      %p151 = pneg %p74
      %p152 = pneg %p103
      %p153 = pneg %p100
      %p154 = scmp.lt.s32.totalorder %s14, 1
      %s155 = scalar_select %p154, %s14, 1
      %s156 = smul.addr %s155, 8
      %s157 = scalar_lea.vmem %s3, %s156
      %p158 = scmp.lt.s32.totalorder %s14, 1
      %s159 = scalar_select %p158, %s14, 1
      %s160 = smul.addr %s159, 8
      %s161 = scalar_lea.vmem %s0, %s160
      %p162 = scmp.lt.s32.totalorder %s14, 1
      %s163 = scalar_select %p162, %s14, 1
      %s164 = smul.addr %s163, 8
      %s165 = scalar_lea.vmem %s3, %s164
      %v166 = vld [vmem:[%s161] sm:$0xff]
      %v167 = vld [vmem:[%s1] sm:$0x1]
      %v168 = vld [vmem:[%s2] sm:$0x1]
      %vm169 = vcmask 261120
      %v170 = vsel %vm169, %v166, 0.0
      %171 = vadd.xlane.f32.xlu0 %v170
      %v172 = vpop.xlane.xlu0 %171
      %v173 = vrcp.pop 32.0
      %v174 = vmul.f32 %v172, %v173
      %v175 = vsub.f32 %v166, %v174
      %v176 = vmul.f32 %v175, %v175
      %v177 = vsel %vm169, %v176, 0.0
      %178 = vadd.xlane.f32.xlu0 %v177
      %v179 = vpop.xlane.xlu0 %178
      %v180 = vmul.f32 %v179, %v173
      %v181 = vadd.f32 %v180, 1e-05
      %v182 = vrsqrt.pop %v181
      %v183 = vmul.f32 %v175, %v182
      %v185 = vlaneseq
      %v186 = vshrl.u32 %v185, 7
      %v187 = vsub.s32 0, %v186
      %v188 = vrot.slane %v167, %v187
      %v190 = vmul.f32 %v183, %v188
      %v192 = vlaneseq
      %v193 = vshrl.u32 %v192, 7
      %v194 = vsub.s32 0, %v193
      %v195 = vrot.slane %v168, %v194
      %v197 = vadd.f32 %v190, %v195
      %198 = vst.msk [vmem:[%s165] sm:$0xff] %vm169, %v197
      %p199 = scmp.lt.s32.totalorder %s14, 1
      %s200 = scalar_select %p199, %s14, 1
      %s201 = smul.addr %s200, 8
      %s202 = scalar_lea.vmem %s3, %s201
      // Predicated region
      $region33: #{transformer_forward.52} parent=31 // pred_check
        %p203 = pneg %p100
      $region34: #{transformer_forward.52} parent=31 // pred_check_branch
        %205 = sbr.rel (%p203) target = $region36
      $region35: #{transformer_forward.52} parent=31 // pred_region
        _
      $region36: #{transformer_forward.52} parent=31 // pred_fallthru
        _
    $region32: #{transformer_forward.52} parent=5 // pred_fallthru
      _
    %p206 = scmp.le.s32.totalorder 2, %s9
    // Predicated region
    $region37: #{transformer_forward.52} parent=5 // pred_check
      %p207 = pneg %p206
    $region38: #{transformer_forward.52} parent=5 // pred_check_branch
      %209 = sbr.rel (%p207) target = $region40
    $region39: #{transformer_forward.52} parent=5 // pred_region
      %s210 = ssub.s32 %s9, 2
      // Predicated region
      $region41: #{transformer_forward.52} parent=39 // pred_check
        %p211 = pneg %p106
      $region42: #{transformer_forward.52} parent=39 // pred_check_branch
        %213 = sbr.rel (%p211) target = $region44
      $region43: #{transformer_forward.52} parent=39 // pred_region
        %p214 = scmp.lt.s32.totalorder %s15, 1
        %s215 = scalar_select %p214, %s15, 1
        %s216 = smul.addr %s215, 8
        %s217 = scalar_lea.vmem %s3, %s216
      $region44: #{transformer_forward.52} parent=39 // pred_fallthru
        _
    $region40: #{transformer_forward.52} parent=5 // pred_fallthru
      _
  $region6: #{transformer_forward.52} parent=0 // loop_footer
    %s13 = sadd.s32 1, %s9
  $region7: #{transformer_forward.52} parent=0 // loop_footer_branch
    %8 = sbr.rel target = $region3
  $region8: #{transformer_forward.52} parent=0 // loop_exit
    _

// kernel: transformer_forward.43
$region0: #{transformer_forward.43}
  #allocation0 [shape = 'u32[]', space=smem, size = 0x4, offset = 0x4, fixed_abs, tag = 'smem constant byte address 0x4 - core index']
  #allocation1 [shape = 'u32[144,128]{1,0:T(1,128)}', space=vmem, size = 0x12000, scoped, tag = 'internal scratch']
  %s0 = inlined_call_operand.vmem [shape: f32[16,32], index: 0, kind: input, shape index: {}]
  %s1 = inlined_call_operand.vmem [shape: bf16[32,64], index: 1, kind: input, shape index: {}]
  %s2 = inlined_call_operand.vmem [shape: f32[1,64], index: 2, kind: input, shape index: {}]
  %s3 = inlined_call_operand.vmem [shape: bf16[64,32], index: 3, kind: input, shape index: {}]
  %s4 = inlined_call_operand.vmem [shape: f32[1,32], index: 4, kind: input, shape index: {}]
  %s5 = inlined_call_operand.vmem [shape: f32[1,32], index: 5, kind: input, shape index: {}]
  %s6 = inlined_call_operand.vmem [shape: f32[1,32], index: 6, kind: input, shape index: {}]
  %s7 = inlined_call_operand.vmem [shape: f32[16,32], index: 7, kind: output, shape index: {}]
  %s8 = sld [smem:[#allocation0]]
  $region61: #{transformer_forward.43} parent=0
    _
  %s10 = ssub.s32 1, %s8
  %s11 = scalar_select 0, %s10, %s8
  loop: start=0, step=1, limit=4
  $region2: #{transformer_forward.43} parent=0 // loop_pre_header
    _
  $region3: #{transformer_forward.43} parent=0 // loop_header
    %s13 = sphi 0, %s17
    %p14 = scmp.ge.s32.totalorder %s13, 4
    %s23 = sphi 0, %s25
    %s26 = sphi 0, %s23
    %s27 = sphi 0, %s26
    %s43 = sphi 0, %s27
    %s47 = sphi 0, %s47
    %s49 = sphi 0, %s47
    %s50 = sphi 0, %s49
    %s64 = sphi 0, %s50
    %s68 = sphi 0, %s68
    %s70 = sphi 0, %s68
    %s71 = sphi 0, %s70
    %s85 = sphi 0, %s71
    %s89 = sphi 0, %s89
    %s91 = sphi 0, %s89
    %s92 = sphi 0, %s91
    %s106 = sphi 0, %s92
    %s110 = sphi 0, %s110
    %s112 = sphi 0, %s110
    %s113 = sphi 0, %s112
    %s127 = sphi 0, %s113
    %s131 = sphi 0, %s131
    %s133 = sphi 0, %s131
    %s134 = sphi 0, %s133
    %s148 = sphi 0, %s134
    %s152 = sphi 0, %s152
    %s154 = sphi 0, %s152
    %s155 = sphi 0, %s154
    %s169 = sphi 0, %s155
    %s175 = sphi 0, %s177
    %s178 = sphi 0, %s175
    %s179 = sphi 0, %s178
    %s195 = sphi 0, %s179
  $region4: #{transformer_forward.43} parent=0 // loop_header_branch
    %16 = sbr.rel (%p14) target = $region8
  $region5: #{transformer_forward.43} parent=0 // loop_body
    %s18 = ssub.s32 %s13, 1
    %s19 = ssub.s32 %s13, 2
    %s20 = sadd.s32 %s13, 1
    %s21 = ssub.s32 %s13, %s20
    %p22 = scmp.eq.s32.totalorder %s21, 0
    %s24 = sadd.s32 %s23, 1
    %s25 = scalar_select %p22, %s23, %s24
    %p28 = pneg %p22
    %p29 = scmp.eq.s32.totalorder %s13, 1
    %p30 = por %p28, %p29
    %p31 = scmp.ne.s32.totalorder %s23, %s26
    %p32 = scmp.eq.s32.totalorder %s13, 0
    %p33 = por %p31, %p32
    %p34 = scmp.ne.s32.totalorder %s23, %s26
    %p35 = scmp.eq.s32.totalorder %s18, 1
    %p36 = por %p34, %p35
    %p37 = scmp.ne.s32.totalorder %s26, %s27
    %p38 = scmp.eq.s32.totalorder %s18, 0
    %p39 = por %p37, %p38
    %p40 = scmp.ne.s32.totalorder %s26, %s27
    %p41 = scmp.eq.s32.totalorder %s19, 1
    %p42 = por %p40, %p41
    %p44 = scmp.ne.s32.totalorder %s27, %s43
    %p45 = scmp.eq.s32.totalorder %s19, 0
    %p46 = por %p44, %p45
    %s48 = sadd.s32 %s47, 1
    %p51 = scmp.eq.s32.totalorder %s13, 1
    %p52 = scmp.ne.s32.totalorder %s47, %s49
    %p53 = scmp.eq.s32.totalorder %s13, 0
    %p54 = por %p52, %p53
    %p55 = scmp.ne.s32.totalorder %s47, %s49
    %p56 = scmp.eq.s32.totalorder %s18, 1
    %p57 = por %p55, %p56
    %p58 = scmp.ne.s32.totalorder %s49, %s50
    %p59 = scmp.eq.s32.totalorder %s18, 0
    %p60 = por %p58, %p59
    %p61 = scmp.ne.s32.totalorder %s49, %s50
    %p62 = scmp.eq.s32.totalorder %s19, 1
    %p63 = por %p61, %p62
    %p65 = scmp.ne.s32.totalorder %s50, %s64
    %p66 = scmp.eq.s32.totalorder %s19, 0
    %p67 = por %p65, %p66
    %s69 = sadd.s32 %s68, 1
    %p72 = scmp.eq.s32.totalorder %s13, 1
    %p73 = scmp.ne.s32.totalorder %s68, %s70
    %p74 = scmp.eq.s32.totalorder %s13, 0
    %p75 = por %p73, %p74
    %p76 = scmp.ne.s32.totalorder %s68, %s70
    %p77 = scmp.eq.s32.totalorder %s18, 1
    %p78 = por %p76, %p77
    %p79 = scmp.ne.s32.totalorder %s70, %s71
    %p80 = scmp.eq.s32.totalorder %s18, 0
    %p81 = por %p79, %p80
    %p82 = scmp.ne.s32.totalorder %s70, %s71
    %p83 = scmp.eq.s32.totalorder %s19, 1
    %p84 = por %p82, %p83
    %p86 = scmp.ne.s32.totalorder %s71, %s85
    %p87 = scmp.eq.s32.totalorder %s19, 0
    %p88 = por %p86, %p87
    %s90 = sadd.s32 %s89, 1
    %p93 = scmp.eq.s32.totalorder %s13, 1
    %p94 = scmp.ne.s32.totalorder %s89, %s91
    %p95 = scmp.eq.s32.totalorder %s13, 0
    %p96 = por %p94, %p95
    %p97 = scmp.ne.s32.totalorder %s89, %s91
    %p98 = scmp.eq.s32.totalorder %s18, 1
    %p99 = por %p97, %p98
    %p100 = scmp.ne.s32.totalorder %s91, %s92
    %p101 = scmp.eq.s32.totalorder %s18, 0
    %p102 = por %p100, %p101
    %p103 = scmp.ne.s32.totalorder %s91, %s92
    %p104 = scmp.eq.s32.totalorder %s19, 1
    %p105 = por %p103, %p104
    %p107 = scmp.ne.s32.totalorder %s92, %s106
    %p108 = scmp.eq.s32.totalorder %s19, 0
    %p109 = por %p107, %p108
    %s111 = sadd.s32 %s110, 1
    %p114 = scmp.eq.s32.totalorder %s13, 1
    %p115 = scmp.ne.s32.totalorder %s110, %s112
    %p116 = scmp.eq.s32.totalorder %s13, 0
    %p117 = por %p115, %p116
    %p118 = scmp.ne.s32.totalorder %s110, %s112
    %p119 = scmp.eq.s32.totalorder %s18, 1
    %p120 = por %p118, %p119
    %p121 = scmp.ne.s32.totalorder %s112, %s113
    %p122 = scmp.eq.s32.totalorder %s18, 0
    %p123 = por %p121, %p122
    %p124 = scmp.ne.s32.totalorder %s112, %s113
    %p125 = scmp.eq.s32.totalorder %s19, 1
    %p126 = por %p124, %p125
    %p128 = scmp.ne.s32.totalorder %s113, %s127
    %p129 = scmp.eq.s32.totalorder %s19, 0
    %p130 = por %p128, %p129
    %s132 = sadd.s32 %s131, 1
    %p135 = scmp.eq.s32.totalorder %s13, 1
    %p136 = scmp.ne.s32.totalorder %s131, %s133
    %p137 = scmp.eq.s32.totalorder %s13, 0
    %p138 = por %p136, %p137
    %p139 = scmp.ne.s32.totalorder %s131, %s133
    %p140 = scmp.eq.s32.totalorder %s18, 1
    %p141 = por %p139, %p140
    %p142 = scmp.ne.s32.totalorder %s133, %s134
    %p143 = scmp.eq.s32.totalorder %s18, 0
    %p144 = por %p142, %p143
    %p145 = scmp.ne.s32.totalorder %s133, %s134
    %p146 = scmp.eq.s32.totalorder %s19, 1
    %p147 = por %p145, %p146
    %p149 = scmp.ne.s32.totalorder %s134, %s148
    %p150 = scmp.eq.s32.totalorder %s19, 0
    %p151 = por %p149, %p150
    %s153 = sadd.s32 %s152, 1
    %p156 = scmp.eq.s32.totalorder %s13, 1
    %p157 = scmp.ne.s32.totalorder %s152, %s154
    %p158 = scmp.eq.s32.totalorder %s13, 0
    %p159 = por %p157, %p158
    %p160 = scmp.ne.s32.totalorder %s152, %s154
    %p161 = scmp.eq.s32.totalorder %s18, 1
    %p162 = por %p160, %p161
    %p163 = scmp.ne.s32.totalorder %s154, %s155
    %p164 = scmp.eq.s32.totalorder %s18, 0
    %p165 = por %p163, %p164
    %p166 = scmp.ne.s32.totalorder %s154, %s155
    %p167 = scmp.eq.s32.totalorder %s19, 1
    %p168 = por %p166, %p167
    %p170 = scmp.ne.s32.totalorder %s155, %s169
    %p171 = scmp.eq.s32.totalorder %s19, 0
    %p172 = por %p170, %p171
    %s173 = ssub.s32 %s13, %s20
    %p174 = scmp.eq.s32.totalorder %s173, 0
    %s176 = sadd.s32 %s175, 1
    %s177 = scalar_select %p174, %s175, %s176
    %p180 = pneg %p174
    %p181 = scmp.eq.s32.totalorder %s13, 1
    %p182 = por %p180, %p181
    %p183 = scmp.ne.s32.totalorder %s175, %s178
    %p184 = scmp.eq.s32.totalorder %s13, 0
    %p185 = por %p183, %p184
    %p186 = scmp.ne.s32.totalorder %s175, %s178
    %p187 = scmp.eq.s32.totalorder %s18, 1
    %p188 = por %p186, %p187
    %p189 = scmp.ne.s32.totalorder %s178, %s179
    %p190 = scmp.eq.s32.totalorder %s18, 0
    %p191 = por %p189, %p190
    %p192 = scmp.ne.s32.totalorder %s178, %s179
    %p193 = scmp.eq.s32.totalorder %s19, 1
    %p194 = por %p192, %p193
    %p196 = scmp.ne.s32.totalorder %s179, %s195
    %p197 = scmp.eq.s32.totalorder %s19, 0
    %p198 = por %p196, %p197
    %p199 = scmp.le.s32.totalorder 1, %s13
    %p200 = scmp.lt.s32.totalorder %s13, 3
    %p201 = pnand %p199, %p200
    %p202 = pneg %p201
    // Predicated region
    $region9: #{transformer_forward.43} parent=5 // pred_check
      _
    $region10: #{transformer_forward.43} parent=5 // pred_check_branch
      %204 = sbr.rel (%p201) target = $region12
    $region11: #{transformer_forward.43} parent=5 // pred_region
      %s205 = ssub.s32 %s13, 1
      // Predicated region
      $region13: #{transformer_forward.43} parent=11 // pred_check
        %p206 = pneg %p60
      $region14: #{transformer_forward.43} parent=11 // pred_check_branch
        %208 = sbr.rel (%p206) target = $region16
      $region15: #{transformer_forward.43} parent=11 // pred_region
        _
      $region16: #{transformer_forward.43} parent=11 // pred_fallthru
        _
      // Predicated region
      $region17: #{transformer_forward.43} parent=11 // pred_check
        %p209 = pneg %p81
      $region18: #{transformer_forward.43} parent=11 // pred_check_branch
        %211 = sbr.rel (%p209) target = $region20
      $region19: #{transformer_forward.43} parent=11 // pred_region
        _
      $region20: #{transformer_forward.43} parent=11 // pred_fallthru
        _
      // Predicated region
      $region21: #{transformer_forward.43} parent=11 // pred_check
        %p212 = pneg %p102
      $region22: #{transformer_forward.43} parent=11 // pred_check_branch
        %214 = sbr.rel (%p212) target = $region24
      $region23: #{transformer_forward.43} parent=11 // pred_region
        _
      $region24: #{transformer_forward.43} parent=11 // pred_fallthru
        _
      // Predicated region
      $region25: #{transformer_forward.43} parent=11 // pred_check
        %p215 = pneg %p123
      $region26: #{transformer_forward.43} parent=11 // pred_check_branch
        %217 = sbr.rel (%p215) target = $region28
      $region27: #{transformer_forward.43} parent=11 // pred_region
        _
      $region28: #{transformer_forward.43} parent=11 // pred_fallthru
        _
      // Predicated region
      $region29: #{transformer_forward.43} parent=11 // pred_check
        %p218 = pneg %p144
      $region30: #{transformer_forward.43} parent=11 // pred_check_branch
        %220 = sbr.rel (%p218) target = $region32
      $region31: #{transformer_forward.43} parent=11 // pred_region
        _
      $region32: #{transformer_forward.43} parent=11 // pred_fallthru
        _
      // Predicated region
      $region33: #{transformer_forward.43} parent=11 // pred_check
        %p221 = pneg %p165
      $region34: #{transformer_forward.43} parent=11 // pred_check_branch
        %223 = sbr.rel (%p221) target = $region36
      $region35: #{transformer_forward.43} parent=11 // pred_region
        _
      $region36: #{transformer_forward.43} parent=11 // pred_fallthru
        _
    $region12: #{transformer_forward.43} parent=5 // pred_fallthru
      _
    %p224 = scmp.lt.s32.totalorder %s13, 2
    // Predicated region
    $region37: #{transformer_forward.43} parent=5 // pred_check
      %p225 = pneg %p224
    $region38: #{transformer_forward.43} parent=5 // pred_check_branch
      %227 = sbr.rel (%p225) target = $region40
    $region39: #{transformer_forward.43} parent=5 // pred_region
      // Predicated region
      $region41: #{transformer_forward.43} parent=39 // pred_check
        %p228 = pneg %p33
      $region42: #{transformer_forward.43} parent=39 // pred_check_branch
        %230 = sbr.rel (%p228) target = $region44
      $region43: #{transformer_forward.43} parent=39 // pred_region
        %p231 = scmp.lt.s32.totalorder %s13, 1
        %s232 = scalar_select %p231, %s13, 1
        %s233 = smul.addr %s232, 8
        %s234 = scalar_lea.vmem %s0, %s233
      $region44: #{transformer_forward.43} parent=39 // pred_fallthru
        _
    $region40: #{transformer_forward.43} parent=5 // pred_fallthru
      _
    %p235 = scmp.le.s32.totalorder 1, %s13
    %p236 = scmp.lt.s32.totalorder %s13, 3
    %p237 = pnand %p235, %p236
    %p238 = pneg %p237
    // Predicated region
    $region45: #{transformer_forward.43} parent=5 // pred_check
      _
    $region46: #{transformer_forward.43} parent=5 // pred_check_branch
      %240 = sbr.rel (%p237) target = $region48
    $region47: #{transformer_forward.43} parent=5 // pred_region
      %s241 = ssub.s32 %s13, 1
      %p242 = scmp.lt.s32.totalorder %s18, 1
      %s243 = scalar_select %p242, %s18, 1
      %s244 = smul.addr %s243, 8
      %s245 = scalar_lea.vmem %s0, %s244
      %p246 = pneg %p39
      %p247 = pneg %p36
      %p248 = pneg %p60
      %p249 = pneg %p57
      %p250 = pneg %p81
      %p251 = pneg %p78
      %p252 = pneg %p102
      %p253 = pneg %p99
      %p254 = pneg %p123
      %p255 = pneg %p120
      %p256 = pneg %p144
      %p257 = pneg %p141
      %p258 = pneg %p165
      %p259 = pneg %p162
      %p260 = pneg %p191
      %p261 = pneg %p188
      %p262 = scmp.lt.s32.totalorder %s18, 1
      %s263 = scalar_select %p262, %s18, 1
      %s264 = smul.addr %s263, 8
      %s265 = scalar_lea.vmem %s7, %s264
      %p266 = scmp.lt.s32.totalorder %s18, 1
      %s267 = scalar_select %p266, %s18, 1
      %s268 = smul.addr %s267, 8
      %s269 = scalar_lea.vmem %s0, %s268
      %p270 = scmp.lt.s32.totalorder %s18, 1
      %s271 = scalar_select %p270, %s18, 1
      %s272 = smul.addr %s271, 8
      %s273 = scalar_lea.vmem %s7, %s272
      %v275 = vld [vmem:[%s269] sm:$0xff]
      %v276 = vpack.c.bf16 %v275, %v275
      %v277 = vld [vmem:[%s1] sm:$0xf]
      %v278 = vld [vmem:[%s1 + $0x4] sm:$0xf]
      %v279 = vld [vmem:[%s1 + $0x8] sm:$0xf]
      %v280 = vld [vmem:[%s1 + $0xc] sm:$0xf]
      %v281 = vld [vmem:[%s2] sm:$0x1]
      %v283 = vlaneseq
      %v284 = vshrl.u32 %v283, 7
      %v285 = vsub.s32 0, %v284
      %v286 = vrot.slane %v281, %v285
      %v292 = vunpack.c.l.b16 %v277
      %v293 = vunpack.c.l.b16 %v278
      %v294 = vunpack.c.l.b16 %v279
      %v295 = vunpack.c.l.b16 %v280
      %v296 = vpack.c.b16 %v293, %v292
      %v297 = vpack.c.b16 %v295, %v294
      %vm300 = vcmask 261120
      %v302 = vsel %vm300, %v276, 0
      %304 = vmatprep.subr.bf16.mxu0 0
      %305 = vmatpush1.bf16.msra.mxu0 0
      %306 = vmatprep.subr.bf16.mxu0 0
      %307 = vmatpush1.bf16.msra.mxu0 0
      %308 = vmatprep.subr.bf16.mxu0 0
      %309 = vmatpush1.bf16.msra.mxu0 0
      %310 = vmatprep.subr.bf16.mxu0 0
      %311 = vmatpush1.bf16.msra.mxu0 0
      %312 = vmatprep.subr.bf16.mxu0 0
      %313 = vmatpush1.bf16.msra.mxu0 0
      %314 = vmatprep.subr.bf16.mxu0 0
      %315 = vmatpush1.bf16.msra.mxu0 0
      %316 = vmatprep.subr.bf16.mxu0 0
      %317 = vmatpush1.bf16.msra.mxu0 %v297
      %318 = vmatprep.subr.bf16.mxu0 0
      %319 = vmatpush1.bf16.msra.mxu0 %v296
      %320 = vmatprep.subr.bf16.mxu0 0
      %321 = vmatpush2.bf16.msra.mxu0 0
      %322 = vmatprep.subr.bf16.mxu0 0
      %323 = vmatpush2.bf16.msra.mxu0 0
      %324 = vmatprep.subr.bf16.mxu0 0
      %325 = vmatpush2.bf16.msra.mxu0 0
      %326 = vmatprep.subr.bf16.mxu0 0
      %327 = vmatpush2.bf16.msra.mxu0 0
      %328 = vmatprep.subr.bf16.mxu0 0
      %329 = vmatpush2.bf16.msra.mxu0 0
      %330 = vmatprep.subr.bf16.mxu0 0
      %331 = vmatpush2.bf16.msra.mxu0 0
      %332 = vmatprep.subr.bf16.mxu0 0
      %333 = vmatpush2.bf16.msra.mxu0 0
      %334 = vmatprep.subr.bf16.mxu0 0
      %335 = vmatpush2.bf16.msra.mxu0 0
      %336 = vmatprep.mubr.bf16.mxu0 0
      %337 = vmatmul.mubr.bf16.gmra.mxu0 %v302
      %v338 = vpop.f32.mrf.mxu0
      %v339 = vadd.f32 %v286, %v338
      %v340 = vpop.f32.mrf.mxu0
      %v341 = vpop.f32.mrf.mxu0
      %v342 = vpop.f32.mrf.mxu0
      %343 = vdwg.mxu0
      %v344 = vmax.f32 %v339, 0.0
      %v345 = vpack.c.bf16 %v344, %v344
      %v346 = vld [vmem:[%s3] sm:$0xf]
      %v347 = vld [vmem:[%s3 + $0x4] sm:$0xf]
      %v348 = vld [vmem:[%s3 + $0x8] sm:$0xf]
      %v349 = vld [vmem:[%s3 + $0xc] sm:$0xf]
      %v350 = vld [vmem:[%s3 + $0x10] sm:$0xf]
      %v351 = vld [vmem:[%s3 + $0x14] sm:$0xf]
      %v352 = vld [vmem:[%s3 + $0x18] sm:$0xf]
      %v353 = vld [vmem:[%s3 + $0x1c] sm:$0xf]
      %v354 = vld [vmem:[%s4] sm:$0x1]
      %v356 = vlaneseq
      %v357 = vshrl.u32 %v356, 7
      %v358 = vsub.s32 0, %v357
      %v359 = vrot.slane %v354, %v358
      %v369 = vunpack.c.l.b16 %v346
      %v370 = vunpack.c.l.b16 %v347
      %v371 = vunpack.c.l.b16 %v348
      %v372 = vunpack.c.l.b16 %v349
      %v373 = vunpack.c.l.b16 %v350
      %v374 = vunpack.c.l.b16 %v351
      %v375 = vunpack.c.l.b16 %v352
      %v376 = vunpack.c.l.b16 %v353
      %v377 = vpack.c.b16 %v370, %v369
      %v378 = vpack.c.b16 %v372, %v371
      %v379 = vpack.c.b16 %v374, %v373
      %v380 = vpack.c.b16 %v376, %v375
      %vm385 = vcmask 523264
      %v387 = vsel %vm385, %v345, 0
      %389 = vmatprep.subr.bf16.mxu0 0
      %390 = vmatpush1.bf16.msra.mxu0 0
      %391 = vmatprep.subr.bf16.mxu0 0
      %392 = vmatpush1.bf16.msra.mxu0 0
      %393 = vmatprep.subr.bf16.mxu0 0
      %394 = vmatpush1.bf16.msra.mxu0 0
      %395 = vmatprep.subr.bf16.mxu0 0
      %396 = vmatpush1.bf16.msra.mxu0 0
      %397 = vmatprep.subr.bf16.mxu0 0
      %398 = vmatpush1.bf16.msra.mxu0 %v380
      %399 = vmatprep.subr.bf16.mxu0 0
      %400 = vmatpush1.bf16.msra.mxu0 %v379
      %401 = vmatprep.subr.bf16.mxu0 0
      %402 = vmatpush1.bf16.msra.mxu0 %v378
      %403 = vmatprep.subr.bf16.mxu0 0
      %404 = vmatpush1.bf16.msra.mxu0 %v377
      %405 = vmatprep.subr.bf16.mxu0 0
      %406 = vmatpush2.bf16.msra.mxu0 0
      %407 = vmatprep.subr.bf16.mxu0 0
      %408 = vmatpush2.bf16.msra.mxu0 0
      %409 = vmatprep.subr.bf16.mxu0 0
      %410 = vmatpush2.bf16.msra.mxu0 0
      %411 = vmatprep.subr.bf16.mxu0 0
      %412 = vmatpush2.bf16.msra.mxu0 0
      %413 = vmatprep.subr.bf16.mxu0 0
      %414 = vmatpush2.bf16.msra.mxu0 0
      %415 = vmatprep.subr.bf16.mxu0 0
      %416 = vmatpush2.bf16.msra.mxu0 0
      %417 = vmatprep.subr.bf16.mxu0 0
      %418 = vmatpush2.bf16.msra.mxu0 0
      %419 = vmatprep.subr.bf16.mxu0 0
      %420 = vmatpush2.bf16.msra.mxu0 0
      %421 = vmatprep.mubr.bf16.mxu0 0
      %422 = vmatmul.mubr.bf16.gmra.mxu0 %v387
      %v423 = vpop.f32.mrf.mxu0
      %v424 = vadd.f32 %v359, %v423
      %v425 = vpop.f32.mrf.mxu0
      %v426 = vpop.f32.mrf.mxu0
      %v427 = vpop.f32.mrf.mxu0
      %428 = vdwg.mxu0
      %v429 = vadd.f32 %v424, %v275
      %v430 = vld [vmem:[%s5] sm:$0x1]
      %v431 = vld [vmem:[%s6] sm:$0x1]
      %v432 = vsel %vm300, %v429, 0.0
      %433 = vadd.xlane.f32.xlu0 %v432
      %v434 = vpop.xlane.xlu0 %433
      %v435 = vrcp.pop 32.0
      %v436 = vmul.f32 %v434, %v435
      %v437 = vsub.f32 %v429, %v436
      %v438 = vmul.f32 %v437, %v437
      %v439 = vsel %vm300, %v438, 0.0
      %440 = vadd.xlane.f32.xlu0 %v439
      %v441 = vpop.xlane.xlu0 %440
      %v442 = vmul.f32 %v441, %v435
      %v443 = vadd.f32 %v442, 1e-05
      %v444 = vrsqrt.pop %v443
      %v445 = vmul.f32 %v437, %v444
      %v447 = vlaneseq
      %v448 = vshrl.u32 %v447, 7
      %v449 = vsub.s32 0, %v448
      %v450 = vrot.slane %v430, %v449
      %v452 = vmul.f32 %v445, %v450
      %v454 = vlaneseq
      %v455 = vshrl.u32 %v454, 7
      %v456 = vsub.s32 0, %v455
      %v457 = vrot.slane %v431, %v456
      %v459 = vadd.f32 %v452, %v457
      %460 = vst.msk [vmem:[%s273] sm:$0xff] %vm300, %v459
      %p461 = scmp.lt.s32.totalorder %s18, 1
      %s462 = scalar_select %p461, %s18, 1
      %s463 = smul.addr %s462, 8
      %s464 = scalar_lea.vmem %s7, %s463
      // Predicated region
      $region49: #{transformer_forward.43} parent=47 // pred_check
        %p465 = pneg %p188
      $region50: #{transformer_forward.43} parent=47 // pred_check_branch
        %467 = sbr.rel (%p465) target = $region52
      $region51: #{transformer_forward.43} parent=47 // pred_region
        _
      $region52: #{transformer_forward.43} parent=47 // pred_fallthru
        _
    $region48: #{transformer_forward.43} parent=5 // pred_fallthru
      _
    %p468 = scmp.le.s32.totalorder 2, %s13
    // Predicated region
    $region53: #{transformer_forward.43} parent=5 // pred_check
      %p469 = pneg %p468
    $region54: #{transformer_forward.43} parent=5 // pred_check_branch
      %471 = sbr.rel (%p469) target = $region56
    $region55: #{transformer_forward.43} parent=5 // pred_region
      %s472 = ssub.s32 %s13, 2
      // Predicated region
      $region57: #{transformer_forward.43} parent=55 // pred_check
        %p473 = pneg %p194
      $region58: #{transformer_forward.43} parent=55 // pred_check_branch
        %475 = sbr.rel (%p473) target = $region60
      $region59: #{transformer_forward.43} parent=55 // pred_region
        %p476 = scmp.lt.s32.totalorder %s19, 1
        %s477 = scalar_select %p476, %s19, 1
        %s478 = smul.addr %s477, 8
        %s479 = scalar_lea.vmem %s7, %s478
      $region60: #{transformer_forward.43} parent=55 // pred_fallthru
        _
    $region56: #{transformer_forward.43} parent=5 // pred_fallthru
      _
  $region6: #{transformer_forward.43} parent=0 // loop_footer
    %s17 = sadd.s32 1, %s13
  $region7: #{transformer_forward.43} parent=0 // loop_footer_branch
    %12 = sbr.rel target = $region3
  $region8: #{transformer_forward.43} parent=0 // loop_exit
    _

// kernel: transformer_forward.53
$region0: #{transformer_forward.53}
  #allocation0 [shape = 'u32[]', space=smem, size = 0x4, offset = 0x4, fixed_abs, tag = 'smem constant byte address 0x4 - core index']
  #allocation1 [shape = 'u32[144,128]{1,0:T(1,128)}', space=vmem, size = 0x12000, scoped, tag = 'internal scratch']
  %s0 = inlined_call_operand.vmem [shape: bf16[16,32], index: 0, kind: input, shape index: {}]
  %s1 = inlined_call_operand.vmem [shape: bf16[32,128], index: 1, kind: input, shape index: {}]
  %s2 = inlined_call_operand.vmem [shape: f32[1,128], index: 2, kind: input, shape index: {}]
  %s3 = inlined_call_operand.hbm [shape: f32[16,128], index: 3, kind: output, shape index: {}]
  %s4 = sld [smem:[#allocation0]]
  $region45: #{transformer_forward.53} parent=0
    _
  %s6 = ssub.s32 1, %s4
  %s7 = scalar_select 0, %s6, %s4
  $region1: #{transformer_forward.53} parent=0
    #allocation2 [shape = 'u8[8192]{0}', space=vmem, size = 0x2000, scoped, tag = 'output window, operand 0']
    #allocation3 [shape = 's32[2]{0}', space=sflag, size = 0x8, scoped, tag = 'scoped memory for transformer_forward.53']
    %8 = vsyncpa [#allocation3], 0
    %s9 = scalar_lea.sflag [#allocation3], 1
    %10 = vsyncpa %s9, 0
    loop: start=0, step=1, limit=4
    $region2: #{transformer_forward.53} parent=1 // loop_pre_header
      _
    $region3: #{transformer_forward.53} parent=1 // loop_header
      %s12 = sphi 0, %s16
      %p13 = scmp.ge.s32.totalorder %s12, 4
      %s19 = sphi 0, %s31
      %s20 = sphi 0, %s27
      %s21 = sphi 0, %s19
      %s22 = sphi 0, %s20
      %s23 = sphi 0, %s21
      %s24 = sphi 0, %s22
      %s34 = sphi 0, %s36
      %s37 = sphi 0, %s34
      %s38 = sphi 0, %s37
      %s54 = sphi 0, %s38
      %s60 = sphi 0, %s62
      %s63 = sphi 0, %s60
      %s64 = sphi 0, %s63
      %s80 = sphi 0, %s64
      %s86 = sphi 0, %s88
      %s89 = sphi 0, %s86
      %s90 = sphi 0, %s89
      %s106 = sphi 0, %s90
      %s114 = sphi 0, %s116
      %s117 = sphi 0, %s114
      %s118 = sphi 0, %s117
      %s134 = sphi 0, %s118
    $region4: #{transformer_forward.53} parent=1 // loop_header_branch
      %15 = sbr.rel (%p13) target = $region8
    $region5: #{transformer_forward.53} parent=1 // loop_body
      %s17 = ssub.s32 %s12, 1
      %s18 = ssub.s32 %s12, 2
      %s25 = sadd.s32 1, %s20
      %p26 = scmp.ge.s32.totalorder %s25, 1
      %s27 = scalar_select %p26, 0, %s25
      %s28 = sadd.s32 1, %s19
      %s29 = scalar_select %p26, %s28, %s19
      %p30 = scmp.ge.s32.totalorder %s29, 2
      %s31 = scalar_select %p30, 0, %s29
      %s32 = ssub.s32 %s19, %s31
      %p33 = scmp.eq.s32.totalorder %s32, 0
      %s35 = sadd.s32 %s34, 1
      %s36 = scalar_select %p33, %s34, %s35
      %p39 = pneg %p33
      %p40 = scmp.eq.s32.totalorder %s12, 1
      %p41 = por %p39, %p40
      %p42 = scmp.ne.s32.totalorder %s34, %s37
      %p43 = scmp.eq.s32.totalorder %s12, 0
      %p44 = por %p42, %p43
      %p45 = scmp.ne.s32.totalorder %s34, %s37
      %p46 = scmp.eq.s32.totalorder %s17, 1
      %p47 = por %p45, %p46
      %p48 = scmp.ne.s32.totalorder %s37, %s38
      %p49 = scmp.eq.s32.totalorder %s17, 0
      %p50 = por %p48, %p49
      %p51 = scmp.ne.s32.totalorder %s37, %s38
      %p52 = scmp.eq.s32.totalorder %s18, 1
      %p53 = por %p51, %p52
      %p55 = scmp.ne.s32.totalorder %s38, %s54
      %p56 = scmp.eq.s32.totalorder %s18, 0
      %p57 = por %p55, %p56
      %s58 = ssub.s32 %s20, %s27
      %p59 = scmp.eq.s32.totalorder %s58, 0
      %s61 = sadd.s32 %s60, 1
      %s62 = scalar_select %p59, %s60, %s61
      %p65 = pneg %p59
      %p66 = scmp.eq.s32.totalorder %s12, 1
      %p67 = por %p65, %p66
      %p68 = scmp.ne.s32.totalorder %s60, %s63
      %p69 = scmp.eq.s32.totalorder %s12, 0
      %p70 = por %p68, %p69
      %p71 = scmp.ne.s32.totalorder %s60, %s63
      %p72 = scmp.eq.s32.totalorder %s17, 1
      %p73 = por %p71, %p72
      %p74 = scmp.ne.s32.totalorder %s63, %s64
      %p75 = scmp.eq.s32.totalorder %s17, 0
      %p76 = por %p74, %p75
      %p77 = scmp.ne.s32.totalorder %s63, %s64
      %p78 = scmp.eq.s32.totalorder %s18, 1
      %p79 = por %p77, %p78
      %p81 = scmp.ne.s32.totalorder %s64, %s80
      %p82 = scmp.eq.s32.totalorder %s18, 0
      %p83 = por %p81, %p82
      %s84 = ssub.s32 %s20, %s27
      %p85 = scmp.eq.s32.totalorder %s84, 0
      %s87 = sadd.s32 %s86, 1
      %s88 = scalar_select %p85, %s86, %s87
      %p91 = pneg %p85
      %p92 = scmp.eq.s32.totalorder %s12, 1
      %p93 = por %p91, %p92
      %p94 = scmp.ne.s32.totalorder %s86, %s89
      %p95 = scmp.eq.s32.totalorder %s12, 0
      %p96 = por %p94, %p95
      %p97 = scmp.ne.s32.totalorder %s86, %s89
      %p98 = scmp.eq.s32.totalorder %s17, 1
      %p99 = por %p97, %p98
      %p100 = scmp.ne.s32.totalorder %s89, %s90
      %p101 = scmp.eq.s32.totalorder %s17, 0
      %p102 = por %p100, %p101
      %p103 = scmp.ne.s32.totalorder %s89, %s90
      %p104 = scmp.eq.s32.totalorder %s18, 1
      %p105 = por %p103, %p104
      %p107 = scmp.ne.s32.totalorder %s90, %s106
      %p108 = scmp.eq.s32.totalorder %s18, 0
      %p109 = por %p107, %p108
      %s110 = ssub.s32 %s19, %s31
      %s111 = ssub.s32 %s20, %s27
      %s112 = sor.u32 %s110, %s111
      %p113 = scmp.eq.s32.totalorder %s112, 0
      %s115 = sadd.s32 %s114, 1
      %s116 = scalar_select %p113, %s114, %s115
      %p119 = pneg %p113
      %p120 = scmp.eq.s32.totalorder %s12, 1
      %p121 = por %p119, %p120
      %p122 = scmp.ne.s32.totalorder %s114, %s117
      %p123 = scmp.eq.s32.totalorder %s12, 0
      %p124 = por %p122, %p123
      %p125 = scmp.ne.s32.totalorder %s114, %s117
      %p126 = scmp.eq.s32.totalorder %s17, 1
      %p127 = por %p125, %p126
      %p128 = scmp.ne.s32.totalorder %s117, %s118
      %p129 = scmp.eq.s32.totalorder %s17, 0
      %p130 = por %p128, %p129
      %p131 = scmp.ne.s32.totalorder %s117, %s118
      %p132 = scmp.eq.s32.totalorder %s18, 1
      %p133 = por %p131, %p132
      %p135 = scmp.ne.s32.totalorder %s118, %s134
      %p136 = scmp.eq.s32.totalorder %s18, 0
      %p137 = por %p135, %p136
      %p138 = scmp.le.s32.totalorder 1, %s12
      %p139 = scmp.lt.s32.totalorder %s12, 3
      %p140 = pnand %p138, %p139
      %p141 = pneg %p140
      // Predicated region
      $region9: #{transformer_forward.53} parent=5 // pred_check
        _
      $region10: #{transformer_forward.53} parent=5 // pred_check_branch
        %143 = sbr.rel (%p140) target = $region12
      $region11: #{transformer_forward.53} parent=5 // pred_region
        %s144 = ssub.s32 %s12, 1
        // Predicated region
        $region13: #{transformer_forward.53} parent=11 // pred_check
          %p145 = pneg %p76
        $region14: #{transformer_forward.53} parent=11 // pred_check_branch
          %147 = sbr.rel (%p145) target = $region16
        $region15: #{transformer_forward.53} parent=11 // pred_region
          %p148 = scmp.lt.s32.totalorder %s22, 0
          %s149 = scalar_select %p148, %s22, 0
          %s150 = smul.addr %s149, 4
          %s151 = scalar_lea.vmem %s1, %s150
        $region16: #{transformer_forward.53} parent=11 // pred_fallthru
          _
        // Predicated region
        $region17: #{transformer_forward.53} parent=11 // pred_check
          %p152 = pneg %p102
        $region18: #{transformer_forward.53} parent=11 // pred_check_branch
          %154 = sbr.rel (%p152) target = $region20
        $region19: #{transformer_forward.53} parent=11 // pred_region
          %p155 = scmp.lt.s32.totalorder %s22, 0
          %s156 = scalar_select %p155, %s22, 0
          %s157 = scalar_lea.vmem %s2, %s156
        $region20: #{transformer_forward.53} parent=11 // pred_fallthru
          _
      $region12: #{transformer_forward.53} parent=5 // pred_fallthru
        _
      %p158 = scmp.lt.s32.totalorder %s12, 2
      // Predicated region
      $region21: #{transformer_forward.53} parent=5 // pred_check
        %p159 = pneg %p158
      $region22: #{transformer_forward.53} parent=5 // pred_check_branch
        %161 = sbr.rel (%p159) target = $region24
      $region23: #{transformer_forward.53} parent=5 // pred_region
        // Predicated region
        $region25: #{transformer_forward.53} parent=23 // pred_check
          %p162 = pneg %p44
        $region26: #{transformer_forward.53} parent=23 // pred_check_branch
          %164 = sbr.rel (%p162) target = $region28
        $region27: #{transformer_forward.53} parent=23 // pred_region
          %p165 = scmp.lt.s32.totalorder %s19, 1
          %s166 = scalar_select %p165, %s19, 1
          %s167 = smul.addr %s166, 4
          %s168 = scalar_lea.vmem %s0, %s167
        $region28: #{transformer_forward.53} parent=23 // pred_fallthru
          _
      $region24: #{transformer_forward.53} parent=5 // pred_fallthru
        _
      %p169 = scmp.le.s32.totalorder 1, %s12
      %p170 = scmp.lt.s32.totalorder %s12, 3
      %p171 = pnand %p169, %p170
      %p172 = pneg %p171
      // Predicated region
      $region29: #{transformer_forward.53} parent=5 // pred_check
        _
      $region30: #{transformer_forward.53} parent=5 // pred_check_branch
        %174 = sbr.rel (%p171) target = $region32
      $region31: #{transformer_forward.53} parent=5 // pred_region
        %s175 = ssub.s32 %s12, 1
        %p176 = scmp.lt.s32.totalorder %s21, 1
        %s177 = scalar_select %p176, %s21, 1
        %s178 = smul.addr %s177, 4
        %s179 = scalar_lea.vmem %s0, %s178
        %p180 = pneg %p50
        %p181 = pneg %p47
        %p182 = scmp.lt.s32.totalorder %s22, 0
        %s183 = scalar_select %p182, %s22, 0
        %s184 = smul.addr %s183, 4
        %s185 = scalar_lea.vmem %s1, %s184
        %p186 = pneg %p76
        %p187 = pneg %p73
        %p188 = scmp.lt.s32.totalorder %s22, 0
        %s189 = scalar_select %p188, %s22, 0
        %s190 = scalar_lea.vmem %s2, %s189
        %p191 = pneg %p102
        %p192 = pneg %p99
        %p193 = pneg %p130
        %p194 = pneg %p127
        %s195 = sand.u32 %s117, 1
        %s196 = scalar_lea.sflag [#allocation3], %s195
        %s197 = sand.u32 %s117, 1
        %s198 = smul.addr %s197, 8
        %s199 = scalar_lea.vmem [#allocation2], %s198
        %p200 = scmp.lt.s32.totalorder %s21, 1
        %s201 = scalar_select %p200, %s21, 1
        %s202 = smul.addr %s201, 4
        %s203 = scalar_lea.vmem %s0, %s202
        %p204 = scmp.lt.s32.totalorder %s22, 0
        %s205 = scalar_select %p204, %s22, 0
        %s206 = smul.addr %s205, 4
        %s207 = scalar_lea.vmem %s1, %s206
        %p208 = scmp.lt.s32.totalorder %s22, 0
        %s209 = scalar_select %p208, %s22, 0
        %s210 = scalar_lea.vmem %s2, %s209
        %v212 = vld [vmem:[%s203] sm:$0xf]
        %v213 = vld [vmem:[%s207] sm:$0xf]
        %v214 = vld [vmem:[%s207 + $0x4] sm:$0xf]
        %v215 = vld [vmem:[%s207 + $0x8] sm:$0xf]
        %v216 = vld [vmem:[%s207 + $0xc] sm:$0xf]
        %v217 = vld [vmem:[%s210] sm:$0x1]
        %v219 = vlaneseq
        %v220 = vshrl.u32 %v219, 7
        %v221 = vsub.s32 0, %v220
        %v222 = vrot.slane %v217, %v221
        %v228 = vunpack.c.l.b16 %v213
        %v229 = vunpack.c.l.b16 %v214
        %v230 = vunpack.c.l.b16 %v215
        %v231 = vunpack.c.l.b16 %v216
        %v232 = vpack.c.b16 %v229, %v228
        %v233 = vpack.c.b16 %v231, %v230
        %vm236 = vcmask 261120
        %v238 = vsel %vm236, %v212, 0
        %240 = vmatprep.subr.bf16.mxu0 0
        %241 = vmatpush1.bf16.msra.mxu0 0
        %242 = vmatprep.subr.bf16.mxu0 0
        %243 = vmatpush1.bf16.msra.mxu0 0
        %244 = vmatprep.subr.bf16.mxu0 0
        %245 = vmatpush1.bf16.msra.mxu0 0
        %246 = vmatprep.subr.bf16.mxu0 0
        %247 = vmatpush1.bf16.msra.mxu0 0
        %248 = vmatprep.subr.bf16.mxu0 0
        %249 = vmatpush1.bf16.msra.mxu0 0
        %250 = vmatprep.subr.bf16.mxu0 0
        %251 = vmatpush1.bf16.msra.mxu0 0
        %252 = vmatprep.subr.bf16.mxu0 0
        %253 = vmatpush1.bf16.msra.mxu0 %v233
        %254 = vmatprep.subr.bf16.mxu0 0
        %255 = vmatpush1.bf16.msra.mxu0 %v232
        %256 = vmatprep.subr.bf16.mxu0 0
        %257 = vmatpush2.bf16.msra.mxu0 0
        %258 = vmatprep.subr.bf16.mxu0 0
        %259 = vmatpush2.bf16.msra.mxu0 0
        %260 = vmatprep.subr.bf16.mxu0 0
        %261 = vmatpush2.bf16.msra.mxu0 0
        %262 = vmatprep.subr.bf16.mxu0 0
        %263 = vmatpush2.bf16.msra.mxu0 0
        %264 = vmatprep.subr.bf16.mxu0 0
        %265 = vmatpush2.bf16.msra.mxu0 0
        %266 = vmatprep.subr.bf16.mxu0 0
        %267 = vmatpush2.bf16.msra.mxu0 0
        %268 = vmatprep.subr.bf16.mxu0 0
        %269 = vmatpush2.bf16.msra.mxu0 0
        %270 = vmatprep.subr.bf16.mxu0 0
        %271 = vmatpush2.bf16.msra.mxu0 0
        %272 = vmatprep.mubr.bf16.mxu0 0
        %273 = vmatmul.mubr.bf16.gmra.mxu0 %v238
        %v274 = vpop.f32.mrf.mxu0
        %v275 = vadd.f32 %v222, %v274
        %v276 = vpop.f32.mrf.mxu0
        %v277 = vpop.f32.mrf.mxu0
        %v278 = vpop.f32.mrf.mxu0
        %279 = vdwg.mxu0
        %280 = vst [vmem:[%s199] sm:$0xff] %v275
        %s281 = sand.u32 %s117, 1
        %s282 = scalar_lea.sflag [#allocation3], %s281
        %s283 = sand.u32 %s117, 1
        %s284 = smul.addr %s283, 8
        %s285 = scalar_lea.vmem [#allocation2], %s284
        // Predicated region
        $region33: #{transformer_forward.53} parent=31 // pred_check
          %p286 = pneg %p127
        $region34: #{transformer_forward.53} parent=31 // pred_check_branch
          %288 = sbr.rel (%p286) target = $region36
        $region35: #{transformer_forward.53} parent=31 // pred_region
          %s290 = ssub.s32 128, 128
          %291 = vsyncadd %s282, %s290
          %s292 = sadd.s32 %s22, %s21
          %s293 = smul.addr %s292, 128
          %s294 = scalar_lea.hbm %s3, %s293
          %s296 = sshll.u32 %s285, 4
          %s297 = int_to_ptr.vmem [resolvable:$true] %s296
          %299 = dma.vmem_to_hbm [thread:$0]  %s297, 128, %s294, %s282
        $region36: #{transformer_forward.53} parent=31 // pred_fallthru
          _
      $region32: #{transformer_forward.53} parent=5 // pred_fallthru
        _
      %p300 = scmp.le.s32.totalorder 2, %s12
      // Predicated region
      $region37: #{transformer_forward.53} parent=5 // pred_check
        %p301 = pneg %p300
      $region38: #{transformer_forward.53} parent=5 // pred_check_branch
        %303 = sbr.rel (%p301) target = $region40
      $region39: #{transformer_forward.53} parent=5 // pred_region
        %s304 = ssub.s32 %s12, 2
        // Predicated region
        $region41: #{transformer_forward.53} parent=39 // pred_check
          %p305 = pneg %p133
        $region42: #{transformer_forward.53} parent=39 // pred_check_branch
          %307 = sbr.rel (%p305) target = $region44
        $region43: #{transformer_forward.53} parent=39 // pred_region
          %s308 = sand.u32 %s118, 1
          %s309 = scalar_lea.sflag [#allocation3], %s308
          %s310 = sand.u32 %s118, 1
          %s311 = smul.addr %s310, 8
          %s312 = scalar_lea.vmem [#allocation2], %s311
          %313 = dma.done %s309, 128
        $region44: #{transformer_forward.53} parent=39 // pred_fallthru
          _
      $region40: #{transformer_forward.53} parent=5 // pred_fallthru
        _
    $region6: #{transformer_forward.53} parent=1 // loop_footer
      %s16 = sadd.s32 1, %s12
    $region7: #{transformer_forward.53} parent=1 // loop_footer_branch
      %11 = sbr.rel target = $region3
    $region8: #{transformer_forward.53} parent=1 // loop_exit
      _
    %314 = vsyncpa [#allocation3], 1
    %s315 = scalar_lea.sflag [#allocation3], 1
    %316 = vsyncpa %s315, 1

</llo_original>
